<compile_context>
chip_gen: v7x
topology: tpu7x:2x2x1
jax: 0.10.0
libtpu: 0.0.40
codegen_flags: <defaults>
</compile_context>

<pallas_src>
import jax
import jax.numpy as jnp
from jax.experimental import pallas as pl
from jax.experimental.pallas import tpu as pltpu

# ---- logical dims (from the PyTorch module) ----
D_IN = 258        # input feature dim
H = 512           # hidden dim
D_SKIP = 254      # output of fc_stack_1
D_OUT = 1         # final scalar SDF

# ---- packed / padded layout dims ----
X_PAD = 512       # padded x lane width
X_MAIN = 256      # lanes 0..255 hold features 0..255 (MXU contraction width)
XC0_LANE = 256    # feature 256 stored at lane 256 (tile-aligned)
XC1_LANE = 384    # feature 257 stored at lane 384 (tile-aligned)
D_SKIP_P = 256    # 254 -> 256
D_OUT_P = 128     # 1 -> 128 (lane-dense output block)

TM_MAX = 512      # max row tile


def _sdf_kernel(x_ref, wx, we0, we1, b1, w2, b2, w3, b3, w4, b4,
                w5a, b5, w6, b6, w7, b7, w8r, b8, out_ref):
    f32 = jnp.float32
    bf16 = jnp.bfloat16

    x = x_ref[...]                                     # (TM, 512) bf16
    xm = x[:, :X_MAIN]                                 # (TM, 256) bf16, aligned
    xc0 = x[:, XC0_LANE:XC0_LANE + 1].astype(f32)      # (TM, 1)  feature 256
    xc1 = x[:, XC1_LANE:XC1_LANE + 1].astype(f32)      # (TM, 1)  feature 257

    # fused x-projection: [w1 | w5_x] -> (TM, 1024); the 2 leftover input
    # features are rank-1 VPU corrections (keeps the contraction at 256).
    xproj = jnp.dot(xm, wx[...], preferred_element_type=f32)       # (TM, 1024)
    xproj = xproj + xc0 * we0[...] + xc1 * we1[...]

    h = jnp.maximum(xproj[:, :H] + b1[...], 0.0).astype(bf16)      # layer 1
    skip_x = xproj[:, H:]                                          # x @ w5[254:]

    # fc_stack_1 remainder: 512 -> 512 -> 512 -> 254 (padded to 256)
    h = jnp.maximum(jnp.dot(h, w2[...], preferred_element_type=f32) + b2[...], 0.0).astype(bf16)
    h = jnp.maximum(jnp.dot(h, w3[...], preferred_element_type=f32) + b3[...], 0.0).astype(bf16)
    h = jnp.maximum(jnp.dot(h, w4[...], preferred_element_type=f32) + b4[...], 0.0).astype(bf16)

    # skip layer: cat([skip_out, x]) @ w5 == skip_out @ w5[:254] + x @ w5[254:]
    s = jnp.dot(h, w5a[...], preferred_element_type=f32) + skip_x + b5[...]
    s = jnp.maximum(s, 0.0).astype(bf16)

    # fc_stack_2 remainder: 512 -> 512 -> 512
    s = jnp.maximum(jnp.dot(s, w6[...], preferred_element_type=f32) + b6[...], 0.0).astype(bf16)
    s = jnp.maximum(jnp.dot(s, w7[...], preferred_element_type=f32) + b7[...], 0.0)  # keep f32

    # final 512 -> 1 on VPU/XLU (padded 512x128 MXU matmul would be 128x waste)
    y = jnp.sum(s * w8r[...], axis=-1, keepdims=True) + b8[...]    # (TM, 1)
    out_ref[...] = jnp.broadcast_to(jnp.tanh(y), out_ref.shape)


def _pad_to(a, shape):
    pads = [(0, t - s) for s, t in zip(a.shape, shape)]
    return jnp.pad(a, pads)


def _round_up(n, m):
    return ((n + m - 1) // m) * m


def _choose_tm(m):
    """Row tile: up to 512, but keep >= 2 grid steps when M allows (v7x megacore)."""
    m128 = _round_up(max(m, 1), 128)
    if m128 <= 128:
        return 128
    tm = min(TM_MAX, m128 // 2)
    tm = max(128, (tm // 128) * 128)
    return tm


def sdf_decoder_forward(x, params):
    """x: (B, N, 258) float32 -> (B, N, 1) float32."""
    B, N, d = x.shape
    assert d == D_IN
    M = B * N
    tm = _choose_tm(M)
    M_pad = _round_up(M, tm)

    # pack x: features 0..256 at lanes 0..256, feature 257 at lane 384 (so the
    # two width-1 in-kernel slices are tile-aligned); rest zero. Cast to bf16.
    x2 = x.reshape(M, D_IN).astype(jnp.float32)
    xp = jnp.zeros((M_pad, X_PAD), jnp.float32)
    xp = xp.at[:M, :XC0_LANE + 1].set(x2[:, :XC0_LANE + 1])
    xp = xp.at[:M, XC1_LANE].set(x2[:, XC0_LANE + 1])
    xp = xp.astype(jnp.bfloat16)

    (w1, b1, w2, b2, w3, b3, w4, b4, w5, b5, w6, b6, w7, b7, w8, b8) = params
    bf16 = jnp.bfloat16
    f32 = jnp.float32

    # fused x-projection weight: [w1 | w5[254:, :]] -> (258, 1024)
    wx_full = jnp.concatenate([w1, w5[D_SKIP:, :]], axis=1)            # (258, 1024)
    wx_main = wx_full[:X_MAIN, :].astype(bf16)                         # (256, 1024)
    we0 = wx_full[X_MAIN:X_MAIN + 1, :].astype(f32)                    # (1, 1024)
    we1 = wx_full[X_MAIN + 1:X_MAIN + 2, :].astype(f32)                # (1, 1024)

    w4p = _pad_to(w4, (H, D_SKIP_P)).astype(bf16)                      # (512, 256)
    b4p = _pad_to(b4.reshape(1, -1), (1, D_SKIP_P)).astype(f32)
    w5a = _pad_to(w5[:D_SKIP, :], (D_SKIP_P, H)).astype(bf16)          # (256, 512)
    w8row = w8.reshape(1, H).astype(f32)                               # (1, 512)

    weights = [
        wx_main, we0, we1,
        b1.reshape(1, H).astype(f32),
        w2.astype(bf16), b2.reshape(1, H).astype(f32),
        w3.astype(bf16), b3.reshape(1, H).astype(f32),
        w4p, b4p,
        w5a, b5.reshape(1, H).astype(f32),
        w6.astype(bf16), b6.reshape(1, H).astype(f32),
        w7.astype(bf16), b7.reshape(1, H).astype(f32),
        w8row, b8.reshape(1, 1).astype(f32),
    ]

    def full_spec(a):
        nd = a.ndim
        return pl.BlockSpec(a.shape, lambda i, _nd=nd: (0,) * _nd)

    grid = (M_pad // tm,)
    out = pl.pallas_call(
        _sdf_kernel,
        out_shape=jax.ShapeDtypeStruct((M_pad, D_OUT_P), jnp.float32),
        grid_spec=pltpu.PrefetchScalarGridSpec(
            num_scalar_prefetch=0,
            grid=grid,
            in_specs=[pl.BlockSpec((tm, X_PAD), lambda i: (i, 0))]
                     + [full_spec(a) for a in weights],
            out_specs=pl.BlockSpec((tm, D_OUT_P), lambda i: (i, 0)),
        ),
        compiler_params=pltpu.CompilerParams(
            dimension_semantics=("parallel",),
            vmem_limit_bytes=40 * 1024 * 1024,
        ),
    )(xp, *weights)

    return out[:M, 0:1].reshape(B, N, D_OUT)


# ---------- deterministic parameter construction (weight_norm resolved) ----------

def _make_linear(key, fan_in, fan_out):
    kv, kg, kb = jax.random.split(key, 3)
    # weight_norm: w = g * v / ||v||  (norm over the input dim, per output row)
    v = jax.random.normal(kv, (fan_out, fan_in), jnp.float32) * 0.05
    g = 1.0 + 0.1 * jax.random.uniform(kg, (fan_out,), jnp.float32)
    w_torch = v * (g / (jnp.linalg.norm(v, axis=1) + 1e-12))[:, None]   # (out, in)
    b = jax.random.normal(kb, (fan_out,), jnp.float32) * 0.05
    return w_torch.T.astype(jnp.float32), b                              # (in, out)


def make_params(seed=0):
    key = jax.random.PRNGKey(seed)
    dims = [(D_IN, H), (H, H), (H, H), (H, D_SKIP),          # fc_stack_1
            (H, H), (H, H), (H, H), (H, D_OUT)]              # fc_stack_2
    keys = jax.random.split(key, len(dims))
    params = []
    for k, (fi, fo) in zip(keys, dims):
        w, b = _make_linear(k, fi, fo)
        params += [w, b]
    return tuple(params)


def reference_forward(x, params):
    (w1, b1, w2, b2, w3, b3, w4, b4, w5, b5, w6, b6, w7, b7, w8, b8) = params
    relu = lambda a: jnp.maximum(a, 0.0)
    h = relu(x @ w1 + b1)
    h = relu(h @ w2 + b2)
    h = relu(h @ w3 + b3)
    h = relu(h @ w4 + b4)
    skip_in = jnp.concatenate([h, x], axis=2)
    s = relu(skip_in @ w5 + b5)
    s = relu(s @ w6 + b6)
    s = relu(s @ w7 + b7)
    return jnp.tanh(s @ w8 + b8)


if __name__ == "__main__":
    B, N = 2, 8
    key = jax.random.PRNGKey(0)
    x = jax.random.normal(key, (B, N, D_IN), jnp.float32)

    params = make_params(seed=0)

    out = sdf_decoder_forward(x, params)
    out = jax.block_until_ready(out)

    ref = reference_forward(x, params)
    assert out.shape == (B, N, 1), out.shape
    # bf16 matmul operands (f32 accumulation) => loose tolerance vs f32 reference
    err = float(jnp.max(jnp.abs(out - ref)))
    assert err < 5e-2, err

    print("KERNEL_OK")
</pallas_src>

<mosaic_0001>
module attributes {stable_mosaic.version = 11 : i64} {
  func.func @_sdf_kernel(%arg0: i32, %arg1: memref<128x512xbf16, #tpu.memory_space<vmem>>, %arg2: memref<256x1024xbf16, #tpu.memory_space<vmem>>, %arg3: memref<1x1024xf32, #tpu.memory_space<vmem>>, %arg4: memref<1x1024xf32, #tpu.memory_space<vmem>>, %arg5: memref<1x512xf32, #tpu.memory_space<vmem>>, %arg6: memref<512x512xbf16, #tpu.memory_space<vmem>>, %arg7: memref<1x512xf32, #tpu.memory_space<vmem>>, %arg8: memref<512x512xbf16, #tpu.memory_space<vmem>>, %arg9: memref<1x512xf32, #tpu.memory_space<vmem>>, %arg10: memref<512x256xbf16, #tpu.memory_space<vmem>>, %arg11: memref<1x256xf32, #tpu.memory_space<vmem>>, %arg12: memref<256x512xbf16, #tpu.memory_space<vmem>>, %arg13: memref<1x512xf32, #tpu.memory_space<vmem>>, %arg14: memref<512x512xbf16, #tpu.memory_space<vmem>>, %arg15: memref<1x512xf32, #tpu.memory_space<vmem>>, %arg16: memref<512x512xbf16, #tpu.memory_space<vmem>>, %arg17: memref<1x512xf32, #tpu.memory_space<vmem>>, %arg18: memref<1x512xf32, #tpu.memory_space<vmem>>, %arg19: memref<1x1xf32, #tpu.memory_space<vmem>>, %arg20: memref<128x128xf32, #tpu.memory_space<vmem>>) attributes {dimension_semantics = [#tpu.dimension_semantics<parallel>], iteration_bounds = array<i64: 1>, scalar_prefetch = 0 : i64, scratch_operands = 0 : i64, tpu.core_type = #tpu.core_type<tc>, window_params = [{transform_indices = @transform_0, window_bounds = array<i64: 128, 512>}, {pipeline_mode = #tpu.pipeline_mode<synchronous>, transform_indices = @transform_1, window_bounds = array<i64: 256, 1024>}, {pipeline_mode = #tpu.pipeline_mode<synchronous>, transform_indices = @transform_2, window_bounds = array<i64: 1, 1024>}, {pipeline_mode = #tpu.pipeline_mode<synchronous>, transform_indices = @transform_3, window_bounds = array<i64: 1, 1024>}, {pipeline_mode = #tpu.pipeline_mode<synchronous>, transform_indices = @transform_4, window_bounds = array<i64: 1, 512>}, {pipeline_mode = #tpu.pipeline_mode<synchronous>, transform_indices = @transform_5, window_bounds = array<i64: 512, 512>}, {pipeline_mode = #tpu.pipeline_mode<synchronous>, transform_indices = @transform_6, window_bounds = array<i64: 1, 512>}, {pipeline_mode = #tpu.pipeline_mode<synchronous>, transform_indices = @transform_7, window_bounds = array<i64: 512, 512>}, {pipeline_mode = #tpu.pipeline_mode<synchronous>, transform_indices = @transform_8, window_bounds = array<i64: 1, 512>}, {pipeline_mode = #tpu.pipeline_mode<synchronous>, transform_indices = @transform_9, window_bounds = array<i64: 512, 256>}, {pipeline_mode = #tpu.pipeline_mode<synchronous>, transform_indices = @transform_10, window_bounds = array<i64: 1, 256>}, {pipeline_mode = #tpu.pipeline_mode<synchronous>, transform_indices = @transform_11, window_bounds = array<i64: 256, 512>}, {pipeline_mode = #tpu.pipeline_mode<synchronous>, transform_indices = @transform_12, window_bounds = array<i64: 1, 512>}, {pipeline_mode = #tpu.pipeline_mode<synchronous>, transform_indices = @transform_13, window_bounds = array<i64: 512, 512>}, {pipeline_mode = #tpu.pipeline_mode<synchronous>, transform_indices = @transform_14, window_bounds = array<i64: 1, 512>}, {pipeline_mode = #tpu.pipeline_mode<synchronous>, transform_indices = @transform_15, window_bounds = array<i64: 512, 512>}, {pipeline_mode = #tpu.pipeline_mode<synchronous>, transform_indices = @transform_16, window_bounds = array<i64: 1, 512>}, {pipeline_mode = #tpu.pipeline_mode<synchronous>, transform_indices = @transform_17, window_bounds = array<i64: 1, 512>}, {pipeline_mode = #tpu.pipeline_mode<synchronous>, transform_indices = @transform_18, window_bounds = array<i64: 1, 1>}, {transform_indices = @transform_19, window_bounds = array<i64: 128, 128>}]} {
    %c0 = arith.constant 0 : index
    %c0_0 = arith.constant 0 : index
    %0 = vector.load %arg1[%c0, %c0_0] : memref<128x512xbf16, #tpu.memory_space<vmem>>, vector<128x512xbf16>
    %1 = vector.extract_strided_slice %0 {offsets = [0, 0], sizes = [128, 256], strides = [1, 1]} : vector<128x512xbf16> to vector<128x256xbf16>
    %2 = vector.extract_strided_slice %0 {offsets = [0, 256], sizes = [128, 1], strides = [1, 1]} : vector<128x512xbf16> to vector<128x1xbf16>
    %3 = arith.extf %2 : vector<128x1xbf16> to vector<128x1xf32>
    %4 = vector.extract_strided_slice %0 {offsets = [0, 384], sizes = [128, 1], strides = [1, 1]} : vector<128x512xbf16> to vector<128x1xbf16>
    %5 = arith.extf %4 : vector<128x1xbf16> to vector<128x1xf32>
    %c0_1 = arith.constant 0 : index
    %c0_2 = arith.constant 0 : index
    %6 = vector.load %arg2[%c0_1, %c0_2] : memref<256x1024xbf16, #tpu.memory_space<vmem>>, vector<256x1024xbf16>
    %cst = arith.constant dense<0.000000e+00> : vector<128x1024xf32>
    %7 = tpu.matmul %1, %6, %cst {dimension_numbers = #tpu.dot_dimension_numbers<[1], [0], [0], [1], [0, 0, 1, 1], [], []>} : vector<128x256xbf16>, vector<256x1024xbf16>, vector<128x1024xf32> -> vector<128x1024xf32>
    %c0_3 = arith.constant 0 : index
    %c0_4 = arith.constant 0 : index
    %8 = vector.load %arg3[%c0_3, %c0_4] : memref<1x1024xf32, #tpu.memory_space<vmem>>, vector<1x1024xf32>
    %9 = vector.broadcast %3 : vector<128x1xf32> to vector<128x1024xf32>
    %10 = vector.broadcast %8 : vector<1x1024xf32> to vector<128x1024xf32>
    %11 = arith.mulf %9, %10 : vector<128x1024xf32>
    %12 = arith.addf %7, %11 : vector<128x1024xf32>
    %c0_5 = arith.constant 0 : index
    %c0_6 = arith.constant 0 : index
    %13 = vector.load %arg4[%c0_5, %c0_6] : memref<1x1024xf32, #tpu.memory_space<vmem>>, vector<1x1024xf32>
    %14 = vector.broadcast %5 : vector<128x1xf32> to vector<128x1024xf32>
    %15 = vector.broadcast %13 : vector<1x1024xf32> to vector<128x1024xf32>
    %16 = arith.mulf %14, %15 : vector<128x1024xf32>
    %17 = arith.addf %12, %16 : vector<128x1024xf32>
    %18 = vector.extract_strided_slice %17 {offsets = [0, 0], sizes = [128, 512], strides = [1, 1]} : vector<128x1024xf32> to vector<128x512xf32>
    %c0_7 = arith.constant 0 : index
    %c0_8 = arith.constant 0 : index
    %19 = vector.load %arg5[%c0_7, %c0_8] : memref<1x512xf32, #tpu.memory_space<vmem>>, vector<1x512xf32>
    %20 = vector.broadcast %19 : vector<1x512xf32> to vector<128x512xf32>
    %21 = arith.addf %18, %20 : vector<128x512xf32>
    %cst_9 = arith.constant 0.000000e+00 : f32
    %22 = vector.broadcast %cst_9 : f32 to vector<128x512xf32>
    %23 = arith.maximumf %21, %22 : vector<128x512xf32>
    %24 = arith.truncf %23 : vector<128x512xf32> to vector<128x512xbf16>
    %25 = vector.extract_strided_slice %17 {offsets = [0, 512], sizes = [128, 512], strides = [1, 1]} : vector<128x1024xf32> to vector<128x512xf32>
    %c0_10 = arith.constant 0 : index
    %c0_11 = arith.constant 0 : index
    %26 = vector.load %arg6[%c0_10, %c0_11] : memref<512x512xbf16, #tpu.memory_space<vmem>>, vector<512x512xbf16>
    %cst_12 = arith.constant dense<0.000000e+00> : vector<128x512xf32>
    %27 = tpu.matmul %24, %26, %cst_12 {dimension_numbers = #tpu.dot_dimension_numbers<[1], [0], [0], [1], [0, 0, 1, 1], [], []>} : vector<128x512xbf16>, vector<512x512xbf16>, vector<128x512xf32> -> vector<128x512xf32>
    %c0_13 = arith.constant 0 : index
    %c0_14 = arith.constant 0 : index
    %28 = vector.load %arg7[%c0_13, %c0_14] : memref<1x512xf32, #tpu.memory_space<vmem>>, vector<1x512xf32>
    %29 = vector.broadcast %28 : vector<1x512xf32> to vector<128x512xf32>
    %30 = arith.addf %27, %29 : vector<128x512xf32>
    %cst_15 = arith.constant 0.000000e+00 : f32
    %31 = vector.broadcast %cst_15 : f32 to vector<128x512xf32>
    %32 = arith.maximumf %30, %31 : vector<128x512xf32>
    %33 = arith.truncf %32 : vector<128x512xf32> to vector<128x512xbf16>
    %c0_16 = arith.constant 0 : index
    %c0_17 = arith.constant 0 : index
    %34 = vector.load %arg8[%c0_16, %c0_17] : memref<512x512xbf16, #tpu.memory_space<vmem>>, vector<512x512xbf16>
    %cst_18 = arith.constant dense<0.000000e+00> : vector<128x512xf32>
    %35 = tpu.matmul %33, %34, %cst_18 {dimension_numbers = #tpu.dot_dimension_numbers<[1], [0], [0], [1], [0, 0, 1, 1], [], []>} : vector<128x512xbf16>, vector<512x512xbf16>, vector<128x512xf32> -> vector<128x512xf32>
    %c0_19 = arith.constant 0 : index
    %c0_20 = arith.constant 0 : index
    %36 = vector.load %arg9[%c0_19, %c0_20] : memref<1x512xf32, #tpu.memory_space<vmem>>, vector<1x512xf32>
    %37 = vector.broadcast %36 : vector<1x512xf32> to vector<128x512xf32>
    %38 = arith.addf %35, %37 : vector<128x512xf32>
    %cst_21 = arith.constant 0.000000e+00 : f32
    %39 = vector.broadcast %cst_21 : f32 to vector<128x512xf32>
    %40 = arith.maximumf %38, %39 : vector<128x512xf32>
    %41 = arith.truncf %40 : vector<128x512xf32> to vector<128x512xbf16>
    %c0_22 = arith.constant 0 : index
    %c0_23 = arith.constant 0 : index
    %42 = vector.load %arg10[%c0_22, %c0_23] : memref<512x256xbf16, #tpu.memory_space<vmem>>, vector<512x256xbf16>
    %cst_24 = arith.constant dense<0.000000e+00> : vector<128x256xf32>
    %43 = tpu.matmul %41, %42, %cst_24 {dimension_numbers = #tpu.dot_dimension_numbers<[1], [0], [0], [1], [0, 0, 1, 1], [], []>} : vector<128x512xbf16>, vector<512x256xbf16>, vector<128x256xf32> -> vector<128x256xf32>
    %c0_25 = arith.constant 0 : index
    %c0_26 = arith.constant 0 : index
    %44 = vector.load %arg11[%c0_25, %c0_26] : memref<1x256xf32, #tpu.memory_space<vmem>>, vector<1x256xf32>
    %45 = vector.broadcast %44 : vector<1x256xf32> to vector<128x256xf32>
    %46 = arith.addf %43, %45 : vector<128x256xf32>
    %cst_27 = arith.constant 0.000000e+00 : f32
    %47 = vector.broadcast %cst_27 : f32 to vector<128x256xf32>
    %48 = arith.maximumf %46, %47 : vector<128x256xf32>
    %49 = arith.truncf %48 : vector<128x256xf32> to vector<128x256xbf16>
    %c0_28 = arith.constant 0 : index
    %c0_29 = arith.constant 0 : index
    %50 = vector.load %arg12[%c0_28, %c0_29] : memref<256x512xbf16, #tpu.memory_space<vmem>>, vector<256x512xbf16>
    %cst_30 = arith.constant dense<0.000000e+00> : vector<128x512xf32>
    %51 = tpu.matmul %49, %50, %cst_30 {dimension_numbers = #tpu.dot_dimension_numbers<[1], [0], [0], [1], [0, 0, 1, 1], [], []>} : vector<128x256xbf16>, vector<256x512xbf16>, vector<128x512xf32> -> vector<128x512xf32>
    %52 = arith.addf %51, %25 : vector<128x512xf32>
    %c0_31 = arith.constant 0 : index
    %c0_32 = arith.constant 0 : index
    %53 = vector.load %arg13[%c0_31, %c0_32] : memref<1x512xf32, #tpu.memory_space<vmem>>, vector<1x512xf32>
    %54 = vector.broadcast %53 : vector<1x512xf32> to vector<128x512xf32>
    %55 = arith.addf %52, %54 : vector<128x512xf32>
    %cst_33 = arith.constant 0.000000e+00 : f32
    %56 = vector.broadcast %cst_33 : f32 to vector<128x512xf32>
    %57 = arith.maximumf %55, %56 : vector<128x512xf32>
    %58 = arith.truncf %57 : vector<128x512xf32> to vector<128x512xbf16>
    %c0_34 = arith.constant 0 : index
    %c0_35 = arith.constant 0 : index
    %59 = vector.load %arg14[%c0_34, %c0_35] : memref<512x512xbf16, #tpu.memory_space<vmem>>, vector<512x512xbf16>
    %cst_36 = arith.constant dense<0.000000e+00> : vector<128x512xf32>
    %60 = tpu.matmul %58, %59, %cst_36 {dimension_numbers = #tpu.dot_dimension_numbers<[1], [0], [0], [1], [0, 0, 1, 1], [], []>} : vector<128x512xbf16>, vector<512x512xbf16>, vector<128x512xf32> -> vector<128x512xf32>
    %c0_37 = arith.constant 0 : index
    %c0_38 = arith.constant 0 : index
    %61 = vector.load %arg15[%c0_37, %c0_38] : memref<1x512xf32, #tpu.memory_space<vmem>>, vector<1x512xf32>
    %62 = vector.broadcast %61 : vector<1x512xf32> to vector<128x512xf32>
    %63 = arith.addf %60, %62 : vector<128x512xf32>
    %cst_39 = arith.constant 0.000000e+00 : f32
    %64 = vector.broadcast %cst_39 : f32 to vector<128x512xf32>
    %65 = arith.maximumf %63, %64 : vector<128x512xf32>
    %66 = arith.truncf %65 : vector<128x512xf32> to vector<128x512xbf16>
    %c0_40 = arith.constant 0 : index
    %c0_41 = arith.constant 0 : index
    %67 = vector.load %arg16[%c0_40, %c0_41] : memref<512x512xbf16, #tpu.memory_space<vmem>>, vector<512x512xbf16>
    %cst_42 = arith.constant dense<0.000000e+00> : vector<128x512xf32>
    %68 = tpu.matmul %66, %67, %cst_42 {dimension_numbers = #tpu.dot_dimension_numbers<[1], [0], [0], [1], [0, 0, 1, 1], [], []>} : vector<128x512xbf16>, vector<512x512xbf16>, vector<128x512xf32> -> vector<128x512xf32>
    %c0_43 = arith.constant 0 : index
    %c0_44 = arith.constant 0 : index
    %69 = vector.load %arg17[%c0_43, %c0_44] : memref<1x512xf32, #tpu.memory_space<vmem>>, vector<1x512xf32>
    %70 = vector.broadcast %69 : vector<1x512xf32> to vector<128x512xf32>
    %71 = arith.addf %68, %70 : vector<128x512xf32>
    %cst_45 = arith.constant 0.000000e+00 : f32
    %72 = vector.broadcast %cst_45 : f32 to vector<128x512xf32>
    %73 = arith.maximumf %71, %72 : vector<128x512xf32>
    %c0_46 = arith.constant 0 : index
    %c0_47 = arith.constant 0 : index
    %74 = vector.load %arg18[%c0_46, %c0_47] : memref<1x512xf32, #tpu.memory_space<vmem>>, vector<1x512xf32>
    %75 = vector.broadcast %74 : vector<1x512xf32> to vector<128x512xf32>
    %76 = arith.mulf %73, %75 : vector<128x512xf32>
    %cst_48 = arith.constant dense<0.000000e+00> : vector<128xf32>
    %77 = vector.multi_reduction <add>, %76, %cst_48 [1] : vector<128x512xf32> to vector<128xf32>
    %78 = vector.shape_cast %77 : vector<128xf32> to vector<128x1xf32>
    %c0_49 = arith.constant 0 : index
    %c0_50 = arith.constant 0 : index
    %79 = vector.load %arg19[%c0_49, %c0_50] : memref<1x1xf32, #tpu.memory_space<vmem>>, vector<1x1xf32>
    %80 = vector.broadcast %79 : vector<1x1xf32> to vector<128x1xf32>
    %81 = arith.addf %78, %80 : vector<128x1xf32>
    %82 = math.tanh %81 : vector<128x1xf32>
    %83 = vector.shape_cast %82 : vector<128x1xf32> to vector<128x1xf32>
    %84 = vector.broadcast %83 : vector<128x1xf32> to vector<128x128xf32>
    %c0_51 = arith.constant 0 : index
    %c0_52 = arith.constant 0 : index
    %85 = vector.load %arg20[%c0_51, %c0_52] : memref<128x128xf32, #tpu.memory_space<vmem>>, vector<128x128xf32>
    tpu.vector_store %arg20[%c0_51, %c0_52], %84 {strides = array<i32>} : memref<128x128xf32, #tpu.memory_space<vmem>>, vector<128x128xf32>,
    return
  }
  func.func @transform_0(%arg0: i32) -> (i32, i32) {
    %c0_i32 = arith.constant 0 : i32
    %c0_i32_0 = arith.constant 0 : i32
    return %arg0, %c0_i32 : i32, i32
  }
  func.func @transform_1(%arg0: i32) -> (i32, i32) {
    %c0_i32 = arith.constant 0 : i32
    %c0_i32_0 = arith.constant 0 : i32
    %c0_i32_1 = arith.constant 0 : i32
    return %c0_i32, %c0_i32_0 : i32, i32
  }
  func.func @transform_2(%arg0: i32) -> (i32, i32) {
    %c0_i32 = arith.constant 0 : i32
    %c0_i32_0 = arith.constant 0 : i32
    %c0_i32_1 = arith.constant 0 : i32
    return %c0_i32, %c0_i32_0 : i32, i32
  }
  func.func @transform_3(%arg0: i32) -> (i32, i32) {
    %c0_i32 = arith.constant 0 : i32
    %c0_i32_0 = arith.constant 0 : i32
    %c0_i32_1 = arith.constant 0 : i32
    return %c0_i32, %c0_i32_0 : i32, i32
  }
  func.func @transform_4(%arg0: i32) -> (i32, i32) {
    %c0_i32 = arith.constant 0 : i32
    %c0_i32_0 = arith.constant 0 : i32
    %c0_i32_1 = arith.constant 0 : i32
    return %c0_i32, %c0_i32_0 : i32, i32
  }
  func.func @transform_5(%arg0: i32) -> (i32, i32) {
    %c0_i32 = arith.constant 0 : i32
    %c0_i32_0 = arith.constant 0 : i32
    %c0_i32_1 = arith.constant 0 : i32
    return %c0_i32, %c0_i32_0 : i32, i32
  }
  func.func @transform_6(%arg0: i32) -> (i32, i32) {
    %c0_i32 = arith.constant 0 : i32
    %c0_i32_0 = arith.constant 0 : i32
    %c0_i32_1 = arith.constant 0 : i32
    return %c0_i32, %c0_i32_0 : i32, i32
  }
  func.func @transform_7(%arg0: i32) -> (i32, i32) {
    %c0_i32 = arith.constant 0 : i32
    %c0_i32_0 = arith.constant 0 : i32
    %c0_i32_1 = arith.constant 0 : i32
    return %c0_i32, %c0_i32_0 : i32, i32
  }
  func.func @transform_8(%arg0: i32) -> (i32, i32) {
    %c0_i32 = arith.constant 0 : i32
    %c0_i32_0 = arith.constant 0 : i32
    %c0_i32_1 = arith.constant 0 : i32
    return %c0_i32, %c0_i32_0 : i32, i32
  }
  func.func @transform_9(%arg0: i32) -> (i32, i32) {
    %c0_i32 = arith.constant 0 : i32
    %c0_i32_0 = arith.constant 0 : i32
    %c0_i32_1 = arith.constant 0 : i32
    return %c0_i32, %c0_i32_0 : i32, i32
  }
  func.func @transform_10(%arg0: i32) -> (i32, i32) {
    %c0_i32 = arith.constant 0 : i32
    %c0_i32_0 = arith.constant 0 : i32
    %c0_i32_1 = arith.constant 0 : i32
    return %c0_i32, %c0_i32_0 : i32, i32
  }
  func.func @transform_11(%arg0: i32) -> (i32, i32) {
    %c0_i32 = arith.constant 0 : i32
    %c0_i32_0 = arith.constant 0 : i32
    %c0_i32_1 = arith.constant 0 : i32
    return %c0_i32, %c0_i32_0 : i32, i32
  }
  func.func @transform_12(%arg0: i32) -> (i32, i32) {
    %c0_i32 = arith.constant 0 : i32
    %c0_i32_0 = arith.constant 0 : i32
    %c0_i32_1 = arith.constant 0 : i32
    return %c0_i32, %c0_i32_0 : i32, i32
  }
  func.func @transform_13(%arg0: i32) -> (i32, i32) {
    %c0_i32 = arith.constant 0 : i32
    %c0_i32_0 = arith.constant 0 : i32
    %c0_i32_1 = arith.constant 0 : i32
    return %c0_i32, %c0_i32_0 : i32, i32
  }
  func.func @transform_14(%arg0: i32) -> (i32, i32) {
    %c0_i32 = arith.constant 0 : i32
    %c0_i32_0 = arith.constant 0 : i32
    %c0_i32_1 = arith.constant 0 : i32
    return %c0_i32, %c0_i32_0 : i32, i32
  }
  func.func @transform_15(%arg0: i32) -> (i32, i32) {
    %c0_i32 = arith.constant 0 : i32
    %c0_i32_0 = arith.constant 0 : i32
    %c0_i32_1 = arith.constant 0 : i32
    return %c0_i32, %c0_i32_0 : i32, i32
  }
  func.func @transform_16(%arg0: i32) -> (i32, i32) {
    %c0_i32 = arith.constant 0 : i32
    %c0_i32_0 = arith.constant 0 : i32
    %c0_i32_1 = arith.constant 0 : i32
    return %c0_i32, %c0_i32_0 : i32, i32
  }
  func.func @transform_17(%arg0: i32) -> (i32, i32) {
    %c0_i32 = arith.constant 0 : i32
    %c0_i32_0 = arith.constant 0 : i32
    %c0_i32_1 = arith.constant 0 : i32
    return %c0_i32, %c0_i32_0 : i32, i32
  }
  func.func @transform_18(%arg0: i32) -> (i32, i32) {
    %c0_i32 = arith.constant 0 : i32
    %c0_i32_0 = arith.constant 0 : i32
    %c0_i32_1 = arith.constant 0 : i32
    return %c0_i32, %c0_i32_0 : i32, i32
  }
  func.func @transform_19(%arg0: i32) -> (i32, i32) {
    %c0_i32 = arith.constant 0 : i32
    %c0_i32_0 = arith.constant 0 : i32
    return %arg0, %c0_i32 : i32, i32
  }
}

</mosaic_0001>

<llo_original>
// kernel: tpu_custom_call.1
$region0: #{tpu_custom_call.1}
  #allocation0 [shape = 'u32[]', space=smem, size = 0x4, offset = 0x4, fixed_abs, tag = 'smem constant byte address 0x4 - core index']
  #allocation1 [shape = 'u32[144,128]{1,0:T(1,128)}', space=vmem, size = 0x12000, scoped, tag = 'internal scratch']
  #allocation2 [shape = 'f32[1,1]{1,0:T(1,128)S(1)}', space=vmem, size = 0x200, scoped, tag = 'scoped memory for tpu_custom_call.1']
  %s0 = inlined_call_operand.hbm [shape: bf16[128,512], index: 0, kind: input, shape index: {}]
  %s1 = inlined_call_operand.hbm [shape: bf16[256,1024], index: 1, kind: input, shape index: {}]
  %s2 = inlined_call_operand.vmem [shape: f32[1,1024], index: 2, kind: input, shape index: {}]
  %s3 = inlined_call_operand.hbm [shape: f32[1,1024], index: 3, kind: input, shape index: {}]
  %s4 = inlined_call_operand.vmem [shape: f32[1,512], index: 4, kind: input, shape index: {}]
  %s5 = inlined_call_operand.hbm [shape: bf16[512,512], index: 5, kind: input, shape index: {}]
  %s6 = inlined_call_operand.vmem [shape: f32[1,512], index: 6, kind: input, shape index: {}]
  %s7 = inlined_call_operand.hbm [shape: bf16[512,512], index: 7, kind: input, shape index: {}]
  %s8 = inlined_call_operand.vmem [shape: f32[1,512], index: 8, kind: input, shape index: {}]
  %s9 = inlined_call_operand.hbm [shape: bf16[512,256], index: 9, kind: input, shape index: {}]
  %s10 = inlined_call_operand.vmem [shape: f32[1,256], index: 10, kind: input, shape index: {}]
  %s11 = inlined_call_operand.hbm [shape: bf16[256,512], index: 11, kind: input, shape index: {}]
  %s12 = inlined_call_operand.vmem [shape: f32[1,512], index: 12, kind: input, shape index: {}]
  %s13 = inlined_call_operand.hbm [shape: bf16[512,512], index: 13, kind: input, shape index: {}]
  %s14 = inlined_call_operand.vmem [shape: f32[1,512], index: 14, kind: input, shape index: {}]
  %s15 = inlined_call_operand.hbm [shape: bf16[512,512], index: 15, kind: input, shape index: {}]
  %s16 = inlined_call_operand.vmem [shape: f32[1,512], index: 16, kind: input, shape index: {}]
  %s17 = inlined_call_operand.vmem [shape: f32[1,512], index: 17, kind: input, shape index: {}]
  %s18 = inlined_call_operand.<no memory space> [shape: f32[1,1], index: 18, kind: input, shape index: {}]
  %s19 = inlined_call_operand.hbm [shape: f32[128,128], index: 19, kind: output, shape index: {}]
  %s20 = sld [smem:[#allocation0]]
  $region122: #{tpu_custom_call.1} parent=0
    _
  %s22 = ssub.s32 1, %s20
  %s23 = scalar_select 0, %s22, %s20
  %v24 = vstv %s18
  %25 = vst [vmem:[#allocation2] sm:$0x1] %v24
  $region1: #{tpu_custom_call.1} parent=0
    #allocation3 [shape = 'u8[131072]{0}', space=vmem, size = 0x20000, scoped, tag = 'input window, operand 0, single buffered']
    #allocation4 [shape = 's32[1]{0}', space=sflag, size = 0x4, scoped, tag = 'scoped memory for tpu_custom_call.1']
    #allocation5 [shape = 's32[1]{0}', space=sflag, size = 0x4, scoped, tag = 'scoped memory for tpu_custom_call.1']
    #allocation6 [shape = 'u8[524288]{0}', space=vmem, size = 0x80000, scoped, tag = 'input window, operand 1, single buffered']
    #allocation7 [shape = 's32[1]{0}', space=sflag, size = 0x4, scoped, tag = 'scoped memory for tpu_custom_call.1']
    #allocation8 [shape = 'u8[4096]{0}', space=vmem, size = 0x1000, scoped, tag = 'input window, operand 3, single buffered']
    #allocation9 [shape = 'u8[524288]{0}', space=vmem, size = 0x80000, scoped, tag = 'input window, operand 5, single buffered']
    #allocation10 [shape = 's32[1]{0}', space=sflag, size = 0x4, scoped, tag = 'scoped memory for tpu_custom_call.1']
    #allocation11 [shape = 'u8[524288]{0}', space=vmem, size = 0x80000, scoped, tag = 'input window, operand 7, single buffered']
    #allocation12 [shape = 'u8[262144]{0}', space=vmem, size = 0x40000, scoped, tag = 'input window, operand 9, single buffered']
    #allocation13 [shape = 's32[1]{0}', space=sflag, size = 0x4, scoped, tag = 'scoped memory for tpu_custom_call.1']
    #allocation14 [shape = 'u8[262144]{0}', space=vmem, size = 0x40000, scoped, tag = 'input window, operand 11, single buffered']
    #allocation15 [shape = 'u8[524288]{0}', space=vmem, size = 0x80000, scoped, tag = 'input window, operand 13, single buffered']
    #allocation16 [shape = 's32[1]{0}', space=sflag, size = 0x4, scoped, tag = 'scoped memory for tpu_custom_call.1']
    #allocation17 [shape = 'u8[524288]{0}', space=vmem, size = 0x80000, scoped, tag = 'input window, operand 15, single buffered']
    #allocation18 [shape = 'u8[65536]{0}', space=vmem, size = 0x10000, scoped, tag = 'output window, operand 0, single buffered']
    %26 = vsyncpa [#allocation4], 0
    %27 = vsyncpa [#allocation7], 0
    %28 = vsyncpa [#allocation10], 0
    %29 = vsyncpa [#allocation13], 0
    %30 = vsyncpa [#allocation16], 0
    %31 = vsyncpa [#allocation5], 0
    // Predicated region
    $region2: #{tpu_custom_call.1} parent=1 // pred_check
      _
    $region3: #{tpu_custom_call.1} parent=1 // pred_check_branch
      %33 = sbr.rel (0) target = $region5
    $region4: #{tpu_custom_call.1} parent=1 // pred_region
      %s35 = ssub.s32 4096, 4096
      %36 = vsyncadd [#allocation4], %s35
      %s37 = sshll.u32 [#allocation3], 4
      %s38 = int_to_ptr.vmem [resolvable:$true] %s37
      %43 = dma.hbm_to_vmem [thread:$0]  %s0, 4096, %s38, [#allocation4], 256, 256, 16
    $region5: #{tpu_custom_call.1} parent=1 // pred_fallthru
      _
    // Predicated region
    $region6: #{tpu_custom_call.1} parent=1 // pred_check
      _
    $region7: #{tpu_custom_call.1} parent=1 // pred_check_branch
      %45 = sbr.rel (0) target = $region9
    $region8: #{tpu_custom_call.1} parent=1 // pred_region
      %s47 = ssub.s32 16384, 16384
      %48 = vsyncadd [#allocation7], %s47
      %s49 = sshll.u32 [#allocation6], 4
      %s50 = int_to_ptr.vmem [resolvable:$true] %s49
      %55 = dma.hbm_to_vmem [thread:$0]  %s1, 16384, %s50, [#allocation7], 512, 512, 32
    $region9: #{tpu_custom_call.1} parent=1 // pred_fallthru
      _
    // Predicated region
    $region10: #{tpu_custom_call.1} parent=1 // pred_check
      _
    $region11: #{tpu_custom_call.1} parent=1 // pred_check_branch
      %57 = sbr.rel (0) target = $region13
    $region12: #{tpu_custom_call.1} parent=1 // pred_region
      _
    $region13: #{tpu_custom_call.1} parent=1 // pred_fallthru
      _
    // Predicated region
    $region14: #{tpu_custom_call.1} parent=1 // pred_check
      _
    $region15: #{tpu_custom_call.1} parent=1 // pred_check_branch
      %59 = sbr.rel (0) target = $region17
    $region16: #{tpu_custom_call.1} parent=1 // pred_region
      %s61 = ssub.s32 128, 128
      %62 = vsyncadd [#allocation7], %s61
      %s64 = sshll.u32 [#allocation8], 4
      %s65 = int_to_ptr.vmem [resolvable:$true] %s64
      %67 = dma.hbm_to_vmem [thread:$0]  %s3, 128, %s65, [#allocation7]
    $region17: #{tpu_custom_call.1} parent=1 // pred_fallthru
      _
    // Predicated region
    $region18: #{tpu_custom_call.1} parent=1 // pred_check
      _
    $region19: #{tpu_custom_call.1} parent=1 // pred_check_branch
      %69 = sbr.rel (0) target = $region21
    $region20: #{tpu_custom_call.1} parent=1 // pred_region
      _
    $region21: #{tpu_custom_call.1} parent=1 // pred_fallthru
      _
    // Predicated region
    $region22: #{tpu_custom_call.1} parent=1 // pred_check
      _
    $region23: #{tpu_custom_call.1} parent=1 // pred_check_branch
      %71 = sbr.rel (0) target = $region25
    $region24: #{tpu_custom_call.1} parent=1 // pred_region
      %s73 = ssub.s32 16384, 16384
      %74 = vsyncadd [#allocation10], %s73
      %s75 = sshll.u32 [#allocation9], 4
      %s76 = int_to_ptr.vmem [resolvable:$true] %s75
      %81 = dma.hbm_to_vmem [thread:$0]  %s5, 16384, %s76, [#allocation10], 256, 256, 16
    $region25: #{tpu_custom_call.1} parent=1 // pred_fallthru
      _
    // Predicated region
    $region26: #{tpu_custom_call.1} parent=1 // pred_check
      _
    $region27: #{tpu_custom_call.1} parent=1 // pred_check_branch
      %83 = sbr.rel (0) target = $region29
    $region28: #{tpu_custom_call.1} parent=1 // pred_region
      _
    $region29: #{tpu_custom_call.1} parent=1 // pred_fallthru
      _
    // Predicated region
    $region30: #{tpu_custom_call.1} parent=1 // pred_check
      _
    $region31: #{tpu_custom_call.1} parent=1 // pred_check_branch
      %85 = sbr.rel (0) target = $region33
    $region32: #{tpu_custom_call.1} parent=1 // pred_region
      %s87 = ssub.s32 16384, 16384
      %88 = vsyncadd [#allocation10], %s87
      %s89 = sshll.u32 [#allocation11], 4
      %s90 = int_to_ptr.vmem [resolvable:$true] %s89
      %95 = dma.hbm_to_vmem [thread:$0]  %s7, 16384, %s90, [#allocation10], 256, 256, 16
    $region33: #{tpu_custom_call.1} parent=1 // pred_fallthru
      _
    // Predicated region
    $region34: #{tpu_custom_call.1} parent=1 // pred_check
      _
    $region35: #{tpu_custom_call.1} parent=1 // pred_check_branch
      %97 = sbr.rel (0) target = $region37
    $region36: #{tpu_custom_call.1} parent=1 // pred_region
      _
    $region37: #{tpu_custom_call.1} parent=1 // pred_fallthru
      _
    // Predicated region
    $region38: #{tpu_custom_call.1} parent=1 // pred_check
      _
    $region39: #{tpu_custom_call.1} parent=1 // pred_check_branch
      %99 = sbr.rel (0) target = $region41
    $region40: #{tpu_custom_call.1} parent=1 // pred_region
      %s101 = ssub.s32 8192, 8192
      %102 = vsyncadd [#allocation13], %s101
      %s103 = sshll.u32 [#allocation12], 4
      %s104 = int_to_ptr.vmem [resolvable:$true] %s103
      %109 = dma.hbm_to_vmem [thread:$0]  %s9, 8192, %s104, [#allocation13], 128, 128, 8
    $region41: #{tpu_custom_call.1} parent=1 // pred_fallthru
      _
    // Predicated region
    $region42: #{tpu_custom_call.1} parent=1 // pred_check
      _
    $region43: #{tpu_custom_call.1} parent=1 // pred_check_branch
      %111 = sbr.rel (0) target = $region45
    $region44: #{tpu_custom_call.1} parent=1 // pred_region
      _
    $region45: #{tpu_custom_call.1} parent=1 // pred_fallthru
      _
    // Predicated region
    $region46: #{tpu_custom_call.1} parent=1 // pred_check
      _
    $region47: #{tpu_custom_call.1} parent=1 // pred_check_branch
      %113 = sbr.rel (0) target = $region49
    $region48: #{tpu_custom_call.1} parent=1 // pred_region
      %s115 = ssub.s32 8192, 8192
      %116 = vsyncadd [#allocation13], %s115
      %s117 = sshll.u32 [#allocation14], 4
      %s118 = int_to_ptr.vmem [resolvable:$true] %s117
      %123 = dma.hbm_to_vmem [thread:$0]  %s11, 8192, %s118, [#allocation13], 256, 256, 16
    $region49: #{tpu_custom_call.1} parent=1 // pred_fallthru
      _
    // Predicated region
    $region50: #{tpu_custom_call.1} parent=1 // pred_check
      _
    $region51: #{tpu_custom_call.1} parent=1 // pred_check_branch
      %125 = sbr.rel (0) target = $region53
    $region52: #{tpu_custom_call.1} parent=1 // pred_region
      _
    $region53: #{tpu_custom_call.1} parent=1 // pred_fallthru
      _
    // Predicated region
    $region54: #{tpu_custom_call.1} parent=1 // pred_check
      _
    $region55: #{tpu_custom_call.1} parent=1 // pred_check_branch
      %127 = sbr.rel (0) target = $region57
    $region56: #{tpu_custom_call.1} parent=1 // pred_region
      %s129 = ssub.s32 16384, 16384
      %130 = vsyncadd [#allocation16], %s129
      %s131 = sshll.u32 [#allocation15], 4
      %s132 = int_to_ptr.vmem [resolvable:$true] %s131
      %137 = dma.hbm_to_vmem [thread:$0]  %s13, 16384, %s132, [#allocation16], 256, 256, 16
    $region57: #{tpu_custom_call.1} parent=1 // pred_fallthru
      _
    // Predicated region
    $region58: #{tpu_custom_call.1} parent=1 // pred_check
      _
    $region59: #{tpu_custom_call.1} parent=1 // pred_check_branch
      %139 = sbr.rel (0) target = $region61
    $region60: #{tpu_custom_call.1} parent=1 // pred_region
      _
    $region61: #{tpu_custom_call.1} parent=1 // pred_fallthru
      _
    // Predicated region
    $region62: #{tpu_custom_call.1} parent=1 // pred_check
      _
    $region63: #{tpu_custom_call.1} parent=1 // pred_check_branch
      %141 = sbr.rel (0) target = $region65
    $region64: #{tpu_custom_call.1} parent=1 // pred_region
      %s143 = ssub.s32 16384, 16384
      %144 = vsyncadd [#allocation16], %s143
      %s145 = sshll.u32 [#allocation17], 4
      %s146 = int_to_ptr.vmem [resolvable:$true] %s145
      %151 = dma.hbm_to_vmem [thread:$0]  %s15, 16384, %s146, [#allocation16], 256, 256, 16
    $region65: #{tpu_custom_call.1} parent=1 // pred_fallthru
      _
    // Predicated region
    $region66: #{tpu_custom_call.1} parent=1 // pred_check
      _
    $region67: #{tpu_custom_call.1} parent=1 // pred_check_branch
      %153 = sbr.rel (0) target = $region69
    $region68: #{tpu_custom_call.1} parent=1 // pred_region
      _
    $region69: #{tpu_custom_call.1} parent=1 // pred_fallthru
      _
    // Predicated region
    $region70: #{tpu_custom_call.1} parent=1 // pred_check
      _
    $region71: #{tpu_custom_call.1} parent=1 // pred_check_branch
      %155 = sbr.rel (0) target = $region73
    $region72: #{tpu_custom_call.1} parent=1 // pred_region
      _
    $region73: #{tpu_custom_call.1} parent=1 // pred_fallthru
      _
    // Predicated region
    $region74: #{tpu_custom_call.1} parent=1 // pred_check
      _
    $region75: #{tpu_custom_call.1} parent=1 // pred_check_branch
      %157 = sbr.rel (0) target = $region77
    $region76: #{tpu_custom_call.1} parent=1 // pred_region
      _
    $region77: #{tpu_custom_call.1} parent=1 // pred_fallthru
      _
    // Predicated region
    $region78: #{tpu_custom_call.1} parent=1 // pred_check
      _
    $region79: #{tpu_custom_call.1} parent=1 // pred_check_branch
      %159 = sbr.rel (0) target = $region81
    $region80: #{tpu_custom_call.1} parent=1 // pred_region
      %160 = dma.done [#allocation4], 4096
    $region81: #{tpu_custom_call.1} parent=1 // pred_fallthru
      _
    // Predicated region
    $region82: #{tpu_custom_call.1} parent=1 // pred_check
      _
    $region83: #{tpu_custom_call.1} parent=1 // pred_check_branch
      %162 = sbr.rel (0) target = $region85
    $region84: #{tpu_custom_call.1} parent=1 // pred_region
      %163 = dma.done [#allocation7], 16384
    $region85: #{tpu_custom_call.1} parent=1 // pred_fallthru
      _
    // Predicated region
    $region86: #{tpu_custom_call.1} parent=1 // pred_check
      _
    $region87: #{tpu_custom_call.1} parent=1 // pred_check_branch
      %165 = sbr.rel (0) target = $region89
    $region88: #{tpu_custom_call.1} parent=1 // pred_region
      %166 = dma.done [#allocation7], 128
    $region89: #{tpu_custom_call.1} parent=1 // pred_fallthru
      _
    // Predicated region
    $region90: #{tpu_custom_call.1} parent=1 // pred_check
      _
    $region91: #{tpu_custom_call.1} parent=1 // pred_check_branch
      %168 = sbr.rel (0) target = $region93
    $region92: #{tpu_custom_call.1} parent=1 // pred_region
      %169 = dma.done [#allocation10], 16384
    $region93: #{tpu_custom_call.1} parent=1 // pred_fallthru
      _
    // Predicated region
    $region94: #{tpu_custom_call.1} parent=1 // pred_check
      _
    $region95: #{tpu_custom_call.1} parent=1 // pred_check_branch
      %171 = sbr.rel (0) target = $region97
    $region96: #{tpu_custom_call.1} parent=1 // pred_region
      %172 = dma.done [#allocation10], 16384
    $region97: #{tpu_custom_call.1} parent=1 // pred_fallthru
      _
    // Predicated region
    $region98: #{tpu_custom_call.1} parent=1 // pred_check
      _
    $region99: #{tpu_custom_call.1} parent=1 // pred_check_branch
      %174 = sbr.rel (0) target = $region101
    $region100: #{tpu_custom_call.1} parent=1 // pred_region
      %175 = dma.done [#allocation13], 8192
    $region101: #{tpu_custom_call.1} parent=1 // pred_fallthru
      _
    // Predicated region
    $region102: #{tpu_custom_call.1} parent=1 // pred_check
      _
    $region103: #{tpu_custom_call.1} parent=1 // pred_check_branch
      %177 = sbr.rel (0) target = $region105
    $region104: #{tpu_custom_call.1} parent=1 // pred_region
      %178 = dma.done [#allocation13], 8192
    $region105: #{tpu_custom_call.1} parent=1 // pred_fallthru
      _
    // Predicated region
    $region106: #{tpu_custom_call.1} parent=1 // pred_check
      _
    $region107: #{tpu_custom_call.1} parent=1 // pred_check_branch
      %180 = sbr.rel (0) target = $region109
    $region108: #{tpu_custom_call.1} parent=1 // pred_region
      %181 = dma.done [#allocation16], 16384
    $region109: #{tpu_custom_call.1} parent=1 // pred_fallthru
      _
    // Predicated region
    $region110: #{tpu_custom_call.1} parent=1 // pred_check
      _
    $region111: #{tpu_custom_call.1} parent=1 // pred_check_branch
      %183 = sbr.rel (0) target = $region113
    $region112: #{tpu_custom_call.1} parent=1 // pred_region
      %184 = dma.done [#allocation16], 16384
    $region113: #{tpu_custom_call.1} parent=1 // pred_fallthru
      _
    %v185 = vld [vmem:[#allocation3] sm:$0xff]
    %v186 = vld [vmem:[#allocation3 + $0x8] sm:$0xff]
    %v187 = vld [vmem:[#allocation3 + $0x10] sm:$0xff]
    %v188 = vld [vmem:[#allocation3 + $0x18] sm:$0xff]
    %v189 = vld [vmem:[#allocation3 + $0x20] sm:$0xff]
    %v190 = vld [vmem:[#allocation3 + $0x28] sm:$0xff]
    %v191 = vld [vmem:[#allocation3 + $0x30] sm:$0xff]
    %v192 = vld [vmem:[#allocation3 + $0x38] sm:$0xff]
    %v193 = vld [vmem:[#allocation3 + $0x40] sm:$0xff]
    %v194 = vld [vmem:[#allocation3 + $0x48] sm:$0xff]
    %v195 = vld [vmem:[#allocation3 + $0x50] sm:$0xff]
    %v196 = vld [vmem:[#allocation3 + $0x58] sm:$0xff]
    %v197 = vld [vmem:[#allocation3 + $0x60] sm:$0xff]
    %v198 = vld [vmem:[#allocation3 + $0x68] sm:$0xff]
    %v199 = vld [vmem:[#allocation3 + $0x70] sm:$0xff]
    %v200 = vld [vmem:[#allocation3 + $0x78] sm:$0xff]
    %v201 = vld [vmem:[#allocation3 + $0x80] sm:$0xff]
    %v202 = vld [vmem:[#allocation3 + $0x88] sm:$0xff]
    %v203 = vld [vmem:[#allocation3 + $0x90] sm:$0xff]
    %v204 = vld [vmem:[#allocation3 + $0x98] sm:$0xff]
    %v205 = vld [vmem:[#allocation3 + $0xa0] sm:$0xff]
    %v206 = vld [vmem:[#allocation3 + $0xa8] sm:$0xff]
    %v207 = vld [vmem:[#allocation3 + $0xb0] sm:$0xff]
    %v208 = vld [vmem:[#allocation3 + $0xb8] sm:$0xff]
    %v209 = vld [vmem:[#allocation3 + $0xc0] sm:$0xff]
    %v210 = vld [vmem:[#allocation3 + $0xc8] sm:$0xff]
    %v211 = vld [vmem:[#allocation3 + $0xd0] sm:$0xff]
    %v212 = vld [vmem:[#allocation3 + $0xd8] sm:$0xff]
    %v213 = vld [vmem:[#allocation3 + $0xe0] sm:$0xff]
    %v214 = vld [vmem:[#allocation3 + $0xe8] sm:$0xff]
    %v215 = vld [vmem:[#allocation3 + $0xf0] sm:$0xff]
    %v216 = vld [vmem:[#allocation3 + $0xf8] sm:$0xff]
    %v217 = vunpack.c.l.bf16 %v186
    %v218 = vunpack.c.l.bf16 %v188
    %v219 = vunpack.c.l.bf16 %v190
    %v220 = vunpack.c.l.bf16 %v192
    %v221 = vunpack.c.l.bf16 %v194
    %v222 = vunpack.c.l.bf16 %v196
    %v223 = vunpack.c.l.bf16 %v198
    %v224 = vunpack.c.l.bf16 %v200
    %v225 = vunpack.c.l.bf16 %v202
    %v226 = vunpack.c.l.bf16 %v204
    %v227 = vunpack.c.l.bf16 %v206
    %v228 = vunpack.c.l.bf16 %v208
    %v229 = vunpack.c.l.bf16 %v210
    %v230 = vunpack.c.l.bf16 %v212
    %v231 = vunpack.c.l.bf16 %v214
    %v232 = vunpack.c.l.bf16 %v216
    %v249 = vrot.slane %v186, 4
    %v250 = vrot.slane %v188, 4
    %v251 = vrot.slane %v190, 4
    %v252 = vrot.slane %v192, 4
    %v253 = vrot.slane %v194, 4
    %v254 = vrot.slane %v196, 4
    %v255 = vrot.slane %v198, 4
    %v256 = vrot.slane %v200, 4
    %v257 = vrot.slane %v202, 4
    %v258 = vrot.slane %v204, 4
    %v259 = vrot.slane %v206, 4
    %v260 = vrot.slane %v208, 4
    %v261 = vrot.slane %v210, 4
    %v262 = vrot.slane %v212, 4
    %v263 = vrot.slane %v214, 4
    %v264 = vrot.slane %v216, 4
    %v281 = vunpack.c.l.bf16 %v249
    %v282 = vunpack.c.l.bf16 %v250
    %v283 = vunpack.c.l.bf16 %v251
    %v284 = vunpack.c.l.bf16 %v252
    %v285 = vunpack.c.l.bf16 %v253
    %v286 = vunpack.c.l.bf16 %v254
    %v287 = vunpack.c.l.bf16 %v255
    %v288 = vunpack.c.l.bf16 %v256
    %v289 = vunpack.c.l.bf16 %v257
    %v290 = vunpack.c.l.bf16 %v258
    %v291 = vunpack.c.l.bf16 %v259
    %v292 = vunpack.c.l.bf16 %v260
    %v293 = vunpack.c.l.bf16 %v261
    %v294 = vunpack.c.l.bf16 %v262
    %v295 = vunpack.c.l.bf16 %v263
    %v296 = vunpack.c.l.bf16 %v264
    %v297 = vld [vmem:[#allocation6] sm:$0xff]
    %v298 = vld [vmem:[#allocation6 + $0x8] sm:$0xff]
    %v299 = vld [vmem:[#allocation6 + $0x10] sm:$0xff]
    %v300 = vld [vmem:[#allocation6 + $0x18] sm:$0xff]
    %v301 = vld [vmem:[#allocation6 + $0x20] sm:$0xff]
    %v302 = vld [vmem:[#allocation6 + $0x28] sm:$0xff]
    %v303 = vld [vmem:[#allocation6 + $0x30] sm:$0xff]
    %v304 = vld [vmem:[#allocation6 + $0x38] sm:$0xff]
    %v305 = vld [vmem:[#allocation6 + $0x40] sm:$0xff]
    %v306 = vld [vmem:[#allocation6 + $0x48] sm:$0xff]
    %v307 = vld [vmem:[#allocation6 + $0x50] sm:$0xff]
    %v308 = vld [vmem:[#allocation6 + $0x58] sm:$0xff]
    %v309 = vld [vmem:[#allocation6 + $0x60] sm:$0xff]
    %v310 = vld [vmem:[#allocation6 + $0x68] sm:$0xff]
    %v311 = vld [vmem:[#allocation6 + $0x70] sm:$0xff]
    %v312 = vld [vmem:[#allocation6 + $0x78] sm:$0xff]
    %v313 = vld [vmem:[#allocation6 + $0x80] sm:$0xff]
    %v314 = vld [vmem:[#allocation6 + $0x88] sm:$0xff]
    %v315 = vld [vmem:[#allocation6 + $0x90] sm:$0xff]
    %v316 = vld [vmem:[#allocation6 + $0x98] sm:$0xff]
    %v317 = vld [vmem:[#allocation6 + $0xa0] sm:$0xff]
    %v318 = vld [vmem:[#allocation6 + $0xa8] sm:$0xff]
    %v319 = vld [vmem:[#allocation6 + $0xb0] sm:$0xff]
    %v320 = vld [vmem:[#allocation6 + $0xb8] sm:$0xff]
    %v321 = vld [vmem:[#allocation6 + $0xc0] sm:$0xff]
    %v322 = vld [vmem:[#allocation6 + $0xc8] sm:$0xff]
    %v323 = vld [vmem:[#allocation6 + $0xd0] sm:$0xff]
    %v324 = vld [vmem:[#allocation6 + $0xd8] sm:$0xff]
    %v325 = vld [vmem:[#allocation6 + $0xe0] sm:$0xff]
    %v326 = vld [vmem:[#allocation6 + $0xe8] sm:$0xff]
    %v327 = vld [vmem:[#allocation6 + $0xf0] sm:$0xff]
    %v328 = vld [vmem:[#allocation6 + $0xf8] sm:$0xff]
    %v329 = vld [vmem:[#allocation6 + $0x100] sm:$0xff]
    %v330 = vld [vmem:[#allocation6 + $0x108] sm:$0xff]
    %v331 = vld [vmem:[#allocation6 + $0x110] sm:$0xff]
    %v332 = vld [vmem:[#allocation6 + $0x118] sm:$0xff]
    %v333 = vld [vmem:[#allocation6 + $0x120] sm:$0xff]
    %v334 = vld [vmem:[#allocation6 + $0x128] sm:$0xff]
    %v335 = vld [vmem:[#allocation6 + $0x130] sm:$0xff]
    %v336 = vld [vmem:[#allocation6 + $0x138] sm:$0xff]
    %v337 = vld [vmem:[#allocation6 + $0x140] sm:$0xff]
    %v338 = vld [vmem:[#allocation6 + $0x148] sm:$0xff]
    %v339 = vld [vmem:[#allocation6 + $0x150] sm:$0xff]
    %v340 = vld [vmem:[#allocation6 + $0x158] sm:$0xff]
    %v341 = vld [vmem:[#allocation6 + $0x160] sm:$0xff]
    %v342 = vld [vmem:[#allocation6 + $0x168] sm:$0xff]
    %v343 = vld [vmem:[#allocation6 + $0x170] sm:$0xff]
    %v344 = vld [vmem:[#allocation6 + $0x178] sm:$0xff]
    %v345 = vld [vmem:[#allocation6 + $0x180] sm:$0xff]
    %v346 = vld [vmem:[#allocation6 + $0x188] sm:$0xff]
    %v347 = vld [vmem:[#allocation6 + $0x190] sm:$0xff]
    %v348 = vld [vmem:[#allocation6 + $0x198] sm:$0xff]
    %v349 = vld [vmem:[#allocation6 + $0x1a0] sm:$0xff]
    %v350 = vld [vmem:[#allocation6 + $0x1a8] sm:$0xff]
    %v351 = vld [vmem:[#allocation6 + $0x1b0] sm:$0xff]
    %v352 = vld [vmem:[#allocation6 + $0x1b8] sm:$0xff]
    %v353 = vld [vmem:[#allocation6 + $0x1c0] sm:$0xff]
    %v354 = vld [vmem:[#allocation6 + $0x1c8] sm:$0xff]
    %v355 = vld [vmem:[#allocation6 + $0x1d0] sm:$0xff]
    %v356 = vld [vmem:[#allocation6 + $0x1d8] sm:$0xff]
    %v357 = vld [vmem:[#allocation6 + $0x1e0] sm:$0xff]
    %v358 = vld [vmem:[#allocation6 + $0x1e8] sm:$0xff]
    %v359 = vld [vmem:[#allocation6 + $0x1f0] sm:$0xff]
    %v360 = vld [vmem:[#allocation6 + $0x1f8] sm:$0xff]
    %v361 = vld [vmem:[#allocation6 + $0x200] sm:$0xff]
    %v362 = vld [vmem:[#allocation6 + $0x208] sm:$0xff]
    %v363 = vld [vmem:[#allocation6 + $0x210] sm:$0xff]
    %v364 = vld [vmem:[#allocation6 + $0x218] sm:$0xff]
    %v365 = vld [vmem:[#allocation6 + $0x220] sm:$0xff]
    %v366 = vld [vmem:[#allocation6 + $0x228] sm:$0xff]
    %v367 = vld [vmem:[#allocation6 + $0x230] sm:$0xff]
    %v368 = vld [vmem:[#allocation6 + $0x238] sm:$0xff]
    %v369 = vld [vmem:[#allocation6 + $0x240] sm:$0xff]
    %v370 = vld [vmem:[#allocation6 + $0x248] sm:$0xff]
    %v371 = vld [vmem:[#allocation6 + $0x250] sm:$0xff]
    %v372 = vld [vmem:[#allocation6 + $0x258] sm:$0xff]
    %v373 = vld [vmem:[#allocation6 + $0x260] sm:$0xff]
    %v374 = vld [vmem:[#allocation6 + $0x268] sm:$0xff]
    %v375 = vld [vmem:[#allocation6 + $0x270] sm:$0xff]
    %v376 = vld [vmem:[#allocation6 + $0x278] sm:$0xff]
    %v377 = vld [vmem:[#allocation6 + $0x280] sm:$0xff]
    %v378 = vld [vmem:[#allocation6 + $0x288] sm:$0xff]
    %v379 = vld [vmem:[#allocation6 + $0x290] sm:$0xff]
    %v380 = vld [vmem:[#allocation6 + $0x298] sm:$0xff]
    %v381 = vld [vmem:[#allocation6 + $0x2a0] sm:$0xff]
    %v382 = vld [vmem:[#allocation6 + $0x2a8] sm:$0xff]
    %v383 = vld [vmem:[#allocation6 + $0x2b0] sm:$0xff]
    %v384 = vld [vmem:[#allocation6 + $0x2b8] sm:$0xff]
    %v385 = vld [vmem:[#allocation6 + $0x2c0] sm:$0xff]
    %v386 = vld [vmem:[#allocation6 + $0x2c8] sm:$0xff]
    %v387 = vld [vmem:[#allocation6 + $0x2d0] sm:$0xff]
    %v388 = vld [vmem:[#allocation6 + $0x2d8] sm:$0xff]
    %v389 = vld [vmem:[#allocation6 + $0x2e0] sm:$0xff]
    %v390 = vld [vmem:[#allocation6 + $0x2e8] sm:$0xff]
    %v391 = vld [vmem:[#allocation6 + $0x2f0] sm:$0xff]
    %v392 = vld [vmem:[#allocation6 + $0x2f8] sm:$0xff]
    %v393 = vld [vmem:[#allocation6 + $0x300] sm:$0xff]
    %v394 = vld [vmem:[#allocation6 + $0x308] sm:$0xff]
    %v395 = vld [vmem:[#allocation6 + $0x310] sm:$0xff]
    %v396 = vld [vmem:[#allocation6 + $0x318] sm:$0xff]
    %v397 = vld [vmem:[#allocation6 + $0x320] sm:$0xff]
    %v398 = vld [vmem:[#allocation6 + $0x328] sm:$0xff]
    %v399 = vld [vmem:[#allocation6 + $0x330] sm:$0xff]
    %v400 = vld [vmem:[#allocation6 + $0x338] sm:$0xff]
    %v401 = vld [vmem:[#allocation6 + $0x340] sm:$0xff]
    %v402 = vld [vmem:[#allocation6 + $0x348] sm:$0xff]
    %v403 = vld [vmem:[#allocation6 + $0x350] sm:$0xff]
    %v404 = vld [vmem:[#allocation6 + $0x358] sm:$0xff]
    %v405 = vld [vmem:[#allocation6 + $0x360] sm:$0xff]
    %v406 = vld [vmem:[#allocation6 + $0x368] sm:$0xff]
    %v407 = vld [vmem:[#allocation6 + $0x370] sm:$0xff]
    %v408 = vld [vmem:[#allocation6 + $0x378] sm:$0xff]
    %v409 = vld [vmem:[#allocation6 + $0x380] sm:$0xff]
    %v410 = vld [vmem:[#allocation6 + $0x388] sm:$0xff]
    %v411 = vld [vmem:[#allocation6 + $0x390] sm:$0xff]
    %v412 = vld [vmem:[#allocation6 + $0x398] sm:$0xff]
    %v413 = vld [vmem:[#allocation6 + $0x3a0] sm:$0xff]
    %v414 = vld [vmem:[#allocation6 + $0x3a8] sm:$0xff]
    %v415 = vld [vmem:[#allocation6 + $0x3b0] sm:$0xff]
    %v416 = vld [vmem:[#allocation6 + $0x3b8] sm:$0xff]
    %v417 = vld [vmem:[#allocation6 + $0x3c0] sm:$0xff]
    %v418 = vld [vmem:[#allocation6 + $0x3c8] sm:$0xff]
    %v419 = vld [vmem:[#allocation6 + $0x3d0] sm:$0xff]
    %v420 = vld [vmem:[#allocation6 + $0x3d8] sm:$0xff]
    %v421 = vld [vmem:[#allocation6 + $0x3e0] sm:$0xff]
    %v422 = vld [vmem:[#allocation6 + $0x3e8] sm:$0xff]
    %v423 = vld [vmem:[#allocation6 + $0x3f0] sm:$0xff]
    %v424 = vld [vmem:[#allocation6 + $0x3f8] sm:$0xff]
    %v425 = vld [vmem:[%s2] sm:$0xff]
    %427 = vset.pattern.permute.xlu0 0
    %428 = vperm.xlu0 %427, %v217
    %v429 = vpop.permute.xlu0 %428
    %432 = vset.pattern.permute.xlu0 0
    %433 = vperm.xlu0 %432, %v218
    %v434 = vpop.permute.xlu0 %433
    %437 = vset.pattern.permute.xlu0 0
    %438 = vperm.xlu0 %437, %v219
    %v439 = vpop.permute.xlu0 %438
    %442 = vset.pattern.permute.xlu0 0
    %443 = vperm.xlu0 %442, %v220
    %v444 = vpop.permute.xlu0 %443
    %447 = vset.pattern.permute.xlu0 0
    %448 = vperm.xlu0 %447, %v221
    %v449 = vpop.permute.xlu0 %448
    %452 = vset.pattern.permute.xlu0 0
    %453 = vperm.xlu0 %452, %v222
    %v454 = vpop.permute.xlu0 %453
    %457 = vset.pattern.permute.xlu0 0
    %458 = vperm.xlu0 %457, %v223
    %v459 = vpop.permute.xlu0 %458
    %462 = vset.pattern.permute.xlu0 0
    %463 = vperm.xlu0 %462, %v224
    %v464 = vpop.permute.xlu0 %463
    %467 = vset.pattern.permute.xlu0 0
    %468 = vperm.xlu0 %467, %v225
    %v469 = vpop.permute.xlu0 %468
    %472 = vset.pattern.permute.xlu0 0
    %473 = vperm.xlu0 %472, %v226
    %v474 = vpop.permute.xlu0 %473
    %477 = vset.pattern.permute.xlu0 0
    %478 = vperm.xlu0 %477, %v227
    %v479 = vpop.permute.xlu0 %478
    %482 = vset.pattern.permute.xlu0 0
    %483 = vperm.xlu0 %482, %v228
    %v484 = vpop.permute.xlu0 %483
    %487 = vset.pattern.permute.xlu0 0
    %488 = vperm.xlu0 %487, %v229
    %v489 = vpop.permute.xlu0 %488
    %492 = vset.pattern.permute.xlu0 0
    %493 = vperm.xlu0 %492, %v230
    %v494 = vpop.permute.xlu0 %493
    %497 = vset.pattern.permute.xlu0 0
    %498 = vperm.xlu0 %497, %v231
    %v499 = vpop.permute.xlu0 %498
    %502 = vset.pattern.permute.xlu0 0
    %503 = vperm.xlu0 %502, %v232
    %v504 = vpop.permute.xlu0 %503
    %v507 = vlaneseq
    %v508 = vshrl.u32 %v507, 7
    %v509 = vsub.s32 0, %v508
    %v510 = vrot.slane %v425, %v509
    %v511 = vlaneseq
    %v512 = vshrl.u32 %v511, 7
    %v513 = vsub.s32 1, %v512
    %v514 = vrot.slane %v425, %v513
    %v515 = vlaneseq
    %v516 = vshrl.u32 %v515, 7
    %v517 = vsub.s32 2, %v516
    %v518 = vrot.slane %v425, %v517
    %v519 = vlaneseq
    %v520 = vshrl.u32 %v519, 7
    %v521 = vsub.s32 3, %v520
    %v522 = vrot.slane %v425, %v521
    %v523 = vlaneseq
    %v524 = vshrl.u32 %v523, 7
    %v525 = vsub.s32 4, %v524
    %v526 = vrot.slane %v425, %v525
    %v527 = vlaneseq
    %v528 = vshrl.u32 %v527, 7
    %v529 = vsub.s32 5, %v528
    %v530 = vrot.slane %v425, %v529
    %v531 = vlaneseq
    %v532 = vshrl.u32 %v531, 7
    %v533 = vsub.s32 6, %v532
    %v534 = vrot.slane %v425, %v533
    %v535 = vlaneseq
    %v536 = vshrl.u32 %v535, 7
    %v537 = vsub.s32 7, %v536
    %v538 = vrot.slane %v425, %v537
    %v547 = vmul.f32 %v429, %v510
    %v548 = vmul.f32 %v429, %v514
    %v549 = vmul.f32 %v429, %v518
    %v550 = vmul.f32 %v429, %v522
    %v551 = vmul.f32 %v429, %v526
    %v552 = vmul.f32 %v429, %v530
    %v553 = vmul.f32 %v429, %v534
    %v554 = vmul.f32 %v429, %v538
    %v555 = vmul.f32 %v434, %v510
    %v556 = vmul.f32 %v434, %v514
    %v557 = vmul.f32 %v434, %v518
    %v558 = vmul.f32 %v434, %v522
    %v559 = vmul.f32 %v434, %v526
    %v560 = vmul.f32 %v434, %v530
    %v561 = vmul.f32 %v434, %v534
    %v562 = vmul.f32 %v434, %v538
    %v563 = vmul.f32 %v439, %v510
    %v564 = vmul.f32 %v439, %v514
    %v565 = vmul.f32 %v439, %v518
    %v566 = vmul.f32 %v439, %v522
    %v567 = vmul.f32 %v439, %v526
    %v568 = vmul.f32 %v439, %v530
    %v569 = vmul.f32 %v439, %v534
    %v570 = vmul.f32 %v439, %v538
    %v571 = vmul.f32 %v444, %v510
    %v572 = vmul.f32 %v444, %v514
    %v573 = vmul.f32 %v444, %v518
    %v574 = vmul.f32 %v444, %v522
    %v575 = vmul.f32 %v444, %v526
    %v576 = vmul.f32 %v444, %v530
    %v577 = vmul.f32 %v444, %v534
    %v578 = vmul.f32 %v444, %v538
    %v579 = vmul.f32 %v449, %v510
    %v580 = vmul.f32 %v449, %v514
    %v581 = vmul.f32 %v449, %v518
    %v582 = vmul.f32 %v449, %v522
    %v583 = vmul.f32 %v449, %v526
    %v584 = vmul.f32 %v449, %v530
    %v585 = vmul.f32 %v449, %v534
    %v586 = vmul.f32 %v449, %v538
    %v587 = vmul.f32 %v454, %v510
    %v588 = vmul.f32 %v454, %v514
    %v589 = vmul.f32 %v454, %v518
    %v590 = vmul.f32 %v454, %v522
    %v591 = vmul.f32 %v454, %v526
    %v592 = vmul.f32 %v454, %v530
    %v593 = vmul.f32 %v454, %v534
    %v594 = vmul.f32 %v454, %v538
    %v595 = vmul.f32 %v459, %v510
    %v596 = vmul.f32 %v459, %v514
    %v597 = vmul.f32 %v459, %v518
    %v598 = vmul.f32 %v459, %v522
    %v599 = vmul.f32 %v459, %v526
    %v600 = vmul.f32 %v459, %v530
    %v601 = vmul.f32 %v459, %v534
    %v602 = vmul.f32 %v459, %v538
    %v603 = vmul.f32 %v464, %v510
    %v604 = vmul.f32 %v464, %v514
    %v605 = vmul.f32 %v464, %v518
    %v606 = vmul.f32 %v464, %v522
    %v607 = vmul.f32 %v464, %v526
    %v608 = vmul.f32 %v464, %v530
    %v609 = vmul.f32 %v464, %v534
    %v610 = vmul.f32 %v464, %v538
    %v611 = vmul.f32 %v469, %v510
    %v612 = vmul.f32 %v469, %v514
    %v613 = vmul.f32 %v469, %v518
    %v614 = vmul.f32 %v469, %v522
    %v615 = vmul.f32 %v469, %v526
    %v616 = vmul.f32 %v469, %v530
    %v617 = vmul.f32 %v469, %v534
    %v618 = vmul.f32 %v469, %v538
    %v619 = vmul.f32 %v474, %v510
    %v620 = vmul.f32 %v474, %v514
    %v621 = vmul.f32 %v474, %v518
    %v622 = vmul.f32 %v474, %v522
    %v623 = vmul.f32 %v474, %v526
    %v624 = vmul.f32 %v474, %v530
    %v625 = vmul.f32 %v474, %v534
    %v626 = vmul.f32 %v474, %v538
    %v627 = vmul.f32 %v479, %v510
    %v628 = vmul.f32 %v479, %v514
    %v629 = vmul.f32 %v479, %v518
    %v630 = vmul.f32 %v479, %v522
    %v631 = vmul.f32 %v479, %v526
    %v632 = vmul.f32 %v479, %v530
    %v633 = vmul.f32 %v479, %v534
    %v634 = vmul.f32 %v479, %v538
    %v635 = vmul.f32 %v484, %v510
    %v636 = vmul.f32 %v484, %v514
    %v637 = vmul.f32 %v484, %v518
    %v638 = vmul.f32 %v484, %v522
    %v639 = vmul.f32 %v484, %v526
    %v640 = vmul.f32 %v484, %v530
    %v641 = vmul.f32 %v484, %v534
    %v642 = vmul.f32 %v484, %v538
    %v643 = vmul.f32 %v489, %v510
    %v644 = vmul.f32 %v489, %v514
    %v645 = vmul.f32 %v489, %v518
    %v646 = vmul.f32 %v489, %v522
    %v647 = vmul.f32 %v489, %v526
    %v648 = vmul.f32 %v489, %v530
    %v649 = vmul.f32 %v489, %v534
    %v650 = vmul.f32 %v489, %v538
    %v651 = vmul.f32 %v494, %v510
    %v652 = vmul.f32 %v494, %v514
    %v653 = vmul.f32 %v494, %v518
    %v654 = vmul.f32 %v494, %v522
    %v655 = vmul.f32 %v494, %v526
    %v656 = vmul.f32 %v494, %v530
    %v657 = vmul.f32 %v494, %v534
    %v658 = vmul.f32 %v494, %v538
    %v659 = vmul.f32 %v499, %v510
    %v660 = vmul.f32 %v499, %v514
    %v661 = vmul.f32 %v499, %v518
    %v662 = vmul.f32 %v499, %v522
    %v663 = vmul.f32 %v499, %v526
    %v664 = vmul.f32 %v499, %v530
    %v665 = vmul.f32 %v499, %v534
    %v666 = vmul.f32 %v499, %v538
    %v667 = vmul.f32 %v504, %v510
    %v668 = vmul.f32 %v504, %v514
    %v669 = vmul.f32 %v504, %v518
    %v670 = vmul.f32 %v504, %v522
    %v671 = vmul.f32 %v504, %v526
    %v672 = vmul.f32 %v504, %v530
    %v673 = vmul.f32 %v504, %v534
    %v674 = vmul.f32 %v504, %v538
    %v691 = vunpack.c.l.b16 %v185
    %v692 = vunpack.c.h.b16 %v185
    %v693 = vunpack.c.l.b16 %v187
    %v694 = vunpack.c.h.b16 %v187
    %v695 = vunpack.c.l.b16 %v189
    %v696 = vunpack.c.h.b16 %v189
    %v697 = vunpack.c.l.b16 %v191
    %v698 = vunpack.c.h.b16 %v191
    %v699 = vunpack.c.l.b16 %v193
    %v700 = vunpack.c.h.b16 %v193
    %v701 = vunpack.c.l.b16 %v195
    %v702 = vunpack.c.h.b16 %v195
    %v703 = vunpack.c.l.b16 %v197
    %v704 = vunpack.c.h.b16 %v197
    %v705 = vunpack.c.l.b16 %v199
    %v706 = vunpack.c.h.b16 %v199
    %v707 = vunpack.c.l.b16 %v201
    %v708 = vunpack.c.h.b16 %v201
    %v709 = vunpack.c.l.b16 %v203
    %v710 = vunpack.c.h.b16 %v203
    %v711 = vunpack.c.l.b16 %v205
    %v712 = vunpack.c.h.b16 %v205
    %v713 = vunpack.c.l.b16 %v207
    %v714 = vunpack.c.h.b16 %v207
    %v715 = vunpack.c.l.b16 %v209
    %v716 = vunpack.c.h.b16 %v209
    %v717 = vunpack.c.l.b16 %v211
    %v718 = vunpack.c.h.b16 %v211
    %v719 = vunpack.c.l.b16 %v213
    %v720 = vunpack.c.h.b16 %v213
    %v721 = vunpack.c.l.b16 %v215
    %v722 = vunpack.c.h.b16 %v215
    %v723 = vpack.c.b16 %v693, %v691
    %v724 = vpack.c.b16 %v694, %v692
    %v725 = vpack.c.b16 %v697, %v695
    %v726 = vpack.c.b16 %v698, %v696
    %v727 = vpack.c.b16 %v701, %v699
    %v728 = vpack.c.b16 %v702, %v700
    %v729 = vpack.c.b16 %v705, %v703
    %v730 = vpack.c.b16 %v706, %v704
    %v731 = vpack.c.b16 %v709, %v707
    %v732 = vpack.c.b16 %v710, %v708
    %v733 = vpack.c.b16 %v713, %v711
    %v734 = vpack.c.b16 %v714, %v712
    %v735 = vpack.c.b16 %v717, %v715
    %v736 = vpack.c.b16 %v718, %v716
    %v737 = vpack.c.b16 %v721, %v719
    %v738 = vpack.c.b16 %v722, %v720
    %v883 = vunpack.c.l.b16 %v297
    %v884 = vunpack.c.h.b16 %v297
    %v885 = vunpack.c.l.b16 %v298
    %v886 = vunpack.c.h.b16 %v298
    %v887 = vunpack.c.l.b16 %v299
    %v888 = vunpack.c.h.b16 %v299
    %v889 = vunpack.c.l.b16 %v300
    %v890 = vunpack.c.h.b16 %v300
    %v891 = vunpack.c.l.b16 %v301
    %v892 = vunpack.c.h.b16 %v301
    %v893 = vunpack.c.l.b16 %v302
    %v894 = vunpack.c.h.b16 %v302
    %v895 = vunpack.c.l.b16 %v303
    %v896 = vunpack.c.h.b16 %v303
    %v897 = vunpack.c.l.b16 %v304
    %v898 = vunpack.c.h.b16 %v304
    %v899 = vunpack.c.l.b16 %v305
    %v900 = vunpack.c.h.b16 %v305
    %v901 = vunpack.c.l.b16 %v306
    %v902 = vunpack.c.h.b16 %v306
    %v903 = vunpack.c.l.b16 %v307
    %v904 = vunpack.c.h.b16 %v307
    %v905 = vunpack.c.l.b16 %v308
    %v906 = vunpack.c.h.b16 %v308
    %v907 = vunpack.c.l.b16 %v309
    %v908 = vunpack.c.h.b16 %v309
    %v909 = vunpack.c.l.b16 %v310
    %v910 = vunpack.c.h.b16 %v310
    %v911 = vunpack.c.l.b16 %v311
    %v912 = vunpack.c.h.b16 %v311
    %v913 = vunpack.c.l.b16 %v312
    %v914 = vunpack.c.h.b16 %v312
    %v915 = vunpack.c.l.b16 %v313
    %v916 = vunpack.c.h.b16 %v313
    %v917 = vunpack.c.l.b16 %v314
    %v918 = vunpack.c.h.b16 %v314
    %v919 = vunpack.c.l.b16 %v315
    %v920 = vunpack.c.h.b16 %v315
    %v921 = vunpack.c.l.b16 %v316
    %v922 = vunpack.c.h.b16 %v316
    %v923 = vunpack.c.l.b16 %v317
    %v924 = vunpack.c.h.b16 %v317
    %v925 = vunpack.c.l.b16 %v318
    %v926 = vunpack.c.h.b16 %v318
    %v927 = vunpack.c.l.b16 %v319
    %v928 = vunpack.c.h.b16 %v319
    %v929 = vunpack.c.l.b16 %v320
    %v930 = vunpack.c.h.b16 %v320
    %v931 = vunpack.c.l.b16 %v321
    %v932 = vunpack.c.h.b16 %v321
    %v933 = vunpack.c.l.b16 %v322
    %v934 = vunpack.c.h.b16 %v322
    %v935 = vunpack.c.l.b16 %v323
    %v936 = vunpack.c.h.b16 %v323
    %v937 = vunpack.c.l.b16 %v324
    %v938 = vunpack.c.h.b16 %v324
    %v939 = vunpack.c.l.b16 %v325
    %v940 = vunpack.c.h.b16 %v325
    %v941 = vunpack.c.l.b16 %v326
    %v942 = vunpack.c.h.b16 %v326
    %v943 = vunpack.c.l.b16 %v327
    %v944 = vunpack.c.h.b16 %v327
    %v945 = vunpack.c.l.b16 %v328
    %v946 = vunpack.c.h.b16 %v328
    %v947 = vunpack.c.l.b16 %v329
    %v948 = vunpack.c.h.b16 %v329
    %v949 = vunpack.c.l.b16 %v330
    %v950 = vunpack.c.h.b16 %v330
    %v951 = vunpack.c.l.b16 %v331
    %v952 = vunpack.c.h.b16 %v331
    %v953 = vunpack.c.l.b16 %v332
    %v954 = vunpack.c.h.b16 %v332
    %v955 = vunpack.c.l.b16 %v333
    %v956 = vunpack.c.h.b16 %v333
    %v957 = vunpack.c.l.b16 %v334
    %v958 = vunpack.c.h.b16 %v334
    %v959 = vunpack.c.l.b16 %v335
    %v960 = vunpack.c.h.b16 %v335
    %v961 = vunpack.c.l.b16 %v336
    %v962 = vunpack.c.h.b16 %v336
    %v963 = vunpack.c.l.b16 %v337
    %v964 = vunpack.c.h.b16 %v337
    %v965 = vunpack.c.l.b16 %v338
    %v966 = vunpack.c.h.b16 %v338
    %v967 = vunpack.c.l.b16 %v339
    %v968 = vunpack.c.h.b16 %v339
    %v969 = vunpack.c.l.b16 %v340
    %v970 = vunpack.c.h.b16 %v340
    %v971 = vunpack.c.l.b16 %v341
    %v972 = vunpack.c.h.b16 %v341
    %v973 = vunpack.c.l.b16 %v342
    %v974 = vunpack.c.h.b16 %v342
    %v975 = vunpack.c.l.b16 %v343
    %v976 = vunpack.c.h.b16 %v343
    %v977 = vunpack.c.l.b16 %v344
    %v978 = vunpack.c.h.b16 %v344
    %v979 = vunpack.c.l.b16 %v345
    %v980 = vunpack.c.h.b16 %v345
    %v981 = vunpack.c.l.b16 %v346
    %v982 = vunpack.c.h.b16 %v346
    %v983 = vunpack.c.l.b16 %v347
    %v984 = vunpack.c.h.b16 %v347
    %v985 = vunpack.c.l.b16 %v348
    %v986 = vunpack.c.h.b16 %v348
    %v987 = vunpack.c.l.b16 %v349
    %v988 = vunpack.c.h.b16 %v349
    %v989 = vunpack.c.l.b16 %v350
    %v990 = vunpack.c.h.b16 %v350
    %v991 = vunpack.c.l.b16 %v351
    %v992 = vunpack.c.h.b16 %v351
    %v993 = vunpack.c.l.b16 %v352
    %v994 = vunpack.c.h.b16 %v352
    %v995 = vunpack.c.l.b16 %v353
    %v996 = vunpack.c.h.b16 %v353
    %v997 = vunpack.c.l.b16 %v354
    %v998 = vunpack.c.h.b16 %v354
    %v999 = vunpack.c.l.b16 %v355
    %v1000 = vunpack.c.h.b16 %v355
    %v1001 = vunpack.c.l.b16 %v356
    %v1002 = vunpack.c.h.b16 %v356
    %v1003 = vunpack.c.l.b16 %v357
    %v1004 = vunpack.c.h.b16 %v357
    %v1005 = vunpack.c.l.b16 %v358
    %v1006 = vunpack.c.h.b16 %v358
    %v1007 = vunpack.c.l.b16 %v359
    %v1008 = vunpack.c.h.b16 %v359
    %v1009 = vunpack.c.l.b16 %v360
    %v1010 = vunpack.c.h.b16 %v360
    %v1011 = vunpack.c.l.b16 %v361
    %v1012 = vunpack.c.h.b16 %v361
    %v1013 = vunpack.c.l.b16 %v362
    %v1014 = vunpack.c.h.b16 %v362
    %v1015 = vunpack.c.l.b16 %v363
    %v1016 = vunpack.c.h.b16 %v363
    %v1017 = vunpack.c.l.b16 %v364
    %v1018 = vunpack.c.h.b16 %v364
    %v1019 = vunpack.c.l.b16 %v365
    %v1020 = vunpack.c.h.b16 %v365
    %v1021 = vunpack.c.l.b16 %v366
    %v1022 = vunpack.c.h.b16 %v366
    %v1023 = vunpack.c.l.b16 %v367
    %v1024 = vunpack.c.h.b16 %v367
    %v1025 = vunpack.c.l.b16 %v368
    %v1026 = vunpack.c.h.b16 %v368
    %v1027 = vunpack.c.l.b16 %v369
    %v1028 = vunpack.c.h.b16 %v369
    %v1029 = vunpack.c.l.b16 %v370
    %v1030 = vunpack.c.h.b16 %v370
    %v1031 = vunpack.c.l.b16 %v371
    %v1032 = vunpack.c.h.b16 %v371
    %v1033 = vunpack.c.l.b16 %v372
    %v1034 = vunpack.c.h.b16 %v372
    %v1035 = vunpack.c.l.b16 %v373
    %v1036 = vunpack.c.h.b16 %v373
    %v1037 = vunpack.c.l.b16 %v374
    %v1038 = vunpack.c.h.b16 %v374
    %v1039 = vunpack.c.l.b16 %v375
    %v1040 = vunpack.c.h.b16 %v375
    %v1041 = vunpack.c.l.b16 %v376
    %v1042 = vunpack.c.h.b16 %v376
    %v1043 = vunpack.c.l.b16 %v377
    %v1044 = vunpack.c.h.b16 %v377
    %v1045 = vunpack.c.l.b16 %v378
    %v1046 = vunpack.c.h.b16 %v378
    %v1047 = vunpack.c.l.b16 %v379
    %v1048 = vunpack.c.h.b16 %v379
    %v1049 = vunpack.c.l.b16 %v380
    %v1050 = vunpack.c.h.b16 %v380
    %v1051 = vunpack.c.l.b16 %v381
    %v1052 = vunpack.c.h.b16 %v381
    %v1053 = vunpack.c.l.b16 %v382
    %v1054 = vunpack.c.h.b16 %v382
    %v1055 = vunpack.c.l.b16 %v383
    %v1056 = vunpack.c.h.b16 %v383
    %v1057 = vunpack.c.l.b16 %v384
    %v1058 = vunpack.c.h.b16 %v384
    %v1059 = vunpack.c.l.b16 %v385
    %v1060 = vunpack.c.h.b16 %v385
    %v1061 = vunpack.c.l.b16 %v386
    %v1062 = vunpack.c.h.b16 %v386
    %v1063 = vunpack.c.l.b16 %v387
    %v1064 = vunpack.c.h.b16 %v387
    %v1065 = vunpack.c.l.b16 %v388
    %v1066 = vunpack.c.h.b16 %v388
    %v1067 = vunpack.c.l.b16 %v389
    %v1068 = vunpack.c.h.b16 %v389
    %v1069 = vunpack.c.l.b16 %v390
    %v1070 = vunpack.c.h.b16 %v390
    %v1071 = vunpack.c.l.b16 %v391
    %v1072 = vunpack.c.h.b16 %v391
    %v1073 = vunpack.c.l.b16 %v392
    %v1074 = vunpack.c.h.b16 %v392
    %v1075 = vunpack.c.l.b16 %v393
    %v1076 = vunpack.c.h.b16 %v393
    %v1077 = vunpack.c.l.b16 %v394
    %v1078 = vunpack.c.h.b16 %v394
    %v1079 = vunpack.c.l.b16 %v395
    %v1080 = vunpack.c.h.b16 %v395
    %v1081 = vunpack.c.l.b16 %v396
    %v1082 = vunpack.c.h.b16 %v396
    %v1083 = vunpack.c.l.b16 %v397
    %v1084 = vunpack.c.h.b16 %v397
    %v1085 = vunpack.c.l.b16 %v398
    %v1086 = vunpack.c.h.b16 %v398
    %v1087 = vunpack.c.l.b16 %v399
    %v1088 = vunpack.c.h.b16 %v399
    %v1089 = vunpack.c.l.b16 %v400
    %v1090 = vunpack.c.h.b16 %v400
    %v1091 = vunpack.c.l.b16 %v401
    %v1092 = vunpack.c.h.b16 %v401
    %v1093 = vunpack.c.l.b16 %v402
    %v1094 = vunpack.c.h.b16 %v402
    %v1095 = vunpack.c.l.b16 %v403
    %v1096 = vunpack.c.h.b16 %v403
    %v1097 = vunpack.c.l.b16 %v404
    %v1098 = vunpack.c.h.b16 %v404
    %v1099 = vunpack.c.l.b16 %v405
    %v1100 = vunpack.c.h.b16 %v405
    %v1101 = vunpack.c.l.b16 %v406
    %v1102 = vunpack.c.h.b16 %v406
    %v1103 = vunpack.c.l.b16 %v407
    %v1104 = vunpack.c.h.b16 %v407
    %v1105 = vunpack.c.l.b16 %v408
    %v1106 = vunpack.c.h.b16 %v408
    %v1107 = vunpack.c.l.b16 %v409
    %v1108 = vunpack.c.h.b16 %v409
    %v1109 = vunpack.c.l.b16 %v410
    %v1110 = vunpack.c.h.b16 %v410
    %v1111 = vunpack.c.l.b16 %v411
    %v1112 = vunpack.c.h.b16 %v411
    %v1113 = vunpack.c.l.b16 %v412
    %v1114 = vunpack.c.h.b16 %v412
    %v1115 = vunpack.c.l.b16 %v413
    %v1116 = vunpack.c.h.b16 %v413
    %v1117 = vunpack.c.l.b16 %v414
    %v1118 = vunpack.c.h.b16 %v414
    %v1119 = vunpack.c.l.b16 %v415
    %v1120 = vunpack.c.h.b16 %v415
    %v1121 = vunpack.c.l.b16 %v416
    %v1122 = vunpack.c.h.b16 %v416
    %v1123 = vunpack.c.l.b16 %v417
    %v1124 = vunpack.c.h.b16 %v417
    %v1125 = vunpack.c.l.b16 %v418
    %v1126 = vunpack.c.h.b16 %v418
    %v1127 = vunpack.c.l.b16 %v419
    %v1128 = vunpack.c.h.b16 %v419
    %v1129 = vunpack.c.l.b16 %v420
    %v1130 = vunpack.c.h.b16 %v420
    %v1131 = vunpack.c.l.b16 %v421
    %v1132 = vunpack.c.h.b16 %v421
    %v1133 = vunpack.c.l.b16 %v422
    %v1134 = vunpack.c.h.b16 %v422
    %v1135 = vunpack.c.l.b16 %v423
    %v1136 = vunpack.c.h.b16 %v423
    %v1137 = vunpack.c.l.b16 %v424
    %v1138 = vunpack.c.h.b16 %v424
    %v1139 = vpack.c.b16 %v891, %v883
    %v1140 = vpack.c.b16 %v892, %v884
    %v1141 = vpack.c.b16 %v893, %v885
    %v1142 = vpack.c.b16 %v894, %v886
    %v1143 = vpack.c.b16 %v895, %v887
    %v1144 = vpack.c.b16 %v896, %v888
    %v1145 = vpack.c.b16 %v897, %v889
    %v1146 = vpack.c.b16 %v898, %v890
    %v1147 = vpack.c.b16 %v907, %v899
    %v1148 = vpack.c.b16 %v908, %v900
    %v1149 = vpack.c.b16 %v909, %v901
    %v1150 = vpack.c.b16 %v910, %v902
    %v1151 = vpack.c.b16 %v911, %v903
    %v1152 = vpack.c.b16 %v912, %v904
    %v1153 = vpack.c.b16 %v913, %v905
    %v1154 = vpack.c.b16 %v914, %v906
    %v1155 = vpack.c.b16 %v923, %v915
    %v1156 = vpack.c.b16 %v924, %v916
    %v1157 = vpack.c.b16 %v925, %v917
    %v1158 = vpack.c.b16 %v926, %v918
    %v1159 = vpack.c.b16 %v927, %v919
    %v1160 = vpack.c.b16 %v928, %v920
    %v1161 = vpack.c.b16 %v929, %v921
    %v1162 = vpack.c.b16 %v930, %v922
    %v1163 = vpack.c.b16 %v939, %v931
    %v1164 = vpack.c.b16 %v940, %v932
    %v1165 = vpack.c.b16 %v941, %v933
    %v1166 = vpack.c.b16 %v942, %v934
    %v1167 = vpack.c.b16 %v943, %v935
    %v1168 = vpack.c.b16 %v944, %v936
    %v1169 = vpack.c.b16 %v945, %v937
    %v1170 = vpack.c.b16 %v946, %v938
    %v1171 = vpack.c.b16 %v955, %v947
    %v1172 = vpack.c.b16 %v956, %v948
    %v1173 = vpack.c.b16 %v957, %v949
    %v1174 = vpack.c.b16 %v958, %v950
    %v1175 = vpack.c.b16 %v959, %v951
    %v1176 = vpack.c.b16 %v960, %v952
    %v1177 = vpack.c.b16 %v961, %v953
    %v1178 = vpack.c.b16 %v962, %v954
    %v1179 = vpack.c.b16 %v971, %v963
    %v1180 = vpack.c.b16 %v972, %v964
    %v1181 = vpack.c.b16 %v973, %v965
    %v1182 = vpack.c.b16 %v974, %v966
    %v1183 = vpack.c.b16 %v975, %v967
    %v1184 = vpack.c.b16 %v976, %v968
    %v1185 = vpack.c.b16 %v977, %v969
    %v1186 = vpack.c.b16 %v978, %v970
    %v1187 = vpack.c.b16 %v987, %v979
    %v1188 = vpack.c.b16 %v988, %v980
    %v1189 = vpack.c.b16 %v989, %v981
    %v1190 = vpack.c.b16 %v990, %v982
    %v1191 = vpack.c.b16 %v991, %v983
    %v1192 = vpack.c.b16 %v992, %v984
    %v1193 = vpack.c.b16 %v993, %v985
    %v1194 = vpack.c.b16 %v994, %v986
    %v1195 = vpack.c.b16 %v1003, %v995
    %v1196 = vpack.c.b16 %v1004, %v996
    %v1197 = vpack.c.b16 %v1005, %v997
    %v1198 = vpack.c.b16 %v1006, %v998
    %v1199 = vpack.c.b16 %v1007, %v999
    %v1200 = vpack.c.b16 %v1008, %v1000
    %v1201 = vpack.c.b16 %v1009, %v1001
    %v1202 = vpack.c.b16 %v1010, %v1002
    %v1203 = vpack.c.b16 %v1019, %v1011
    %v1204 = vpack.c.b16 %v1020, %v1012
    %v1205 = vpack.c.b16 %v1021, %v1013
    %v1206 = vpack.c.b16 %v1022, %v1014
    %v1207 = vpack.c.b16 %v1023, %v1015
    %v1208 = vpack.c.b16 %v1024, %v1016
    %v1209 = vpack.c.b16 %v1025, %v1017
    %v1210 = vpack.c.b16 %v1026, %v1018
    %v1211 = vpack.c.b16 %v1035, %v1027
    %v1212 = vpack.c.b16 %v1036, %v1028
    %v1213 = vpack.c.b16 %v1037, %v1029
    %v1214 = vpack.c.b16 %v1038, %v1030
    %v1215 = vpack.c.b16 %v1039, %v1031
    %v1216 = vpack.c.b16 %v1040, %v1032
    %v1217 = vpack.c.b16 %v1041, %v1033
    %v1218 = vpack.c.b16 %v1042, %v1034
    %v1219 = vpack.c.b16 %v1051, %v1043
    %v1220 = vpack.c.b16 %v1052, %v1044
    %v1221 = vpack.c.b16 %v1053, %v1045
    %v1222 = vpack.c.b16 %v1054, %v1046
    %v1223 = vpack.c.b16 %v1055, %v1047
    %v1224 = vpack.c.b16 %v1056, %v1048
    %v1225 = vpack.c.b16 %v1057, %v1049
    %v1226 = vpack.c.b16 %v1058, %v1050
    %v1227 = vpack.c.b16 %v1067, %v1059
    %v1228 = vpack.c.b16 %v1068, %v1060
    %v1229 = vpack.c.b16 %v1069, %v1061
    %v1230 = vpack.c.b16 %v1070, %v1062
    %v1231 = vpack.c.b16 %v1071, %v1063
    %v1232 = vpack.c.b16 %v1072, %v1064
    %v1233 = vpack.c.b16 %v1073, %v1065
    %v1234 = vpack.c.b16 %v1074, %v1066
    %v1235 = vpack.c.b16 %v1083, %v1075
    %v1236 = vpack.c.b16 %v1084, %v1076
    %v1237 = vpack.c.b16 %v1085, %v1077
    %v1238 = vpack.c.b16 %v1086, %v1078
    %v1239 = vpack.c.b16 %v1087, %v1079
    %v1240 = vpack.c.b16 %v1088, %v1080
    %v1241 = vpack.c.b16 %v1089, %v1081
    %v1242 = vpack.c.b16 %v1090, %v1082
    %v1243 = vpack.c.b16 %v1099, %v1091
    %v1244 = vpack.c.b16 %v1100, %v1092
    %v1245 = vpack.c.b16 %v1101, %v1093
    %v1246 = vpack.c.b16 %v1102, %v1094
    %v1247 = vpack.c.b16 %v1103, %v1095
    %v1248 = vpack.c.b16 %v1104, %v1096
    %v1249 = vpack.c.b16 %v1105, %v1097
    %v1250 = vpack.c.b16 %v1106, %v1098
    %v1251 = vpack.c.b16 %v1115, %v1107
    %v1252 = vpack.c.b16 %v1116, %v1108
    %v1253 = vpack.c.b16 %v1117, %v1109
    %v1254 = vpack.c.b16 %v1118, %v1110
    %v1255 = vpack.c.b16 %v1119, %v1111
    %v1256 = vpack.c.b16 %v1120, %v1112
    %v1257 = vpack.c.b16 %v1121, %v1113
    %v1258 = vpack.c.b16 %v1122, %v1114
    %v1259 = vpack.c.b16 %v1131, %v1123
    %v1260 = vpack.c.b16 %v1132, %v1124
    %v1261 = vpack.c.b16 %v1133, %v1125
    %v1262 = vpack.c.b16 %v1134, %v1126
    %v1263 = vpack.c.b16 %v1135, %v1127
    %v1264 = vpack.c.b16 %v1136, %v1128
    %v1265 = vpack.c.b16 %v1137, %v1129
    %v1266 = vpack.c.b16 %v1138, %v1130
    %1395 = vmatprep.subr.bf16.mxu0 %v1140
    %1396 = vmatpush1.bf16.msra.mxu0 %v1139
    %1397 = vmatprep.subr.bf16.mxu0 %v1148
    %1398 = vmatpush1.bf16.msra.mxu0 %v1147
    %1399 = vmatprep.subr.bf16.mxu0 %v1156
    %1400 = vmatpush1.bf16.msra.mxu0 %v1155
    %1401 = vmatprep.subr.bf16.mxu0 %v1164
    %1402 = vmatpush1.bf16.msra.mxu0 %v1163
    %1403 = vmatprep.subr.bf16.mxu0 %v1172
    %1404 = vmatpush1.bf16.msra.mxu0 %v1171
    %1405 = vmatprep.subr.bf16.mxu0 %v1180
    %1406 = vmatpush1.bf16.msra.mxu0 %v1179
    %1407 = vmatprep.subr.bf16.mxu0 %v1188
    %1408 = vmatpush1.bf16.msra.mxu0 %v1187
    %1409 = vmatprep.subr.bf16.mxu0 %v1196
    %1410 = vmatpush1.bf16.msra.mxu0 %v1195
    %1411 = vmatprep.subr.bf16.mxu0 %v1204
    %1412 = vmatpush1.bf16.msra.mxu0 %v1203
    %1413 = vmatprep.subr.bf16.mxu0 %v1212
    %1414 = vmatpush1.bf16.msra.mxu0 %v1211
    %1415 = vmatprep.subr.bf16.mxu0 %v1220
    %1416 = vmatpush1.bf16.msra.mxu0 %v1219
    %1417 = vmatprep.subr.bf16.mxu0 %v1228
    %1418 = vmatpush1.bf16.msra.mxu0 %v1227
    %1419 = vmatprep.subr.bf16.mxu0 %v1236
    %1420 = vmatpush1.bf16.msra.mxu0 %v1235
    %1421 = vmatprep.subr.bf16.mxu0 %v1244
    %1422 = vmatpush1.bf16.msra.mxu0 %v1243
    %1423 = vmatprep.subr.bf16.mxu0 %v1252
    %1424 = vmatpush1.bf16.msra.mxu0 %v1251
    %1425 = vmatprep.subr.bf16.mxu0 %v1260
    %1426 = vmatpush1.bf16.msra.mxu0 %v1259
    %1427 = vmatprep.mubr.bf16.mxu0 %v724
    %1428 = vmatmul.mubr.bf16.gmra.mrb[0].mxu0 %v723
    %v1429 = vpop.f32.mrb[0].mxu0
    %v1430 = vadd.f32 %v547, %v1429
    %v1431 = vpop.f32.mrb[0].mxu0
    %v1432 = vadd.f32 %v548, %v1431
    %v1433 = vpop.f32.mrb[0].mxu0
    %v1434 = vadd.f32 %v555, %v1433
    %v1435 = vpop.f32.mrb[0].mxu0
    %v1436 = vadd.f32 %v556, %v1435
    %1437 = vmatprep.mubr.bf16.mxu0 %v726
    %1438 = vmatmul.mubr.bf16.gmra.mrb[0].mxu0 %v725
    %v1439 = vpop.f32.mrb[0].mxu0
    %v1440 = vadd.f32 %v563, %v1439
    %v1441 = vpop.f32.mrb[0].mxu0
    %v1442 = vadd.f32 %v564, %v1441
    %v1443 = vpop.f32.mrb[0].mxu0
    %v1444 = vadd.f32 %v571, %v1443
    %v1445 = vpop.f32.mrb[0].mxu0
    %v1446 = vadd.f32 %v572, %v1445
    %1447 = vmatprep.mubr.bf16.mxu0 %v728
    %1448 = vmatmul.mubr.bf16.gmra.mrb[0].mxu0 %v727
    %v1449 = vpop.f32.mrb[0].mxu0
    %v1450 = vadd.f32 %v579, %v1449
    %v1451 = vpop.f32.mrb[0].mxu0
    %v1452 = vadd.f32 %v580, %v1451
    %v1453 = vpop.f32.mrb[0].mxu0
    %v1454 = vadd.f32 %v587, %v1453
    %v1455 = vpop.f32.mrb[0].mxu0
    %v1456 = vadd.f32 %v588, %v1455
    %1457 = vmatprep.mubr.bf16.mxu0 %v730
    %1458 = vmatmul.mubr.bf16.gmra.mrb[0].mxu0 %v729
    %v1459 = vpop.f32.mrb[0].mxu0
    %v1460 = vadd.f32 %v595, %v1459
    %v1461 = vpop.f32.mrb[0].mxu0
    %v1462 = vadd.f32 %v596, %v1461
    %v1463 = vpop.f32.mrb[0].mxu0
    %v1464 = vadd.f32 %v603, %v1463
    %v1465 = vpop.f32.mrb[0].mxu0
    %v1466 = vadd.f32 %v604, %v1465
    %1467 = vmatprep.mubr.bf16.mxu0 %v732
    %1468 = vmatmul.mubr.bf16.gmra.mrb[0].mxu0 %v731
    %v1469 = vpop.f32.mrb[0].mxu0
    %v1470 = vadd.f32 %v611, %v1469
    %v1471 = vpop.f32.mrb[0].mxu0
    %v1472 = vadd.f32 %v612, %v1471
    %v1473 = vpop.f32.mrb[0].mxu0
    %v1474 = vadd.f32 %v619, %v1473
    %v1475 = vpop.f32.mrb[0].mxu0
    %v1476 = vadd.f32 %v620, %v1475
    %1477 = vmatprep.mubr.bf16.mxu0 %v734
    %1478 = vmatmul.mubr.bf16.gmra.mrb[0].mxu0 %v733
    %v1479 = vpop.f32.mrb[0].mxu0
    %v1480 = vadd.f32 %v627, %v1479
    %v1481 = vpop.f32.mrb[0].mxu0
    %v1482 = vadd.f32 %v628, %v1481
    %v1483 = vpop.f32.mrb[0].mxu0
    %v1484 = vadd.f32 %v635, %v1483
    %v1485 = vpop.f32.mrb[0].mxu0
    %v1486 = vadd.f32 %v636, %v1485
    %1487 = vmatprep.mubr.bf16.mxu0 %v736
    %1488 = vmatmul.mubr.bf16.gmra.mrb[0].mxu0 %v735
    %v1489 = vpop.f32.mrb[0].mxu0
    %v1490 = vadd.f32 %v643, %v1489
    %v1491 = vpop.f32.mrb[0].mxu0
    %v1492 = vadd.f32 %v644, %v1491
    %v1493 = vpop.f32.mrb[0].mxu0
    %v1494 = vadd.f32 %v651, %v1493
    %v1495 = vpop.f32.mrb[0].mxu0
    %v1496 = vadd.f32 %v652, %v1495
    %1497 = vmatprep.mubr.bf16.mxu0 %v738
    %1498 = vmatmul.mubr.bf16.gmra.mrb[0].mxu0 %v737
    %v1499 = vpop.f32.mrb[0].mxu0
    %v1500 = vadd.f32 %v659, %v1499
    %v1501 = vpop.f32.mrb[0].mxu0
    %v1502 = vadd.f32 %v660, %v1501
    %v1503 = vpop.f32.mrb[0].mxu0
    %v1504 = vadd.f32 %v667, %v1503
    %v1505 = vpop.f32.mrb[0].mxu0
    %v1506 = vadd.f32 %v668, %v1505
    %1507 = vdwg.mxu0
    %1508 = vmatprep.subr.bf16.mxu0 %v1142
    %1509 = vmatpush1.bf16.msra.mxu0 %v1141
    %1510 = vmatprep.subr.bf16.mxu0 %v1150
    %1511 = vmatpush1.bf16.msra.mxu0 %v1149
    %1512 = vmatprep.subr.bf16.mxu0 %v1158
    %1513 = vmatpush1.bf16.msra.mxu0 %v1157
    %1514 = vmatprep.subr.bf16.mxu0 %v1166
    %1515 = vmatpush1.bf16.msra.mxu0 %v1165
    %1516 = vmatprep.subr.bf16.mxu0 %v1174
    %1517 = vmatpush1.bf16.msra.mxu0 %v1173
    %1518 = vmatprep.subr.bf16.mxu0 %v1182
    %1519 = vmatpush1.bf16.msra.mxu0 %v1181
    %1520 = vmatprep.subr.bf16.mxu0 %v1190
    %1521 = vmatpush1.bf16.msra.mxu0 %v1189
    %1522 = vmatprep.subr.bf16.mxu0 %v1198
    %1523 = vmatpush1.bf16.msra.mxu0 %v1197
    %1524 = vmatprep.subr.bf16.mxu0 %v1206
    %1525 = vmatpush1.bf16.msra.mxu0 %v1205
    %1526 = vmatprep.subr.bf16.mxu0 %v1214
    %1527 = vmatpush1.bf16.msra.mxu0 %v1213
    %1528 = vmatprep.subr.bf16.mxu0 %v1222
    %1529 = vmatpush1.bf16.msra.mxu0 %v1221
    %1530 = vmatprep.subr.bf16.mxu0 %v1230
    %1531 = vmatpush1.bf16.msra.mxu0 %v1229
    %1532 = vmatprep.subr.bf16.mxu0 %v1238
    %1533 = vmatpush1.bf16.msra.mxu0 %v1237
    %1534 = vmatprep.subr.bf16.mxu0 %v1246
    %1535 = vmatpush1.bf16.msra.mxu0 %v1245
    %1536 = vmatprep.subr.bf16.mxu0 %v1254
    %1537 = vmatpush1.bf16.msra.mxu0 %v1253
    %1538 = vmatprep.subr.bf16.mxu0 %v1262
    %1539 = vmatpush1.bf16.msra.mxu0 %v1261
    %1540 = vmatprep.mubr.bf16.mxu0 %v724
    %1541 = vmatmul.mubr.bf16.gmra.mrb[0].mxu0 %v723
    %v1542 = vpop.f32.mrb[0].mxu0
    %v1543 = vadd.f32 %v549, %v1542
    %v1544 = vpop.f32.mrb[0].mxu0
    %v1545 = vadd.f32 %v550, %v1544
    %v1546 = vpop.f32.mrb[0].mxu0
    %v1547 = vadd.f32 %v557, %v1546
    %v1548 = vpop.f32.mrb[0].mxu0
    %v1549 = vadd.f32 %v558, %v1548
    %1550 = vmatprep.mubr.bf16.mxu0 %v726
    %1551 = vmatmul.mubr.bf16.gmra.mrb[0].mxu0 %v725
    %v1552 = vpop.f32.mrb[0].mxu0
    %v1553 = vadd.f32 %v565, %v1552
    %v1554 = vpop.f32.mrb[0].mxu0
    %v1555 = vadd.f32 %v566, %v1554
    %v1556 = vpop.f32.mrb[0].mxu0
    %v1557 = vadd.f32 %v573, %v1556
    %v1558 = vpop.f32.mrb[0].mxu0
    %v1559 = vadd.f32 %v574, %v1558
    %1560 = vmatprep.mubr.bf16.mxu0 %v728
    %1561 = vmatmul.mubr.bf16.gmra.mrb[0].mxu0 %v727
    %v1562 = vpop.f32.mrb[0].mxu0
    %v1563 = vadd.f32 %v581, %v1562
    %v1564 = vpop.f32.mrb[0].mxu0
    %v1565 = vadd.f32 %v582, %v1564
    %v1566 = vpop.f32.mrb[0].mxu0
    %v1567 = vadd.f32 %v589, %v1566
    %v1568 = vpop.f32.mrb[0].mxu0
    %v1569 = vadd.f32 %v590, %v1568
    %1570 = vmatprep.mubr.bf16.mxu0 %v730
    %1571 = vmatmul.mubr.bf16.gmra.mrb[0].mxu0 %v729
    %v1572 = vpop.f32.mrb[0].mxu0
    %v1573 = vadd.f32 %v597, %v1572
    %v1574 = vpop.f32.mrb[0].mxu0
    %v1575 = vadd.f32 %v598, %v1574
    %v1576 = vpop.f32.mrb[0].mxu0
    %v1577 = vadd.f32 %v605, %v1576
    %v1578 = vpop.f32.mrb[0].mxu0
    %v1579 = vadd.f32 %v606, %v1578
    %1580 = vmatprep.mubr.bf16.mxu0 %v732
    %1581 = vmatmul.mubr.bf16.gmra.mrb[0].mxu0 %v731
    %v1582 = vpop.f32.mrb[0].mxu0
    %v1583 = vadd.f32 %v613, %v1582
    %v1584 = vpop.f32.mrb[0].mxu0
    %v1585 = vadd.f32 %v614, %v1584
    %v1586 = vpop.f32.mrb[0].mxu0
    %v1587 = vadd.f32 %v621, %v1586
    %v1588 = vpop.f32.mrb[0].mxu0
    %v1589 = vadd.f32 %v622, %v1588
    %1590 = vmatprep.mubr.bf16.mxu0 %v734
    %1591 = vmatmul.mubr.bf16.gmra.mrb[0].mxu0 %v733
    %v1592 = vpop.f32.mrb[0].mxu0
    %v1593 = vadd.f32 %v629, %v1592
    %v1594 = vpop.f32.mrb[0].mxu0
    %v1595 = vadd.f32 %v630, %v1594
    %v1596 = vpop.f32.mrb[0].mxu0
    %v1597 = vadd.f32 %v637, %v1596
    %v1598 = vpop.f32.mrb[0].mxu0
    %v1599 = vadd.f32 %v638, %v1598
    %1600 = vmatprep.mubr.bf16.mxu0 %v736
    %1601 = vmatmul.mubr.bf16.gmra.mrb[0].mxu0 %v735
    %v1602 = vpop.f32.mrb[0].mxu0
    %v1603 = vadd.f32 %v645, %v1602
    %v1604 = vpop.f32.mrb[0].mxu0
    %v1605 = vadd.f32 %v646, %v1604
    %v1606 = vpop.f32.mrb[0].mxu0
    %v1607 = vadd.f32 %v653, %v1606
    %v1608 = vpop.f32.mrb[0].mxu0
    %v1609 = vadd.f32 %v654, %v1608
    %1610 = vmatprep.mubr.bf16.mxu0 %v738
    %1611 = vmatmul.mubr.bf16.gmra.mrb[0].mxu0 %v737
    %v1612 = vpop.f32.mrb[0].mxu0
    %v1613 = vadd.f32 %v661, %v1612
    %v1614 = vpop.f32.mrb[0].mxu0
    %v1615 = vadd.f32 %v662, %v1614
    %v1616 = vpop.f32.mrb[0].mxu0
    %v1617 = vadd.f32 %v669, %v1616
    %v1618 = vpop.f32.mrb[0].mxu0
    %v1619 = vadd.f32 %v670, %v1618
    %1620 = vdwg.mxu0
    %1621 = vmatprep.subr.bf16.mxu0 %v1144
    %1622 = vmatpush1.bf16.msra.mxu0 %v1143
    %1623 = vmatprep.subr.bf16.mxu0 %v1152
    %1624 = vmatpush1.bf16.msra.mxu0 %v1151
    %1625 = vmatprep.subr.bf16.mxu0 %v1160
    %1626 = vmatpush1.bf16.msra.mxu0 %v1159
    %1627 = vmatprep.subr.bf16.mxu0 %v1168
    %1628 = vmatpush1.bf16.msra.mxu0 %v1167
    %1629 = vmatprep.subr.bf16.mxu0 %v1176
    %1630 = vmatpush1.bf16.msra.mxu0 %v1175
    %1631 = vmatprep.subr.bf16.mxu0 %v1184
    %1632 = vmatpush1.bf16.msra.mxu0 %v1183
    %1633 = vmatprep.subr.bf16.mxu0 %v1192
    %1634 = vmatpush1.bf16.msra.mxu0 %v1191
    %1635 = vmatprep.subr.bf16.mxu0 %v1200
    %1636 = vmatpush1.bf16.msra.mxu0 %v1199
    %1637 = vmatprep.subr.bf16.mxu0 %v1208
    %1638 = vmatpush1.bf16.msra.mxu0 %v1207
    %1639 = vmatprep.subr.bf16.mxu0 %v1216
    %1640 = vmatpush1.bf16.msra.mxu0 %v1215
    %1641 = vmatprep.subr.bf16.mxu0 %v1224
    %1642 = vmatpush1.bf16.msra.mxu0 %v1223
    %1643 = vmatprep.subr.bf16.mxu0 %v1232
    %1644 = vmatpush1.bf16.msra.mxu0 %v1231
    %1645 = vmatprep.subr.bf16.mxu0 %v1240
    %1646 = vmatpush1.bf16.msra.mxu0 %v1239
    %1647 = vmatprep.subr.bf16.mxu0 %v1248
    %1648 = vmatpush1.bf16.msra.mxu0 %v1247
    %1649 = vmatprep.subr.bf16.mxu0 %v1256
    %1650 = vmatpush1.bf16.msra.mxu0 %v1255
    %1651 = vmatprep.subr.bf16.mxu0 %v1264
    %1652 = vmatpush1.bf16.msra.mxu0 %v1263
    %1653 = vmatprep.mubr.bf16.mxu0 %v724
    %1654 = vmatmul.mubr.bf16.gmra.mrb[0].mxu0 %v723
    %v1655 = vpop.f32.mrb[0].mxu0
    %v1656 = vadd.f32 %v551, %v1655
    %v1657 = vpop.f32.mrb[0].mxu0
    %v1658 = vadd.f32 %v552, %v1657
    %v1659 = vpop.f32.mrb[0].mxu0
    %v1660 = vadd.f32 %v559, %v1659
    %v1661 = vpop.f32.mrb[0].mxu0
    %v1662 = vadd.f32 %v560, %v1661
    %1663 = vmatprep.mubr.bf16.mxu0 %v726
    %1664 = vmatmul.mubr.bf16.gmra.mrb[0].mxu0 %v725
    %v1665 = vpop.f32.mrb[0].mxu0
    %v1666 = vadd.f32 %v567, %v1665
    %v1667 = vpop.f32.mrb[0].mxu0
    %v1668 = vadd.f32 %v568, %v1667
    %v1669 = vpop.f32.mrb[0].mxu0
    %v1670 = vadd.f32 %v575, %v1669
    %v1671 = vpop.f32.mrb[0].mxu0
    %v1672 = vadd.f32 %v576, %v1671
    %1673 = vmatprep.mubr.bf16.mxu0 %v728
    %1674 = vmatmul.mubr.bf16.gmra.mrb[0].mxu0 %v727
    %v1675 = vpop.f32.mrb[0].mxu0
    %v1676 = vadd.f32 %v583, %v1675
    %v1677 = vpop.f32.mrb[0].mxu0
    %v1678 = vadd.f32 %v584, %v1677
    %v1679 = vpop.f32.mrb[0].mxu0
    %v1680 = vadd.f32 %v591, %v1679
    %v1681 = vpop.f32.mrb[0].mxu0
    %v1682 = vadd.f32 %v592, %v1681
    %1683 = vmatprep.mubr.bf16.mxu0 %v730
    %1684 = vmatmul.mubr.bf16.gmra.mrb[0].mxu0 %v729
    %v1685 = vpop.f32.mrb[0].mxu0
    %v1686 = vadd.f32 %v599, %v1685
    %v1687 = vpop.f32.mrb[0].mxu0
    %v1688 = vadd.f32 %v600, %v1687
    %v1689 = vpop.f32.mrb[0].mxu0
    %v1690 = vadd.f32 %v607, %v1689
    %v1691 = vpop.f32.mrb[0].mxu0
    %v1692 = vadd.f32 %v608, %v1691
    %1693 = vmatprep.mubr.bf16.mxu0 %v732
    %1694 = vmatmul.mubr.bf16.gmra.mrb[0].mxu0 %v731
    %v1695 = vpop.f32.mrb[0].mxu0
    %v1696 = vadd.f32 %v615, %v1695
    %v1697 = vpop.f32.mrb[0].mxu0
    %v1698 = vadd.f32 %v616, %v1697
    %v1699 = vpop.f32.mrb[0].mxu0
    %v1700 = vadd.f32 %v623, %v1699
    %v1701 = vpop.f32.mrb[0].mxu0
    %v1702 = vadd.f32 %v624, %v1701
    %1703 = vmatprep.mubr.bf16.mxu0 %v734
    %1704 = vmatmul.mubr.bf16.gmra.mrb[0].mxu0 %v733
    %v1705 = vpop.f32.mrb[0].mxu0
    %v1706 = vadd.f32 %v631, %v1705
    %v1707 = vpop.f32.mrb[0].mxu0
    %v1708 = vadd.f32 %v632, %v1707
    %v1709 = vpop.f32.mrb[0].mxu0
    %v1710 = vadd.f32 %v639, %v1709
    %v1711 = vpop.f32.mrb[0].mxu0
    %v1712 = vadd.f32 %v640, %v1711
    %1713 = vmatprep.mubr.bf16.mxu0 %v736
    %1714 = vmatmul.mubr.bf16.gmra.mrb[0].mxu0 %v735
    %v1715 = vpop.f32.mrb[0].mxu0
    %v1716 = vadd.f32 %v647, %v1715
    %v1717 = vpop.f32.mrb[0].mxu0
    %v1718 = vadd.f32 %v648, %v1717
    %v1719 = vpop.f32.mrb[0].mxu0
    %v1720 = vadd.f32 %v655, %v1719
    %v1721 = vpop.f32.mrb[0].mxu0
    %v1722 = vadd.f32 %v656, %v1721
    %1723 = vmatprep.mubr.bf16.mxu0 %v738
    %1724 = vmatmul.mubr.bf16.gmra.mrb[0].mxu0 %v737
    %v1725 = vpop.f32.mrb[0].mxu0
    %v1726 = vadd.f32 %v663, %v1725
    %v1727 = vpop.f32.mrb[0].mxu0
    %v1728 = vadd.f32 %v664, %v1727
    %v1729 = vpop.f32.mrb[0].mxu0
    %v1730 = vadd.f32 %v671, %v1729
    %v1731 = vpop.f32.mrb[0].mxu0
    %v1732 = vadd.f32 %v672, %v1731
    %1733 = vdwg.mxu0
    %1734 = vmatprep.subr.bf16.mxu0 %v1146
    %1735 = vmatpush1.bf16.msra.mxu0 %v1145
    %1736 = vmatprep.subr.bf16.mxu0 %v1154
    %1737 = vmatpush1.bf16.msra.mxu0 %v1153
    %1738 = vmatprep.subr.bf16.mxu0 %v1162
    %1739 = vmatpush1.bf16.msra.mxu0 %v1161
    %1740 = vmatprep.subr.bf16.mxu0 %v1170
    %1741 = vmatpush1.bf16.msra.mxu0 %v1169
    %1742 = vmatprep.subr.bf16.mxu0 %v1178
    %1743 = vmatpush1.bf16.msra.mxu0 %v1177
    %1744 = vmatprep.subr.bf16.mxu0 %v1186
    %1745 = vmatpush1.bf16.msra.mxu0 %v1185
    %1746 = vmatprep.subr.bf16.mxu0 %v1194
    %1747 = vmatpush1.bf16.msra.mxu0 %v1193
    %1748 = vmatprep.subr.bf16.mxu0 %v1202
    %1749 = vmatpush1.bf16.msra.mxu0 %v1201
    %1750 = vmatprep.subr.bf16.mxu0 %v1210
    %1751 = vmatpush1.bf16.msra.mxu0 %v1209
    %1752 = vmatprep.subr.bf16.mxu0 %v1218
    %1753 = vmatpush1.bf16.msra.mxu0 %v1217
    %1754 = vmatprep.subr.bf16.mxu0 %v1226
    %1755 = vmatpush1.bf16.msra.mxu0 %v1225
    %1756 = vmatprep.subr.bf16.mxu0 %v1234
    %1757 = vmatpush1.bf16.msra.mxu0 %v1233
    %1758 = vmatprep.subr.bf16.mxu0 %v1242
    %1759 = vmatpush1.bf16.msra.mxu0 %v1241
    %1760 = vmatprep.subr.bf16.mxu0 %v1250
    %1761 = vmatpush1.bf16.msra.mxu0 %v1249
    %1762 = vmatprep.subr.bf16.mxu0 %v1258
    %1763 = vmatpush1.bf16.msra.mxu0 %v1257
    %1764 = vmatprep.subr.bf16.mxu0 %v1266
    %1765 = vmatpush1.bf16.msra.mxu0 %v1265
    %1766 = vmatprep.mubr.bf16.mxu0 %v724
    %1767 = vmatmul.mubr.bf16.gmra.mrb[0].mxu0 %v723
    %v1768 = vpop.f32.mrb[0].mxu0
    %v1769 = vadd.f32 %v553, %v1768
    %v1770 = vpop.f32.mrb[0].mxu0
    %v1771 = vadd.f32 %v554, %v1770
    %v1772 = vpop.f32.mrb[0].mxu0
    %v1773 = vadd.f32 %v561, %v1772
    %v1774 = vpop.f32.mrb[0].mxu0
    %v1775 = vadd.f32 %v562, %v1774
    %1776 = vmatprep.mubr.bf16.mxu0 %v726
    %1777 = vmatmul.mubr.bf16.gmra.mrb[0].mxu0 %v725
    %v1778 = vpop.f32.mrb[0].mxu0
    %v1779 = vadd.f32 %v569, %v1778
    %v1780 = vpop.f32.mrb[0].mxu0
    %v1781 = vadd.f32 %v570, %v1780
    %v1782 = vpop.f32.mrb[0].mxu0
    %v1783 = vadd.f32 %v577, %v1782
    %v1784 = vpop.f32.mrb[0].mxu0
    %v1785 = vadd.f32 %v578, %v1784
    %1786 = vmatprep.mubr.bf16.mxu0 %v728
    %1787 = vmatmul.mubr.bf16.gmra.mrb[0].mxu0 %v727
    %v1788 = vpop.f32.mrb[0].mxu0
    %v1789 = vadd.f32 %v585, %v1788
    %v1790 = vpop.f32.mrb[0].mxu0
    %v1791 = vadd.f32 %v586, %v1790
    %v1792 = vpop.f32.mrb[0].mxu0
    %v1793 = vadd.f32 %v593, %v1792
    %v1794 = vpop.f32.mrb[0].mxu0
    %v1795 = vadd.f32 %v594, %v1794
    %1796 = vmatprep.mubr.bf16.mxu0 %v730
    %1797 = vmatmul.mubr.bf16.gmra.mrb[0].mxu0 %v729
    %v1798 = vpop.f32.mrb[0].mxu0
    %v1799 = vadd.f32 %v601, %v1798
    %v1800 = vpop.f32.mrb[0].mxu0
    %v1801 = vadd.f32 %v602, %v1800
    %v1802 = vpop.f32.mrb[0].mxu0
    %v1803 = vadd.f32 %v609, %v1802
    %v1804 = vpop.f32.mrb[0].mxu0
    %v1805 = vadd.f32 %v610, %v1804
    %1806 = vmatprep.mubr.bf16.mxu0 %v732
    %1807 = vmatmul.mubr.bf16.gmra.mrb[0].mxu0 %v731
    %v1808 = vpop.f32.mrb[0].mxu0
    %v1809 = vadd.f32 %v617, %v1808
    %v1810 = vpop.f32.mrb[0].mxu0
    %v1811 = vadd.f32 %v618, %v1810
    %v1812 = vpop.f32.mrb[0].mxu0
    %v1813 = vadd.f32 %v625, %v1812
    %v1814 = vpop.f32.mrb[0].mxu0
    %v1815 = vadd.f32 %v626, %v1814
    %1816 = vmatprep.mubr.bf16.mxu0 %v734
    %1817 = vmatmul.mubr.bf16.gmra.mrb[0].mxu0 %v733
    %v1818 = vpop.f32.mrb[0].mxu0
    %v1819 = vadd.f32 %v633, %v1818
    %v1820 = vpop.f32.mrb[0].mxu0
    %v1821 = vadd.f32 %v634, %v1820
    %v1822 = vpop.f32.mrb[0].mxu0
    %v1823 = vadd.f32 %v641, %v1822
    %v1824 = vpop.f32.mrb[0].mxu0
    %v1825 = vadd.f32 %v642, %v1824
    %1826 = vmatprep.mubr.bf16.mxu0 %v736
    %1827 = vmatmul.mubr.bf16.gmra.mrb[0].mxu0 %v735
    %v1828 = vpop.f32.mrb[0].mxu0
    %v1829 = vadd.f32 %v649, %v1828
    %v1830 = vpop.f32.mrb[0].mxu0
    %v1831 = vadd.f32 %v650, %v1830
    %v1832 = vpop.f32.mrb[0].mxu0
    %v1833 = vadd.f32 %v657, %v1832
    %v1834 = vpop.f32.mrb[0].mxu0
    %v1835 = vadd.f32 %v658, %v1834
    %1836 = vmatprep.mubr.bf16.mxu0 %v738
    %1837 = vmatmul.mubr.bf16.gmra.mrb[0].mxu0 %v737
    %v1838 = vpop.f32.mrb[0].mxu0
    %v1839 = vadd.f32 %v665, %v1838
    %v1840 = vpop.f32.mrb[0].mxu0
    %v1841 = vadd.f32 %v666, %v1840
    %v1842 = vpop.f32.mrb[0].mxu0
    %v1843 = vadd.f32 %v673, %v1842
    %v1844 = vpop.f32.mrb[0].mxu0
    %v1845 = vadd.f32 %v674, %v1844
    %1846 = vdwg.mxu0
    %v1847 = vld [vmem:[#allocation8] sm:$0xff]
    %1849 = vset.pattern.permute.xlu0 0
    %1850 = vperm.xlu0 %1849, %v281
    %v1851 = vpop.permute.xlu0 %1850
    %1854 = vset.pattern.permute.xlu0 0
    %1855 = vperm.xlu0 %1854, %v282
    %v1856 = vpop.permute.xlu0 %1855
    %1859 = vset.pattern.permute.xlu0 0
    %1860 = vperm.xlu0 %1859, %v283
    %v1861 = vpop.permute.xlu0 %1860
    %1864 = vset.pattern.permute.xlu0 0
    %1865 = vperm.xlu0 %1864, %v284
    %v1866 = vpop.permute.xlu0 %1865
    %1869 = vset.pattern.permute.xlu0 0
    %1870 = vperm.xlu0 %1869, %v285
    %v1871 = vpop.permute.xlu0 %1870
    %1874 = vset.pattern.permute.xlu0 0
    %1875 = vperm.xlu0 %1874, %v286
    %v1876 = vpop.permute.xlu0 %1875
    %1879 = vset.pattern.permute.xlu0 0
    %1880 = vperm.xlu0 %1879, %v287
    %v1881 = vpop.permute.xlu0 %1880
    %1884 = vset.pattern.permute.xlu0 0
    %1885 = vperm.xlu0 %1884, %v288
    %v1886 = vpop.permute.xlu0 %1885
    %1889 = vset.pattern.permute.xlu0 0
    %1890 = vperm.xlu0 %1889, %v289
    %v1891 = vpop.permute.xlu0 %1890
    %1894 = vset.pattern.permute.xlu0 0
    %1895 = vperm.xlu0 %1894, %v290
    %v1896 = vpop.permute.xlu0 %1895
    %1899 = vset.pattern.permute.xlu0 0
    %1900 = vperm.xlu0 %1899, %v291
    %v1901 = vpop.permute.xlu0 %1900
    %1904 = vset.pattern.permute.xlu0 0
    %1905 = vperm.xlu0 %1904, %v292
    %v1906 = vpop.permute.xlu0 %1905
    %1909 = vset.pattern.permute.xlu0 0
    %1910 = vperm.xlu0 %1909, %v293
    %v1911 = vpop.permute.xlu0 %1910
    %1914 = vset.pattern.permute.xlu0 0
    %1915 = vperm.xlu0 %1914, %v294
    %v1916 = vpop.permute.xlu0 %1915
    %1919 = vset.pattern.permute.xlu0 0
    %1920 = vperm.xlu0 %1919, %v295
    %v1921 = vpop.permute.xlu0 %1920
    %1924 = vset.pattern.permute.xlu0 0
    %1925 = vperm.xlu0 %1924, %v296
    %v1926 = vpop.permute.xlu0 %1925
    %v1929 = vlaneseq
    %v1930 = vshrl.u32 %v1929, 7
    %v1931 = vsub.s32 0, %v1930
    %v1932 = vrot.slane %v1847, %v1931
    %v1933 = vlaneseq
    %v1934 = vshrl.u32 %v1933, 7
    %v1935 = vsub.s32 1, %v1934
    %v1936 = vrot.slane %v1847, %v1935
    %v1937 = vlaneseq
    %v1938 = vshrl.u32 %v1937, 7
    %v1939 = vsub.s32 2, %v1938
    %v1940 = vrot.slane %v1847, %v1939
    %v1941 = vlaneseq
    %v1942 = vshrl.u32 %v1941, 7
    %v1943 = vsub.s32 3, %v1942
    %v1944 = vrot.slane %v1847, %v1943
    %v1945 = vlaneseq
    %v1946 = vshrl.u32 %v1945, 7
    %v1947 = vsub.s32 4, %v1946
    %v1948 = vrot.slane %v1847, %v1947
    %v1949 = vlaneseq
    %v1950 = vshrl.u32 %v1949, 7
    %v1951 = vsub.s32 5, %v1950
    %v1952 = vrot.slane %v1847, %v1951
    %v1953 = vlaneseq
    %v1954 = vshrl.u32 %v1953, 7
    %v1955 = vsub.s32 6, %v1954
    %v1956 = vrot.slane %v1847, %v1955
    %v1957 = vlaneseq
    %v1958 = vshrl.u32 %v1957, 7
    %v1959 = vsub.s32 7, %v1958
    %v1960 = vrot.slane %v1847, %v1959
    %v1969 = vmul.f32 %v1851, %v1932
    %v1970 = vmul.f32 %v1851, %v1936
    %v1971 = vmul.f32 %v1851, %v1940
    %v1972 = vmul.f32 %v1851, %v1944
    %v1973 = vmul.f32 %v1851, %v1948
    %v1974 = vmul.f32 %v1851, %v1952
    %v1975 = vmul.f32 %v1851, %v1956
    %v1976 = vmul.f32 %v1851, %v1960
    %v1977 = vmul.f32 %v1856, %v1932
    %v1978 = vmul.f32 %v1856, %v1936
    %v1979 = vmul.f32 %v1856, %v1940
    %v1980 = vmul.f32 %v1856, %v1944
    %v1981 = vmul.f32 %v1856, %v1948
    %v1982 = vmul.f32 %v1856, %v1952
    %v1983 = vmul.f32 %v1856, %v1956
    %v1984 = vmul.f32 %v1856, %v1960
    %v1985 = vmul.f32 %v1861, %v1932
    %v1986 = vmul.f32 %v1861, %v1936
    %v1987 = vmul.f32 %v1861, %v1940
    %v1988 = vmul.f32 %v1861, %v1944
    %v1989 = vmul.f32 %v1861, %v1948
    %v1990 = vmul.f32 %v1861, %v1952
    %v1991 = vmul.f32 %v1861, %v1956
    %v1992 = vmul.f32 %v1861, %v1960
    %v1993 = vmul.f32 %v1866, %v1932
    %v1994 = vmul.f32 %v1866, %v1936
    %v1995 = vmul.f32 %v1866, %v1940
    %v1996 = vmul.f32 %v1866, %v1944
    %v1997 = vmul.f32 %v1866, %v1948
    %v1998 = vmul.f32 %v1866, %v1952
    %v1999 = vmul.f32 %v1866, %v1956
    %v2000 = vmul.f32 %v1866, %v1960
    %v2001 = vmul.f32 %v1871, %v1932
    %v2002 = vmul.f32 %v1871, %v1936
    %v2003 = vmul.f32 %v1871, %v1940
    %v2004 = vmul.f32 %v1871, %v1944
    %v2005 = vmul.f32 %v1871, %v1948
    %v2006 = vmul.f32 %v1871, %v1952
    %v2007 = vmul.f32 %v1871, %v1956
    %v2008 = vmul.f32 %v1871, %v1960
    %v2009 = vmul.f32 %v1876, %v1932
    %v2010 = vmul.f32 %v1876, %v1936
    %v2011 = vmul.f32 %v1876, %v1940
    %v2012 = vmul.f32 %v1876, %v1944
    %v2013 = vmul.f32 %v1876, %v1948
    %v2014 = vmul.f32 %v1876, %v1952
    %v2015 = vmul.f32 %v1876, %v1956
    %v2016 = vmul.f32 %v1876, %v1960
    %v2017 = vmul.f32 %v1881, %v1932
    %v2018 = vmul.f32 %v1881, %v1936
    %v2019 = vmul.f32 %v1881, %v1940
    %v2020 = vmul.f32 %v1881, %v1944
    %v2021 = vmul.f32 %v1881, %v1948
    %v2022 = vmul.f32 %v1881, %v1952
    %v2023 = vmul.f32 %v1881, %v1956
    %v2024 = vmul.f32 %v1881, %v1960
    %v2025 = vmul.f32 %v1886, %v1932
    %v2026 = vmul.f32 %v1886, %v1936
    %v2027 = vmul.f32 %v1886, %v1940
    %v2028 = vmul.f32 %v1886, %v1944
    %v2029 = vmul.f32 %v1886, %v1948
    %v2030 = vmul.f32 %v1886, %v1952
    %v2031 = vmul.f32 %v1886, %v1956
    %v2032 = vmul.f32 %v1886, %v1960
    %v2033 = vmul.f32 %v1891, %v1932
    %v2034 = vmul.f32 %v1891, %v1936
    %v2035 = vmul.f32 %v1891, %v1940
    %v2036 = vmul.f32 %v1891, %v1944
    %v2037 = vmul.f32 %v1891, %v1948
    %v2038 = vmul.f32 %v1891, %v1952
    %v2039 = vmul.f32 %v1891, %v1956
    %v2040 = vmul.f32 %v1891, %v1960
    %v2041 = vmul.f32 %v1896, %v1932
    %v2042 = vmul.f32 %v1896, %v1936
    %v2043 = vmul.f32 %v1896, %v1940
    %v2044 = vmul.f32 %v1896, %v1944
    %v2045 = vmul.f32 %v1896, %v1948
    %v2046 = vmul.f32 %v1896, %v1952
    %v2047 = vmul.f32 %v1896, %v1956
    %v2048 = vmul.f32 %v1896, %v1960
    %v2049 = vmul.f32 %v1901, %v1932
    %v2050 = vmul.f32 %v1901, %v1936
    %v2051 = vmul.f32 %v1901, %v1940
    %v2052 = vmul.f32 %v1901, %v1944
    %v2053 = vmul.f32 %v1901, %v1948
    %v2054 = vmul.f32 %v1901, %v1952
    %v2055 = vmul.f32 %v1901, %v1956
    %v2056 = vmul.f32 %v1901, %v1960
    %v2057 = vmul.f32 %v1906, %v1932
    %v2058 = vmul.f32 %v1906, %v1936
    %v2059 = vmul.f32 %v1906, %v1940
    %v2060 = vmul.f32 %v1906, %v1944
    %v2061 = vmul.f32 %v1906, %v1948
    %v2062 = vmul.f32 %v1906, %v1952
    %v2063 = vmul.f32 %v1906, %v1956
    %v2064 = vmul.f32 %v1906, %v1960
    %v2065 = vmul.f32 %v1911, %v1932
    %v2066 = vmul.f32 %v1911, %v1936
    %v2067 = vmul.f32 %v1911, %v1940
    %v2068 = vmul.f32 %v1911, %v1944
    %v2069 = vmul.f32 %v1911, %v1948
    %v2070 = vmul.f32 %v1911, %v1952
    %v2071 = vmul.f32 %v1911, %v1956
    %v2072 = vmul.f32 %v1911, %v1960
    %v2073 = vmul.f32 %v1916, %v1932
    %v2074 = vmul.f32 %v1916, %v1936
    %v2075 = vmul.f32 %v1916, %v1940
    %v2076 = vmul.f32 %v1916, %v1944
    %v2077 = vmul.f32 %v1916, %v1948
    %v2078 = vmul.f32 %v1916, %v1952
    %v2079 = vmul.f32 %v1916, %v1956
    %v2080 = vmul.f32 %v1916, %v1960
    %v2081 = vmul.f32 %v1921, %v1932
    %v2082 = vmul.f32 %v1921, %v1936
    %v2083 = vmul.f32 %v1921, %v1940
    %v2084 = vmul.f32 %v1921, %v1944
    %v2085 = vmul.f32 %v1921, %v1948
    %v2086 = vmul.f32 %v1921, %v1952
    %v2087 = vmul.f32 %v1921, %v1956
    %v2088 = vmul.f32 %v1921, %v1960
    %v2089 = vmul.f32 %v1926, %v1932
    %v2090 = vmul.f32 %v1926, %v1936
    %v2091 = vmul.f32 %v1926, %v1940
    %v2092 = vmul.f32 %v1926, %v1944
    %v2093 = vmul.f32 %v1926, %v1948
    %v2094 = vmul.f32 %v1926, %v1952
    %v2095 = vmul.f32 %v1926, %v1956
    %v2096 = vmul.f32 %v1926, %v1960
    %v2097 = vadd.f32 %v1430, %v1969
    %v2098 = vadd.f32 %v1432, %v1970
    %v2099 = vadd.f32 %v1543, %v1971
    %v2100 = vadd.f32 %v1545, %v1972
    %v2101 = vadd.f32 %v1656, %v1973
    %v2102 = vadd.f32 %v1658, %v1974
    %v2103 = vadd.f32 %v1769, %v1975
    %v2104 = vadd.f32 %v1771, %v1976
    %v2105 = vadd.f32 %v1434, %v1977
    %v2106 = vadd.f32 %v1436, %v1978
    %v2107 = vadd.f32 %v1547, %v1979
    %v2108 = vadd.f32 %v1549, %v1980
    %v2109 = vadd.f32 %v1660, %v1981
    %v2110 = vadd.f32 %v1662, %v1982
    %v2111 = vadd.f32 %v1773, %v1983
    %v2112 = vadd.f32 %v1775, %v1984
    %v2113 = vadd.f32 %v1440, %v1985
    %v2114 = vadd.f32 %v1442, %v1986
    %v2115 = vadd.f32 %v1553, %v1987
    %v2116 = vadd.f32 %v1555, %v1988
    %v2117 = vadd.f32 %v1666, %v1989
    %v2118 = vadd.f32 %v1668, %v1990
    %v2119 = vadd.f32 %v1779, %v1991
    %v2120 = vadd.f32 %v1781, %v1992
    %v2121 = vadd.f32 %v1444, %v1993
    %v2122 = vadd.f32 %v1446, %v1994
    %v2123 = vadd.f32 %v1557, %v1995
    %v2124 = vadd.f32 %v1559, %v1996
    %v2125 = vadd.f32 %v1670, %v1997
    %v2126 = vadd.f32 %v1672, %v1998
    %v2127 = vadd.f32 %v1783, %v1999
    %v2128 = vadd.f32 %v1785, %v2000
    %v2129 = vadd.f32 %v1450, %v2001
    %v2130 = vadd.f32 %v1452, %v2002
    %v2131 = vadd.f32 %v1563, %v2003
    %v2132 = vadd.f32 %v1565, %v2004
    %v2133 = vadd.f32 %v1676, %v2005
    %v2134 = vadd.f32 %v1678, %v2006
    %v2135 = vadd.f32 %v1789, %v2007
    %v2136 = vadd.f32 %v1791, %v2008
    %v2137 = vadd.f32 %v1454, %v2009
    %v2138 = vadd.f32 %v1456, %v2010
    %v2139 = vadd.f32 %v1567, %v2011
    %v2140 = vadd.f32 %v1569, %v2012
    %v2141 = vadd.f32 %v1680, %v2013
    %v2142 = vadd.f32 %v1682, %v2014
    %v2143 = vadd.f32 %v1793, %v2015
    %v2144 = vadd.f32 %v1795, %v2016
    %v2145 = vadd.f32 %v1460, %v2017
    %v2146 = vadd.f32 %v1462, %v2018
    %v2147 = vadd.f32 %v1573, %v2019
    %v2148 = vadd.f32 %v1575, %v2020
    %v2149 = vadd.f32 %v1686, %v2021
    %v2150 = vadd.f32 %v1688, %v2022
    %v2151 = vadd.f32 %v1799, %v2023
    %v2152 = vadd.f32 %v1801, %v2024
    %v2153 = vadd.f32 %v1464, %v2025
    %v2154 = vadd.f32 %v1466, %v2026
    %v2155 = vadd.f32 %v1577, %v2027
    %v2156 = vadd.f32 %v1579, %v2028
    %v2157 = vadd.f32 %v1690, %v2029
    %v2158 = vadd.f32 %v1692, %v2030
    %v2159 = vadd.f32 %v1803, %v2031
    %v2160 = vadd.f32 %v1805, %v2032
    %v2161 = vadd.f32 %v1470, %v2033
    %v2162 = vadd.f32 %v1472, %v2034
    %v2163 = vadd.f32 %v1583, %v2035
    %v2164 = vadd.f32 %v1585, %v2036
    %v2165 = vadd.f32 %v1696, %v2037
    %v2166 = vadd.f32 %v1698, %v2038
    %v2167 = vadd.f32 %v1809, %v2039
    %v2168 = vadd.f32 %v1811, %v2040
    %v2169 = vadd.f32 %v1474, %v2041
    %v2170 = vadd.f32 %v1476, %v2042
    %v2171 = vadd.f32 %v1587, %v2043
    %v2172 = vadd.f32 %v1589, %v2044
    %v2173 = vadd.f32 %v1700, %v2045
    %v2174 = vadd.f32 %v1702, %v2046
    %v2175 = vadd.f32 %v1813, %v2047
    %v2176 = vadd.f32 %v1815, %v2048
    %v2177 = vadd.f32 %v1480, %v2049
    %v2178 = vadd.f32 %v1482, %v2050
    %v2179 = vadd.f32 %v1593, %v2051
    %v2180 = vadd.f32 %v1595, %v2052
    %v2181 = vadd.f32 %v1706, %v2053
    %v2182 = vadd.f32 %v1708, %v2054
    %v2183 = vadd.f32 %v1819, %v2055
    %v2184 = vadd.f32 %v1821, %v2056
    %v2185 = vadd.f32 %v1484, %v2057
    %v2186 = vadd.f32 %v1486, %v2058
    %v2187 = vadd.f32 %v1597, %v2059
    %v2188 = vadd.f32 %v1599, %v2060
    %v2189 = vadd.f32 %v1710, %v2061
    %v2190 = vadd.f32 %v1712, %v2062
    %v2191 = vadd.f32 %v1823, %v2063
    %v2192 = vadd.f32 %v1825, %v2064
    %v2193 = vadd.f32 %v1490, %v2065
    %v2194 = vadd.f32 %v1492, %v2066
    %v2195 = vadd.f32 %v1603, %v2067
    %v2196 = vadd.f32 %v1605, %v2068
    %v2197 = vadd.f32 %v1716, %v2069
    %v2198 = vadd.f32 %v1718, %v2070
    %v2199 = vadd.f32 %v1829, %v2071
    %v2200 = vadd.f32 %v1831, %v2072
    %v2201 = vadd.f32 %v1494, %v2073
    %v2202 = vadd.f32 %v1496, %v2074
    %v2203 = vadd.f32 %v1607, %v2075
    %v2204 = vadd.f32 %v1609, %v2076
    %v2205 = vadd.f32 %v1720, %v2077
    %v2206 = vadd.f32 %v1722, %v2078
    %v2207 = vadd.f32 %v1833, %v2079
    %v2208 = vadd.f32 %v1835, %v2080
    %v2209 = vadd.f32 %v1500, %v2081
    %v2210 = vadd.f32 %v1502, %v2082
    %v2211 = vadd.f32 %v1613, %v2083
    %v2212 = vadd.f32 %v1615, %v2084
    %v2213 = vadd.f32 %v1726, %v2085
    %v2214 = vadd.f32 %v1728, %v2086
    %v2215 = vadd.f32 %v1839, %v2087
    %v2216 = vadd.f32 %v1841, %v2088
    %v2217 = vadd.f32 %v1504, %v2089
    %v2218 = vadd.f32 %v1506, %v2090
    %v2219 = vadd.f32 %v1617, %v2091
    %v2220 = vadd.f32 %v1619, %v2092
    %v2221 = vadd.f32 %v1730, %v2093
    %v2222 = vadd.f32 %v1732, %v2094
    %v2223 = vadd.f32 %v1843, %v2095
    %v2224 = vadd.f32 %v1845, %v2096
    %v2225 = vld [vmem:[%s4] sm:$0xf]
    %v2227 = vlaneseq
    %v2228 = vshrl.u32 %v2227, 7
    %v2229 = vsub.s32 0, %v2228
    %v2230 = vrot.slane %v2225, %v2229
    %v2231 = vlaneseq
    %v2232 = vshrl.u32 %v2231, 7
    %v2233 = vsub.s32 1, %v2232
    %v2234 = vrot.slane %v2225, %v2233
    %v2235 = vlaneseq
    %v2236 = vshrl.u32 %v2235, 7
    %v2237 = vsub.s32 2, %v2236
    %v2238 = vrot.slane %v2225, %v2237
    %v2239 = vlaneseq
    %v2240 = vshrl.u32 %v2239, 7
    %v2241 = vsub.s32 3, %v2240
    %v2242 = vrot.slane %v2225, %v2241
    %v2247 = vadd.f32 %v2097, %v2230
    %v2248 = vadd.f32 %v2098, %v2234
    %v2249 = vadd.f32 %v2099, %v2238
    %v2250 = vadd.f32 %v2100, %v2242
    %v2251 = vadd.f32 %v2105, %v2230
    %v2252 = vadd.f32 %v2106, %v2234
    %v2253 = vadd.f32 %v2107, %v2238
    %v2254 = vadd.f32 %v2108, %v2242
    %v2255 = vadd.f32 %v2113, %v2230
    %v2256 = vadd.f32 %v2114, %v2234
    %v2257 = vadd.f32 %v2115, %v2238
    %v2258 = vadd.f32 %v2116, %v2242
    %v2259 = vadd.f32 %v2121, %v2230
    %v2260 = vadd.f32 %v2122, %v2234
    %v2261 = vadd.f32 %v2123, %v2238
    %v2262 = vadd.f32 %v2124, %v2242
    %v2263 = vadd.f32 %v2129, %v2230
    %v2264 = vadd.f32 %v2130, %v2234
    %v2265 = vadd.f32 %v2131, %v2238
    %v2266 = vadd.f32 %v2132, %v2242
    %v2267 = vadd.f32 %v2137, %v2230
    %v2268 = vadd.f32 %v2138, %v2234
    %v2269 = vadd.f32 %v2139, %v2238
    %v2270 = vadd.f32 %v2140, %v2242
    %v2271 = vadd.f32 %v2145, %v2230
    %v2272 = vadd.f32 %v2146, %v2234
    %v2273 = vadd.f32 %v2147, %v2238
    %v2274 = vadd.f32 %v2148, %v2242
    %v2275 = vadd.f32 %v2153, %v2230
    %v2276 = vadd.f32 %v2154, %v2234
    %v2277 = vadd.f32 %v2155, %v2238
    %v2278 = vadd.f32 %v2156, %v2242
    %v2279 = vadd.f32 %v2161, %v2230
    %v2280 = vadd.f32 %v2162, %v2234
    %v2281 = vadd.f32 %v2163, %v2238
    %v2282 = vadd.f32 %v2164, %v2242
    %v2283 = vadd.f32 %v2169, %v2230
    %v2284 = vadd.f32 %v2170, %v2234
    %v2285 = vadd.f32 %v2171, %v2238
    %v2286 = vadd.f32 %v2172, %v2242
    %v2287 = vadd.f32 %v2177, %v2230
    %v2288 = vadd.f32 %v2178, %v2234
    %v2289 = vadd.f32 %v2179, %v2238
    %v2290 = vadd.f32 %v2180, %v2242
    %v2291 = vadd.f32 %v2185, %v2230
    %v2292 = vadd.f32 %v2186, %v2234
    %v2293 = vadd.f32 %v2187, %v2238
    %v2294 = vadd.f32 %v2188, %v2242
    %v2295 = vadd.f32 %v2193, %v2230
    %v2296 = vadd.f32 %v2194, %v2234
    %v2297 = vadd.f32 %v2195, %v2238
    %v2298 = vadd.f32 %v2196, %v2242
    %v2299 = vadd.f32 %v2201, %v2230
    %v2300 = vadd.f32 %v2202, %v2234
    %v2301 = vadd.f32 %v2203, %v2238
    %v2302 = vadd.f32 %v2204, %v2242
    %v2303 = vadd.f32 %v2209, %v2230
    %v2304 = vadd.f32 %v2210, %v2234
    %v2305 = vadd.f32 %v2211, %v2238
    %v2306 = vadd.f32 %v2212, %v2242
    %v2307 = vadd.f32 %v2217, %v2230
    %v2308 = vadd.f32 %v2218, %v2234
    %v2309 = vadd.f32 %v2219, %v2238
    %v2310 = vadd.f32 %v2220, %v2242
    %v2311 = vmax.f32 %v2247, 0.0
    %v2312 = vmax.f32 %v2248, 0.0
    %v2313 = vmax.f32 %v2249, 0.0
    %v2314 = vmax.f32 %v2250, 0.0
    %v2315 = vmax.f32 %v2251, 0.0
    %v2316 = vmax.f32 %v2252, 0.0
    %v2317 = vmax.f32 %v2253, 0.0
    %v2318 = vmax.f32 %v2254, 0.0
    %v2319 = vmax.f32 %v2255, 0.0
    %v2320 = vmax.f32 %v2256, 0.0
    %v2321 = vmax.f32 %v2257, 0.0
    %v2322 = vmax.f32 %v2258, 0.0
    %v2323 = vmax.f32 %v2259, 0.0
    %v2324 = vmax.f32 %v2260, 0.0
    %v2325 = vmax.f32 %v2261, 0.0
    %v2326 = vmax.f32 %v2262, 0.0
    %v2327 = vmax.f32 %v2263, 0.0
    %v2328 = vmax.f32 %v2264, 0.0
    %v2329 = vmax.f32 %v2265, 0.0
    %v2330 = vmax.f32 %v2266, 0.0
    %v2331 = vmax.f32 %v2267, 0.0
    %v2332 = vmax.f32 %v2268, 0.0
    %v2333 = vmax.f32 %v2269, 0.0
    %v2334 = vmax.f32 %v2270, 0.0
    %v2335 = vmax.f32 %v2271, 0.0
    %v2336 = vmax.f32 %v2272, 0.0
    %v2337 = vmax.f32 %v2273, 0.0
    %v2338 = vmax.f32 %v2274, 0.0
    %v2339 = vmax.f32 %v2275, 0.0
    %v2340 = vmax.f32 %v2276, 0.0
    %v2341 = vmax.f32 %v2277, 0.0
    %v2342 = vmax.f32 %v2278, 0.0
    %v2343 = vmax.f32 %v2279, 0.0
    %v2344 = vmax.f32 %v2280, 0.0
    %v2345 = vmax.f32 %v2281, 0.0
    %v2346 = vmax.f32 %v2282, 0.0
    %v2347 = vmax.f32 %v2283, 0.0
    %v2348 = vmax.f32 %v2284, 0.0
    %v2349 = vmax.f32 %v2285, 0.0
    %v2350 = vmax.f32 %v2286, 0.0
    %v2351 = vmax.f32 %v2287, 0.0
    %v2352 = vmax.f32 %v2288, 0.0
    %v2353 = vmax.f32 %v2289, 0.0
    %v2354 = vmax.f32 %v2290, 0.0
    %v2355 = vmax.f32 %v2291, 0.0
    %v2356 = vmax.f32 %v2292, 0.0
    %v2357 = vmax.f32 %v2293, 0.0
    %v2358 = vmax.f32 %v2294, 0.0
    %v2359 = vmax.f32 %v2295, 0.0
    %v2360 = vmax.f32 %v2296, 0.0
    %v2361 = vmax.f32 %v2297, 0.0
    %v2362 = vmax.f32 %v2298, 0.0
    %v2363 = vmax.f32 %v2299, 0.0
    %v2364 = vmax.f32 %v2300, 0.0
    %v2365 = vmax.f32 %v2301, 0.0
    %v2366 = vmax.f32 %v2302, 0.0
    %v2367 = vmax.f32 %v2303, 0.0
    %v2368 = vmax.f32 %v2304, 0.0
    %v2369 = vmax.f32 %v2305, 0.0
    %v2370 = vmax.f32 %v2306, 0.0
    %v2371 = vmax.f32 %v2307, 0.0
    %v2372 = vmax.f32 %v2308, 0.0
    %v2373 = vmax.f32 %v2309, 0.0
    %v2374 = vmax.f32 %v2310, 0.0
    %v2375 = vpack.c.bf16 %v2315, %v2311
    %v2376 = vpack.c.bf16 %v2316, %v2312
    %v2377 = vpack.c.bf16 %v2317, %v2313
    %v2378 = vpack.c.bf16 %v2318, %v2314
    %v2379 = vpack.c.bf16 %v2323, %v2319
    %v2380 = vpack.c.bf16 %v2324, %v2320
    %v2381 = vpack.c.bf16 %v2325, %v2321
    %v2382 = vpack.c.bf16 %v2326, %v2322
    %v2383 = vpack.c.bf16 %v2331, %v2327
    %v2384 = vpack.c.bf16 %v2332, %v2328
    %v2385 = vpack.c.bf16 %v2333, %v2329
    %v2386 = vpack.c.bf16 %v2334, %v2330
    %v2387 = vpack.c.bf16 %v2339, %v2335
    %v2388 = vpack.c.bf16 %v2340, %v2336
    %v2389 = vpack.c.bf16 %v2341, %v2337
    %v2390 = vpack.c.bf16 %v2342, %v2338
    %v2391 = vpack.c.bf16 %v2347, %v2343
    %v2392 = vpack.c.bf16 %v2348, %v2344
    %v2393 = vpack.c.bf16 %v2349, %v2345
    %v2394 = vpack.c.bf16 %v2350, %v2346
    %v2395 = vpack.c.bf16 %v2355, %v2351
    %v2396 = vpack.c.bf16 %v2356, %v2352
    %v2397 = vpack.c.bf16 %v2357, %v2353
    %v2398 = vpack.c.bf16 %v2358, %v2354
    %v2399 = vpack.c.bf16 %v2363, %v2359
    %v2400 = vpack.c.bf16 %v2364, %v2360
    %v2401 = vpack.c.bf16 %v2365, %v2361
    %v2402 = vpack.c.bf16 %v2366, %v2362
    %v2403 = vpack.c.bf16 %v2371, %v2367
    %v2404 = vpack.c.bf16 %v2372, %v2368
    %v2405 = vpack.c.bf16 %v2373, %v2369
    %v2406 = vpack.c.bf16 %v2374, %v2370
    %v2407 = vld [vmem:[#allocation9] sm:$0xff]
    %v2408 = vld [vmem:[#allocation9 + $0x8] sm:$0xff]
    %v2409 = vld [vmem:[#allocation9 + $0x10] sm:$0xff]
    %v2410 = vld [vmem:[#allocation9 + $0x18] sm:$0xff]
    %v2411 = vld [vmem:[#allocation9 + $0x20] sm:$0xff]
    %v2412 = vld [vmem:[#allocation9 + $0x28] sm:$0xff]
    %v2413 = vld [vmem:[#allocation9 + $0x30] sm:$0xff]
    %v2414 = vld [vmem:[#allocation9 + $0x38] sm:$0xff]
    %v2415 = vld [vmem:[#allocation9 + $0x40] sm:$0xff]
    %v2416 = vld [vmem:[#allocation9 + $0x48] sm:$0xff]
    %v2417 = vld [vmem:[#allocation9 + $0x50] sm:$0xff]
    %v2418 = vld [vmem:[#allocation9 + $0x58] sm:$0xff]
    %v2419 = vld [vmem:[#allocation9 + $0x60] sm:$0xff]
    %v2420 = vld [vmem:[#allocation9 + $0x68] sm:$0xff]
    %v2421 = vld [vmem:[#allocation9 + $0x70] sm:$0xff]
    %v2422 = vld [vmem:[#allocation9 + $0x78] sm:$0xff]
    %v2423 = vld [vmem:[#allocation9 + $0x80] sm:$0xff]
    %v2424 = vld [vmem:[#allocation9 + $0x88] sm:$0xff]
    %v2425 = vld [vmem:[#allocation9 + $0x90] sm:$0xff]
    %v2426 = vld [vmem:[#allocation9 + $0x98] sm:$0xff]
    %v2427 = vld [vmem:[#allocation9 + $0xa0] sm:$0xff]
    %v2428 = vld [vmem:[#allocation9 + $0xa8] sm:$0xff]
    %v2429 = vld [vmem:[#allocation9 + $0xb0] sm:$0xff]
    %v2430 = vld [vmem:[#allocation9 + $0xb8] sm:$0xff]
    %v2431 = vld [vmem:[#allocation9 + $0xc0] sm:$0xff]
    %v2432 = vld [vmem:[#allocation9 + $0xc8] sm:$0xff]
    %v2433 = vld [vmem:[#allocation9 + $0xd0] sm:$0xff]
    %v2434 = vld [vmem:[#allocation9 + $0xd8] sm:$0xff]
    %v2435 = vld [vmem:[#allocation9 + $0xe0] sm:$0xff]
    %v2436 = vld [vmem:[#allocation9 + $0xe8] sm:$0xff]
    %v2437 = vld [vmem:[#allocation9 + $0xf0] sm:$0xff]
    %v2438 = vld [vmem:[#allocation9 + $0xf8] sm:$0xff]
    %v2439 = vld [vmem:[#allocation9 + $0x100] sm:$0xff]
    %v2440 = vld [vmem:[#allocation9 + $0x108] sm:$0xff]
    %v2441 = vld [vmem:[#allocation9 + $0x110] sm:$0xff]
    %v2442 = vld [vmem:[#allocation9 + $0x118] sm:$0xff]
    %v2443 = vld [vmem:[#allocation9 + $0x120] sm:$0xff]
    %v2444 = vld [vmem:[#allocation9 + $0x128] sm:$0xff]
    %v2445 = vld [vmem:[#allocation9 + $0x130] sm:$0xff]
    %v2446 = vld [vmem:[#allocation9 + $0x138] sm:$0xff]
    %v2447 = vld [vmem:[#allocation9 + $0x140] sm:$0xff]
    %v2448 = vld [vmem:[#allocation9 + $0x148] sm:$0xff]
    %v2449 = vld [vmem:[#allocation9 + $0x150] sm:$0xff]
    %v2450 = vld [vmem:[#allocation9 + $0x158] sm:$0xff]
    %v2451 = vld [vmem:[#allocation9 + $0x160] sm:$0xff]
    %v2452 = vld [vmem:[#allocation9 + $0x168] sm:$0xff]
    %v2453 = vld [vmem:[#allocation9 + $0x170] sm:$0xff]
    %v2454 = vld [vmem:[#allocation9 + $0x178] sm:$0xff]
    %v2455 = vld [vmem:[#allocation9 + $0x180] sm:$0xff]
    %v2456 = vld [vmem:[#allocation9 + $0x188] sm:$0xff]
    %v2457 = vld [vmem:[#allocation9 + $0x190] sm:$0xff]
    %v2458 = vld [vmem:[#allocation9 + $0x198] sm:$0xff]
    %v2459 = vld [vmem:[#allocation9 + $0x1a0] sm:$0xff]
    %v2460 = vld [vmem:[#allocation9 + $0x1a8] sm:$0xff]
    %v2461 = vld [vmem:[#allocation9 + $0x1b0] sm:$0xff]
    %v2462 = vld [vmem:[#allocation9 + $0x1b8] sm:$0xff]
    %v2463 = vld [vmem:[#allocation9 + $0x1c0] sm:$0xff]
    %v2464 = vld [vmem:[#allocation9 + $0x1c8] sm:$0xff]
    %v2465 = vld [vmem:[#allocation9 + $0x1d0] sm:$0xff]
    %v2466 = vld [vmem:[#allocation9 + $0x1d8] sm:$0xff]
    %v2467 = vld [vmem:[#allocation9 + $0x1e0] sm:$0xff]
    %v2468 = vld [vmem:[#allocation9 + $0x1e8] sm:$0xff]
    %v2469 = vld [vmem:[#allocation9 + $0x1f0] sm:$0xff]
    %v2470 = vld [vmem:[#allocation9 + $0x1f8] sm:$0xff]
    %v2471 = vld [vmem:[#allocation9 + $0x200] sm:$0xff]
    %v2472 = vld [vmem:[#allocation9 + $0x208] sm:$0xff]
    %v2473 = vld [vmem:[#allocation9 + $0x210] sm:$0xff]
    %v2474 = vld [vmem:[#allocation9 + $0x218] sm:$0xff]
    %v2475 = vld [vmem:[#allocation9 + $0x220] sm:$0xff]
    %v2476 = vld [vmem:[#allocation9 + $0x228] sm:$0xff]
    %v2477 = vld [vmem:[#allocation9 + $0x230] sm:$0xff]
    %v2478 = vld [vmem:[#allocation9 + $0x238] sm:$0xff]
    %v2479 = vld [vmem:[#allocation9 + $0x240] sm:$0xff]
    %v2480 = vld [vmem:[#allocation9 + $0x248] sm:$0xff]
    %v2481 = vld [vmem:[#allocation9 + $0x250] sm:$0xff]
    %v2482 = vld [vmem:[#allocation9 + $0x258] sm:$0xff]
    %v2483 = vld [vmem:[#allocation9 + $0x260] sm:$0xff]
    %v2484 = vld [vmem:[#allocation9 + $0x268] sm:$0xff]
    %v2485 = vld [vmem:[#allocation9 + $0x270] sm:$0xff]
    %v2486 = vld [vmem:[#allocation9 + $0x278] sm:$0xff]
    %v2487 = vld [vmem:[#allocation9 + $0x280] sm:$0xff]
    %v2488 = vld [vmem:[#allocation9 + $0x288] sm:$0xff]
    %v2489 = vld [vmem:[#allocation9 + $0x290] sm:$0xff]
    %v2490 = vld [vmem:[#allocation9 + $0x298] sm:$0xff]
    %v2491 = vld [vmem:[#allocation9 + $0x2a0] sm:$0xff]
    %v2492 = vld [vmem:[#allocation9 + $0x2a8] sm:$0xff]
    %v2493 = vld [vmem:[#allocation9 + $0x2b0] sm:$0xff]
    %v2494 = vld [vmem:[#allocation9 + $0x2b8] sm:$0xff]
    %v2495 = vld [vmem:[#allocation9 + $0x2c0] sm:$0xff]
    %v2496 = vld [vmem:[#allocation9 + $0x2c8] sm:$0xff]
    %v2497 = vld [vmem:[#allocation9 + $0x2d0] sm:$0xff]
    %v2498 = vld [vmem:[#allocation9 + $0x2d8] sm:$0xff]
    %v2499 = vld [vmem:[#allocation9 + $0x2e0] sm:$0xff]
    %v2500 = vld [vmem:[#allocation9 + $0x2e8] sm:$0xff]
    %v2501 = vld [vmem:[#allocation9 + $0x2f0] sm:$0xff]
    %v2502 = vld [vmem:[#allocation9 + $0x2f8] sm:$0xff]
    %v2503 = vld [vmem:[#allocation9 + $0x300] sm:$0xff]
    %v2504 = vld [vmem:[#allocation9 + $0x308] sm:$0xff]
    %v2505 = vld [vmem:[#allocation9 + $0x310] sm:$0xff]
    %v2506 = vld [vmem:[#allocation9 + $0x318] sm:$0xff]
    %v2507 = vld [vmem:[#allocation9 + $0x320] sm:$0xff]
    %v2508 = vld [vmem:[#allocation9 + $0x328] sm:$0xff]
    %v2509 = vld [vmem:[#allocation9 + $0x330] sm:$0xff]
    %v2510 = vld [vmem:[#allocation9 + $0x338] sm:$0xff]
    %v2511 = vld [vmem:[#allocation9 + $0x340] sm:$0xff]
    %v2512 = vld [vmem:[#allocation9 + $0x348] sm:$0xff]
    %v2513 = vld [vmem:[#allocation9 + $0x350] sm:$0xff]
    %v2514 = vld [vmem:[#allocation9 + $0x358] sm:$0xff]
    %v2515 = vld [vmem:[#allocation9 + $0x360] sm:$0xff]
    %v2516 = vld [vmem:[#allocation9 + $0x368] sm:$0xff]
    %v2517 = vld [vmem:[#allocation9 + $0x370] sm:$0xff]
    %v2518 = vld [vmem:[#allocation9 + $0x378] sm:$0xff]
    %v2519 = vld [vmem:[#allocation9 + $0x380] sm:$0xff]
    %v2520 = vld [vmem:[#allocation9 + $0x388] sm:$0xff]
    %v2521 = vld [vmem:[#allocation9 + $0x390] sm:$0xff]
    %v2522 = vld [vmem:[#allocation9 + $0x398] sm:$0xff]
    %v2523 = vld [vmem:[#allocation9 + $0x3a0] sm:$0xff]
    %v2524 = vld [vmem:[#allocation9 + $0x3a8] sm:$0xff]
    %v2525 = vld [vmem:[#allocation9 + $0x3b0] sm:$0xff]
    %v2526 = vld [vmem:[#allocation9 + $0x3b8] sm:$0xff]
    %v2527 = vld [vmem:[#allocation9 + $0x3c0] sm:$0xff]
    %v2528 = vld [vmem:[#allocation9 + $0x3c8] sm:$0xff]
    %v2529 = vld [vmem:[#allocation9 + $0x3d0] sm:$0xff]
    %v2530 = vld [vmem:[#allocation9 + $0x3d8] sm:$0xff]
    %v2531 = vld [vmem:[#allocation9 + $0x3e0] sm:$0xff]
    %v2532 = vld [vmem:[#allocation9 + $0x3e8] sm:$0xff]
    %v2533 = vld [vmem:[#allocation9 + $0x3f0] sm:$0xff]
    %v2534 = vld [vmem:[#allocation9 + $0x3f8] sm:$0xff]
    %v2535 = vld [vmem:[%s6] sm:$0xf]
    %v2537 = vlaneseq
    %v2538 = vshrl.u32 %v2537, 7
    %v2539 = vsub.s32 0, %v2538
    %v2540 = vrot.slane %v2535, %v2539
    %v2541 = vlaneseq
    %v2542 = vshrl.u32 %v2541, 7
    %v2543 = vsub.s32 1, %v2542
    %v2544 = vrot.slane %v2535, %v2543
    %v2545 = vlaneseq
    %v2546 = vshrl.u32 %v2545, 7
    %v2547 = vsub.s32 2, %v2546
    %v2548 = vrot.slane %v2535, %v2547
    %v2549 = vlaneseq
    %v2550 = vshrl.u32 %v2549, 7
    %v2551 = vsub.s32 3, %v2550
    %v2552 = vrot.slane %v2535, %v2551
    %v2685 = vunpack.c.l.b16 %v2407
    %v2686 = vunpack.c.h.b16 %v2407
    %v2687 = vunpack.c.l.b16 %v2408
    %v2688 = vunpack.c.h.b16 %v2408
    %v2689 = vunpack.c.l.b16 %v2409
    %v2690 = vunpack.c.h.b16 %v2409
    %v2691 = vunpack.c.l.b16 %v2410
    %v2692 = vunpack.c.h.b16 %v2410
    %v2693 = vunpack.c.l.b16 %v2411
    %v2694 = vunpack.c.h.b16 %v2411
    %v2695 = vunpack.c.l.b16 %v2412
    %v2696 = vunpack.c.h.b16 %v2412
    %v2697 = vunpack.c.l.b16 %v2413
    %v2698 = vunpack.c.h.b16 %v2413
    %v2699 = vunpack.c.l.b16 %v2414
    %v2700 = vunpack.c.h.b16 %v2414
    %v2701 = vunpack.c.l.b16 %v2415
    %v2702 = vunpack.c.h.b16 %v2415
    %v2703 = vunpack.c.l.b16 %v2416
    %v2704 = vunpack.c.h.b16 %v2416
    %v2705 = vunpack.c.l.b16 %v2417
    %v2706 = vunpack.c.h.b16 %v2417
    %v2707 = vunpack.c.l.b16 %v2418
    %v2708 = vunpack.c.h.b16 %v2418
    %v2709 = vunpack.c.l.b16 %v2419
    %v2710 = vunpack.c.h.b16 %v2419
    %v2711 = vunpack.c.l.b16 %v2420
    %v2712 = vunpack.c.h.b16 %v2420
    %v2713 = vunpack.c.l.b16 %v2421
    %v2714 = vunpack.c.h.b16 %v2421
    %v2715 = vunpack.c.l.b16 %v2422
    %v2716 = vunpack.c.h.b16 %v2422
    %v2717 = vunpack.c.l.b16 %v2423
    %v2718 = vunpack.c.h.b16 %v2423
    %v2719 = vunpack.c.l.b16 %v2424
    %v2720 = vunpack.c.h.b16 %v2424
    %v2721 = vunpack.c.l.b16 %v2425
    %v2722 = vunpack.c.h.b16 %v2425
    %v2723 = vunpack.c.l.b16 %v2426
    %v2724 = vunpack.c.h.b16 %v2426
    %v2725 = vunpack.c.l.b16 %v2427
    %v2726 = vunpack.c.h.b16 %v2427
    %v2727 = vunpack.c.l.b16 %v2428
    %v2728 = vunpack.c.h.b16 %v2428
    %v2729 = vunpack.c.l.b16 %v2429
    %v2730 = vunpack.c.h.b16 %v2429
    %v2731 = vunpack.c.l.b16 %v2430
    %v2732 = vunpack.c.h.b16 %v2430
    %v2733 = vunpack.c.l.b16 %v2431
    %v2734 = vunpack.c.h.b16 %v2431
    %v2735 = vunpack.c.l.b16 %v2432
    %v2736 = vunpack.c.h.b16 %v2432
    %v2737 = vunpack.c.l.b16 %v2433
    %v2738 = vunpack.c.h.b16 %v2433
    %v2739 = vunpack.c.l.b16 %v2434
    %v2740 = vunpack.c.h.b16 %v2434
    %v2741 = vunpack.c.l.b16 %v2435
    %v2742 = vunpack.c.h.b16 %v2435
    %v2743 = vunpack.c.l.b16 %v2436
    %v2744 = vunpack.c.h.b16 %v2436
    %v2745 = vunpack.c.l.b16 %v2437
    %v2746 = vunpack.c.h.b16 %v2437
    %v2747 = vunpack.c.l.b16 %v2438
    %v2748 = vunpack.c.h.b16 %v2438
    %v2749 = vunpack.c.l.b16 %v2439
    %v2750 = vunpack.c.h.b16 %v2439
    %v2751 = vunpack.c.l.b16 %v2440
    %v2752 = vunpack.c.h.b16 %v2440
    %v2753 = vunpack.c.l.b16 %v2441
    %v2754 = vunpack.c.h.b16 %v2441
    %v2755 = vunpack.c.l.b16 %v2442
    %v2756 = vunpack.c.h.b16 %v2442
    %v2757 = vunpack.c.l.b16 %v2443
    %v2758 = vunpack.c.h.b16 %v2443
    %v2759 = vunpack.c.l.b16 %v2444
    %v2760 = vunpack.c.h.b16 %v2444
    %v2761 = vunpack.c.l.b16 %v2445
    %v2762 = vunpack.c.h.b16 %v2445
    %v2763 = vunpack.c.l.b16 %v2446
    %v2764 = vunpack.c.h.b16 %v2446
    %v2765 = vunpack.c.l.b16 %v2447
    %v2766 = vunpack.c.h.b16 %v2447
    %v2767 = vunpack.c.l.b16 %v2448
    %v2768 = vunpack.c.h.b16 %v2448
    %v2769 = vunpack.c.l.b16 %v2449
    %v2770 = vunpack.c.h.b16 %v2449
    %v2771 = vunpack.c.l.b16 %v2450
    %v2772 = vunpack.c.h.b16 %v2450
    %v2773 = vunpack.c.l.b16 %v2451
    %v2774 = vunpack.c.h.b16 %v2451
    %v2775 = vunpack.c.l.b16 %v2452
    %v2776 = vunpack.c.h.b16 %v2452
    %v2777 = vunpack.c.l.b16 %v2453
    %v2778 = vunpack.c.h.b16 %v2453
    %v2779 = vunpack.c.l.b16 %v2454
    %v2780 = vunpack.c.h.b16 %v2454
    %v2781 = vunpack.c.l.b16 %v2455
    %v2782 = vunpack.c.h.b16 %v2455
    %v2783 = vunpack.c.l.b16 %v2456
    %v2784 = vunpack.c.h.b16 %v2456
    %v2785 = vunpack.c.l.b16 %v2457
    %v2786 = vunpack.c.h.b16 %v2457
    %v2787 = vunpack.c.l.b16 %v2458
    %v2788 = vunpack.c.h.b16 %v2458
    %v2789 = vunpack.c.l.b16 %v2459
    %v2790 = vunpack.c.h.b16 %v2459
    %v2791 = vunpack.c.l.b16 %v2460
    %v2792 = vunpack.c.h.b16 %v2460
    %v2793 = vunpack.c.l.b16 %v2461
    %v2794 = vunpack.c.h.b16 %v2461
    %v2795 = vunpack.c.l.b16 %v2462
    %v2796 = vunpack.c.h.b16 %v2462
    %v2797 = vunpack.c.l.b16 %v2463
    %v2798 = vunpack.c.h.b16 %v2463
    %v2799 = vunpack.c.l.b16 %v2464
    %v2800 = vunpack.c.h.b16 %v2464
    %v2801 = vunpack.c.l.b16 %v2465
    %v2802 = vunpack.c.h.b16 %v2465
    %v2803 = vunpack.c.l.b16 %v2466
    %v2804 = vunpack.c.h.b16 %v2466
    %v2805 = vunpack.c.l.b16 %v2467
    %v2806 = vunpack.c.h.b16 %v2467
    %v2807 = vunpack.c.l.b16 %v2468
    %v2808 = vunpack.c.h.b16 %v2468
    %v2809 = vunpack.c.l.b16 %v2469
    %v2810 = vunpack.c.h.b16 %v2469
    %v2811 = vunpack.c.l.b16 %v2470
    %v2812 = vunpack.c.h.b16 %v2470
    %v2813 = vunpack.c.l.b16 %v2471
    %v2814 = vunpack.c.h.b16 %v2471
    %v2815 = vunpack.c.l.b16 %v2472
    %v2816 = vunpack.c.h.b16 %v2472
    %v2817 = vunpack.c.l.b16 %v2473
    %v2818 = vunpack.c.h.b16 %v2473
    %v2819 = vunpack.c.l.b16 %v2474
    %v2820 = vunpack.c.h.b16 %v2474
    %v2821 = vunpack.c.l.b16 %v2475
    %v2822 = vunpack.c.h.b16 %v2475
    %v2823 = vunpack.c.l.b16 %v2476
    %v2824 = vunpack.c.h.b16 %v2476
    %v2825 = vunpack.c.l.b16 %v2477
    %v2826 = vunpack.c.h.b16 %v2477
    %v2827 = vunpack.c.l.b16 %v2478
    %v2828 = vunpack.c.h.b16 %v2478
    %v2829 = vunpack.c.l.b16 %v2479
    %v2830 = vunpack.c.h.b16 %v2479
    %v2831 = vunpack.c.l.b16 %v2480
    %v2832 = vunpack.c.h.b16 %v2480
    %v2833 = vunpack.c.l.b16 %v2481
    %v2834 = vunpack.c.h.b16 %v2481
    %v2835 = vunpack.c.l.b16 %v2482
    %v2836 = vunpack.c.h.b16 %v2482
    %v2837 = vunpack.c.l.b16 %v2483
    %v2838 = vunpack.c.h.b16 %v2483
    %v2839 = vunpack.c.l.b16 %v2484
    %v2840 = vunpack.c.h.b16 %v2484
    %v2841 = vunpack.c.l.b16 %v2485
    %v2842 = vunpack.c.h.b16 %v2485
    %v2843 = vunpack.c.l.b16 %v2486
    %v2844 = vunpack.c.h.b16 %v2486
    %v2845 = vunpack.c.l.b16 %v2487
    %v2846 = vunpack.c.h.b16 %v2487
    %v2847 = vunpack.c.l.b16 %v2488
    %v2848 = vunpack.c.h.b16 %v2488
    %v2849 = vunpack.c.l.b16 %v2489
    %v2850 = vunpack.c.h.b16 %v2489
    %v2851 = vunpack.c.l.b16 %v2490
    %v2852 = vunpack.c.h.b16 %v2490
    %v2853 = vunpack.c.l.b16 %v2491
    %v2854 = vunpack.c.h.b16 %v2491
    %v2855 = vunpack.c.l.b16 %v2492
    %v2856 = vunpack.c.h.b16 %v2492
    %v2857 = vunpack.c.l.b16 %v2493
    %v2858 = vunpack.c.h.b16 %v2493
    %v2859 = vunpack.c.l.b16 %v2494
    %v2860 = vunpack.c.h.b16 %v2494
    %v2861 = vunpack.c.l.b16 %v2495
    %v2862 = vunpack.c.h.b16 %v2495
    %v2863 = vunpack.c.l.b16 %v2496
    %v2864 = vunpack.c.h.b16 %v2496
    %v2865 = vunpack.c.l.b16 %v2497
    %v2866 = vunpack.c.h.b16 %v2497
    %v2867 = vunpack.c.l.b16 %v2498
    %v2868 = vunpack.c.h.b16 %v2498
    %v2869 = vunpack.c.l.b16 %v2499
    %v2870 = vunpack.c.h.b16 %v2499
    %v2871 = vunpack.c.l.b16 %v2500
    %v2872 = vunpack.c.h.b16 %v2500
    %v2873 = vunpack.c.l.b16 %v2501
    %v2874 = vunpack.c.h.b16 %v2501
    %v2875 = vunpack.c.l.b16 %v2502
    %v2876 = vunpack.c.h.b16 %v2502
    %v2877 = vunpack.c.l.b16 %v2503
    %v2878 = vunpack.c.h.b16 %v2503
    %v2879 = vunpack.c.l.b16 %v2504
    %v2880 = vunpack.c.h.b16 %v2504
    %v2881 = vunpack.c.l.b16 %v2505
    %v2882 = vunpack.c.h.b16 %v2505
    %v2883 = vunpack.c.l.b16 %v2506
    %v2884 = vunpack.c.h.b16 %v2506
    %v2885 = vunpack.c.l.b16 %v2507
    %v2886 = vunpack.c.h.b16 %v2507
    %v2887 = vunpack.c.l.b16 %v2508
    %v2888 = vunpack.c.h.b16 %v2508
    %v2889 = vunpack.c.l.b16 %v2509
    %v2890 = vunpack.c.h.b16 %v2509
    %v2891 = vunpack.c.l.b16 %v2510
    %v2892 = vunpack.c.h.b16 %v2510
    %v2893 = vunpack.c.l.b16 %v2511
    %v2894 = vunpack.c.h.b16 %v2511
    %v2895 = vunpack.c.l.b16 %v2512
    %v2896 = vunpack.c.h.b16 %v2512
    %v2897 = vunpack.c.l.b16 %v2513
    %v2898 = vunpack.c.h.b16 %v2513
    %v2899 = vunpack.c.l.b16 %v2514
    %v2900 = vunpack.c.h.b16 %v2514
    %v2901 = vunpack.c.l.b16 %v2515
    %v2902 = vunpack.c.h.b16 %v2515
    %v2903 = vunpack.c.l.b16 %v2516
    %v2904 = vunpack.c.h.b16 %v2516
    %v2905 = vunpack.c.l.b16 %v2517
    %v2906 = vunpack.c.h.b16 %v2517
    %v2907 = vunpack.c.l.b16 %v2518
    %v2908 = vunpack.c.h.b16 %v2518
    %v2909 = vunpack.c.l.b16 %v2519
    %v2910 = vunpack.c.h.b16 %v2519
    %v2911 = vunpack.c.l.b16 %v2520
    %v2912 = vunpack.c.h.b16 %v2520
    %v2913 = vunpack.c.l.b16 %v2521
    %v2914 = vunpack.c.h.b16 %v2521
    %v2915 = vunpack.c.l.b16 %v2522
    %v2916 = vunpack.c.h.b16 %v2522
    %v2917 = vunpack.c.l.b16 %v2523
    %v2918 = vunpack.c.h.b16 %v2523
    %v2919 = vunpack.c.l.b16 %v2524
    %v2920 = vunpack.c.h.b16 %v2524
    %v2921 = vunpack.c.l.b16 %v2525
    %v2922 = vunpack.c.h.b16 %v2525
    %v2923 = vunpack.c.l.b16 %v2526
    %v2924 = vunpack.c.h.b16 %v2526
    %v2925 = vunpack.c.l.b16 %v2527
    %v2926 = vunpack.c.h.b16 %v2527
    %v2927 = vunpack.c.l.b16 %v2528
    %v2928 = vunpack.c.h.b16 %v2528
    %v2929 = vunpack.c.l.b16 %v2529
    %v2930 = vunpack.c.h.b16 %v2529
    %v2931 = vunpack.c.l.b16 %v2530
    %v2932 = vunpack.c.h.b16 %v2530
    %v2933 = vunpack.c.l.b16 %v2531
    %v2934 = vunpack.c.h.b16 %v2531
    %v2935 = vunpack.c.l.b16 %v2532
    %v2936 = vunpack.c.h.b16 %v2532
    %v2937 = vunpack.c.l.b16 %v2533
    %v2938 = vunpack.c.h.b16 %v2533
    %v2939 = vunpack.c.l.b16 %v2534
    %v2940 = vunpack.c.h.b16 %v2534
    %v2941 = vpack.c.b16 %v2689, %v2685
    %v2942 = vpack.c.b16 %v2690, %v2686
    %v2943 = vpack.c.b16 %v2691, %v2687
    %v2944 = vpack.c.b16 %v2692, %v2688
    %v2945 = vpack.c.b16 %v2697, %v2693
    %v2946 = vpack.c.b16 %v2698, %v2694
    %v2947 = vpack.c.b16 %v2699, %v2695
    %v2948 = vpack.c.b16 %v2700, %v2696
    %v2949 = vpack.c.b16 %v2705, %v2701
    %v2950 = vpack.c.b16 %v2706, %v2702
    %v2951 = vpack.c.b16 %v2707, %v2703
    %v2952 = vpack.c.b16 %v2708, %v2704
    %v2953 = vpack.c.b16 %v2713, %v2709
    %v2954 = vpack.c.b16 %v2714, %v2710
    %v2955 = vpack.c.b16 %v2715, %v2711
    %v2956 = vpack.c.b16 %v2716, %v2712
    %v2957 = vpack.c.b16 %v2721, %v2717
    %v2958 = vpack.c.b16 %v2722, %v2718
    %v2959 = vpack.c.b16 %v2723, %v2719
    %v2960 = vpack.c.b16 %v2724, %v2720
    %v2961 = vpack.c.b16 %v2729, %v2725
    %v2962 = vpack.c.b16 %v2730, %v2726
    %v2963 = vpack.c.b16 %v2731, %v2727
    %v2964 = vpack.c.b16 %v2732, %v2728
    %v2965 = vpack.c.b16 %v2737, %v2733
    %v2966 = vpack.c.b16 %v2738, %v2734
    %v2967 = vpack.c.b16 %v2739, %v2735
    %v2968 = vpack.c.b16 %v2740, %v2736
    %v2969 = vpack.c.b16 %v2745, %v2741
    %v2970 = vpack.c.b16 %v2746, %v2742
    %v2971 = vpack.c.b16 %v2747, %v2743
    %v2972 = vpack.c.b16 %v2748, %v2744
    %v2973 = vpack.c.b16 %v2753, %v2749
    %v2974 = vpack.c.b16 %v2754, %v2750
    %v2975 = vpack.c.b16 %v2755, %v2751
    %v2976 = vpack.c.b16 %v2756, %v2752
    %v2977 = vpack.c.b16 %v2761, %v2757
    %v2978 = vpack.c.b16 %v2762, %v2758
    %v2979 = vpack.c.b16 %v2763, %v2759
    %v2980 = vpack.c.b16 %v2764, %v2760
    %v2981 = vpack.c.b16 %v2769, %v2765
    %v2982 = vpack.c.b16 %v2770, %v2766
    %v2983 = vpack.c.b16 %v2771, %v2767
    %v2984 = vpack.c.b16 %v2772, %v2768
    %v2985 = vpack.c.b16 %v2777, %v2773
    %v2986 = vpack.c.b16 %v2778, %v2774
    %v2987 = vpack.c.b16 %v2779, %v2775
    %v2988 = vpack.c.b16 %v2780, %v2776
    %v2989 = vpack.c.b16 %v2785, %v2781
    %v2990 = vpack.c.b16 %v2786, %v2782
    %v2991 = vpack.c.b16 %v2787, %v2783
    %v2992 = vpack.c.b16 %v2788, %v2784
    %v2993 = vpack.c.b16 %v2793, %v2789
    %v2994 = vpack.c.b16 %v2794, %v2790
    %v2995 = vpack.c.b16 %v2795, %v2791
    %v2996 = vpack.c.b16 %v2796, %v2792
    %v2997 = vpack.c.b16 %v2801, %v2797
    %v2998 = vpack.c.b16 %v2802, %v2798
    %v2999 = vpack.c.b16 %v2803, %v2799
    %v3000 = vpack.c.b16 %v2804, %v2800
    %v3001 = vpack.c.b16 %v2809, %v2805
    %v3002 = vpack.c.b16 %v2810, %v2806
    %v3003 = vpack.c.b16 %v2811, %v2807
    %v3004 = vpack.c.b16 %v2812, %v2808
    %v3005 = vpack.c.b16 %v2817, %v2813
    %v3006 = vpack.c.b16 %v2818, %v2814
    %v3007 = vpack.c.b16 %v2819, %v2815
    %v3008 = vpack.c.b16 %v2820, %v2816
    %v3009 = vpack.c.b16 %v2825, %v2821
    %v3010 = vpack.c.b16 %v2826, %v2822
    %v3011 = vpack.c.b16 %v2827, %v2823
    %v3012 = vpack.c.b16 %v2828, %v2824
    %v3013 = vpack.c.b16 %v2833, %v2829
    %v3014 = vpack.c.b16 %v2834, %v2830
    %v3015 = vpack.c.b16 %v2835, %v2831
    %v3016 = vpack.c.b16 %v2836, %v2832
    %v3017 = vpack.c.b16 %v2841, %v2837
    %v3018 = vpack.c.b16 %v2842, %v2838
    %v3019 = vpack.c.b16 %v2843, %v2839
    %v3020 = vpack.c.b16 %v2844, %v2840
    %v3021 = vpack.c.b16 %v2849, %v2845
    %v3022 = vpack.c.b16 %v2850, %v2846
    %v3023 = vpack.c.b16 %v2851, %v2847
    %v3024 = vpack.c.b16 %v2852, %v2848
    %v3025 = vpack.c.b16 %v2857, %v2853
    %v3026 = vpack.c.b16 %v2858, %v2854
    %v3027 = vpack.c.b16 %v2859, %v2855
    %v3028 = vpack.c.b16 %v2860, %v2856
    %v3029 = vpack.c.b16 %v2865, %v2861
    %v3030 = vpack.c.b16 %v2866, %v2862
    %v3031 = vpack.c.b16 %v2867, %v2863
    %v3032 = vpack.c.b16 %v2868, %v2864
    %v3033 = vpack.c.b16 %v2873, %v2869
    %v3034 = vpack.c.b16 %v2874, %v2870
    %v3035 = vpack.c.b16 %v2875, %v2871
    %v3036 = vpack.c.b16 %v2876, %v2872
    %v3037 = vpack.c.b16 %v2881, %v2877
    %v3038 = vpack.c.b16 %v2882, %v2878
    %v3039 = vpack.c.b16 %v2883, %v2879
    %v3040 = vpack.c.b16 %v2884, %v2880
    %v3041 = vpack.c.b16 %v2889, %v2885
    %v3042 = vpack.c.b16 %v2890, %v2886
    %v3043 = vpack.c.b16 %v2891, %v2887
    %v3044 = vpack.c.b16 %v2892, %v2888
    %v3045 = vpack.c.b16 %v2897, %v2893
    %v3046 = vpack.c.b16 %v2898, %v2894
    %v3047 = vpack.c.b16 %v2899, %v2895
    %v3048 = vpack.c.b16 %v2900, %v2896
    %v3049 = vpack.c.b16 %v2905, %v2901
    %v3050 = vpack.c.b16 %v2906, %v2902
    %v3051 = vpack.c.b16 %v2907, %v2903
    %v3052 = vpack.c.b16 %v2908, %v2904
    %v3053 = vpack.c.b16 %v2913, %v2909
    %v3054 = vpack.c.b16 %v2914, %v2910
    %v3055 = vpack.c.b16 %v2915, %v2911
    %v3056 = vpack.c.b16 %v2916, %v2912
    %v3057 = vpack.c.b16 %v2921, %v2917
    %v3058 = vpack.c.b16 %v2922, %v2918
    %v3059 = vpack.c.b16 %v2923, %v2919
    %v3060 = vpack.c.b16 %v2924, %v2920
    %v3061 = vpack.c.b16 %v2929, %v2925
    %v3062 = vpack.c.b16 %v2930, %v2926
    %v3063 = vpack.c.b16 %v2931, %v2927
    %v3064 = vpack.c.b16 %v2932, %v2928
    %v3065 = vpack.c.b16 %v2937, %v2933
    %v3066 = vpack.c.b16 %v2938, %v2934
    %v3067 = vpack.c.b16 %v2939, %v2935
    %v3068 = vpack.c.b16 %v2940, %v2936
    %3197 = vmatprep.subr.bf16.mxu0 %v2942
    %3198 = vmatpush1.bf16.msra.mxu0 %v2941
    %3199 = vmatprep.subr.bf16.mxu0 %v2946
    %3200 = vmatpush1.bf16.msra.mxu0 %v2945
    %3201 = vmatprep.subr.bf16.mxu0 %v2950
    %3202 = vmatpush1.bf16.msra.mxu0 %v2949
    %3203 = vmatprep.subr.bf16.mxu0 %v2954
    %3204 = vmatpush1.bf16.msra.mxu0 %v2953
    %3205 = vmatprep.subr.bf16.mxu0 %v2958
    %3206 = vmatpush1.bf16.msra.mxu0 %v2957
    %3207 = vmatprep.subr.bf16.mxu0 %v2962
    %3208 = vmatpush1.bf16.msra.mxu0 %v2961
    %3209 = vmatprep.subr.bf16.mxu0 %v2966
    %3210 = vmatpush1.bf16.msra.mxu0 %v2965
    %3211 = vmatprep.subr.bf16.mxu0 %v2970
    %3212 = vmatpush1.bf16.msra.mxu0 %v2969
    %3213 = vmatprep.subr.bf16.mxu0 %v2974
    %3214 = vmatpush1.bf16.msra.mxu0 %v2973
    %3215 = vmatprep.subr.bf16.mxu0 %v2978
    %3216 = vmatpush1.bf16.msra.mxu0 %v2977
    %3217 = vmatprep.subr.bf16.mxu0 %v2982
    %3218 = vmatpush1.bf16.msra.mxu0 %v2981
    %3219 = vmatprep.subr.bf16.mxu0 %v2986
    %3220 = vmatpush1.bf16.msra.mxu0 %v2985
    %3221 = vmatprep.subr.bf16.mxu0 %v2990
    %3222 = vmatpush1.bf16.msra.mxu0 %v2989
    %3223 = vmatprep.subr.bf16.mxu0 %v2994
    %3224 = vmatpush1.bf16.msra.mxu0 %v2993
    %3225 = vmatprep.subr.bf16.mxu0 %v2998
    %3226 = vmatpush1.bf16.msra.mxu0 %v2997
    %3227 = vmatprep.subr.bf16.mxu0 %v3002
    %3228 = vmatpush1.bf16.msra.mxu0 %v3001
    %3229 = vmatprep.mubr.bf16.mxu0 %v2376
    %3230 = vmatmul.mubr.bf16.gmra.mrb[0].mxu0 %v2375
    %v3231 = vpop.f32.mrb[0].mxu0
    %v3232 = vadd.f32 %v2540, %v3231
    %v3233 = vpop.f32.mrb[0].mxu0
    %v3234 = vadd.f32 %v2544, %v3233
    %v3235 = vpop.f32.mrb[0].mxu0
    %v3236 = vadd.f32 %v2540, %v3235
    %v3237 = vpop.f32.mrb[0].mxu0
    %v3238 = vadd.f32 %v2544, %v3237
    %3239 = vmatprep.mubr.bf16.mxu0 %v2380
    %3240 = vmatmul.mubr.bf16.gmra.mrb[0].mxu0 %v2379
    %v3241 = vpop.f32.mrb[0].mxu0
    %v3242 = vadd.f32 %v2540, %v3241
    %v3243 = vpop.f32.mrb[0].mxu0
    %v3244 = vadd.f32 %v2544, %v3243
    %v3245 = vpop.f32.mrb[0].mxu0
    %v3246 = vadd.f32 %v2540, %v3245
    %v3247 = vpop.f32.mrb[0].mxu0
    %v3248 = vadd.f32 %v2544, %v3247
    %3249 = vmatprep.mubr.bf16.mxu0 %v2384
    %3250 = vmatmul.mubr.bf16.gmra.mrb[0].mxu0 %v2383
    %v3251 = vpop.f32.mrb[0].mxu0
    %v3252 = vadd.f32 %v2540, %v3251
    %v3253 = vpop.f32.mrb[0].mxu0
    %v3254 = vadd.f32 %v2544, %v3253
    %v3255 = vpop.f32.mrb[0].mxu0
    %v3256 = vadd.f32 %v2540, %v3255
    %v3257 = vpop.f32.mrb[0].mxu0
    %v3258 = vadd.f32 %v2544, %v3257
    %3259 = vmatprep.mubr.bf16.mxu0 %v2388
    %3260 = vmatmul.mubr.bf16.gmra.mrb[0].mxu0 %v2387
    %v3261 = vpop.f32.mrb[0].mxu0
    %v3262 = vadd.f32 %v2540, %v3261
    %v3263 = vpop.f32.mrb[0].mxu0
    %v3264 = vadd.f32 %v2544, %v3263
    %v3265 = vpop.f32.mrb[0].mxu0
    %v3266 = vadd.f32 %v2540, %v3265
    %v3267 = vpop.f32.mrb[0].mxu0
    %v3268 = vadd.f32 %v2544, %v3267
    %3269 = vmatprep.mubr.bf16.mxu0 %v2392
    %3270 = vmatmul.mubr.bf16.gmra.mrb[0].mxu0 %v2391
    %v3271 = vpop.f32.mrb[0].mxu0
    %v3272 = vadd.f32 %v2540, %v3271
    %v3273 = vpop.f32.mrb[0].mxu0
    %v3274 = vadd.f32 %v2544, %v3273
    %v3275 = vpop.f32.mrb[0].mxu0
    %v3276 = vadd.f32 %v2540, %v3275
    %v3277 = vpop.f32.mrb[0].mxu0
    %v3278 = vadd.f32 %v2544, %v3277
    %3279 = vmatprep.mubr.bf16.mxu0 %v2396
    %3280 = vmatmul.mubr.bf16.gmra.mrb[0].mxu0 %v2395
    %v3281 = vpop.f32.mrb[0].mxu0
    %v3282 = vadd.f32 %v2540, %v3281
    %v3283 = vpop.f32.mrb[0].mxu0
    %v3284 = vadd.f32 %v2544, %v3283
    %v3285 = vpop.f32.mrb[0].mxu0
    %v3286 = vadd.f32 %v2540, %v3285
    %v3287 = vpop.f32.mrb[0].mxu0
    %v3288 = vadd.f32 %v2544, %v3287
    %3289 = vmatprep.mubr.bf16.mxu0 %v2400
    %3290 = vmatmul.mubr.bf16.gmra.mrb[0].mxu0 %v2399
    %v3291 = vpop.f32.mrb[0].mxu0
    %v3292 = vadd.f32 %v2540, %v3291
    %v3293 = vpop.f32.mrb[0].mxu0
    %v3294 = vadd.f32 %v2544, %v3293
    %v3295 = vpop.f32.mrb[0].mxu0
    %v3296 = vadd.f32 %v2540, %v3295
    %v3297 = vpop.f32.mrb[0].mxu0
    %v3298 = vadd.f32 %v2544, %v3297
    %3299 = vmatprep.mubr.bf16.mxu0 %v2404
    %3300 = vmatmul.mubr.bf16.gmra.mrb[0].mxu0 %v2403
    %v3301 = vpop.f32.mrb[0].mxu0
    %v3302 = vadd.f32 %v2540, %v3301
    %v3303 = vpop.f32.mrb[0].mxu0
    %v3304 = vadd.f32 %v2544, %v3303
    %v3305 = vpop.f32.mrb[0].mxu0
    %v3306 = vadd.f32 %v2540, %v3305
    %v3307 = vpop.f32.mrb[0].mxu0
    %v3308 = vadd.f32 %v2544, %v3307
    %3309 = vdwg.mxu0
    %3310 = vmatprep.subr.bf16.mxu0 %v3006
    %3311 = vmatpush1.bf16.msra.mxu0 %v3005
    %3312 = vmatprep.subr.bf16.mxu0 %v3010
    %3313 = vmatpush1.bf16.msra.mxu0 %v3009
    %3314 = vmatprep.subr.bf16.mxu0 %v3014
    %3315 = vmatpush1.bf16.msra.mxu0 %v3013
    %3316 = vmatprep.subr.bf16.mxu0 %v3018
    %3317 = vmatpush1.bf16.msra.mxu0 %v3017
    %3318 = vmatprep.subr.bf16.mxu0 %v3022
    %3319 = vmatpush1.bf16.msra.mxu0 %v3021
    %3320 = vmatprep.subr.bf16.mxu0 %v3026
    %3321 = vmatpush1.bf16.msra.mxu0 %v3025
    %3322 = vmatprep.subr.bf16.mxu0 %v3030
    %3323 = vmatpush1.bf16.msra.mxu0 %v3029
    %3324 = vmatprep.subr.bf16.mxu0 %v3034
    %3325 = vmatpush1.bf16.msra.mxu0 %v3033
    %3326 = vmatprep.subr.bf16.mxu0 %v3038
    %3327 = vmatpush1.bf16.msra.mxu0 %v3037
    %3328 = vmatprep.subr.bf16.mxu0 %v3042
    %3329 = vmatpush1.bf16.msra.mxu0 %v3041
    %3330 = vmatprep.subr.bf16.mxu0 %v3046
    %3331 = vmatpush1.bf16.msra.mxu0 %v3045
    %3332 = vmatprep.subr.bf16.mxu0 %v3050
    %3333 = vmatpush1.bf16.msra.mxu0 %v3049
    %3334 = vmatprep.subr.bf16.mxu0 %v3054
    %3335 = vmatpush1.bf16.msra.mxu0 %v3053
    %3336 = vmatprep.subr.bf16.mxu0 %v3058
    %3337 = vmatpush1.bf16.msra.mxu0 %v3057
    %3338 = vmatprep.subr.bf16.mxu0 %v3062
    %3339 = vmatpush1.bf16.msra.mxu0 %v3061
    %3340 = vmatprep.subr.bf16.mxu0 %v3066
    %3341 = vmatpush1.bf16.msra.mxu0 %v3065
    %3342 = vmatprep.mubr.bf16.mxu0 %v2378
    %3343 = vmatmul.mubr.bf16.gmra.mrb[0].mxu0 %v2377
    %v3344 = vpop.f32.mrb[0].mxu0
    %v3345 = vadd.f32 %v3232, %v3344
    %v3346 = vpop.f32.mrb[0].mxu0
    %v3347 = vadd.f32 %v3234, %v3346
    %v3348 = vpop.f32.mrb[0].mxu0
    %v3349 = vadd.f32 %v3236, %v3348
    %v3350 = vpop.f32.mrb[0].mxu0
    %v3351 = vadd.f32 %v3238, %v3350
    %3352 = vmatprep.mubr.bf16.mxu0 %v2382
    %3353 = vmatmul.mubr.bf16.gmra.mrb[0].mxu0 %v2381
    %v3354 = vpop.f32.mrb[0].mxu0
    %v3355 = vadd.f32 %v3242, %v3354
    %v3356 = vpop.f32.mrb[0].mxu0
    %v3357 = vadd.f32 %v3244, %v3356
    %v3358 = vpop.f32.mrb[0].mxu0
    %v3359 = vadd.f32 %v3246, %v3358
    %v3360 = vpop.f32.mrb[0].mxu0
    %v3361 = vadd.f32 %v3248, %v3360
    %3362 = vmatprep.mubr.bf16.mxu0 %v2386
    %3363 = vmatmul.mubr.bf16.gmra.mrb[0].mxu0 %v2385
    %v3364 = vpop.f32.mrb[0].mxu0
    %v3365 = vadd.f32 %v3252, %v3364
    %v3366 = vpop.f32.mrb[0].mxu0
    %v3367 = vadd.f32 %v3254, %v3366
    %v3368 = vpop.f32.mrb[0].mxu0
    %v3369 = vadd.f32 %v3256, %v3368
    %v3370 = vpop.f32.mrb[0].mxu0
    %v3371 = vadd.f32 %v3258, %v3370
    %3372 = vmatprep.mubr.bf16.mxu0 %v2390
    %3373 = vmatmul.mubr.bf16.gmra.mrb[0].mxu0 %v2389
    %v3374 = vpop.f32.mrb[0].mxu0
    %v3375 = vadd.f32 %v3262, %v3374
    %v3376 = vpop.f32.mrb[0].mxu0
    %v3377 = vadd.f32 %v3264, %v3376
    %v3378 = vpop.f32.mrb[0].mxu0
    %v3379 = vadd.f32 %v3266, %v3378
    %v3380 = vpop.f32.mrb[0].mxu0
    %v3381 = vadd.f32 %v3268, %v3380
    %3382 = vmatprep.mubr.bf16.mxu0 %v2394
    %3383 = vmatmul.mubr.bf16.gmra.mrb[0].mxu0 %v2393
    %v3384 = vpop.f32.mrb[0].mxu0
    %v3385 = vadd.f32 %v3272, %v3384
    %v3386 = vpop.f32.mrb[0].mxu0
    %v3387 = vadd.f32 %v3274, %v3386
    %v3388 = vpop.f32.mrb[0].mxu0
    %v3389 = vadd.f32 %v3276, %v3388
    %v3390 = vpop.f32.mrb[0].mxu0
    %v3391 = vadd.f32 %v3278, %v3390
    %3392 = vmatprep.mubr.bf16.mxu0 %v2398
    %3393 = vmatmul.mubr.bf16.gmra.mrb[0].mxu0 %v2397
    %v3394 = vpop.f32.mrb[0].mxu0
    %v3395 = vadd.f32 %v3282, %v3394
    %v3396 = vpop.f32.mrb[0].mxu0
    %v3397 = vadd.f32 %v3284, %v3396
    %v3398 = vpop.f32.mrb[0].mxu0
    %v3399 = vadd.f32 %v3286, %v3398
    %v3400 = vpop.f32.mrb[0].mxu0
    %v3401 = vadd.f32 %v3288, %v3400
    %3402 = vmatprep.mubr.bf16.mxu0 %v2402
    %3403 = vmatmul.mubr.bf16.gmra.mrb[0].mxu0 %v2401
    %v3404 = vpop.f32.mrb[0].mxu0
    %v3405 = vadd.f32 %v3292, %v3404
    %v3406 = vpop.f32.mrb[0].mxu0
    %v3407 = vadd.f32 %v3294, %v3406
    %v3408 = vpop.f32.mrb[0].mxu0
    %v3409 = vadd.f32 %v3296, %v3408
    %v3410 = vpop.f32.mrb[0].mxu0
    %v3411 = vadd.f32 %v3298, %v3410
    %3412 = vmatprep.mubr.bf16.mxu0 %v2406
    %3413 = vmatmul.mubr.bf16.gmra.mrb[0].mxu0 %v2405
    %v3414 = vpop.f32.mrb[0].mxu0
    %v3415 = vadd.f32 %v3302, %v3414
    %v3416 = vpop.f32.mrb[0].mxu0
    %v3417 = vadd.f32 %v3304, %v3416
    %v3418 = vpop.f32.mrb[0].mxu0
    %v3419 = vadd.f32 %v3306, %v3418
    %v3420 = vpop.f32.mrb[0].mxu0
    %v3421 = vadd.f32 %v3308, %v3420
    %3422 = vdwg.mxu0
    %3423 = vmatprep.subr.bf16.mxu0 %v2944
    %3424 = vmatpush1.bf16.msra.mxu0 %v2943
    %3425 = vmatprep.subr.bf16.mxu0 %v2948
    %3426 = vmatpush1.bf16.msra.mxu0 %v2947
    %3427 = vmatprep.subr.bf16.mxu0 %v2952
    %3428 = vmatpush1.bf16.msra.mxu0 %v2951
    %3429 = vmatprep.subr.bf16.mxu0 %v2956
    %3430 = vmatpush1.bf16.msra.mxu0 %v2955
    %3431 = vmatprep.subr.bf16.mxu0 %v2960
    %3432 = vmatpush1.bf16.msra.mxu0 %v2959
    %3433 = vmatprep.subr.bf16.mxu0 %v2964
    %3434 = vmatpush1.bf16.msra.mxu0 %v2963
    %3435 = vmatprep.subr.bf16.mxu0 %v2968
    %3436 = vmatpush1.bf16.msra.mxu0 %v2967
    %3437 = vmatprep.subr.bf16.mxu0 %v2972
    %3438 = vmatpush1.bf16.msra.mxu0 %v2971
    %3439 = vmatprep.subr.bf16.mxu0 %v2976
    %3440 = vmatpush1.bf16.msra.mxu0 %v2975
    %3441 = vmatprep.subr.bf16.mxu0 %v2980
    %3442 = vmatpush1.bf16.msra.mxu0 %v2979
    %3443 = vmatprep.subr.bf16.mxu0 %v2984
    %3444 = vmatpush1.bf16.msra.mxu0 %v2983
    %3445 = vmatprep.subr.bf16.mxu0 %v2988
    %3446 = vmatpush1.bf16.msra.mxu0 %v2987
    %3447 = vmatprep.subr.bf16.mxu0 %v2992
    %3448 = vmatpush1.bf16.msra.mxu0 %v2991
    %3449 = vmatprep.subr.bf16.mxu0 %v2996
    %3450 = vmatpush1.bf16.msra.mxu0 %v2995
    %3451 = vmatprep.subr.bf16.mxu0 %v3000
    %3452 = vmatpush1.bf16.msra.mxu0 %v2999
    %3453 = vmatprep.subr.bf16.mxu0 %v3004
    %3454 = vmatpush1.bf16.msra.mxu0 %v3003
    %3455 = vmatprep.mubr.bf16.mxu0 %v2376
    %3456 = vmatmul.mubr.bf16.gmra.mrb[0].mxu0 %v2375
    %v3457 = vpop.f32.mrb[0].mxu0
    %v3458 = vadd.f32 %v2548, %v3457
    %v3459 = vpop.f32.mrb[0].mxu0
    %v3460 = vadd.f32 %v2552, %v3459
    %v3461 = vpop.f32.mrb[0].mxu0
    %v3462 = vadd.f32 %v2548, %v3461
    %v3463 = vpop.f32.mrb[0].mxu0
    %v3464 = vadd.f32 %v2552, %v3463
    %3465 = vmatprep.mubr.bf16.mxu0 %v2380
    %3466 = vmatmul.mubr.bf16.gmra.mrb[0].mxu0 %v2379
    %v3467 = vpop.f32.mrb[0].mxu0
    %v3468 = vadd.f32 %v2548, %v3467
    %v3469 = vpop.f32.mrb[0].mxu0
    %v3470 = vadd.f32 %v2552, %v3469
    %v3471 = vpop.f32.mrb[0].mxu0
    %v3472 = vadd.f32 %v2548, %v3471
    %v3473 = vpop.f32.mrb[0].mxu0
    %v3474 = vadd.f32 %v2552, %v3473
    %3475 = vmatprep.mubr.bf16.mxu0 %v2384
    %3476 = vmatmul.mubr.bf16.gmra.mrb[0].mxu0 %v2383
    %v3477 = vpop.f32.mrb[0].mxu0
    %v3478 = vadd.f32 %v2548, %v3477
    %v3479 = vpop.f32.mrb[0].mxu0
    %v3480 = vadd.f32 %v2552, %v3479
    %v3481 = vpop.f32.mrb[0].mxu0
    %v3482 = vadd.f32 %v2548, %v3481
    %v3483 = vpop.f32.mrb[0].mxu0
    %v3484 = vadd.f32 %v2552, %v3483
    %3485 = vmatprep.mubr.bf16.mxu0 %v2388
    %3486 = vmatmul.mubr.bf16.gmra.mrb[0].mxu0 %v2387
    %v3487 = vpop.f32.mrb[0].mxu0
    %v3488 = vadd.f32 %v2548, %v3487
    %v3489 = vpop.f32.mrb[0].mxu0
    %v3490 = vadd.f32 %v2552, %v3489
    %v3491 = vpop.f32.mrb[0].mxu0
    %v3492 = vadd.f32 %v2548, %v3491
    %v3493 = vpop.f32.mrb[0].mxu0
    %v3494 = vadd.f32 %v2552, %v3493
    %3495 = vmatprep.mubr.bf16.mxu0 %v2392
    %3496 = vmatmul.mubr.bf16.gmra.mrb[0].mxu0 %v2391
    %v3497 = vpop.f32.mrb[0].mxu0
    %v3498 = vadd.f32 %v2548, %v3497
    %v3499 = vpop.f32.mrb[0].mxu0
    %v3500 = vadd.f32 %v2552, %v3499
    %v3501 = vpop.f32.mrb[0].mxu0
    %v3502 = vadd.f32 %v2548, %v3501
    %v3503 = vpop.f32.mrb[0].mxu0
    %v3504 = vadd.f32 %v2552, %v3503
    %3505 = vmatprep.mubr.bf16.mxu0 %v2396
    %3506 = vmatmul.mubr.bf16.gmra.mrb[0].mxu0 %v2395
    %v3507 = vpop.f32.mrb[0].mxu0
    %v3508 = vadd.f32 %v2548, %v3507
    %v3509 = vpop.f32.mrb[0].mxu0
    %v3510 = vadd.f32 %v2552, %v3509
    %v3511 = vpop.f32.mrb[0].mxu0
    %v3512 = vadd.f32 %v2548, %v3511
    %v3513 = vpop.f32.mrb[0].mxu0
    %v3514 = vadd.f32 %v2552, %v3513
    %3515 = vmatprep.mubr.bf16.mxu0 %v2400
    %3516 = vmatmul.mubr.bf16.gmra.mrb[0].mxu0 %v2399
    %v3517 = vpop.f32.mrb[0].mxu0
    %v3518 = vadd.f32 %v2548, %v3517
    %v3519 = vpop.f32.mrb[0].mxu0
    %v3520 = vadd.f32 %v2552, %v3519
    %v3521 = vpop.f32.mrb[0].mxu0
    %v3522 = vadd.f32 %v2548, %v3521
    %v3523 = vpop.f32.mrb[0].mxu0
    %v3524 = vadd.f32 %v2552, %v3523
    %3525 = vmatprep.mubr.bf16.mxu0 %v2404
    %3526 = vmatmul.mubr.bf16.gmra.mrb[0].mxu0 %v2403
    %v3527 = vpop.f32.mrb[0].mxu0
    %v3528 = vadd.f32 %v2548, %v3527
    %v3529 = vpop.f32.mrb[0].mxu0
    %v3530 = vadd.f32 %v2552, %v3529
    %v3531 = vpop.f32.mrb[0].mxu0
    %v3532 = vadd.f32 %v2548, %v3531
    %v3533 = vpop.f32.mrb[0].mxu0
    %v3534 = vadd.f32 %v2552, %v3533
    %3535 = vdwg.mxu0
    %3536 = vmatprep.subr.bf16.mxu0 %v3008
    %3537 = vmatpush1.bf16.msra.mxu0 %v3007
    %3538 = vmatprep.subr.bf16.mxu0 %v3012
    %3539 = vmatpush1.bf16.msra.mxu0 %v3011
    %3540 = vmatprep.subr.bf16.mxu0 %v3016
    %3541 = vmatpush1.bf16.msra.mxu0 %v3015
    %3542 = vmatprep.subr.bf16.mxu0 %v3020
    %3543 = vmatpush1.bf16.msra.mxu0 %v3019
    %3544 = vmatprep.subr.bf16.mxu0 %v3024
    %3545 = vmatpush1.bf16.msra.mxu0 %v3023
    %3546 = vmatprep.subr.bf16.mxu0 %v3028
    %3547 = vmatpush1.bf16.msra.mxu0 %v3027
    %3548 = vmatprep.subr.bf16.mxu0 %v3032
    %3549 = vmatpush1.bf16.msra.mxu0 %v3031
    %3550 = vmatprep.subr.bf16.mxu0 %v3036
    %3551 = vmatpush1.bf16.msra.mxu0 %v3035
    %3552 = vmatprep.subr.bf16.mxu0 %v3040
    %3553 = vmatpush1.bf16.msra.mxu0 %v3039
    %3554 = vmatprep.subr.bf16.mxu0 %v3044
    %3555 = vmatpush1.bf16.msra.mxu0 %v3043
    %3556 = vmatprep.subr.bf16.mxu0 %v3048
    %3557 = vmatpush1.bf16.msra.mxu0 %v3047
    %3558 = vmatprep.subr.bf16.mxu0 %v3052
    %3559 = vmatpush1.bf16.msra.mxu0 %v3051
    %3560 = vmatprep.subr.bf16.mxu0 %v3056
    %3561 = vmatpush1.bf16.msra.mxu0 %v3055
    %3562 = vmatprep.subr.bf16.mxu0 %v3060
    %3563 = vmatpush1.bf16.msra.mxu0 %v3059
    %3564 = vmatprep.subr.bf16.mxu0 %v3064
    %3565 = vmatpush1.bf16.msra.mxu0 %v3063
    %3566 = vmatprep.subr.bf16.mxu0 %v3068
    %3567 = vmatpush1.bf16.msra.mxu0 %v3067
    %3568 = vmatprep.mubr.bf16.mxu0 %v2378
    %3569 = vmatmul.mubr.bf16.gmra.mrb[0].mxu0 %v2377
    %v3570 = vpop.f32.mrb[0].mxu0
    %v3571 = vadd.f32 %v3458, %v3570
    %v3572 = vpop.f32.mrb[0].mxu0
    %v3573 = vadd.f32 %v3460, %v3572
    %v3574 = vpop.f32.mrb[0].mxu0
    %v3575 = vadd.f32 %v3462, %v3574
    %v3576 = vpop.f32.mrb[0].mxu0
    %v3577 = vadd.f32 %v3464, %v3576
    %3578 = vmatprep.mubr.bf16.mxu0 %v2382
    %3579 = vmatmul.mubr.bf16.gmra.mrb[0].mxu0 %v2381
    %v3580 = vpop.f32.mrb[0].mxu0
    %v3581 = vadd.f32 %v3468, %v3580
    %v3582 = vpop.f32.mrb[0].mxu0
    %v3583 = vadd.f32 %v3470, %v3582
    %v3584 = vpop.f32.mrb[0].mxu0
    %v3585 = vadd.f32 %v3472, %v3584
    %v3586 = vpop.f32.mrb[0].mxu0
    %v3587 = vadd.f32 %v3474, %v3586
    %3588 = vmatprep.mubr.bf16.mxu0 %v2386
    %3589 = vmatmul.mubr.bf16.gmra.mrb[0].mxu0 %v2385
    %v3590 = vpop.f32.mrb[0].mxu0
    %v3591 = vadd.f32 %v3478, %v3590
    %v3592 = vpop.f32.mrb[0].mxu0
    %v3593 = vadd.f32 %v3480, %v3592
    %v3594 = vpop.f32.mrb[0].mxu0
    %v3595 = vadd.f32 %v3482, %v3594
    %v3596 = vpop.f32.mrb[0].mxu0
    %v3597 = vadd.f32 %v3484, %v3596
    %3598 = vmatprep.mubr.bf16.mxu0 %v2390
    %3599 = vmatmul.mubr.bf16.gmra.mrb[0].mxu0 %v2389
    %v3600 = vpop.f32.mrb[0].mxu0
    %v3601 = vadd.f32 %v3488, %v3600
    %v3602 = vpop.f32.mrb[0].mxu0
    %v3603 = vadd.f32 %v3490, %v3602
    %v3604 = vpop.f32.mrb[0].mxu0
    %v3605 = vadd.f32 %v3492, %v3604
    %v3606 = vpop.f32.mrb[0].mxu0
    %v3607 = vadd.f32 %v3494, %v3606
    %3608 = vmatprep.mubr.bf16.mxu0 %v2394
    %3609 = vmatmul.mubr.bf16.gmra.mrb[0].mxu0 %v2393
    %v3610 = vpop.f32.mrb[0].mxu0
    %v3611 = vadd.f32 %v3498, %v3610
    %v3612 = vpop.f32.mrb[0].mxu0
    %v3613 = vadd.f32 %v3500, %v3612
    %v3614 = vpop.f32.mrb[0].mxu0
    %v3615 = vadd.f32 %v3502, %v3614
    %v3616 = vpop.f32.mrb[0].mxu0
    %v3617 = vadd.f32 %v3504, %v3616
    %3618 = vmatprep.mubr.bf16.mxu0 %v2398
    %3619 = vmatmul.mubr.bf16.gmra.mrb[0].mxu0 %v2397
    %v3620 = vpop.f32.mrb[0].mxu0
    %v3621 = vadd.f32 %v3508, %v3620
    %v3622 = vpop.f32.mrb[0].mxu0
    %v3623 = vadd.f32 %v3510, %v3622
    %v3624 = vpop.f32.mrb[0].mxu0
    %v3625 = vadd.f32 %v3512, %v3624
    %v3626 = vpop.f32.mrb[0].mxu0
    %v3627 = vadd.f32 %v3514, %v3626
    %3628 = vmatprep.mubr.bf16.mxu0 %v2402
    %3629 = vmatmul.mubr.bf16.gmra.mrb[0].mxu0 %v2401
    %v3630 = vpop.f32.mrb[0].mxu0
    %v3631 = vadd.f32 %v3518, %v3630
    %v3632 = vpop.f32.mrb[0].mxu0
    %v3633 = vadd.f32 %v3520, %v3632
    %v3634 = vpop.f32.mrb[0].mxu0
    %v3635 = vadd.f32 %v3522, %v3634
    %v3636 = vpop.f32.mrb[0].mxu0
    %v3637 = vadd.f32 %v3524, %v3636
    %3638 = vmatprep.mubr.bf16.mxu0 %v2406
    %3639 = vmatmul.mubr.bf16.gmra.mrb[0].mxu0 %v2405
    %v3640 = vpop.f32.mrb[0].mxu0
    %v3641 = vadd.f32 %v3528, %v3640
    %v3642 = vpop.f32.mrb[0].mxu0
    %v3643 = vadd.f32 %v3530, %v3642
    %v3644 = vpop.f32.mrb[0].mxu0
    %v3645 = vadd.f32 %v3532, %v3644
    %v3646 = vpop.f32.mrb[0].mxu0
    %v3647 = vadd.f32 %v3534, %v3646
    %3648 = vdwg.mxu0
    %v3649 = vmax.f32 %v3345, 0.0
    %v3650 = vmax.f32 %v3347, 0.0
    %v3651 = vmax.f32 %v3571, 0.0
    %v3652 = vmax.f32 %v3573, 0.0
    %v3653 = vmax.f32 %v3349, 0.0
    %v3654 = vmax.f32 %v3351, 0.0
    %v3655 = vmax.f32 %v3575, 0.0
    %v3656 = vmax.f32 %v3577, 0.0
    %v3657 = vmax.f32 %v3355, 0.0
    %v3658 = vmax.f32 %v3357, 0.0
    %v3659 = vmax.f32 %v3581, 0.0
    %v3660 = vmax.f32 %v3583, 0.0
    %v3661 = vmax.f32 %v3359, 0.0
    %v3662 = vmax.f32 %v3361, 0.0
    %v3663 = vmax.f32 %v3585, 0.0
    %v3664 = vmax.f32 %v3587, 0.0
    %v3665 = vmax.f32 %v3365, 0.0
    %v3666 = vmax.f32 %v3367, 0.0
    %v3667 = vmax.f32 %v3591, 0.0
    %v3668 = vmax.f32 %v3593, 0.0
    %v3669 = vmax.f32 %v3369, 0.0
    %v3670 = vmax.f32 %v3371, 0.0
    %v3671 = vmax.f32 %v3595, 0.0
    %v3672 = vmax.f32 %v3597, 0.0
    %v3673 = vmax.f32 %v3375, 0.0
    %v3674 = vmax.f32 %v3377, 0.0
    %v3675 = vmax.f32 %v3601, 0.0
    %v3676 = vmax.f32 %v3603, 0.0
    %v3677 = vmax.f32 %v3379, 0.0
    %v3678 = vmax.f32 %v3381, 0.0
    %v3679 = vmax.f32 %v3605, 0.0
    %v3680 = vmax.f32 %v3607, 0.0
    %v3681 = vmax.f32 %v3385, 0.0
    %v3682 = vmax.f32 %v3387, 0.0
    %v3683 = vmax.f32 %v3611, 0.0
    %v3684 = vmax.f32 %v3613, 0.0
    %v3685 = vmax.f32 %v3389, 0.0
    %v3686 = vmax.f32 %v3391, 0.0
    %v3687 = vmax.f32 %v3615, 0.0
    %v3688 = vmax.f32 %v3617, 0.0
    %v3689 = vmax.f32 %v3395, 0.0
    %v3690 = vmax.f32 %v3397, 0.0
    %v3691 = vmax.f32 %v3621, 0.0
    %v3692 = vmax.f32 %v3623, 0.0
    %v3693 = vmax.f32 %v3399, 0.0
    %v3694 = vmax.f32 %v3401, 0.0
    %v3695 = vmax.f32 %v3625, 0.0
    %v3696 = vmax.f32 %v3627, 0.0
    %v3697 = vmax.f32 %v3405, 0.0
    %v3698 = vmax.f32 %v3407, 0.0
    %v3699 = vmax.f32 %v3631, 0.0
    %v3700 = vmax.f32 %v3633, 0.0
    %v3701 = vmax.f32 %v3409, 0.0
    %v3702 = vmax.f32 %v3411, 0.0
    %v3703 = vmax.f32 %v3635, 0.0
    %v3704 = vmax.f32 %v3637, 0.0
    %v3705 = vmax.f32 %v3415, 0.0
    %v3706 = vmax.f32 %v3417, 0.0
    %v3707 = vmax.f32 %v3641, 0.0
    %v3708 = vmax.f32 %v3643, 0.0
    %v3709 = vmax.f32 %v3419, 0.0
    %v3710 = vmax.f32 %v3421, 0.0
    %v3711 = vmax.f32 %v3645, 0.0
    %v3712 = vmax.f32 %v3647, 0.0
    %v3713 = vpack.c.bf16 %v3653, %v3649
    %v3714 = vpack.c.bf16 %v3654, %v3650
    %v3715 = vpack.c.bf16 %v3655, %v3651
    %v3716 = vpack.c.bf16 %v3656, %v3652
    %v3717 = vpack.c.bf16 %v3661, %v3657
    %v3718 = vpack.c.bf16 %v3662, %v3658
    %v3719 = vpack.c.bf16 %v3663, %v3659
    %v3720 = vpack.c.bf16 %v3664, %v3660
    %v3721 = vpack.c.bf16 %v3669, %v3665
    %v3722 = vpack.c.bf16 %v3670, %v3666
    %v3723 = vpack.c.bf16 %v3671, %v3667
    %v3724 = vpack.c.bf16 %v3672, %v3668
    %v3725 = vpack.c.bf16 %v3677, %v3673
    %v3726 = vpack.c.bf16 %v3678, %v3674
    %v3727 = vpack.c.bf16 %v3679, %v3675
    %v3728 = vpack.c.bf16 %v3680, %v3676
    %v3729 = vpack.c.bf16 %v3685, %v3681
    %v3730 = vpack.c.bf16 %v3686, %v3682
    %v3731 = vpack.c.bf16 %v3687, %v3683
    %v3732 = vpack.c.bf16 %v3688, %v3684
    %v3733 = vpack.c.bf16 %v3693, %v3689
    %v3734 = vpack.c.bf16 %v3694, %v3690
    %v3735 = vpack.c.bf16 %v3695, %v3691
    %v3736 = vpack.c.bf16 %v3696, %v3692
    %v3737 = vpack.c.bf16 %v3701, %v3697
    %v3738 = vpack.c.bf16 %v3702, %v3698
    %v3739 = vpack.c.bf16 %v3703, %v3699
    %v3740 = vpack.c.bf16 %v3704, %v3700
    %v3741 = vpack.c.bf16 %v3709, %v3705
    %v3742 = vpack.c.bf16 %v3710, %v3706
    %v3743 = vpack.c.bf16 %v3711, %v3707
    %v3744 = vpack.c.bf16 %v3712, %v3708
    %v3745 = vld [vmem:[#allocation11] sm:$0xff]
    %v3746 = vld [vmem:[#allocation11 + $0x8] sm:$0xff]
    %v3747 = vld [vmem:[#allocation11 + $0x10] sm:$0xff]
    %v3748 = vld [vmem:[#allocation11 + $0x18] sm:$0xff]
    %v3749 = vld [vmem:[#allocation11 + $0x20] sm:$0xff]
    %v3750 = vld [vmem:[#allocation11 + $0x28] sm:$0xff]
    %v3751 = vld [vmem:[#allocation11 + $0x30] sm:$0xff]
    %v3752 = vld [vmem:[#allocation11 + $0x38] sm:$0xff]
    %v3753 = vld [vmem:[#allocation11 + $0x40] sm:$0xff]
    %v3754 = vld [vmem:[#allocation11 + $0x48] sm:$0xff]
    %v3755 = vld [vmem:[#allocation11 + $0x50] sm:$0xff]
    %v3756 = vld [vmem:[#allocation11 + $0x58] sm:$0xff]
    %v3757 = vld [vmem:[#allocation11 + $0x60] sm:$0xff]
    %v3758 = vld [vmem:[#allocation11 + $0x68] sm:$0xff]
    %v3759 = vld [vmem:[#allocation11 + $0x70] sm:$0xff]
    %v3760 = vld [vmem:[#allocation11 + $0x78] sm:$0xff]
    %v3761 = vld [vmem:[#allocation11 + $0x80] sm:$0xff]
    %v3762 = vld [vmem:[#allocation11 + $0x88] sm:$0xff]
    %v3763 = vld [vmem:[#allocation11 + $0x90] sm:$0xff]
    %v3764 = vld [vmem:[#allocation11 + $0x98] sm:$0xff]
    %v3765 = vld [vmem:[#allocation11 + $0xa0] sm:$0xff]
    %v3766 = vld [vmem:[#allocation11 + $0xa8] sm:$0xff]
    %v3767 = vld [vmem:[#allocation11 + $0xb0] sm:$0xff]
    %v3768 = vld [vmem:[#allocation11 + $0xb8] sm:$0xff]
    %v3769 = vld [vmem:[#allocation11 + $0xc0] sm:$0xff]
    %v3770 = vld [vmem:[#allocation11 + $0xc8] sm:$0xff]
    %v3771 = vld [vmem:[#allocation11 + $0xd0] sm:$0xff]
    %v3772 = vld [vmem:[#allocation11 + $0xd8] sm:$0xff]
    %v3773 = vld [vmem:[#allocation11 + $0xe0] sm:$0xff]
    %v3774 = vld [vmem:[#allocation11 + $0xe8] sm:$0xff]
    %v3775 = vld [vmem:[#allocation11 + $0xf0] sm:$0xff]
    %v3776 = vld [vmem:[#allocation11 + $0xf8] sm:$0xff]
    %v3777 = vld [vmem:[#allocation11 + $0x100] sm:$0xff]
    %v3778 = vld [vmem:[#allocation11 + $0x108] sm:$0xff]
    %v3779 = vld [vmem:[#allocation11 + $0x110] sm:$0xff]
    %v3780 = vld [vmem:[#allocation11 + $0x118] sm:$0xff]
    %v3781 = vld [vmem:[#allocation11 + $0x120] sm:$0xff]
    %v3782 = vld [vmem:[#allocation11 + $0x128] sm:$0xff]
    %v3783 = vld [vmem:[#allocation11 + $0x130] sm:$0xff]
    %v3784 = vld [vmem:[#allocation11 + $0x138] sm:$0xff]
    %v3785 = vld [vmem:[#allocation11 + $0x140] sm:$0xff]
    %v3786 = vld [vmem:[#allocation11 + $0x148] sm:$0xff]
    %v3787 = vld [vmem:[#allocation11 + $0x150] sm:$0xff]
    %v3788 = vld [vmem:[#allocation11 + $0x158] sm:$0xff]
    %v3789 = vld [vmem:[#allocation11 + $0x160] sm:$0xff]
    %v3790 = vld [vmem:[#allocation11 + $0x168] sm:$0xff]
    %v3791 = vld [vmem:[#allocation11 + $0x170] sm:$0xff]
    %v3792 = vld [vmem:[#allocation11 + $0x178] sm:$0xff]
    %v3793 = vld [vmem:[#allocation11 + $0x180] sm:$0xff]
    %v3794 = vld [vmem:[#allocation11 + $0x188] sm:$0xff]
    %v3795 = vld [vmem:[#allocation11 + $0x190] sm:$0xff]
    %v3796 = vld [vmem:[#allocation11 + $0x198] sm:$0xff]
    %v3797 = vld [vmem:[#allocation11 + $0x1a0] sm:$0xff]
    %v3798 = vld [vmem:[#allocation11 + $0x1a8] sm:$0xff]
    %v3799 = vld [vmem:[#allocation11 + $0x1b0] sm:$0xff]
    %v3800 = vld [vmem:[#allocation11 + $0x1b8] sm:$0xff]
    %v3801 = vld [vmem:[#allocation11 + $0x1c0] sm:$0xff]
    %v3802 = vld [vmem:[#allocation11 + $0x1c8] sm:$0xff]
    %v3803 = vld [vmem:[#allocation11 + $0x1d0] sm:$0xff]
    %v3804 = vld [vmem:[#allocation11 + $0x1d8] sm:$0xff]
    %v3805 = vld [vmem:[#allocation11 + $0x1e0] sm:$0xff]
    %v3806 = vld [vmem:[#allocation11 + $0x1e8] sm:$0xff]
    %v3807 = vld [vmem:[#allocation11 + $0x1f0] sm:$0xff]
    %v3808 = vld [vmem:[#allocation11 + $0x1f8] sm:$0xff]
    %v3809 = vld [vmem:[#allocation11 + $0x200] sm:$0xff]
    %v3810 = vld [vmem:[#allocation11 + $0x208] sm:$0xff]
    %v3811 = vld [vmem:[#allocation11 + $0x210] sm:$0xff]
    %v3812 = vld [vmem:[#allocation11 + $0x218] sm:$0xff]
    %v3813 = vld [vmem:[#allocation11 + $0x220] sm:$0xff]
    %v3814 = vld [vmem:[#allocation11 + $0x228] sm:$0xff]
    %v3815 = vld [vmem:[#allocation11 + $0x230] sm:$0xff]
    %v3816 = vld [vmem:[#allocation11 + $0x238] sm:$0xff]
    %v3817 = vld [vmem:[#allocation11 + $0x240] sm:$0xff]
    %v3818 = vld [vmem:[#allocation11 + $0x248] sm:$0xff]
    %v3819 = vld [vmem:[#allocation11 + $0x250] sm:$0xff]
    %v3820 = vld [vmem:[#allocation11 + $0x258] sm:$0xff]
    %v3821 = vld [vmem:[#allocation11 + $0x260] sm:$0xff]
    %v3822 = vld [vmem:[#allocation11 + $0x268] sm:$0xff]
    %v3823 = vld [vmem:[#allocation11 + $0x270] sm:$0xff]
    %v3824 = vld [vmem:[#allocation11 + $0x278] sm:$0xff]
    %v3825 = vld [vmem:[#allocation11 + $0x280] sm:$0xff]
    %v3826 = vld [vmem:[#allocation11 + $0x288] sm:$0xff]
    %v3827 = vld [vmem:[#allocation11 + $0x290] sm:$0xff]
    %v3828 = vld [vmem:[#allocation11 + $0x298] sm:$0xff]
    %v3829 = vld [vmem:[#allocation11 + $0x2a0] sm:$0xff]
    %v3830 = vld [vmem:[#allocation11 + $0x2a8] sm:$0xff]
    %v3831 = vld [vmem:[#allocation11 + $0x2b0] sm:$0xff]
    %v3832 = vld [vmem:[#allocation11 + $0x2b8] sm:$0xff]
    %v3833 = vld [vmem:[#allocation11 + $0x2c0] sm:$0xff]
    %v3834 = vld [vmem:[#allocation11 + $0x2c8] sm:$0xff]
    %v3835 = vld [vmem:[#allocation11 + $0x2d0] sm:$0xff]
    %v3836 = vld [vmem:[#allocation11 + $0x2d8] sm:$0xff]
    %v3837 = vld [vmem:[#allocation11 + $0x2e0] sm:$0xff]
    %v3838 = vld [vmem:[#allocation11 + $0x2e8] sm:$0xff]
    %v3839 = vld [vmem:[#allocation11 + $0x2f0] sm:$0xff]
    %v3840 = vld [vmem:[#allocation11 + $0x2f8] sm:$0xff]
    %v3841 = vld [vmem:[#allocation11 + $0x300] sm:$0xff]
    %v3842 = vld [vmem:[#allocation11 + $0x308] sm:$0xff]
    %v3843 = vld [vmem:[#allocation11 + $0x310] sm:$0xff]
    %v3844 = vld [vmem:[#allocation11 + $0x318] sm:$0xff]
    %v3845 = vld [vmem:[#allocation11 + $0x320] sm:$0xff]
    %v3846 = vld [vmem:[#allocation11 + $0x328] sm:$0xff]
    %v3847 = vld [vmem:[#allocation11 + $0x330] sm:$0xff]
    %v3848 = vld [vmem:[#allocation11 + $0x338] sm:$0xff]
    %v3849 = vld [vmem:[#allocation11 + $0x340] sm:$0xff]
    %v3850 = vld [vmem:[#allocation11 + $0x348] sm:$0xff]
    %v3851 = vld [vmem:[#allocation11 + $0x350] sm:$0xff]
    %v3852 = vld [vmem:[#allocation11 + $0x358] sm:$0xff]
    %v3853 = vld [vmem:[#allocation11 + $0x360] sm:$0xff]
    %v3854 = vld [vmem:[#allocation11 + $0x368] sm:$0xff]
    %v3855 = vld [vmem:[#allocation11 + $0x370] sm:$0xff]
    %v3856 = vld [vmem:[#allocation11 + $0x378] sm:$0xff]
    %v3857 = vld [vmem:[#allocation11 + $0x380] sm:$0xff]
    %v3858 = vld [vmem:[#allocation11 + $0x388] sm:$0xff]
    %v3859 = vld [vmem:[#allocation11 + $0x390] sm:$0xff]
    %v3860 = vld [vmem:[#allocation11 + $0x398] sm:$0xff]
    %v3861 = vld [vmem:[#allocation11 + $0x3a0] sm:$0xff]
    %v3862 = vld [vmem:[#allocation11 + $0x3a8] sm:$0xff]
    %v3863 = vld [vmem:[#allocation11 + $0x3b0] sm:$0xff]
    %v3864 = vld [vmem:[#allocation11 + $0x3b8] sm:$0xff]
    %v3865 = vld [vmem:[#allocation11 + $0x3c0] sm:$0xff]
    %v3866 = vld [vmem:[#allocation11 + $0x3c8] sm:$0xff]
    %v3867 = vld [vmem:[#allocation11 + $0x3d0] sm:$0xff]
    %v3868 = vld [vmem:[#allocation11 + $0x3d8] sm:$0xff]
    %v3869 = vld [vmem:[#allocation11 + $0x3e0] sm:$0xff]
    %v3870 = vld [vmem:[#allocation11 + $0x3e8] sm:$0xff]
    %v3871 = vld [vmem:[#allocation11 + $0x3f0] sm:$0xff]
    %v3872 = vld [vmem:[#allocation11 + $0x3f8] sm:$0xff]
    %v3873 = vld [vmem:[%s8] sm:$0xf]
    %v3875 = vlaneseq
    %v3876 = vshrl.u32 %v3875, 7
    %v3877 = vsub.s32 0, %v3876
    %v3878 = vrot.slane %v3873, %v3877
    %v3879 = vlaneseq
    %v3880 = vshrl.u32 %v3879, 7
    %v3881 = vsub.s32 1, %v3880
    %v3882 = vrot.slane %v3873, %v3881
    %v3883 = vlaneseq
    %v3884 = vshrl.u32 %v3883, 7
    %v3885 = vsub.s32 2, %v3884
    %v3886 = vrot.slane %v3873, %v3885
    %v3887 = vlaneseq
    %v3888 = vshrl.u32 %v3887, 7
    %v3889 = vsub.s32 3, %v3888
    %v3890 = vrot.slane %v3873, %v3889
    %v4023 = vunpack.c.l.b16 %v3745
    %v4024 = vunpack.c.h.b16 %v3745
    %v4025 = vunpack.c.l.b16 %v3746
    %v4026 = vunpack.c.h.b16 %v3746
    %v4027 = vunpack.c.l.b16 %v3747
    %v4028 = vunpack.c.h.b16 %v3747
    %v4029 = vunpack.c.l.b16 %v3748
    %v4030 = vunpack.c.h.b16 %v3748
    %v4031 = vunpack.c.l.b16 %v3749
    %v4032 = vunpack.c.h.b16 %v3749
    %v4033 = vunpack.c.l.b16 %v3750
    %v4034 = vunpack.c.h.b16 %v3750
    %v4035 = vunpack.c.l.b16 %v3751
    %v4036 = vunpack.c.h.b16 %v3751
    %v4037 = vunpack.c.l.b16 %v3752
    %v4038 = vunpack.c.h.b16 %v3752
    %v4039 = vunpack.c.l.b16 %v3753
    %v4040 = vunpack.c.h.b16 %v3753
    %v4041 = vunpack.c.l.b16 %v3754
    %v4042 = vunpack.c.h.b16 %v3754
    %v4043 = vunpack.c.l.b16 %v3755
    %v4044 = vunpack.c.h.b16 %v3755
    %v4045 = vunpack.c.l.b16 %v3756
    %v4046 = vunpack.c.h.b16 %v3756
    %v4047 = vunpack.c.l.b16 %v3757
    %v4048 = vunpack.c.h.b16 %v3757
    %v4049 = vunpack.c.l.b16 %v3758
    %v4050 = vunpack.c.h.b16 %v3758
    %v4051 = vunpack.c.l.b16 %v3759
    %v4052 = vunpack.c.h.b16 %v3759
    %v4053 = vunpack.c.l.b16 %v3760
    %v4054 = vunpack.c.h.b16 %v3760
    %v4055 = vunpack.c.l.b16 %v3761
    %v4056 = vunpack.c.h.b16 %v3761
    %v4057 = vunpack.c.l.b16 %v3762
    %v4058 = vunpack.c.h.b16 %v3762
    %v4059 = vunpack.c.l.b16 %v3763
    %v4060 = vunpack.c.h.b16 %v3763
    %v4061 = vunpack.c.l.b16 %v3764
    %v4062 = vunpack.c.h.b16 %v3764
    %v4063 = vunpack.c.l.b16 %v3765
    %v4064 = vunpack.c.h.b16 %v3765
    %v4065 = vunpack.c.l.b16 %v3766
    %v4066 = vunpack.c.h.b16 %v3766
    %v4067 = vunpack.c.l.b16 %v3767
    %v4068 = vunpack.c.h.b16 %v3767
    %v4069 = vunpack.c.l.b16 %v3768
    %v4070 = vunpack.c.h.b16 %v3768
    %v4071 = vunpack.c.l.b16 %v3769
    %v4072 = vunpack.c.h.b16 %v3769
    %v4073 = vunpack.c.l.b16 %v3770
    %v4074 = vunpack.c.h.b16 %v3770
    %v4075 = vunpack.c.l.b16 %v3771
    %v4076 = vunpack.c.h.b16 %v3771
    %v4077 = vunpack.c.l.b16 %v3772
    %v4078 = vunpack.c.h.b16 %v3772
    %v4079 = vunpack.c.l.b16 %v3773
    %v4080 = vunpack.c.h.b16 %v3773
    %v4081 = vunpack.c.l.b16 %v3774
    %v4082 = vunpack.c.h.b16 %v3774
    %v4083 = vunpack.c.l.b16 %v3775
    %v4084 = vunpack.c.h.b16 %v3775
    %v4085 = vunpack.c.l.b16 %v3776
    %v4086 = vunpack.c.h.b16 %v3776
    %v4087 = vunpack.c.l.b16 %v3777
    %v4088 = vunpack.c.h.b16 %v3777
    %v4089 = vunpack.c.l.b16 %v3778
    %v4090 = vunpack.c.h.b16 %v3778
    %v4091 = vunpack.c.l.b16 %v3779
    %v4092 = vunpack.c.h.b16 %v3779
    %v4093 = vunpack.c.l.b16 %v3780
    %v4094 = vunpack.c.h.b16 %v3780
    %v4095 = vunpack.c.l.b16 %v3781
    %v4096 = vunpack.c.h.b16 %v3781
    %v4097 = vunpack.c.l.b16 %v3782
    %v4098 = vunpack.c.h.b16 %v3782
    %v4099 = vunpack.c.l.b16 %v3783
    %v4100 = vunpack.c.h.b16 %v3783
    %v4101 = vunpack.c.l.b16 %v3784
    %v4102 = vunpack.c.h.b16 %v3784
    %v4103 = vunpack.c.l.b16 %v3785
    %v4104 = vunpack.c.h.b16 %v3785
    %v4105 = vunpack.c.l.b16 %v3786
    %v4106 = vunpack.c.h.b16 %v3786
    %v4107 = vunpack.c.l.b16 %v3787
    %v4108 = vunpack.c.h.b16 %v3787
    %v4109 = vunpack.c.l.b16 %v3788
    %v4110 = vunpack.c.h.b16 %v3788
    %v4111 = vunpack.c.l.b16 %v3789
    %v4112 = vunpack.c.h.b16 %v3789
    %v4113 = vunpack.c.l.b16 %v3790
    %v4114 = vunpack.c.h.b16 %v3790
    %v4115 = vunpack.c.l.b16 %v3791
    %v4116 = vunpack.c.h.b16 %v3791
    %v4117 = vunpack.c.l.b16 %v3792
    %v4118 = vunpack.c.h.b16 %v3792
    %v4119 = vunpack.c.l.b16 %v3793
    %v4120 = vunpack.c.h.b16 %v3793
    %v4121 = vunpack.c.l.b16 %v3794
    %v4122 = vunpack.c.h.b16 %v3794
    %v4123 = vunpack.c.l.b16 %v3795
    %v4124 = vunpack.c.h.b16 %v3795
    %v4125 = vunpack.c.l.b16 %v3796
    %v4126 = vunpack.c.h.b16 %v3796
    %v4127 = vunpack.c.l.b16 %v3797
    %v4128 = vunpack.c.h.b16 %v3797
    %v4129 = vunpack.c.l.b16 %v3798
    %v4130 = vunpack.c.h.b16 %v3798
    %v4131 = vunpack.c.l.b16 %v3799
    %v4132 = vunpack.c.h.b16 %v3799
    %v4133 = vunpack.c.l.b16 %v3800
    %v4134 = vunpack.c.h.b16 %v3800
    %v4135 = vunpack.c.l.b16 %v3801
    %v4136 = vunpack.c.h.b16 %v3801
    %v4137 = vunpack.c.l.b16 %v3802
    %v4138 = vunpack.c.h.b16 %v3802
    %v4139 = vunpack.c.l.b16 %v3803
    %v4140 = vunpack.c.h.b16 %v3803
    %v4141 = vunpack.c.l.b16 %v3804
    %v4142 = vunpack.c.h.b16 %v3804
    %v4143 = vunpack.c.l.b16 %v3805
    %v4144 = vunpack.c.h.b16 %v3805
    %v4145 = vunpack.c.l.b16 %v3806
    %v4146 = vunpack.c.h.b16 %v3806
    %v4147 = vunpack.c.l.b16 %v3807
    %v4148 = vunpack.c.h.b16 %v3807
    %v4149 = vunpack.c.l.b16 %v3808
    %v4150 = vunpack.c.h.b16 %v3808
    %v4151 = vunpack.c.l.b16 %v3809
    %v4152 = vunpack.c.h.b16 %v3809
    %v4153 = vunpack.c.l.b16 %v3810
    %v4154 = vunpack.c.h.b16 %v3810
    %v4155 = vunpack.c.l.b16 %v3811
    %v4156 = vunpack.c.h.b16 %v3811
    %v4157 = vunpack.c.l.b16 %v3812
    %v4158 = vunpack.c.h.b16 %v3812
    %v4159 = vunpack.c.l.b16 %v3813
    %v4160 = vunpack.c.h.b16 %v3813
    %v4161 = vunpack.c.l.b16 %v3814
    %v4162 = vunpack.c.h.b16 %v3814
    %v4163 = vunpack.c.l.b16 %v3815
    %v4164 = vunpack.c.h.b16 %v3815
    %v4165 = vunpack.c.l.b16 %v3816
    %v4166 = vunpack.c.h.b16 %v3816
    %v4167 = vunpack.c.l.b16 %v3817
    %v4168 = vunpack.c.h.b16 %v3817
    %v4169 = vunpack.c.l.b16 %v3818
    %v4170 = vunpack.c.h.b16 %v3818
    %v4171 = vunpack.c.l.b16 %v3819
    %v4172 = vunpack.c.h.b16 %v3819
    %v4173 = vunpack.c.l.b16 %v3820
    %v4174 = vunpack.c.h.b16 %v3820
    %v4175 = vunpack.c.l.b16 %v3821
    %v4176 = vunpack.c.h.b16 %v3821
    %v4177 = vunpack.c.l.b16 %v3822
    %v4178 = vunpack.c.h.b16 %v3822
    %v4179 = vunpack.c.l.b16 %v3823
    %v4180 = vunpack.c.h.b16 %v3823
    %v4181 = vunpack.c.l.b16 %v3824
    %v4182 = vunpack.c.h.b16 %v3824
    %v4183 = vunpack.c.l.b16 %v3825
    %v4184 = vunpack.c.h.b16 %v3825
    %v4185 = vunpack.c.l.b16 %v3826
    %v4186 = vunpack.c.h.b16 %v3826
    %v4187 = vunpack.c.l.b16 %v3827
    %v4188 = vunpack.c.h.b16 %v3827
    %v4189 = vunpack.c.l.b16 %v3828
    %v4190 = vunpack.c.h.b16 %v3828
    %v4191 = vunpack.c.l.b16 %v3829
    %v4192 = vunpack.c.h.b16 %v3829
    %v4193 = vunpack.c.l.b16 %v3830
    %v4194 = vunpack.c.h.b16 %v3830
    %v4195 = vunpack.c.l.b16 %v3831
    %v4196 = vunpack.c.h.b16 %v3831
    %v4197 = vunpack.c.l.b16 %v3832
    %v4198 = vunpack.c.h.b16 %v3832
    %v4199 = vunpack.c.l.b16 %v3833
    %v4200 = vunpack.c.h.b16 %v3833
    %v4201 = vunpack.c.l.b16 %v3834
    %v4202 = vunpack.c.h.b16 %v3834
    %v4203 = vunpack.c.l.b16 %v3835
    %v4204 = vunpack.c.h.b16 %v3835
    %v4205 = vunpack.c.l.b16 %v3836
    %v4206 = vunpack.c.h.b16 %v3836
    %v4207 = vunpack.c.l.b16 %v3837
    %v4208 = vunpack.c.h.b16 %v3837
    %v4209 = vunpack.c.l.b16 %v3838
    %v4210 = vunpack.c.h.b16 %v3838
    %v4211 = vunpack.c.l.b16 %v3839
    %v4212 = vunpack.c.h.b16 %v3839
    %v4213 = vunpack.c.l.b16 %v3840
    %v4214 = vunpack.c.h.b16 %v3840
    %v4215 = vunpack.c.l.b16 %v3841
    %v4216 = vunpack.c.h.b16 %v3841
    %v4217 = vunpack.c.l.b16 %v3842
    %v4218 = vunpack.c.h.b16 %v3842
    %v4219 = vunpack.c.l.b16 %v3843
    %v4220 = vunpack.c.h.b16 %v3843
    %v4221 = vunpack.c.l.b16 %v3844
    %v4222 = vunpack.c.h.b16 %v3844
    %v4223 = vunpack.c.l.b16 %v3845
    %v4224 = vunpack.c.h.b16 %v3845
    %v4225 = vunpack.c.l.b16 %v3846
    %v4226 = vunpack.c.h.b16 %v3846
    %v4227 = vunpack.c.l.b16 %v3847
    %v4228 = vunpack.c.h.b16 %v3847
    %v4229 = vunpack.c.l.b16 %v3848
    %v4230 = vunpack.c.h.b16 %v3848
    %v4231 = vunpack.c.l.b16 %v3849
    %v4232 = vunpack.c.h.b16 %v3849
    %v4233 = vunpack.c.l.b16 %v3850
    %v4234 = vunpack.c.h.b16 %v3850
    %v4235 = vunpack.c.l.b16 %v3851
    %v4236 = vunpack.c.h.b16 %v3851
    %v4237 = vunpack.c.l.b16 %v3852
    %v4238 = vunpack.c.h.b16 %v3852
    %v4239 = vunpack.c.l.b16 %v3853
    %v4240 = vunpack.c.h.b16 %v3853
    %v4241 = vunpack.c.l.b16 %v3854
    %v4242 = vunpack.c.h.b16 %v3854
    %v4243 = vunpack.c.l.b16 %v3855
    %v4244 = vunpack.c.h.b16 %v3855
    %v4245 = vunpack.c.l.b16 %v3856
    %v4246 = vunpack.c.h.b16 %v3856
    %v4247 = vunpack.c.l.b16 %v3857
    %v4248 = vunpack.c.h.b16 %v3857
    %v4249 = vunpack.c.l.b16 %v3858
    %v4250 = vunpack.c.h.b16 %v3858
    %v4251 = vunpack.c.l.b16 %v3859
    %v4252 = vunpack.c.h.b16 %v3859
    %v4253 = vunpack.c.l.b16 %v3860
    %v4254 = vunpack.c.h.b16 %v3860
    %v4255 = vunpack.c.l.b16 %v3861
    %v4256 = vunpack.c.h.b16 %v3861
    %v4257 = vunpack.c.l.b16 %v3862
    %v4258 = vunpack.c.h.b16 %v3862
    %v4259 = vunpack.c.l.b16 %v3863
    %v4260 = vunpack.c.h.b16 %v3863
    %v4261 = vunpack.c.l.b16 %v3864
    %v4262 = vunpack.c.h.b16 %v3864
    %v4263 = vunpack.c.l.b16 %v3865
    %v4264 = vunpack.c.h.b16 %v3865
    %v4265 = vunpack.c.l.b16 %v3866
    %v4266 = vunpack.c.h.b16 %v3866
    %v4267 = vunpack.c.l.b16 %v3867
    %v4268 = vunpack.c.h.b16 %v3867
    %v4269 = vunpack.c.l.b16 %v3868
    %v4270 = vunpack.c.h.b16 %v3868
    %v4271 = vunpack.c.l.b16 %v3869
    %v4272 = vunpack.c.h.b16 %v3869
    %v4273 = vunpack.c.l.b16 %v3870
    %v4274 = vunpack.c.h.b16 %v3870
    %v4275 = vunpack.c.l.b16 %v3871
    %v4276 = vunpack.c.h.b16 %v3871
    %v4277 = vunpack.c.l.b16 %v3872
    %v4278 = vunpack.c.h.b16 %v3872
    %v4279 = vpack.c.b16 %v4027, %v4023
    %v4280 = vpack.c.b16 %v4028, %v4024
    %v4281 = vpack.c.b16 %v4029, %v4025
    %v4282 = vpack.c.b16 %v4030, %v4026
    %v4283 = vpack.c.b16 %v4035, %v4031
    %v4284 = vpack.c.b16 %v4036, %v4032
    %v4285 = vpack.c.b16 %v4037, %v4033
    %v4286 = vpack.c.b16 %v4038, %v4034
    %v4287 = vpack.c.b16 %v4043, %v4039
    %v4288 = vpack.c.b16 %v4044, %v4040
    %v4289 = vpack.c.b16 %v4045, %v4041
    %v4290 = vpack.c.b16 %v4046, %v4042
    %v4291 = vpack.c.b16 %v4051, %v4047
    %v4292 = vpack.c.b16 %v4052, %v4048
    %v4293 = vpack.c.b16 %v4053, %v4049
    %v4294 = vpack.c.b16 %v4054, %v4050
    %v4295 = vpack.c.b16 %v4059, %v4055
    %v4296 = vpack.c.b16 %v4060, %v4056
    %v4297 = vpack.c.b16 %v4061, %v4057
    %v4298 = vpack.c.b16 %v4062, %v4058
    %v4299 = vpack.c.b16 %v4067, %v4063
    %v4300 = vpack.c.b16 %v4068, %v4064
    %v4301 = vpack.c.b16 %v4069, %v4065
    %v4302 = vpack.c.b16 %v4070, %v4066
    %v4303 = vpack.c.b16 %v4075, %v4071
    %v4304 = vpack.c.b16 %v4076, %v4072
    %v4305 = vpack.c.b16 %v4077, %v4073
    %v4306 = vpack.c.b16 %v4078, %v4074
    %v4307 = vpack.c.b16 %v4083, %v4079
    %v4308 = vpack.c.b16 %v4084, %v4080
    %v4309 = vpack.c.b16 %v4085, %v4081
    %v4310 = vpack.c.b16 %v4086, %v4082
    %v4311 = vpack.c.b16 %v4091, %v4087
    %v4312 = vpack.c.b16 %v4092, %v4088
    %v4313 = vpack.c.b16 %v4093, %v4089
    %v4314 = vpack.c.b16 %v4094, %v4090
    %v4315 = vpack.c.b16 %v4099, %v4095
    %v4316 = vpack.c.b16 %v4100, %v4096
    %v4317 = vpack.c.b16 %v4101, %v4097
    %v4318 = vpack.c.b16 %v4102, %v4098
    %v4319 = vpack.c.b16 %v4107, %v4103
    %v4320 = vpack.c.b16 %v4108, %v4104
    %v4321 = vpack.c.b16 %v4109, %v4105
    %v4322 = vpack.c.b16 %v4110, %v4106
    %v4323 = vpack.c.b16 %v4115, %v4111
    %v4324 = vpack.c.b16 %v4116, %v4112
    %v4325 = vpack.c.b16 %v4117, %v4113
    %v4326 = vpack.c.b16 %v4118, %v4114
    %v4327 = vpack.c.b16 %v4123, %v4119
    %v4328 = vpack.c.b16 %v4124, %v4120
    %v4329 = vpack.c.b16 %v4125, %v4121
    %v4330 = vpack.c.b16 %v4126, %v4122
    %v4331 = vpack.c.b16 %v4131, %v4127
    %v4332 = vpack.c.b16 %v4132, %v4128
    %v4333 = vpack.c.b16 %v4133, %v4129
    %v4334 = vpack.c.b16 %v4134, %v4130
    %v4335 = vpack.c.b16 %v4139, %v4135
    %v4336 = vpack.c.b16 %v4140, %v4136
    %v4337 = vpack.c.b16 %v4141, %v4137
    %v4338 = vpack.c.b16 %v4142, %v4138
    %v4339 = vpack.c.b16 %v4147, %v4143
    %v4340 = vpack.c.b16 %v4148, %v4144
    %v4341 = vpack.c.b16 %v4149, %v4145
    %v4342 = vpack.c.b16 %v4150, %v4146
    %v4343 = vpack.c.b16 %v4155, %v4151
    %v4344 = vpack.c.b16 %v4156, %v4152
    %v4345 = vpack.c.b16 %v4157, %v4153
    %v4346 = vpack.c.b16 %v4158, %v4154
    %v4347 = vpack.c.b16 %v4163, %v4159
    %v4348 = vpack.c.b16 %v4164, %v4160
    %v4349 = vpack.c.b16 %v4165, %v4161
    %v4350 = vpack.c.b16 %v4166, %v4162
    %v4351 = vpack.c.b16 %v4171, %v4167
    %v4352 = vpack.c.b16 %v4172, %v4168
    %v4353 = vpack.c.b16 %v4173, %v4169
    %v4354 = vpack.c.b16 %v4174, %v4170
    %v4355 = vpack.c.b16 %v4179, %v4175
    %v4356 = vpack.c.b16 %v4180, %v4176
    %v4357 = vpack.c.b16 %v4181, %v4177
    %v4358 = vpack.c.b16 %v4182, %v4178
    %v4359 = vpack.c.b16 %v4187, %v4183
    %v4360 = vpack.c.b16 %v4188, %v4184
    %v4361 = vpack.c.b16 %v4189, %v4185
    %v4362 = vpack.c.b16 %v4190, %v4186
    %v4363 = vpack.c.b16 %v4195, %v4191
    %v4364 = vpack.c.b16 %v4196, %v4192
    %v4365 = vpack.c.b16 %v4197, %v4193
    %v4366 = vpack.c.b16 %v4198, %v4194
    %v4367 = vpack.c.b16 %v4203, %v4199
    %v4368 = vpack.c.b16 %v4204, %v4200
    %v4369 = vpack.c.b16 %v4205, %v4201
    %v4370 = vpack.c.b16 %v4206, %v4202
    %v4371 = vpack.c.b16 %v4211, %v4207
    %v4372 = vpack.c.b16 %v4212, %v4208
    %v4373 = vpack.c.b16 %v4213, %v4209
    %v4374 = vpack.c.b16 %v4214, %v4210
    %v4375 = vpack.c.b16 %v4219, %v4215
    %v4376 = vpack.c.b16 %v4220, %v4216
    %v4377 = vpack.c.b16 %v4221, %v4217
    %v4378 = vpack.c.b16 %v4222, %v4218
    %v4379 = vpack.c.b16 %v4227, %v4223
    %v4380 = vpack.c.b16 %v4228, %v4224
    %v4381 = vpack.c.b16 %v4229, %v4225
    %v4382 = vpack.c.b16 %v4230, %v4226
    %v4383 = vpack.c.b16 %v4235, %v4231
    %v4384 = vpack.c.b16 %v4236, %v4232
    %v4385 = vpack.c.b16 %v4237, %v4233
    %v4386 = vpack.c.b16 %v4238, %v4234
    %v4387 = vpack.c.b16 %v4243, %v4239
    %v4388 = vpack.c.b16 %v4244, %v4240
    %v4389 = vpack.c.b16 %v4245, %v4241
    %v4390 = vpack.c.b16 %v4246, %v4242
    %v4391 = vpack.c.b16 %v4251, %v4247
    %v4392 = vpack.c.b16 %v4252, %v4248
    %v4393 = vpack.c.b16 %v4253, %v4249
    %v4394 = vpack.c.b16 %v4254, %v4250
    %v4395 = vpack.c.b16 %v4259, %v4255
    %v4396 = vpack.c.b16 %v4260, %v4256
    %v4397 = vpack.c.b16 %v4261, %v4257
    %v4398 = vpack.c.b16 %v4262, %v4258
    %v4399 = vpack.c.b16 %v4267, %v4263
    %v4400 = vpack.c.b16 %v4268, %v4264
    %v4401 = vpack.c.b16 %v4269, %v4265
    %v4402 = vpack.c.b16 %v4270, %v4266
    %v4403 = vpack.c.b16 %v4275, %v4271
    %v4404 = vpack.c.b16 %v4276, %v4272
    %v4405 = vpack.c.b16 %v4277, %v4273
    %v4406 = vpack.c.b16 %v4278, %v4274
    %4535 = vmatprep.subr.bf16.mxu0 %v4280
    %4536 = vmatpush1.bf16.msra.mxu0 %v4279
    %4537 = vmatprep.subr.bf16.mxu0 %v4284
    %4538 = vmatpush1.bf16.msra.mxu0 %v4283
    %4539 = vmatprep.subr.bf16.mxu0 %v4288
    %4540 = vmatpush1.bf16.msra.mxu0 %v4287
    %4541 = vmatprep.subr.bf16.mxu0 %v4292
    %4542 = vmatpush1.bf16.msra.mxu0 %v4291
    %4543 = vmatprep.subr.bf16.mxu0 %v4296
    %4544 = vmatpush1.bf16.msra.mxu0 %v4295
    %4545 = vmatprep.subr.bf16.mxu0 %v4300
    %4546 = vmatpush1.bf16.msra.mxu0 %v4299
    %4547 = vmatprep.subr.bf16.mxu0 %v4304
    %4548 = vmatpush1.bf16.msra.mxu0 %v4303
    %4549 = vmatprep.subr.bf16.mxu0 %v4308
    %4550 = vmatpush1.bf16.msra.mxu0 %v4307
    %4551 = vmatprep.subr.bf16.mxu0 %v4312
    %4552 = vmatpush1.bf16.msra.mxu0 %v4311
    %4553 = vmatprep.subr.bf16.mxu0 %v4316
    %4554 = vmatpush1.bf16.msra.mxu0 %v4315
    %4555 = vmatprep.subr.bf16.mxu0 %v4320
    %4556 = vmatpush1.bf16.msra.mxu0 %v4319
    %4557 = vmatprep.subr.bf16.mxu0 %v4324
    %4558 = vmatpush1.bf16.msra.mxu0 %v4323
    %4559 = vmatprep.subr.bf16.mxu0 %v4328
    %4560 = vmatpush1.bf16.msra.mxu0 %v4327
    %4561 = vmatprep.subr.bf16.mxu0 %v4332
    %4562 = vmatpush1.bf16.msra.mxu0 %v4331
    %4563 = vmatprep.subr.bf16.mxu0 %v4336
    %4564 = vmatpush1.bf16.msra.mxu0 %v4335
    %4565 = vmatprep.subr.bf16.mxu0 %v4340
    %4566 = vmatpush1.bf16.msra.mxu0 %v4339
    %4567 = vmatprep.mubr.bf16.mxu0 %v3714
    %4568 = vmatmul.mubr.bf16.gmra.mrb[0].mxu0 %v3713
    %v4569 = vpop.f32.mrb[0].mxu0
    %v4570 = vadd.f32 %v3878, %v4569
    %v4571 = vpop.f32.mrb[0].mxu0
    %v4572 = vadd.f32 %v3882, %v4571
    %v4573 = vpop.f32.mrb[0].mxu0
    %v4574 = vadd.f32 %v3878, %v4573
    %v4575 = vpop.f32.mrb[0].mxu0
    %v4576 = vadd.f32 %v3882, %v4575
    %4577 = vmatprep.mubr.bf16.mxu0 %v3718
    %4578 = vmatmul.mubr.bf16.gmra.mrb[0].mxu0 %v3717
    %v4579 = vpop.f32.mrb[0].mxu0
    %v4580 = vadd.f32 %v3878, %v4579
    %v4581 = vpop.f32.mrb[0].mxu0
    %v4582 = vadd.f32 %v3882, %v4581
    %v4583 = vpop.f32.mrb[0].mxu0
    %v4584 = vadd.f32 %v3878, %v4583
    %v4585 = vpop.f32.mrb[0].mxu0
    %v4586 = vadd.f32 %v3882, %v4585
    %4587 = vmatprep.mubr.bf16.mxu0 %v3722
    %4588 = vmatmul.mubr.bf16.gmra.mrb[0].mxu0 %v3721
    %v4589 = vpop.f32.mrb[0].mxu0
    %v4590 = vadd.f32 %v3878, %v4589
    %v4591 = vpop.f32.mrb[0].mxu0
    %v4592 = vadd.f32 %v3882, %v4591
    %v4593 = vpop.f32.mrb[0].mxu0
    %v4594 = vadd.f32 %v3878, %v4593
    %v4595 = vpop.f32.mrb[0].mxu0
    %v4596 = vadd.f32 %v3882, %v4595
    %4597 = vmatprep.mubr.bf16.mxu0 %v3726
    %4598 = vmatmul.mubr.bf16.gmra.mrb[0].mxu0 %v3725
    %v4599 = vpop.f32.mrb[0].mxu0
    %v4600 = vadd.f32 %v3878, %v4599
    %v4601 = vpop.f32.mrb[0].mxu0
    %v4602 = vadd.f32 %v3882, %v4601
    %v4603 = vpop.f32.mrb[0].mxu0
    %v4604 = vadd.f32 %v3878, %v4603
    %v4605 = vpop.f32.mrb[0].mxu0
    %v4606 = vadd.f32 %v3882, %v4605
    %4607 = vmatprep.mubr.bf16.mxu0 %v3730
    %4608 = vmatmul.mubr.bf16.gmra.mrb[0].mxu0 %v3729
    %v4609 = vpop.f32.mrb[0].mxu0
    %v4610 = vadd.f32 %v3878, %v4609
    %v4611 = vpop.f32.mrb[0].mxu0
    %v4612 = vadd.f32 %v3882, %v4611
    %v4613 = vpop.f32.mrb[0].mxu0
    %v4614 = vadd.f32 %v3878, %v4613
    %v4615 = vpop.f32.mrb[0].mxu0
    %v4616 = vadd.f32 %v3882, %v4615
    %4617 = vmatprep.mubr.bf16.mxu0 %v3734
    %4618 = vmatmul.mubr.bf16.gmra.mrb[0].mxu0 %v3733
    %v4619 = vpop.f32.mrb[0].mxu0
    %v4620 = vadd.f32 %v3878, %v4619
    %v4621 = vpop.f32.mrb[0].mxu0
    %v4622 = vadd.f32 %v3882, %v4621
    %v4623 = vpop.f32.mrb[0].mxu0
    %v4624 = vadd.f32 %v3878, %v4623
    %v4625 = vpop.f32.mrb[0].mxu0
    %v4626 = vadd.f32 %v3882, %v4625
    %4627 = vmatprep.mubr.bf16.mxu0 %v3738
    %4628 = vmatmul.mubr.bf16.gmra.mrb[0].mxu0 %v3737
    %v4629 = vpop.f32.mrb[0].mxu0
    %v4630 = vadd.f32 %v3878, %v4629
    %v4631 = vpop.f32.mrb[0].mxu0
    %v4632 = vadd.f32 %v3882, %v4631
    %v4633 = vpop.f32.mrb[0].mxu0
    %v4634 = vadd.f32 %v3878, %v4633
    %v4635 = vpop.f32.mrb[0].mxu0
    %v4636 = vadd.f32 %v3882, %v4635
    %4637 = vmatprep.mubr.bf16.mxu0 %v3742
    %4638 = vmatmul.mubr.bf16.gmra.mrb[0].mxu0 %v3741
    %v4639 = vpop.f32.mrb[0].mxu0
    %v4640 = vadd.f32 %v3878, %v4639
    %v4641 = vpop.f32.mrb[0].mxu0
    %v4642 = vadd.f32 %v3882, %v4641
    %v4643 = vpop.f32.mrb[0].mxu0
    %v4644 = vadd.f32 %v3878, %v4643
    %v4645 = vpop.f32.mrb[0].mxu0
    %v4646 = vadd.f32 %v3882, %v4645
    %4647 = vdwg.mxu0
    %4648 = vmatprep.subr.bf16.mxu0 %v4344
    %4649 = vmatpush1.bf16.msra.mxu0 %v4343
    %4650 = vmatprep.subr.bf16.mxu0 %v4348
    %4651 = vmatpush1.bf16.msra.mxu0 %v4347
    %4652 = vmatprep.subr.bf16.mxu0 %v4352
    %4653 = vmatpush1.bf16.msra.mxu0 %v4351
    %4654 = vmatprep.subr.bf16.mxu0 %v4356
    %4655 = vmatpush1.bf16.msra.mxu0 %v4355
    %4656 = vmatprep.subr.bf16.mxu0 %v4360
    %4657 = vmatpush1.bf16.msra.mxu0 %v4359
    %4658 = vmatprep.subr.bf16.mxu0 %v4364
    %4659 = vmatpush1.bf16.msra.mxu0 %v4363
    %4660 = vmatprep.subr.bf16.mxu0 %v4368
    %4661 = vmatpush1.bf16.msra.mxu0 %v4367
    %4662 = vmatprep.subr.bf16.mxu0 %v4372
    %4663 = vmatpush1.bf16.msra.mxu0 %v4371
    %4664 = vmatprep.subr.bf16.mxu0 %v4376
    %4665 = vmatpush1.bf16.msra.mxu0 %v4375
    %4666 = vmatprep.subr.bf16.mxu0 %v4380
    %4667 = vmatpush1.bf16.msra.mxu0 %v4379
    %4668 = vmatprep.subr.bf16.mxu0 %v4384
    %4669 = vmatpush1.bf16.msra.mxu0 %v4383
    %4670 = vmatprep.subr.bf16.mxu0 %v4388
    %4671 = vmatpush1.bf16.msra.mxu0 %v4387
    %4672 = vmatprep.subr.bf16.mxu0 %v4392
    %4673 = vmatpush1.bf16.msra.mxu0 %v4391
    %4674 = vmatprep.subr.bf16.mxu0 %v4396
    %4675 = vmatpush1.bf16.msra.mxu0 %v4395
    %4676 = vmatprep.subr.bf16.mxu0 %v4400
    %4677 = vmatpush1.bf16.msra.mxu0 %v4399
    %4678 = vmatprep.subr.bf16.mxu0 %v4404
    %4679 = vmatpush1.bf16.msra.mxu0 %v4403
    %4680 = vmatprep.mubr.bf16.mxu0 %v3716
    %4681 = vmatmul.mubr.bf16.gmra.mrb[0].mxu0 %v3715
    %v4682 = vpop.f32.mrb[0].mxu0
    %v4683 = vadd.f32 %v4570, %v4682
    %v4684 = vpop.f32.mrb[0].mxu0
    %v4685 = vadd.f32 %v4572, %v4684
    %v4686 = vpop.f32.mrb[0].mxu0
    %v4687 = vadd.f32 %v4574, %v4686
    %v4688 = vpop.f32.mrb[0].mxu0
    %v4689 = vadd.f32 %v4576, %v4688
    %4690 = vmatprep.mubr.bf16.mxu0 %v3720
    %4691 = vmatmul.mubr.bf16.gmra.mrb[0].mxu0 %v3719
    %v4692 = vpop.f32.mrb[0].mxu0
    %v4693 = vadd.f32 %v4580, %v4692
    %v4694 = vpop.f32.mrb[0].mxu0
    %v4695 = vadd.f32 %v4582, %v4694
    %v4696 = vpop.f32.mrb[0].mxu0
    %v4697 = vadd.f32 %v4584, %v4696
    %v4698 = vpop.f32.mrb[0].mxu0
    %v4699 = vadd.f32 %v4586, %v4698
    %4700 = vmatprep.mubr.bf16.mxu0 %v3724
    %4701 = vmatmul.mubr.bf16.gmra.mrb[0].mxu0 %v3723
    %v4702 = vpop.f32.mrb[0].mxu0
    %v4703 = vadd.f32 %v4590, %v4702
    %v4704 = vpop.f32.mrb[0].mxu0
    %v4705 = vadd.f32 %v4592, %v4704
    %v4706 = vpop.f32.mrb[0].mxu0
    %v4707 = vadd.f32 %v4594, %v4706
    %v4708 = vpop.f32.mrb[0].mxu0
    %v4709 = vadd.f32 %v4596, %v4708
    %4710 = vmatprep.mubr.bf16.mxu0 %v3728
    %4711 = vmatmul.mubr.bf16.gmra.mrb[0].mxu0 %v3727
    %v4712 = vpop.f32.mrb[0].mxu0
    %v4713 = vadd.f32 %v4600, %v4712
    %v4714 = vpop.f32.mrb[0].mxu0
    %v4715 = vadd.f32 %v4602, %v4714
    %v4716 = vpop.f32.mrb[0].mxu0
    %v4717 = vadd.f32 %v4604, %v4716
    %v4718 = vpop.f32.mrb[0].mxu0
    %v4719 = vadd.f32 %v4606, %v4718
    %4720 = vmatprep.mubr.bf16.mxu0 %v3732
    %4721 = vmatmul.mubr.bf16.gmra.mrb[0].mxu0 %v3731
    %v4722 = vpop.f32.mrb[0].mxu0
    %v4723 = vadd.f32 %v4610, %v4722
    %v4724 = vpop.f32.mrb[0].mxu0
    %v4725 = vadd.f32 %v4612, %v4724
    %v4726 = vpop.f32.mrb[0].mxu0
    %v4727 = vadd.f32 %v4614, %v4726
    %v4728 = vpop.f32.mrb[0].mxu0
    %v4729 = vadd.f32 %v4616, %v4728
    %4730 = vmatprep.mubr.bf16.mxu0 %v3736
    %4731 = vmatmul.mubr.bf16.gmra.mrb[0].mxu0 %v3735
    %v4732 = vpop.f32.mrb[0].mxu0
    %v4733 = vadd.f32 %v4620, %v4732
    %v4734 = vpop.f32.mrb[0].mxu0
    %v4735 = vadd.f32 %v4622, %v4734
    %v4736 = vpop.f32.mrb[0].mxu0
    %v4737 = vadd.f32 %v4624, %v4736
    %v4738 = vpop.f32.mrb[0].mxu0
    %v4739 = vadd.f32 %v4626, %v4738
    %4740 = vmatprep.mubr.bf16.mxu0 %v3740
    %4741 = vmatmul.mubr.bf16.gmra.mrb[0].mxu0 %v3739
    %v4742 = vpop.f32.mrb[0].mxu0
    %v4743 = vadd.f32 %v4630, %v4742
    %v4744 = vpop.f32.mrb[0].mxu0
    %v4745 = vadd.f32 %v4632, %v4744
    %v4746 = vpop.f32.mrb[0].mxu0
    %v4747 = vadd.f32 %v4634, %v4746
    %v4748 = vpop.f32.mrb[0].mxu0
    %v4749 = vadd.f32 %v4636, %v4748
    %4750 = vmatprep.mubr.bf16.mxu0 %v3744
    %4751 = vmatmul.mubr.bf16.gmra.mrb[0].mxu0 %v3743
    %v4752 = vpop.f32.mrb[0].mxu0
    %v4753 = vadd.f32 %v4640, %v4752
    %v4754 = vpop.f32.mrb[0].mxu0
    %v4755 = vadd.f32 %v4642, %v4754
    %v4756 = vpop.f32.mrb[0].mxu0
    %v4757 = vadd.f32 %v4644, %v4756
    %v4758 = vpop.f32.mrb[0].mxu0
    %v4759 = vadd.f32 %v4646, %v4758
    %4760 = vdwg.mxu0
    %4761 = vmatprep.subr.bf16.mxu0 %v4282
    %4762 = vmatpush1.bf16.msra.mxu0 %v4281
    %4763 = vmatprep.subr.bf16.mxu0 %v4286
    %4764 = vmatpush1.bf16.msra.mxu0 %v4285
    %4765 = vmatprep.subr.bf16.mxu0 %v4290
    %4766 = vmatpush1.bf16.msra.mxu0 %v4289
    %4767 = vmatprep.subr.bf16.mxu0 %v4294
    %4768 = vmatpush1.bf16.msra.mxu0 %v4293
    %4769 = vmatprep.subr.bf16.mxu0 %v4298
    %4770 = vmatpush1.bf16.msra.mxu0 %v4297
    %4771 = vmatprep.subr.bf16.mxu0 %v4302
    %4772 = vmatpush1.bf16.msra.mxu0 %v4301
    %4773 = vmatprep.subr.bf16.mxu0 %v4306
    %4774 = vmatpush1.bf16.msra.mxu0 %v4305
    %4775 = vmatprep.subr.bf16.mxu0 %v4310
    %4776 = vmatpush1.bf16.msra.mxu0 %v4309
    %4777 = vmatprep.subr.bf16.mxu0 %v4314
    %4778 = vmatpush1.bf16.msra.mxu0 %v4313
    %4779 = vmatprep.subr.bf16.mxu0 %v4318
    %4780 = vmatpush1.bf16.msra.mxu0 %v4317
    %4781 = vmatprep.subr.bf16.mxu0 %v4322
    %4782 = vmatpush1.bf16.msra.mxu0 %v4321
    %4783 = vmatprep.subr.bf16.mxu0 %v4326
    %4784 = vmatpush1.bf16.msra.mxu0 %v4325
    %4785 = vmatprep.subr.bf16.mxu0 %v4330
    %4786 = vmatpush1.bf16.msra.mxu0 %v4329
    %4787 = vmatprep.subr.bf16.mxu0 %v4334
    %4788 = vmatpush1.bf16.msra.mxu0 %v4333
    %4789 = vmatprep.subr.bf16.mxu0 %v4338
    %4790 = vmatpush1.bf16.msra.mxu0 %v4337
    %4791 = vmatprep.subr.bf16.mxu0 %v4342
    %4792 = vmatpush1.bf16.msra.mxu0 %v4341
    %4793 = vmatprep.mubr.bf16.mxu0 %v3714
    %4794 = vmatmul.mubr.bf16.gmra.mrb[0].mxu0 %v3713
    %v4795 = vpop.f32.mrb[0].mxu0
    %v4796 = vadd.f32 %v3886, %v4795
    %v4797 = vpop.f32.mrb[0].mxu0
    %v4798 = vadd.f32 %v3890, %v4797
    %v4799 = vpop.f32.mrb[0].mxu0
    %v4800 = vadd.f32 %v3886, %v4799
    %v4801 = vpop.f32.mrb[0].mxu0
    %v4802 = vadd.f32 %v3890, %v4801
    %4803 = vmatprep.mubr.bf16.mxu0 %v3718
    %4804 = vmatmul.mubr.bf16.gmra.mrb[0].mxu0 %v3717
    %v4805 = vpop.f32.mrb[0].mxu0
    %v4806 = vadd.f32 %v3886, %v4805
    %v4807 = vpop.f32.mrb[0].mxu0
    %v4808 = vadd.f32 %v3890, %v4807
    %v4809 = vpop.f32.mrb[0].mxu0
    %v4810 = vadd.f32 %v3886, %v4809
    %v4811 = vpop.f32.mrb[0].mxu0
    %v4812 = vadd.f32 %v3890, %v4811
    %4813 = vmatprep.mubr.bf16.mxu0 %v3722
    %4814 = vmatmul.mubr.bf16.gmra.mrb[0].mxu0 %v3721
    %v4815 = vpop.f32.mrb[0].mxu0
    %v4816 = vadd.f32 %v3886, %v4815
    %v4817 = vpop.f32.mrb[0].mxu0
    %v4818 = vadd.f32 %v3890, %v4817
    %v4819 = vpop.f32.mrb[0].mxu0
    %v4820 = vadd.f32 %v3886, %v4819
    %v4821 = vpop.f32.mrb[0].mxu0
    %v4822 = vadd.f32 %v3890, %v4821
    %4823 = vmatprep.mubr.bf16.mxu0 %v3726
    %4824 = vmatmul.mubr.bf16.gmra.mrb[0].mxu0 %v3725
    %v4825 = vpop.f32.mrb[0].mxu0
    %v4826 = vadd.f32 %v3886, %v4825
    %v4827 = vpop.f32.mrb[0].mxu0
    %v4828 = vadd.f32 %v3890, %v4827
    %v4829 = vpop.f32.mrb[0].mxu0
    %v4830 = vadd.f32 %v3886, %v4829
    %v4831 = vpop.f32.mrb[0].mxu0
    %v4832 = vadd.f32 %v3890, %v4831
    %4833 = vmatprep.mubr.bf16.mxu0 %v3730
    %4834 = vmatmul.mubr.bf16.gmra.mrb[0].mxu0 %v3729
    %v4835 = vpop.f32.mrb[0].mxu0
    %v4836 = vadd.f32 %v3886, %v4835
    %v4837 = vpop.f32.mrb[0].mxu0
    %v4838 = vadd.f32 %v3890, %v4837
    %v4839 = vpop.f32.mrb[0].mxu0
    %v4840 = vadd.f32 %v3886, %v4839
    %v4841 = vpop.f32.mrb[0].mxu0
    %v4842 = vadd.f32 %v3890, %v4841
    %4843 = vmatprep.mubr.bf16.mxu0 %v3734
    %4844 = vmatmul.mubr.bf16.gmra.mrb[0].mxu0 %v3733
    %v4845 = vpop.f32.mrb[0].mxu0
    %v4846 = vadd.f32 %v3886, %v4845
    %v4847 = vpop.f32.mrb[0].mxu0
    %v4848 = vadd.f32 %v3890, %v4847
    %v4849 = vpop.f32.mrb[0].mxu0
    %v4850 = vadd.f32 %v3886, %v4849
    %v4851 = vpop.f32.mrb[0].mxu0
    %v4852 = vadd.f32 %v3890, %v4851
    %4853 = vmatprep.mubr.bf16.mxu0 %v3738
    %4854 = vmatmul.mubr.bf16.gmra.mrb[0].mxu0 %v3737
    %v4855 = vpop.f32.mrb[0].mxu0
    %v4856 = vadd.f32 %v3886, %v4855
    %v4857 = vpop.f32.mrb[0].mxu0
    %v4858 = vadd.f32 %v3890, %v4857
    %v4859 = vpop.f32.mrb[0].mxu0
    %v4860 = vadd.f32 %v3886, %v4859
    %v4861 = vpop.f32.mrb[0].mxu0
    %v4862 = vadd.f32 %v3890, %v4861
    %4863 = vmatprep.mubr.bf16.mxu0 %v3742
    %4864 = vmatmul.mubr.bf16.gmra.mrb[0].mxu0 %v3741
    %v4865 = vpop.f32.mrb[0].mxu0
    %v4866 = vadd.f32 %v3886, %v4865
    %v4867 = vpop.f32.mrb[0].mxu0
    %v4868 = vadd.f32 %v3890, %v4867
    %v4869 = vpop.f32.mrb[0].mxu0
    %v4870 = vadd.f32 %v3886, %v4869
    %v4871 = vpop.f32.mrb[0].mxu0
    %v4872 = vadd.f32 %v3890, %v4871
    %4873 = vdwg.mxu0
    %4874 = vmatprep.subr.bf16.mxu0 %v4346
    %4875 = vmatpush1.bf16.msra.mxu0 %v4345
    %4876 = vmatprep.subr.bf16.mxu0 %v4350
    %4877 = vmatpush1.bf16.msra.mxu0 %v4349
    %4878 = vmatprep.subr.bf16.mxu0 %v4354
    %4879 = vmatpush1.bf16.msra.mxu0 %v4353
    %4880 = vmatprep.subr.bf16.mxu0 %v4358
    %4881 = vmatpush1.bf16.msra.mxu0 %v4357
    %4882 = vmatprep.subr.bf16.mxu0 %v4362
    %4883 = vmatpush1.bf16.msra.mxu0 %v4361
    %4884 = vmatprep.subr.bf16.mxu0 %v4366
    %4885 = vmatpush1.bf16.msra.mxu0 %v4365
    %4886 = vmatprep.subr.bf16.mxu0 %v4370
    %4887 = vmatpush1.bf16.msra.mxu0 %v4369
    %4888 = vmatprep.subr.bf16.mxu0 %v4374
    %4889 = vmatpush1.bf16.msra.mxu0 %v4373
    %4890 = vmatprep.subr.bf16.mxu0 %v4378
    %4891 = vmatpush1.bf16.msra.mxu0 %v4377
    %4892 = vmatprep.subr.bf16.mxu0 %v4382
    %4893 = vmatpush1.bf16.msra.mxu0 %v4381
    %4894 = vmatprep.subr.bf16.mxu0 %v4386
    %4895 = vmatpush1.bf16.msra.mxu0 %v4385
    %4896 = vmatprep.subr.bf16.mxu0 %v4390
    %4897 = vmatpush1.bf16.msra.mxu0 %v4389
    %4898 = vmatprep.subr.bf16.mxu0 %v4394
    %4899 = vmatpush1.bf16.msra.mxu0 %v4393
    %4900 = vmatprep.subr.bf16.mxu0 %v4398
    %4901 = vmatpush1.bf16.msra.mxu0 %v4397
    %4902 = vmatprep.subr.bf16.mxu0 %v4402
    %4903 = vmatpush1.bf16.msra.mxu0 %v4401
    %4904 = vmatprep.subr.bf16.mxu0 %v4406
    %4905 = vmatpush1.bf16.msra.mxu0 %v4405
    %4906 = vmatprep.mubr.bf16.mxu0 %v3716
    %4907 = vmatmul.mubr.bf16.gmra.mrb[0].mxu0 %v3715
    %v4908 = vpop.f32.mrb[0].mxu0
    %v4909 = vadd.f32 %v4796, %v4908
    %v4910 = vpop.f32.mrb[0].mxu0
    %v4911 = vadd.f32 %v4798, %v4910
    %v4912 = vpop.f32.mrb[0].mxu0
    %v4913 = vadd.f32 %v4800, %v4912
    %v4914 = vpop.f32.mrb[0].mxu0
    %v4915 = vadd.f32 %v4802, %v4914
    %4916 = vmatprep.mubr.bf16.mxu0 %v3720
    %4917 = vmatmul.mubr.bf16.gmra.mrb[0].mxu0 %v3719
    %v4918 = vpop.f32.mrb[0].mxu0
    %v4919 = vadd.f32 %v4806, %v4918
    %v4920 = vpop.f32.mrb[0].mxu0
    %v4921 = vadd.f32 %v4808, %v4920
    %v4922 = vpop.f32.mrb[0].mxu0
    %v4923 = vadd.f32 %v4810, %v4922
    %v4924 = vpop.f32.mrb[0].mxu0
    %v4925 = vadd.f32 %v4812, %v4924
    %4926 = vmatprep.mubr.bf16.mxu0 %v3724
    %4927 = vmatmul.mubr.bf16.gmra.mrb[0].mxu0 %v3723
    %v4928 = vpop.f32.mrb[0].mxu0
    %v4929 = vadd.f32 %v4816, %v4928
    %v4930 = vpop.f32.mrb[0].mxu0
    %v4931 = vadd.f32 %v4818, %v4930
    %v4932 = vpop.f32.mrb[0].mxu0
    %v4933 = vadd.f32 %v4820, %v4932
    %v4934 = vpop.f32.mrb[0].mxu0
    %v4935 = vadd.f32 %v4822, %v4934
    %4936 = vmatprep.mubr.bf16.mxu0 %v3728
    %4937 = vmatmul.mubr.bf16.gmra.mrb[0].mxu0 %v3727
    %v4938 = vpop.f32.mrb[0].mxu0
    %v4939 = vadd.f32 %v4826, %v4938
    %v4940 = vpop.f32.mrb[0].mxu0
    %v4941 = vadd.f32 %v4828, %v4940
    %v4942 = vpop.f32.mrb[0].mxu0
    %v4943 = vadd.f32 %v4830, %v4942
    %v4944 = vpop.f32.mrb[0].mxu0
    %v4945 = vadd.f32 %v4832, %v4944
    %4946 = vmatprep.mubr.bf16.mxu0 %v3732
    %4947 = vmatmul.mubr.bf16.gmra.mrb[0].mxu0 %v3731
    %v4948 = vpop.f32.mrb[0].mxu0
    %v4949 = vadd.f32 %v4836, %v4948
    %v4950 = vpop.f32.mrb[0].mxu0
    %v4951 = vadd.f32 %v4838, %v4950
    %v4952 = vpop.f32.mrb[0].mxu0
    %v4953 = vadd.f32 %v4840, %v4952
    %v4954 = vpop.f32.mrb[0].mxu0
    %v4955 = vadd.f32 %v4842, %v4954
    %4956 = vmatprep.mubr.bf16.mxu0 %v3736
    %4957 = vmatmul.mubr.bf16.gmra.mrb[0].mxu0 %v3735
    %v4958 = vpop.f32.mrb[0].mxu0
    %v4959 = vadd.f32 %v4846, %v4958
    %v4960 = vpop.f32.mrb[0].mxu0
    %v4961 = vadd.f32 %v4848, %v4960
    %v4962 = vpop.f32.mrb[0].mxu0
    %v4963 = vadd.f32 %v4850, %v4962
    %v4964 = vpop.f32.mrb[0].mxu0
    %v4965 = vadd.f32 %v4852, %v4964
    %4966 = vmatprep.mubr.bf16.mxu0 %v3740
    %4967 = vmatmul.mubr.bf16.gmra.mrb[0].mxu0 %v3739
    %v4968 = vpop.f32.mrb[0].mxu0
    %v4969 = vadd.f32 %v4856, %v4968
    %v4970 = vpop.f32.mrb[0].mxu0
    %v4971 = vadd.f32 %v4858, %v4970
    %v4972 = vpop.f32.mrb[0].mxu0
    %v4973 = vadd.f32 %v4860, %v4972
    %v4974 = vpop.f32.mrb[0].mxu0
    %v4975 = vadd.f32 %v4862, %v4974
    %4976 = vmatprep.mubr.bf16.mxu0 %v3744
    %4977 = vmatmul.mubr.bf16.gmra.mrb[0].mxu0 %v3743
    %v4978 = vpop.f32.mrb[0].mxu0
    %v4979 = vadd.f32 %v4866, %v4978
    %v4980 = vpop.f32.mrb[0].mxu0
    %v4981 = vadd.f32 %v4868, %v4980
    %v4982 = vpop.f32.mrb[0].mxu0
    %v4983 = vadd.f32 %v4870, %v4982
    %v4984 = vpop.f32.mrb[0].mxu0
    %v4985 = vadd.f32 %v4872, %v4984
    %4986 = vdwg.mxu0
    %v4987 = vmax.f32 %v4683, 0.0
    %v4988 = vmax.f32 %v4685, 0.0
    %v4989 = vmax.f32 %v4909, 0.0
    %v4990 = vmax.f32 %v4911, 0.0
    %v4991 = vmax.f32 %v4687, 0.0
    %v4992 = vmax.f32 %v4689, 0.0
    %v4993 = vmax.f32 %v4913, 0.0
    %v4994 = vmax.f32 %v4915, 0.0
    %v4995 = vmax.f32 %v4693, 0.0
    %v4996 = vmax.f32 %v4695, 0.0
    %v4997 = vmax.f32 %v4919, 0.0
    %v4998 = vmax.f32 %v4921, 0.0
    %v4999 = vmax.f32 %v4697, 0.0
    %v5000 = vmax.f32 %v4699, 0.0
    %v5001 = vmax.f32 %v4923, 0.0
    %v5002 = vmax.f32 %v4925, 0.0
    %v5003 = vmax.f32 %v4703, 0.0
    %v5004 = vmax.f32 %v4705, 0.0
    %v5005 = vmax.f32 %v4929, 0.0
    %v5006 = vmax.f32 %v4931, 0.0
    %v5007 = vmax.f32 %v4707, 0.0
    %v5008 = vmax.f32 %v4709, 0.0
    %v5009 = vmax.f32 %v4933, 0.0
    %v5010 = vmax.f32 %v4935, 0.0
    %v5011 = vmax.f32 %v4713, 0.0
    %v5012 = vmax.f32 %v4715, 0.0
    %v5013 = vmax.f32 %v4939, 0.0
    %v5014 = vmax.f32 %v4941, 0.0
    %v5015 = vmax.f32 %v4717, 0.0
    %v5016 = vmax.f32 %v4719, 0.0
    %v5017 = vmax.f32 %v4943, 0.0
    %v5018 = vmax.f32 %v4945, 0.0
    %v5019 = vmax.f32 %v4723, 0.0
    %v5020 = vmax.f32 %v4725, 0.0
    %v5021 = vmax.f32 %v4949, 0.0
    %v5022 = vmax.f32 %v4951, 0.0
    %v5023 = vmax.f32 %v4727, 0.0
    %v5024 = vmax.f32 %v4729, 0.0
    %v5025 = vmax.f32 %v4953, 0.0
    %v5026 = vmax.f32 %v4955, 0.0
    %v5027 = vmax.f32 %v4733, 0.0
    %v5028 = vmax.f32 %v4735, 0.0
    %v5029 = vmax.f32 %v4959, 0.0
    %v5030 = vmax.f32 %v4961, 0.0
    %v5031 = vmax.f32 %v4737, 0.0
    %v5032 = vmax.f32 %v4739, 0.0
    %v5033 = vmax.f32 %v4963, 0.0
    %v5034 = vmax.f32 %v4965, 0.0
    %v5035 = vmax.f32 %v4743, 0.0
    %v5036 = vmax.f32 %v4745, 0.0
    %v5037 = vmax.f32 %v4969, 0.0
    %v5038 = vmax.f32 %v4971, 0.0
    %v5039 = vmax.f32 %v4747, 0.0
    %v5040 = vmax.f32 %v4749, 0.0
    %v5041 = vmax.f32 %v4973, 0.0
    %v5042 = vmax.f32 %v4975, 0.0
    %v5043 = vmax.f32 %v4753, 0.0
    %v5044 = vmax.f32 %v4755, 0.0
    %v5045 = vmax.f32 %v4979, 0.0
    %v5046 = vmax.f32 %v4981, 0.0
    %v5047 = vmax.f32 %v4757, 0.0
    %v5048 = vmax.f32 %v4759, 0.0
    %v5049 = vmax.f32 %v4983, 0.0
    %v5050 = vmax.f32 %v4985, 0.0
    %v5051 = vpack.c.bf16 %v4991, %v4987
    %v5052 = vpack.c.bf16 %v4992, %v4988
    %v5053 = vpack.c.bf16 %v4993, %v4989
    %v5054 = vpack.c.bf16 %v4994, %v4990
    %v5055 = vpack.c.bf16 %v4999, %v4995
    %v5056 = vpack.c.bf16 %v5000, %v4996
    %v5057 = vpack.c.bf16 %v5001, %v4997
    %v5058 = vpack.c.bf16 %v5002, %v4998
    %v5059 = vpack.c.bf16 %v5007, %v5003
    %v5060 = vpack.c.bf16 %v5008, %v5004
    %v5061 = vpack.c.bf16 %v5009, %v5005
    %v5062 = vpack.c.bf16 %v5010, %v5006
    %v5063 = vpack.c.bf16 %v5015, %v5011
    %v5064 = vpack.c.bf16 %v5016, %v5012
    %v5065 = vpack.c.bf16 %v5017, %v5013
    %v5066 = vpack.c.bf16 %v5018, %v5014
    %v5067 = vpack.c.bf16 %v5023, %v5019
    %v5068 = vpack.c.bf16 %v5024, %v5020
    %v5069 = vpack.c.bf16 %v5025, %v5021
    %v5070 = vpack.c.bf16 %v5026, %v5022
    %v5071 = vpack.c.bf16 %v5031, %v5027
    %v5072 = vpack.c.bf16 %v5032, %v5028
    %v5073 = vpack.c.bf16 %v5033, %v5029
    %v5074 = vpack.c.bf16 %v5034, %v5030
    %v5075 = vpack.c.bf16 %v5039, %v5035
    %v5076 = vpack.c.bf16 %v5040, %v5036
    %v5077 = vpack.c.bf16 %v5041, %v5037
    %v5078 = vpack.c.bf16 %v5042, %v5038
    %v5079 = vpack.c.bf16 %v5047, %v5043
    %v5080 = vpack.c.bf16 %v5048, %v5044
    %v5081 = vpack.c.bf16 %v5049, %v5045
    %v5082 = vpack.c.bf16 %v5050, %v5046
    %v5083 = vld [vmem:[#allocation12] sm:$0xff]
    %v5084 = vld [vmem:[#allocation12 + $0x8] sm:$0xff]
    %v5085 = vld [vmem:[#allocation12 + $0x10] sm:$0xff]
    %v5086 = vld [vmem:[#allocation12 + $0x18] sm:$0xff]
    %v5087 = vld [vmem:[#allocation12 + $0x20] sm:$0xff]
    %v5088 = vld [vmem:[#allocation12 + $0x28] sm:$0xff]
    %v5089 = vld [vmem:[#allocation12 + $0x30] sm:$0xff]
    %v5090 = vld [vmem:[#allocation12 + $0x38] sm:$0xff]
    %v5091 = vld [vmem:[#allocation12 + $0x40] sm:$0xff]
    %v5092 = vld [vmem:[#allocation12 + $0x48] sm:$0xff]
    %v5093 = vld [vmem:[#allocation12 + $0x50] sm:$0xff]
    %v5094 = vld [vmem:[#allocation12 + $0x58] sm:$0xff]
    %v5095 = vld [vmem:[#allocation12 + $0x60] sm:$0xff]
    %v5096 = vld [vmem:[#allocation12 + $0x68] sm:$0xff]
    %v5097 = vld [vmem:[#allocation12 + $0x70] sm:$0xff]
    %v5098 = vld [vmem:[#allocation12 + $0x78] sm:$0xff]
    %v5099 = vld [vmem:[#allocation12 + $0x80] sm:$0xff]
    %v5100 = vld [vmem:[#allocation12 + $0x88] sm:$0xff]
    %v5101 = vld [vmem:[#allocation12 + $0x90] sm:$0xff]
    %v5102 = vld [vmem:[#allocation12 + $0x98] sm:$0xff]
    %v5103 = vld [vmem:[#allocation12 + $0xa0] sm:$0xff]
    %v5104 = vld [vmem:[#allocation12 + $0xa8] sm:$0xff]
    %v5105 = vld [vmem:[#allocation12 + $0xb0] sm:$0xff]
    %v5106 = vld [vmem:[#allocation12 + $0xb8] sm:$0xff]
    %v5107 = vld [vmem:[#allocation12 + $0xc0] sm:$0xff]
    %v5108 = vld [vmem:[#allocation12 + $0xc8] sm:$0xff]
    %v5109 = vld [vmem:[#allocation12 + $0xd0] sm:$0xff]
    %v5110 = vld [vmem:[#allocation12 + $0xd8] sm:$0xff]
    %v5111 = vld [vmem:[#allocation12 + $0xe0] sm:$0xff]
    %v5112 = vld [vmem:[#allocation12 + $0xe8] sm:$0xff]
    %v5113 = vld [vmem:[#allocation12 + $0xf0] sm:$0xff]
    %v5114 = vld [vmem:[#allocation12 + $0xf8] sm:$0xff]
    %v5115 = vld [vmem:[#allocation12 + $0x100] sm:$0xff]
    %v5116 = vld [vmem:[#allocation12 + $0x108] sm:$0xff]
    %v5117 = vld [vmem:[#allocation12 + $0x110] sm:$0xff]
    %v5118 = vld [vmem:[#allocation12 + $0x118] sm:$0xff]
    %v5119 = vld [vmem:[#allocation12 + $0x120] sm:$0xff]
    %v5120 = vld [vmem:[#allocation12 + $0x128] sm:$0xff]
    %v5121 = vld [vmem:[#allocation12 + $0x130] sm:$0xff]
    %v5122 = vld [vmem:[#allocation12 + $0x138] sm:$0xff]
    %v5123 = vld [vmem:[#allocation12 + $0x140] sm:$0xff]
    %v5124 = vld [vmem:[#allocation12 + $0x148] sm:$0xff]
    %v5125 = vld [vmem:[#allocation12 + $0x150] sm:$0xff]
    %v5126 = vld [vmem:[#allocation12 + $0x158] sm:$0xff]
    %v5127 = vld [vmem:[#allocation12 + $0x160] sm:$0xff]
    %v5128 = vld [vmem:[#allocation12 + $0x168] sm:$0xff]
    %v5129 = vld [vmem:[#allocation12 + $0x170] sm:$0xff]
    %v5130 = vld [vmem:[#allocation12 + $0x178] sm:$0xff]
    %v5131 = vld [vmem:[#allocation12 + $0x180] sm:$0xff]
    %v5132 = vld [vmem:[#allocation12 + $0x188] sm:$0xff]
    %v5133 = vld [vmem:[#allocation12 + $0x190] sm:$0xff]
    %v5134 = vld [vmem:[#allocation12 + $0x198] sm:$0xff]
    %v5135 = vld [vmem:[#allocation12 + $0x1a0] sm:$0xff]
    %v5136 = vld [vmem:[#allocation12 + $0x1a8] sm:$0xff]
    %v5137 = vld [vmem:[#allocation12 + $0x1b0] sm:$0xff]
    %v5138 = vld [vmem:[#allocation12 + $0x1b8] sm:$0xff]
    %v5139 = vld [vmem:[#allocation12 + $0x1c0] sm:$0xff]
    %v5140 = vld [vmem:[#allocation12 + $0x1c8] sm:$0xff]
    %v5141 = vld [vmem:[#allocation12 + $0x1d0] sm:$0xff]
    %v5142 = vld [vmem:[#allocation12 + $0x1d8] sm:$0xff]
    %v5143 = vld [vmem:[#allocation12 + $0x1e0] sm:$0xff]
    %v5144 = vld [vmem:[#allocation12 + $0x1e8] sm:$0xff]
    %v5145 = vld [vmem:[#allocation12 + $0x1f0] sm:$0xff]
    %v5146 = vld [vmem:[#allocation12 + $0x1f8] sm:$0xff]
    %v5147 = vld [vmem:[%s10] sm:$0x3]
    %v5149 = vlaneseq
    %v5150 = vshrl.u32 %v5149, 7
    %v5151 = vsub.s32 0, %v5150
    %v5152 = vrot.slane %v5147, %v5151
    %v5153 = vlaneseq
    %v5154 = vshrl.u32 %v5153, 7
    %v5155 = vsub.s32 1, %v5154
    %v5156 = vrot.slane %v5147, %v5155
    %v5223 = vunpack.c.l.b16 %v5083
    %v5224 = vunpack.c.h.b16 %v5083
    %v5225 = vunpack.c.l.b16 %v5084
    %v5226 = vunpack.c.h.b16 %v5084
    %v5227 = vunpack.c.l.b16 %v5085
    %v5228 = vunpack.c.h.b16 %v5085
    %v5229 = vunpack.c.l.b16 %v5086
    %v5230 = vunpack.c.h.b16 %v5086
    %v5231 = vunpack.c.l.b16 %v5087
    %v5232 = vunpack.c.h.b16 %v5087
    %v5233 = vunpack.c.l.b16 %v5088
    %v5234 = vunpack.c.h.b16 %v5088
    %v5235 = vunpack.c.l.b16 %v5089
    %v5236 = vunpack.c.h.b16 %v5089
    %v5237 = vunpack.c.l.b16 %v5090
    %v5238 = vunpack.c.h.b16 %v5090
    %v5239 = vunpack.c.l.b16 %v5091
    %v5240 = vunpack.c.h.b16 %v5091
    %v5241 = vunpack.c.l.b16 %v5092
    %v5242 = vunpack.c.h.b16 %v5092
    %v5243 = vunpack.c.l.b16 %v5093
    %v5244 = vunpack.c.h.b16 %v5093
    %v5245 = vunpack.c.l.b16 %v5094
    %v5246 = vunpack.c.h.b16 %v5094
    %v5247 = vunpack.c.l.b16 %v5095
    %v5248 = vunpack.c.h.b16 %v5095
    %v5249 = vunpack.c.l.b16 %v5096
    %v5250 = vunpack.c.h.b16 %v5096
    %v5251 = vunpack.c.l.b16 %v5097
    %v5252 = vunpack.c.h.b16 %v5097
    %v5253 = vunpack.c.l.b16 %v5098
    %v5254 = vunpack.c.h.b16 %v5098
    %v5255 = vunpack.c.l.b16 %v5099
    %v5256 = vunpack.c.h.b16 %v5099
    %v5257 = vunpack.c.l.b16 %v5100
    %v5258 = vunpack.c.h.b16 %v5100
    %v5259 = vunpack.c.l.b16 %v5101
    %v5260 = vunpack.c.h.b16 %v5101
    %v5261 = vunpack.c.l.b16 %v5102
    %v5262 = vunpack.c.h.b16 %v5102
    %v5263 = vunpack.c.l.b16 %v5103
    %v5264 = vunpack.c.h.b16 %v5103
    %v5265 = vunpack.c.l.b16 %v5104
    %v5266 = vunpack.c.h.b16 %v5104
    %v5267 = vunpack.c.l.b16 %v5105
    %v5268 = vunpack.c.h.b16 %v5105
    %v5269 = vunpack.c.l.b16 %v5106
    %v5270 = vunpack.c.h.b16 %v5106
    %v5271 = vunpack.c.l.b16 %v5107
    %v5272 = vunpack.c.h.b16 %v5107
    %v5273 = vunpack.c.l.b16 %v5108
    %v5274 = vunpack.c.h.b16 %v5108
    %v5275 = vunpack.c.l.b16 %v5109
    %v5276 = vunpack.c.h.b16 %v5109
    %v5277 = vunpack.c.l.b16 %v5110
    %v5278 = vunpack.c.h.b16 %v5110
    %v5279 = vunpack.c.l.b16 %v5111
    %v5280 = vunpack.c.h.b16 %v5111
    %v5281 = vunpack.c.l.b16 %v5112
    %v5282 = vunpack.c.h.b16 %v5112
    %v5283 = vunpack.c.l.b16 %v5113
    %v5284 = vunpack.c.h.b16 %v5113
    %v5285 = vunpack.c.l.b16 %v5114
    %v5286 = vunpack.c.h.b16 %v5114
    %v5287 = vunpack.c.l.b16 %v5115
    %v5288 = vunpack.c.h.b16 %v5115
    %v5289 = vunpack.c.l.b16 %v5116
    %v5290 = vunpack.c.h.b16 %v5116
    %v5291 = vunpack.c.l.b16 %v5117
    %v5292 = vunpack.c.h.b16 %v5117
    %v5293 = vunpack.c.l.b16 %v5118
    %v5294 = vunpack.c.h.b16 %v5118
    %v5295 = vunpack.c.l.b16 %v5119
    %v5296 = vunpack.c.h.b16 %v5119
    %v5297 = vunpack.c.l.b16 %v5120
    %v5298 = vunpack.c.h.b16 %v5120
    %v5299 = vunpack.c.l.b16 %v5121
    %v5300 = vunpack.c.h.b16 %v5121
    %v5301 = vunpack.c.l.b16 %v5122
    %v5302 = vunpack.c.h.b16 %v5122
    %v5303 = vunpack.c.l.b16 %v5123
    %v5304 = vunpack.c.h.b16 %v5123
    %v5305 = vunpack.c.l.b16 %v5124
    %v5306 = vunpack.c.h.b16 %v5124
    %v5307 = vunpack.c.l.b16 %v5125
    %v5308 = vunpack.c.h.b16 %v5125
    %v5309 = vunpack.c.l.b16 %v5126
    %v5310 = vunpack.c.h.b16 %v5126
    %v5311 = vunpack.c.l.b16 %v5127
    %v5312 = vunpack.c.h.b16 %v5127
    %v5313 = vunpack.c.l.b16 %v5128
    %v5314 = vunpack.c.h.b16 %v5128
    %v5315 = vunpack.c.l.b16 %v5129
    %v5316 = vunpack.c.h.b16 %v5129
    %v5317 = vunpack.c.l.b16 %v5130
    %v5318 = vunpack.c.h.b16 %v5130
    %v5319 = vunpack.c.l.b16 %v5131
    %v5320 = vunpack.c.h.b16 %v5131
    %v5321 = vunpack.c.l.b16 %v5132
    %v5322 = vunpack.c.h.b16 %v5132
    %v5323 = vunpack.c.l.b16 %v5133
    %v5324 = vunpack.c.h.b16 %v5133
    %v5325 = vunpack.c.l.b16 %v5134
    %v5326 = vunpack.c.h.b16 %v5134
    %v5327 = vunpack.c.l.b16 %v5135
    %v5328 = vunpack.c.h.b16 %v5135
    %v5329 = vunpack.c.l.b16 %v5136
    %v5330 = vunpack.c.h.b16 %v5136
    %v5331 = vunpack.c.l.b16 %v5137
    %v5332 = vunpack.c.h.b16 %v5137
    %v5333 = vunpack.c.l.b16 %v5138
    %v5334 = vunpack.c.h.b16 %v5138
    %v5335 = vunpack.c.l.b16 %v5139
    %v5336 = vunpack.c.h.b16 %v5139
    %v5337 = vunpack.c.l.b16 %v5140
    %v5338 = vunpack.c.h.b16 %v5140
    %v5339 = vunpack.c.l.b16 %v5141
    %v5340 = vunpack.c.h.b16 %v5141
    %v5341 = vunpack.c.l.b16 %v5142
    %v5342 = vunpack.c.h.b16 %v5142
    %v5343 = vunpack.c.l.b16 %v5143
    %v5344 = vunpack.c.h.b16 %v5143
    %v5345 = vunpack.c.l.b16 %v5144
    %v5346 = vunpack.c.h.b16 %v5144
    %v5347 = vunpack.c.l.b16 %v5145
    %v5348 = vunpack.c.h.b16 %v5145
    %v5349 = vunpack.c.l.b16 %v5146
    %v5350 = vunpack.c.h.b16 %v5146
    %v5351 = vpack.c.b16 %v5225, %v5223
    %v5352 = vpack.c.b16 %v5226, %v5224
    %v5353 = vpack.c.b16 %v5229, %v5227
    %v5354 = vpack.c.b16 %v5230, %v5228
    %v5355 = vpack.c.b16 %v5233, %v5231
    %v5356 = vpack.c.b16 %v5234, %v5232
    %v5357 = vpack.c.b16 %v5237, %v5235
    %v5358 = vpack.c.b16 %v5238, %v5236
    %v5359 = vpack.c.b16 %v5241, %v5239
    %v5360 = vpack.c.b16 %v5242, %v5240
    %v5361 = vpack.c.b16 %v5245, %v5243
    %v5362 = vpack.c.b16 %v5246, %v5244
    %v5363 = vpack.c.b16 %v5249, %v5247
    %v5364 = vpack.c.b16 %v5250, %v5248
    %v5365 = vpack.c.b16 %v5253, %v5251
    %v5366 = vpack.c.b16 %v5254, %v5252
    %v5367 = vpack.c.b16 %v5257, %v5255
    %v5368 = vpack.c.b16 %v5258, %v5256
    %v5369 = vpack.c.b16 %v5261, %v5259
    %v5370 = vpack.c.b16 %v5262, %v5260
    %v5371 = vpack.c.b16 %v5265, %v5263
    %v5372 = vpack.c.b16 %v5266, %v5264
    %v5373 = vpack.c.b16 %v5269, %v5267
    %v5374 = vpack.c.b16 %v5270, %v5268
    %v5375 = vpack.c.b16 %v5273, %v5271
    %v5376 = vpack.c.b16 %v5274, %v5272
    %v5377 = vpack.c.b16 %v5277, %v5275
    %v5378 = vpack.c.b16 %v5278, %v5276
    %v5379 = vpack.c.b16 %v5281, %v5279
    %v5380 = vpack.c.b16 %v5282, %v5280
    %v5381 = vpack.c.b16 %v5285, %v5283
    %v5382 = vpack.c.b16 %v5286, %v5284
    %v5383 = vpack.c.b16 %v5289, %v5287
    %v5384 = vpack.c.b16 %v5290, %v5288
    %v5385 = vpack.c.b16 %v5293, %v5291
    %v5386 = vpack.c.b16 %v5294, %v5292
    %v5387 = vpack.c.b16 %v5297, %v5295
    %v5388 = vpack.c.b16 %v5298, %v5296
    %v5389 = vpack.c.b16 %v5301, %v5299
    %v5390 = vpack.c.b16 %v5302, %v5300
    %v5391 = vpack.c.b16 %v5305, %v5303
    %v5392 = vpack.c.b16 %v5306, %v5304
    %v5393 = vpack.c.b16 %v5309, %v5307
    %v5394 = vpack.c.b16 %v5310, %v5308
    %v5395 = vpack.c.b16 %v5313, %v5311
    %v5396 = vpack.c.b16 %v5314, %v5312
    %v5397 = vpack.c.b16 %v5317, %v5315
    %v5398 = vpack.c.b16 %v5318, %v5316
    %v5399 = vpack.c.b16 %v5321, %v5319
    %v5400 = vpack.c.b16 %v5322, %v5320
    %v5401 = vpack.c.b16 %v5325, %v5323
    %v5402 = vpack.c.b16 %v5326, %v5324
    %v5403 = vpack.c.b16 %v5329, %v5327
    %v5404 = vpack.c.b16 %v5330, %v5328
    %v5405 = vpack.c.b16 %v5333, %v5331
    %v5406 = vpack.c.b16 %v5334, %v5332
    %v5407 = vpack.c.b16 %v5337, %v5335
    %v5408 = vpack.c.b16 %v5338, %v5336
    %v5409 = vpack.c.b16 %v5341, %v5339
    %v5410 = vpack.c.b16 %v5342, %v5340
    %v5411 = vpack.c.b16 %v5345, %v5343
    %v5412 = vpack.c.b16 %v5346, %v5344
    %v5413 = vpack.c.b16 %v5349, %v5347
    %v5414 = vpack.c.b16 %v5350, %v5348
    %5479 = vmatprep.subr.bf16.mxu0 %v5352
    %5480 = vmatpush1.bf16.msra.mxu0 %v5351
    %5481 = vmatprep.subr.bf16.mxu0 %v5354
    %5482 = vmatpush1.bf16.msra.mxu0 %v5353
    %5483 = vmatprep.subr.bf16.mxu0 %v5356
    %5484 = vmatpush1.bf16.msra.mxu0 %v5355
    %5485 = vmatprep.subr.bf16.mxu0 %v5358
    %5486 = vmatpush1.bf16.msra.mxu0 %v5357
    %5487 = vmatprep.subr.bf16.mxu0 %v5360
    %5488 = vmatpush1.bf16.msra.mxu0 %v5359
    %5489 = vmatprep.subr.bf16.mxu0 %v5362
    %5490 = vmatpush1.bf16.msra.mxu0 %v5361
    %5491 = vmatprep.subr.bf16.mxu0 %v5364
    %5492 = vmatpush1.bf16.msra.mxu0 %v5363
    %5493 = vmatprep.subr.bf16.mxu0 %v5366
    %5494 = vmatpush1.bf16.msra.mxu0 %v5365
    %5495 = vmatprep.subr.bf16.mxu0 %v5368
    %5496 = vmatpush1.bf16.msra.mxu0 %v5367
    %5497 = vmatprep.subr.bf16.mxu0 %v5370
    %5498 = vmatpush1.bf16.msra.mxu0 %v5369
    %5499 = vmatprep.subr.bf16.mxu0 %v5372
    %5500 = vmatpush1.bf16.msra.mxu0 %v5371
    %5501 = vmatprep.subr.bf16.mxu0 %v5374
    %5502 = vmatpush1.bf16.msra.mxu0 %v5373
    %5503 = vmatprep.subr.bf16.mxu0 %v5376
    %5504 = vmatpush1.bf16.msra.mxu0 %v5375
    %5505 = vmatprep.subr.bf16.mxu0 %v5378
    %5506 = vmatpush1.bf16.msra.mxu0 %v5377
    %5507 = vmatprep.subr.bf16.mxu0 %v5380
    %5508 = vmatpush1.bf16.msra.mxu0 %v5379
    %5509 = vmatprep.subr.bf16.mxu0 %v5382
    %5510 = vmatpush1.bf16.msra.mxu0 %v5381
    %5511 = vmatprep.mubr.bf16.mxu0 %v5052
    %5512 = vmatmul.mubr.bf16.gmra.mrb[0].mxu0 %v5051
    %v5513 = vpop.f32.mrb[0].mxu0
    %v5514 = vadd.f32 %v5152, %v5513
    %v5515 = vpop.f32.mrb[0].mxu0
    %v5516 = vadd.f32 %v5156, %v5515
    %v5517 = vpop.f32.mrb[0].mxu0
    %v5518 = vadd.f32 %v5152, %v5517
    %v5519 = vpop.f32.mrb[0].mxu0
    %v5520 = vadd.f32 %v5156, %v5519
    %5521 = vmatprep.mubr.bf16.mxu0 %v5056
    %5522 = vmatmul.mubr.bf16.gmra.mrb[0].mxu0 %v5055
    %v5523 = vpop.f32.mrb[0].mxu0
    %v5524 = vadd.f32 %v5152, %v5523
    %v5525 = vpop.f32.mrb[0].mxu0
    %v5526 = vadd.f32 %v5156, %v5525
    %v5527 = vpop.f32.mrb[0].mxu0
    %v5528 = vadd.f32 %v5152, %v5527
    %v5529 = vpop.f32.mrb[0].mxu0
    %v5530 = vadd.f32 %v5156, %v5529
    %5531 = vmatprep.mubr.bf16.mxu0 %v5060
    %5532 = vmatmul.mubr.bf16.gmra.mrb[0].mxu0 %v5059
    %v5533 = vpop.f32.mrb[0].mxu0
    %v5534 = vadd.f32 %v5152, %v5533
    %v5535 = vpop.f32.mrb[0].mxu0
    %v5536 = vadd.f32 %v5156, %v5535
    %v5537 = vpop.f32.mrb[0].mxu0
    %v5538 = vadd.f32 %v5152, %v5537
    %v5539 = vpop.f32.mrb[0].mxu0
    %v5540 = vadd.f32 %v5156, %v5539
    %5541 = vmatprep.mubr.bf16.mxu0 %v5064
    %5542 = vmatmul.mubr.bf16.gmra.mrb[0].mxu0 %v5063
    %v5543 = vpop.f32.mrb[0].mxu0
    %v5544 = vadd.f32 %v5152, %v5543
    %v5545 = vpop.f32.mrb[0].mxu0
    %v5546 = vadd.f32 %v5156, %v5545
    %v5547 = vpop.f32.mrb[0].mxu0
    %v5548 = vadd.f32 %v5152, %v5547
    %v5549 = vpop.f32.mrb[0].mxu0
    %v5550 = vadd.f32 %v5156, %v5549
    %5551 = vmatprep.mubr.bf16.mxu0 %v5068
    %5552 = vmatmul.mubr.bf16.gmra.mrb[0].mxu0 %v5067
    %v5553 = vpop.f32.mrb[0].mxu0
    %v5554 = vadd.f32 %v5152, %v5553
    %v5555 = vpop.f32.mrb[0].mxu0
    %v5556 = vadd.f32 %v5156, %v5555
    %v5557 = vpop.f32.mrb[0].mxu0
    %v5558 = vadd.f32 %v5152, %v5557
    %v5559 = vpop.f32.mrb[0].mxu0
    %v5560 = vadd.f32 %v5156, %v5559
    %5561 = vmatprep.mubr.bf16.mxu0 %v5072
    %5562 = vmatmul.mubr.bf16.gmra.mrb[0].mxu0 %v5071
    %v5563 = vpop.f32.mrb[0].mxu0
    %v5564 = vadd.f32 %v5152, %v5563
    %v5565 = vpop.f32.mrb[0].mxu0
    %v5566 = vadd.f32 %v5156, %v5565
    %v5567 = vpop.f32.mrb[0].mxu0
    %v5568 = vadd.f32 %v5152, %v5567
    %v5569 = vpop.f32.mrb[0].mxu0
    %v5570 = vadd.f32 %v5156, %v5569
    %5571 = vmatprep.mubr.bf16.mxu0 %v5076
    %5572 = vmatmul.mubr.bf16.gmra.mrb[0].mxu0 %v5075
    %v5573 = vpop.f32.mrb[0].mxu0
    %v5574 = vadd.f32 %v5152, %v5573
    %v5575 = vpop.f32.mrb[0].mxu0
    %v5576 = vadd.f32 %v5156, %v5575
    %v5577 = vpop.f32.mrb[0].mxu0
    %v5578 = vadd.f32 %v5152, %v5577
    %v5579 = vpop.f32.mrb[0].mxu0
    %v5580 = vadd.f32 %v5156, %v5579
    %5581 = vmatprep.mubr.bf16.mxu0 %v5080
    %5582 = vmatmul.mubr.bf16.gmra.mrb[0].mxu0 %v5079
    %v5583 = vpop.f32.mrb[0].mxu0
    %v5584 = vadd.f32 %v5152, %v5583
    %v5585 = vpop.f32.mrb[0].mxu0
    %v5586 = vadd.f32 %v5156, %v5585
    %v5587 = vpop.f32.mrb[0].mxu0
    %v5588 = vadd.f32 %v5152, %v5587
    %v5589 = vpop.f32.mrb[0].mxu0
    %v5590 = vadd.f32 %v5156, %v5589
    %5591 = vdwg.mxu0
    %5592 = vmatprep.subr.bf16.mxu0 %v5384
    %5593 = vmatpush1.bf16.msra.mxu0 %v5383
    %5594 = vmatprep.subr.bf16.mxu0 %v5386
    %5595 = vmatpush1.bf16.msra.mxu0 %v5385
    %5596 = vmatprep.subr.bf16.mxu0 %v5388
    %5597 = vmatpush1.bf16.msra.mxu0 %v5387
    %5598 = vmatprep.subr.bf16.mxu0 %v5390
    %5599 = vmatpush1.bf16.msra.mxu0 %v5389
    %5600 = vmatprep.subr.bf16.mxu0 %v5392
    %5601 = vmatpush1.bf16.msra.mxu0 %v5391
    %5602 = vmatprep.subr.bf16.mxu0 %v5394
    %5603 = vmatpush1.bf16.msra.mxu0 %v5393
    %5604 = vmatprep.subr.bf16.mxu0 %v5396
    %5605 = vmatpush1.bf16.msra.mxu0 %v5395
    %5606 = vmatprep.subr.bf16.mxu0 %v5398
    %5607 = vmatpush1.bf16.msra.mxu0 %v5397
    %5608 = vmatprep.subr.bf16.mxu0 %v5400
    %5609 = vmatpush1.bf16.msra.mxu0 %v5399
    %5610 = vmatprep.subr.bf16.mxu0 %v5402
    %5611 = vmatpush1.bf16.msra.mxu0 %v5401
    %5612 = vmatprep.subr.bf16.mxu0 %v5404
    %5613 = vmatpush1.bf16.msra.mxu0 %v5403
    %5614 = vmatprep.subr.bf16.mxu0 %v5406
    %5615 = vmatpush1.bf16.msra.mxu0 %v5405
    %5616 = vmatprep.subr.bf16.mxu0 %v5408
    %5617 = vmatpush1.bf16.msra.mxu0 %v5407
    %5618 = vmatprep.subr.bf16.mxu0 %v5410
    %5619 = vmatpush1.bf16.msra.mxu0 %v5409
    %5620 = vmatprep.subr.bf16.mxu0 %v5412
    %5621 = vmatpush1.bf16.msra.mxu0 %v5411
    %5622 = vmatprep.subr.bf16.mxu0 %v5414
    %5623 = vmatpush1.bf16.msra.mxu0 %v5413
    %5624 = vmatprep.mubr.bf16.mxu0 %v5054
    %5625 = vmatmul.mubr.bf16.gmra.mrb[0].mxu0 %v5053
    %v5626 = vpop.f32.mrb[0].mxu0
    %v5627 = vadd.f32 %v5514, %v5626
    %v5628 = vpop.f32.mrb[0].mxu0
    %v5629 = vadd.f32 %v5516, %v5628
    %v5630 = vpop.f32.mrb[0].mxu0
    %v5631 = vadd.f32 %v5518, %v5630
    %v5632 = vpop.f32.mrb[0].mxu0
    %v5633 = vadd.f32 %v5520, %v5632
    %5634 = vmatprep.mubr.bf16.mxu0 %v5058
    %5635 = vmatmul.mubr.bf16.gmra.mrb[0].mxu0 %v5057
    %v5636 = vpop.f32.mrb[0].mxu0
    %v5637 = vadd.f32 %v5524, %v5636
    %v5638 = vpop.f32.mrb[0].mxu0
    %v5639 = vadd.f32 %v5526, %v5638
    %v5640 = vpop.f32.mrb[0].mxu0
    %v5641 = vadd.f32 %v5528, %v5640
    %v5642 = vpop.f32.mrb[0].mxu0
    %v5643 = vadd.f32 %v5530, %v5642
    %5644 = vmatprep.mubr.bf16.mxu0 %v5062
    %5645 = vmatmul.mubr.bf16.gmra.mrb[0].mxu0 %v5061
    %v5646 = vpop.f32.mrb[0].mxu0
    %v5647 = vadd.f32 %v5534, %v5646
    %v5648 = vpop.f32.mrb[0].mxu0
    %v5649 = vadd.f32 %v5536, %v5648
    %v5650 = vpop.f32.mrb[0].mxu0
    %v5651 = vadd.f32 %v5538, %v5650
    %v5652 = vpop.f32.mrb[0].mxu0
    %v5653 = vadd.f32 %v5540, %v5652
    %5654 = vmatprep.mubr.bf16.mxu0 %v5066
    %5655 = vmatmul.mubr.bf16.gmra.mrb[0].mxu0 %v5065
    %v5656 = vpop.f32.mrb[0].mxu0
    %v5657 = vadd.f32 %v5544, %v5656
    %v5658 = vpop.f32.mrb[0].mxu0
    %v5659 = vadd.f32 %v5546, %v5658
    %v5660 = vpop.f32.mrb[0].mxu0
    %v5661 = vadd.f32 %v5548, %v5660
    %v5662 = vpop.f32.mrb[0].mxu0
    %v5663 = vadd.f32 %v5550, %v5662
    %5664 = vmatprep.mubr.bf16.mxu0 %v5070
    %5665 = vmatmul.mubr.bf16.gmra.mrb[0].mxu0 %v5069
    %v5666 = vpop.f32.mrb[0].mxu0
    %v5667 = vadd.f32 %v5554, %v5666
    %v5668 = vpop.f32.mrb[0].mxu0
    %v5669 = vadd.f32 %v5556, %v5668
    %v5670 = vpop.f32.mrb[0].mxu0
    %v5671 = vadd.f32 %v5558, %v5670
    %v5672 = vpop.f32.mrb[0].mxu0
    %v5673 = vadd.f32 %v5560, %v5672
    %5674 = vmatprep.mubr.bf16.mxu0 %v5074
    %5675 = vmatmul.mubr.bf16.gmra.mrb[0].mxu0 %v5073
    %v5676 = vpop.f32.mrb[0].mxu0
    %v5677 = vadd.f32 %v5564, %v5676
    %v5678 = vpop.f32.mrb[0].mxu0
    %v5679 = vadd.f32 %v5566, %v5678
    %v5680 = vpop.f32.mrb[0].mxu0
    %v5681 = vadd.f32 %v5568, %v5680
    %v5682 = vpop.f32.mrb[0].mxu0
    %v5683 = vadd.f32 %v5570, %v5682
    %5684 = vmatprep.mubr.bf16.mxu0 %v5078
    %5685 = vmatmul.mubr.bf16.gmra.mrb[0].mxu0 %v5077
    %v5686 = vpop.f32.mrb[0].mxu0
    %v5687 = vadd.f32 %v5574, %v5686
    %v5688 = vpop.f32.mrb[0].mxu0
    %v5689 = vadd.f32 %v5576, %v5688
    %v5690 = vpop.f32.mrb[0].mxu0
    %v5691 = vadd.f32 %v5578, %v5690
    %v5692 = vpop.f32.mrb[0].mxu0
    %v5693 = vadd.f32 %v5580, %v5692
    %5694 = vmatprep.mubr.bf16.mxu0 %v5082
    %5695 = vmatmul.mubr.bf16.gmra.mrb[0].mxu0 %v5081
    %v5696 = vpop.f32.mrb[0].mxu0
    %v5697 = vadd.f32 %v5584, %v5696
    %v5698 = vpop.f32.mrb[0].mxu0
    %v5699 = vadd.f32 %v5586, %v5698
    %v5700 = vpop.f32.mrb[0].mxu0
    %v5701 = vadd.f32 %v5588, %v5700
    %v5702 = vpop.f32.mrb[0].mxu0
    %v5703 = vadd.f32 %v5590, %v5702
    %5704 = vdwg.mxu0
    %v5705 = vmax.f32 %v5627, 0.0
    %v5706 = vmax.f32 %v5629, 0.0
    %v5707 = vmax.f32 %v5631, 0.0
    %v5708 = vmax.f32 %v5633, 0.0
    %v5709 = vmax.f32 %v5637, 0.0
    %v5710 = vmax.f32 %v5639, 0.0
    %v5711 = vmax.f32 %v5641, 0.0
    %v5712 = vmax.f32 %v5643, 0.0
    %v5713 = vmax.f32 %v5647, 0.0
    %v5714 = vmax.f32 %v5649, 0.0
    %v5715 = vmax.f32 %v5651, 0.0
    %v5716 = vmax.f32 %v5653, 0.0
    %v5717 = vmax.f32 %v5657, 0.0
    %v5718 = vmax.f32 %v5659, 0.0
    %v5719 = vmax.f32 %v5661, 0.0
    %v5720 = vmax.f32 %v5663, 0.0
    %v5721 = vmax.f32 %v5667, 0.0
    %v5722 = vmax.f32 %v5669, 0.0
    %v5723 = vmax.f32 %v5671, 0.0
    %v5724 = vmax.f32 %v5673, 0.0
    %v5725 = vmax.f32 %v5677, 0.0
    %v5726 = vmax.f32 %v5679, 0.0
    %v5727 = vmax.f32 %v5681, 0.0
    %v5728 = vmax.f32 %v5683, 0.0
    %v5729 = vmax.f32 %v5687, 0.0
    %v5730 = vmax.f32 %v5689, 0.0
    %v5731 = vmax.f32 %v5691, 0.0
    %v5732 = vmax.f32 %v5693, 0.0
    %v5733 = vmax.f32 %v5697, 0.0
    %v5734 = vmax.f32 %v5699, 0.0
    %v5735 = vmax.f32 %v5701, 0.0
    %v5736 = vmax.f32 %v5703, 0.0
    %v5737 = vpack.c.bf16 %v5707, %v5705
    %v5738 = vpack.c.bf16 %v5708, %v5706
    %v5739 = vpack.c.bf16 %v5711, %v5709
    %v5740 = vpack.c.bf16 %v5712, %v5710
    %v5741 = vpack.c.bf16 %v5715, %v5713
    %v5742 = vpack.c.bf16 %v5716, %v5714
    %v5743 = vpack.c.bf16 %v5719, %v5717
    %v5744 = vpack.c.bf16 %v5720, %v5718
    %v5745 = vpack.c.bf16 %v5723, %v5721
    %v5746 = vpack.c.bf16 %v5724, %v5722
    %v5747 = vpack.c.bf16 %v5727, %v5725
    %v5748 = vpack.c.bf16 %v5728, %v5726
    %v5749 = vpack.c.bf16 %v5731, %v5729
    %v5750 = vpack.c.bf16 %v5732, %v5730
    %v5751 = vpack.c.bf16 %v5735, %v5733
    %v5752 = vpack.c.bf16 %v5736, %v5734
    %v5753 = vld [vmem:[#allocation14] sm:$0xff]
    %v5754 = vld [vmem:[#allocation14 + $0x8] sm:$0xff]
    %v5755 = vld [vmem:[#allocation14 + $0x10] sm:$0xff]
    %v5756 = vld [vmem:[#allocation14 + $0x18] sm:$0xff]
    %v5757 = vld [vmem:[#allocation14 + $0x20] sm:$0xff]
    %v5758 = vld [vmem:[#allocation14 + $0x28] sm:$0xff]
    %v5759 = vld [vmem:[#allocation14 + $0x30] sm:$0xff]
    %v5760 = vld [vmem:[#allocation14 + $0x38] sm:$0xff]
    %v5761 = vld [vmem:[#allocation14 + $0x40] sm:$0xff]
    %v5762 = vld [vmem:[#allocation14 + $0x48] sm:$0xff]
    %v5763 = vld [vmem:[#allocation14 + $0x50] sm:$0xff]
    %v5764 = vld [vmem:[#allocation14 + $0x58] sm:$0xff]
    %v5765 = vld [vmem:[#allocation14 + $0x60] sm:$0xff]
    %v5766 = vld [vmem:[#allocation14 + $0x68] sm:$0xff]
    %v5767 = vld [vmem:[#allocation14 + $0x70] sm:$0xff]
    %v5768 = vld [vmem:[#allocation14 + $0x78] sm:$0xff]
    %v5769 = vld [vmem:[#allocation14 + $0x80] sm:$0xff]
    %v5770 = vld [vmem:[#allocation14 + $0x88] sm:$0xff]
    %v5771 = vld [vmem:[#allocation14 + $0x90] sm:$0xff]
    %v5772 = vld [vmem:[#allocation14 + $0x98] sm:$0xff]
    %v5773 = vld [vmem:[#allocation14 + $0xa0] sm:$0xff]
    %v5774 = vld [vmem:[#allocation14 + $0xa8] sm:$0xff]
    %v5775 = vld [vmem:[#allocation14 + $0xb0] sm:$0xff]
    %v5776 = vld [vmem:[#allocation14 + $0xb8] sm:$0xff]
    %v5777 = vld [vmem:[#allocation14 + $0xc0] sm:$0xff]
    %v5778 = vld [vmem:[#allocation14 + $0xc8] sm:$0xff]
    %v5779 = vld [vmem:[#allocation14 + $0xd0] sm:$0xff]
    %v5780 = vld [vmem:[#allocation14 + $0xd8] sm:$0xff]
    %v5781 = vld [vmem:[#allocation14 + $0xe0] sm:$0xff]
    %v5782 = vld [vmem:[#allocation14 + $0xe8] sm:$0xff]
    %v5783 = vld [vmem:[#allocation14 + $0xf0] sm:$0xff]
    %v5784 = vld [vmem:[#allocation14 + $0xf8] sm:$0xff]
    %v5785 = vld [vmem:[#allocation14 + $0x100] sm:$0xff]
    %v5786 = vld [vmem:[#allocation14 + $0x108] sm:$0xff]
    %v5787 = vld [vmem:[#allocation14 + $0x110] sm:$0xff]
    %v5788 = vld [vmem:[#allocation14 + $0x118] sm:$0xff]
    %v5789 = vld [vmem:[#allocation14 + $0x120] sm:$0xff]
    %v5790 = vld [vmem:[#allocation14 + $0x128] sm:$0xff]
    %v5791 = vld [vmem:[#allocation14 + $0x130] sm:$0xff]
    %v5792 = vld [vmem:[#allocation14 + $0x138] sm:$0xff]
    %v5793 = vld [vmem:[#allocation14 + $0x140] sm:$0xff]
    %v5794 = vld [vmem:[#allocation14 + $0x148] sm:$0xff]
    %v5795 = vld [vmem:[#allocation14 + $0x150] sm:$0xff]
    %v5796 = vld [vmem:[#allocation14 + $0x158] sm:$0xff]
    %v5797 = vld [vmem:[#allocation14 + $0x160] sm:$0xff]
    %v5798 = vld [vmem:[#allocation14 + $0x168] sm:$0xff]
    %v5799 = vld [vmem:[#allocation14 + $0x170] sm:$0xff]
    %v5800 = vld [vmem:[#allocation14 + $0x178] sm:$0xff]
    %v5801 = vld [vmem:[#allocation14 + $0x180] sm:$0xff]
    %v5802 = vld [vmem:[#allocation14 + $0x188] sm:$0xff]
    %v5803 = vld [vmem:[#allocation14 + $0x190] sm:$0xff]
    %v5804 = vld [vmem:[#allocation14 + $0x198] sm:$0xff]
    %v5805 = vld [vmem:[#allocation14 + $0x1a0] sm:$0xff]
    %v5806 = vld [vmem:[#allocation14 + $0x1a8] sm:$0xff]
    %v5807 = vld [vmem:[#allocation14 + $0x1b0] sm:$0xff]
    %v5808 = vld [vmem:[#allocation14 + $0x1b8] sm:$0xff]
    %v5809 = vld [vmem:[#allocation14 + $0x1c0] sm:$0xff]
    %v5810 = vld [vmem:[#allocation14 + $0x1c8] sm:$0xff]
    %v5811 = vld [vmem:[#allocation14 + $0x1d0] sm:$0xff]
    %v5812 = vld [vmem:[#allocation14 + $0x1d8] sm:$0xff]
    %v5813 = vld [vmem:[#allocation14 + $0x1e0] sm:$0xff]
    %v5814 = vld [vmem:[#allocation14 + $0x1e8] sm:$0xff]
    %v5815 = vld [vmem:[#allocation14 + $0x1f0] sm:$0xff]
    %v5816 = vld [vmem:[#allocation14 + $0x1f8] sm:$0xff]
    %v5881 = vunpack.c.l.b16 %v5753
    %v5882 = vunpack.c.h.b16 %v5753
    %v5883 = vunpack.c.l.b16 %v5754
    %v5884 = vunpack.c.h.b16 %v5754
    %v5885 = vunpack.c.l.b16 %v5755
    %v5886 = vunpack.c.h.b16 %v5755
    %v5887 = vunpack.c.l.b16 %v5756
    %v5888 = vunpack.c.h.b16 %v5756
    %v5889 = vunpack.c.l.b16 %v5757
    %v5890 = vunpack.c.h.b16 %v5757
    %v5891 = vunpack.c.l.b16 %v5758
    %v5892 = vunpack.c.h.b16 %v5758
    %v5893 = vunpack.c.l.b16 %v5759
    %v5894 = vunpack.c.h.b16 %v5759
    %v5895 = vunpack.c.l.b16 %v5760
    %v5896 = vunpack.c.h.b16 %v5760
    %v5897 = vunpack.c.l.b16 %v5761
    %v5898 = vunpack.c.h.b16 %v5761
    %v5899 = vunpack.c.l.b16 %v5762
    %v5900 = vunpack.c.h.b16 %v5762
    %v5901 = vunpack.c.l.b16 %v5763
    %v5902 = vunpack.c.h.b16 %v5763
    %v5903 = vunpack.c.l.b16 %v5764
    %v5904 = vunpack.c.h.b16 %v5764
    %v5905 = vunpack.c.l.b16 %v5765
    %v5906 = vunpack.c.h.b16 %v5765
    %v5907 = vunpack.c.l.b16 %v5766
    %v5908 = vunpack.c.h.b16 %v5766
    %v5909 = vunpack.c.l.b16 %v5767
    %v5910 = vunpack.c.h.b16 %v5767
    %v5911 = vunpack.c.l.b16 %v5768
    %v5912 = vunpack.c.h.b16 %v5768
    %v5913 = vunpack.c.l.b16 %v5769
    %v5914 = vunpack.c.h.b16 %v5769
    %v5915 = vunpack.c.l.b16 %v5770
    %v5916 = vunpack.c.h.b16 %v5770
    %v5917 = vunpack.c.l.b16 %v5771
    %v5918 = vunpack.c.h.b16 %v5771
    %v5919 = vunpack.c.l.b16 %v5772
    %v5920 = vunpack.c.h.b16 %v5772
    %v5921 = vunpack.c.l.b16 %v5773
    %v5922 = vunpack.c.h.b16 %v5773
    %v5923 = vunpack.c.l.b16 %v5774
    %v5924 = vunpack.c.h.b16 %v5774
    %v5925 = vunpack.c.l.b16 %v5775
    %v5926 = vunpack.c.h.b16 %v5775
    %v5927 = vunpack.c.l.b16 %v5776
    %v5928 = vunpack.c.h.b16 %v5776
    %v5929 = vunpack.c.l.b16 %v5777
    %v5930 = vunpack.c.h.b16 %v5777
    %v5931 = vunpack.c.l.b16 %v5778
    %v5932 = vunpack.c.h.b16 %v5778
    %v5933 = vunpack.c.l.b16 %v5779
    %v5934 = vunpack.c.h.b16 %v5779
    %v5935 = vunpack.c.l.b16 %v5780
    %v5936 = vunpack.c.h.b16 %v5780
    %v5937 = vunpack.c.l.b16 %v5781
    %v5938 = vunpack.c.h.b16 %v5781
    %v5939 = vunpack.c.l.b16 %v5782
    %v5940 = vunpack.c.h.b16 %v5782
    %v5941 = vunpack.c.l.b16 %v5783
    %v5942 = vunpack.c.h.b16 %v5783
    %v5943 = vunpack.c.l.b16 %v5784
    %v5944 = vunpack.c.h.b16 %v5784
    %v5945 = vunpack.c.l.b16 %v5785
    %v5946 = vunpack.c.h.b16 %v5785
    %v5947 = vunpack.c.l.b16 %v5786
    %v5948 = vunpack.c.h.b16 %v5786
    %v5949 = vunpack.c.l.b16 %v5787
    %v5950 = vunpack.c.h.b16 %v5787
    %v5951 = vunpack.c.l.b16 %v5788
    %v5952 = vunpack.c.h.b16 %v5788
    %v5953 = vunpack.c.l.b16 %v5789
    %v5954 = vunpack.c.h.b16 %v5789
    %v5955 = vunpack.c.l.b16 %v5790
    %v5956 = vunpack.c.h.b16 %v5790
    %v5957 = vunpack.c.l.b16 %v5791
    %v5958 = vunpack.c.h.b16 %v5791
    %v5959 = vunpack.c.l.b16 %v5792
    %v5960 = vunpack.c.h.b16 %v5792
    %v5961 = vunpack.c.l.b16 %v5793
    %v5962 = vunpack.c.h.b16 %v5793
    %v5963 = vunpack.c.l.b16 %v5794
    %v5964 = vunpack.c.h.b16 %v5794
    %v5965 = vunpack.c.l.b16 %v5795
    %v5966 = vunpack.c.h.b16 %v5795
    %v5967 = vunpack.c.l.b16 %v5796
    %v5968 = vunpack.c.h.b16 %v5796
    %v5969 = vunpack.c.l.b16 %v5797
    %v5970 = vunpack.c.h.b16 %v5797
    %v5971 = vunpack.c.l.b16 %v5798
    %v5972 = vunpack.c.h.b16 %v5798
    %v5973 = vunpack.c.l.b16 %v5799
    %v5974 = vunpack.c.h.b16 %v5799
    %v5975 = vunpack.c.l.b16 %v5800
    %v5976 = vunpack.c.h.b16 %v5800
    %v5977 = vunpack.c.l.b16 %v5801
    %v5978 = vunpack.c.h.b16 %v5801
    %v5979 = vunpack.c.l.b16 %v5802
    %v5980 = vunpack.c.h.b16 %v5802
    %v5981 = vunpack.c.l.b16 %v5803
    %v5982 = vunpack.c.h.b16 %v5803
    %v5983 = vunpack.c.l.b16 %v5804
    %v5984 = vunpack.c.h.b16 %v5804
    %v5985 = vunpack.c.l.b16 %v5805
    %v5986 = vunpack.c.h.b16 %v5805
    %v5987 = vunpack.c.l.b16 %v5806
    %v5988 = vunpack.c.h.b16 %v5806
    %v5989 = vunpack.c.l.b16 %v5807
    %v5990 = vunpack.c.h.b16 %v5807
    %v5991 = vunpack.c.l.b16 %v5808
    %v5992 = vunpack.c.h.b16 %v5808
    %v5993 = vunpack.c.l.b16 %v5809
    %v5994 = vunpack.c.h.b16 %v5809
    %v5995 = vunpack.c.l.b16 %v5810
    %v5996 = vunpack.c.h.b16 %v5810
    %v5997 = vunpack.c.l.b16 %v5811
    %v5998 = vunpack.c.h.b16 %v5811
    %v5999 = vunpack.c.l.b16 %v5812
    %v6000 = vunpack.c.h.b16 %v5812
    %v6001 = vunpack.c.l.b16 %v5813
    %v6002 = vunpack.c.h.b16 %v5813
    %v6003 = vunpack.c.l.b16 %v5814
    %v6004 = vunpack.c.h.b16 %v5814
    %v6005 = vunpack.c.l.b16 %v5815
    %v6006 = vunpack.c.h.b16 %v5815
    %v6007 = vunpack.c.l.b16 %v5816
    %v6008 = vunpack.c.h.b16 %v5816
    %v6009 = vpack.c.b16 %v5885, %v5881
    %v6010 = vpack.c.b16 %v5886, %v5882
    %v6011 = vpack.c.b16 %v5887, %v5883
    %v6012 = vpack.c.b16 %v5888, %v5884
    %v6013 = vpack.c.b16 %v5893, %v5889
    %v6014 = vpack.c.b16 %v5894, %v5890
    %v6015 = vpack.c.b16 %v5895, %v5891
    %v6016 = vpack.c.b16 %v5896, %v5892
    %v6017 = vpack.c.b16 %v5901, %v5897
    %v6018 = vpack.c.b16 %v5902, %v5898
    %v6019 = vpack.c.b16 %v5903, %v5899
    %v6020 = vpack.c.b16 %v5904, %v5900
    %v6021 = vpack.c.b16 %v5909, %v5905
    %v6022 = vpack.c.b16 %v5910, %v5906
    %v6023 = vpack.c.b16 %v5911, %v5907
    %v6024 = vpack.c.b16 %v5912, %v5908
    %v6025 = vpack.c.b16 %v5917, %v5913
    %v6026 = vpack.c.b16 %v5918, %v5914
    %v6027 = vpack.c.b16 %v5919, %v5915
    %v6028 = vpack.c.b16 %v5920, %v5916
    %v6029 = vpack.c.b16 %v5925, %v5921
    %v6030 = vpack.c.b16 %v5926, %v5922
    %v6031 = vpack.c.b16 %v5927, %v5923
    %v6032 = vpack.c.b16 %v5928, %v5924
    %v6033 = vpack.c.b16 %v5933, %v5929
    %v6034 = vpack.c.b16 %v5934, %v5930
    %v6035 = vpack.c.b16 %v5935, %v5931
    %v6036 = vpack.c.b16 %v5936, %v5932
    %v6037 = vpack.c.b16 %v5941, %v5937
    %v6038 = vpack.c.b16 %v5942, %v5938
    %v6039 = vpack.c.b16 %v5943, %v5939
    %v6040 = vpack.c.b16 %v5944, %v5940
    %v6041 = vpack.c.b16 %v5949, %v5945
    %v6042 = vpack.c.b16 %v5950, %v5946
    %v6043 = vpack.c.b16 %v5951, %v5947
    %v6044 = vpack.c.b16 %v5952, %v5948
    %v6045 = vpack.c.b16 %v5957, %v5953
    %v6046 = vpack.c.b16 %v5958, %v5954
    %v6047 = vpack.c.b16 %v5959, %v5955
    %v6048 = vpack.c.b16 %v5960, %v5956
    %v6049 = vpack.c.b16 %v5965, %v5961
    %v6050 = vpack.c.b16 %v5966, %v5962
    %v6051 = vpack.c.b16 %v5967, %v5963
    %v6052 = vpack.c.b16 %v5968, %v5964
    %v6053 = vpack.c.b16 %v5973, %v5969
    %v6054 = vpack.c.b16 %v5974, %v5970
    %v6055 = vpack.c.b16 %v5975, %v5971
    %v6056 = vpack.c.b16 %v5976, %v5972
    %v6057 = vpack.c.b16 %v5981, %v5977
    %v6058 = vpack.c.b16 %v5982, %v5978
    %v6059 = vpack.c.b16 %v5983, %v5979
    %v6060 = vpack.c.b16 %v5984, %v5980
    %v6061 = vpack.c.b16 %v5989, %v5985
    %v6062 = vpack.c.b16 %v5990, %v5986
    %v6063 = vpack.c.b16 %v5991, %v5987
    %v6064 = vpack.c.b16 %v5992, %v5988
    %v6065 = vpack.c.b16 %v5997, %v5993
    %v6066 = vpack.c.b16 %v5998, %v5994
    %v6067 = vpack.c.b16 %v5999, %v5995
    %v6068 = vpack.c.b16 %v6000, %v5996
    %v6069 = vpack.c.b16 %v6005, %v6001
    %v6070 = vpack.c.b16 %v6006, %v6002
    %v6071 = vpack.c.b16 %v6007, %v6003
    %v6072 = vpack.c.b16 %v6008, %v6004
    %6137 = vmatprep.subr.bf16.mxu0 %v6010
    %6138 = vmatpush1.bf16.msra.mxu0 %v6009
    %6139 = vmatprep.subr.bf16.mxu0 %v6014
    %6140 = vmatpush1.bf16.msra.mxu0 %v6013
    %6141 = vmatprep.subr.bf16.mxu0 %v6018
    %6142 = vmatpush1.bf16.msra.mxu0 %v6017
    %6143 = vmatprep.subr.bf16.mxu0 %v6022
    %6144 = vmatpush1.bf16.msra.mxu0 %v6021
    %6145 = vmatprep.subr.bf16.mxu0 %v6026
    %6146 = vmatpush1.bf16.msra.mxu0 %v6025
    %6147 = vmatprep.subr.bf16.mxu0 %v6030
    %6148 = vmatpush1.bf16.msra.mxu0 %v6029
    %6149 = vmatprep.subr.bf16.mxu0 %v6034
    %6150 = vmatpush1.bf16.msra.mxu0 %v6033
    %6151 = vmatprep.subr.bf16.mxu0 %v6038
    %6152 = vmatpush1.bf16.msra.mxu0 %v6037
    %6153 = vmatprep.subr.bf16.mxu0 %v6042
    %6154 = vmatpush1.bf16.msra.mxu0 %v6041
    %6155 = vmatprep.subr.bf16.mxu0 %v6046
    %6156 = vmatpush1.bf16.msra.mxu0 %v6045
    %6157 = vmatprep.subr.bf16.mxu0 %v6050
    %6158 = vmatpush1.bf16.msra.mxu0 %v6049
    %6159 = vmatprep.subr.bf16.mxu0 %v6054
    %6160 = vmatpush1.bf16.msra.mxu0 %v6053
    %6161 = vmatprep.subr.bf16.mxu0 %v6058
    %6162 = vmatpush1.bf16.msra.mxu0 %v6057
    %6163 = vmatprep.subr.bf16.mxu0 %v6062
    %6164 = vmatpush1.bf16.msra.mxu0 %v6061
    %6165 = vmatprep.subr.bf16.mxu0 %v6066
    %6166 = vmatpush1.bf16.msra.mxu0 %v6065
    %6167 = vmatprep.subr.bf16.mxu0 %v6070
    %6168 = vmatpush1.bf16.msra.mxu0 %v6069
    %6169 = vmatprep.mubr.bf16.mxu0 %v5738
    %6170 = vmatmul.mubr.bf16.gmra.mrb[0].mxu0 %v5737
    %v6171 = vpop.f32.mrb[0].mxu0
    %v6172 = vadd.f32 %v2101, %v6171
    %v6173 = vpop.f32.mrb[0].mxu0
    %v6174 = vadd.f32 %v2102, %v6173
    %v6175 = vpop.f32.mrb[0].mxu0
    %v6176 = vadd.f32 %v2109, %v6175
    %v6177 = vpop.f32.mrb[0].mxu0
    %v6178 = vadd.f32 %v2110, %v6177
    %6179 = vmatprep.mubr.bf16.mxu0 %v5740
    %6180 = vmatmul.mubr.bf16.gmra.mrb[0].mxu0 %v5739
    %v6181 = vpop.f32.mrb[0].mxu0
    %v6182 = vadd.f32 %v2117, %v6181
    %v6183 = vpop.f32.mrb[0].mxu0
    %v6184 = vadd.f32 %v2118, %v6183
    %v6185 = vpop.f32.mrb[0].mxu0
    %v6186 = vadd.f32 %v2125, %v6185
    %v6187 = vpop.f32.mrb[0].mxu0
    %v6188 = vadd.f32 %v2126, %v6187
    %6189 = vmatprep.mubr.bf16.mxu0 %v5742
    %6190 = vmatmul.mubr.bf16.gmra.mrb[0].mxu0 %v5741
    %v6191 = vpop.f32.mrb[0].mxu0
    %v6192 = vadd.f32 %v2133, %v6191
    %v6193 = vpop.f32.mrb[0].mxu0
    %v6194 = vadd.f32 %v2134, %v6193
    %v6195 = vpop.f32.mrb[0].mxu0
    %v6196 = vadd.f32 %v2141, %v6195
    %v6197 = vpop.f32.mrb[0].mxu0
    %v6198 = vadd.f32 %v2142, %v6197
    %6199 = vmatprep.mubr.bf16.mxu0 %v5744
    %6200 = vmatmul.mubr.bf16.gmra.mrb[0].mxu0 %v5743
    %v6201 = vpop.f32.mrb[0].mxu0
    %v6202 = vadd.f32 %v2149, %v6201
    %v6203 = vpop.f32.mrb[0].mxu0
    %v6204 = vadd.f32 %v2150, %v6203
    %v6205 = vpop.f32.mrb[0].mxu0
    %v6206 = vadd.f32 %v2157, %v6205
    %v6207 = vpop.f32.mrb[0].mxu0
    %v6208 = vadd.f32 %v2158, %v6207
    %6209 = vmatprep.mubr.bf16.mxu0 %v5746
    %6210 = vmatmul.mubr.bf16.gmra.mrb[0].mxu0 %v5745
    %v6211 = vpop.f32.mrb[0].mxu0
    %v6212 = vadd.f32 %v2165, %v6211
    %v6213 = vpop.f32.mrb[0].mxu0
    %v6214 = vadd.f32 %v2166, %v6213
    %v6215 = vpop.f32.mrb[0].mxu0
    %v6216 = vadd.f32 %v2173, %v6215
    %v6217 = vpop.f32.mrb[0].mxu0
    %v6218 = vadd.f32 %v2174, %v6217
    %6219 = vmatprep.mubr.bf16.mxu0 %v5748
    %6220 = vmatmul.mubr.bf16.gmra.mrb[0].mxu0 %v5747
    %v6221 = vpop.f32.mrb[0].mxu0
    %v6222 = vadd.f32 %v2181, %v6221
    %v6223 = vpop.f32.mrb[0].mxu0
    %v6224 = vadd.f32 %v2182, %v6223
    %v6225 = vpop.f32.mrb[0].mxu0
    %v6226 = vadd.f32 %v2189, %v6225
    %v6227 = vpop.f32.mrb[0].mxu0
    %v6228 = vadd.f32 %v2190, %v6227
    %6229 = vmatprep.mubr.bf16.mxu0 %v5750
    %6230 = vmatmul.mubr.bf16.gmra.mrb[0].mxu0 %v5749
    %v6231 = vpop.f32.mrb[0].mxu0
    %v6232 = vadd.f32 %v2197, %v6231
    %v6233 = vpop.f32.mrb[0].mxu0
    %v6234 = vadd.f32 %v2198, %v6233
    %v6235 = vpop.f32.mrb[0].mxu0
    %v6236 = vadd.f32 %v2205, %v6235
    %v6237 = vpop.f32.mrb[0].mxu0
    %v6238 = vadd.f32 %v2206, %v6237
    %6239 = vmatprep.mubr.bf16.mxu0 %v5752
    %6240 = vmatmul.mubr.bf16.gmra.mrb[0].mxu0 %v5751
    %v6241 = vpop.f32.mrb[0].mxu0
    %v6242 = vadd.f32 %v2213, %v6241
    %v6243 = vpop.f32.mrb[0].mxu0
    %v6244 = vadd.f32 %v2214, %v6243
    %v6245 = vpop.f32.mrb[0].mxu0
    %v6246 = vadd.f32 %v2221, %v6245
    %v6247 = vpop.f32.mrb[0].mxu0
    %v6248 = vadd.f32 %v2222, %v6247
    %6249 = vdwg.mxu0
    %6250 = vmatprep.subr.bf16.mxu0 %v6012
    %6251 = vmatpush1.bf16.msra.mxu0 %v6011
    %6252 = vmatprep.subr.bf16.mxu0 %v6016
    %6253 = vmatpush1.bf16.msra.mxu0 %v6015
    %6254 = vmatprep.subr.bf16.mxu0 %v6020
    %6255 = vmatpush1.bf16.msra.mxu0 %v6019
    %6256 = vmatprep.subr.bf16.mxu0 %v6024
    %6257 = vmatpush1.bf16.msra.mxu0 %v6023
    %6258 = vmatprep.subr.bf16.mxu0 %v6028
    %6259 = vmatpush1.bf16.msra.mxu0 %v6027
    %6260 = vmatprep.subr.bf16.mxu0 %v6032
    %6261 = vmatpush1.bf16.msra.mxu0 %v6031
    %6262 = vmatprep.subr.bf16.mxu0 %v6036
    %6263 = vmatpush1.bf16.msra.mxu0 %v6035
    %6264 = vmatprep.subr.bf16.mxu0 %v6040
    %6265 = vmatpush1.bf16.msra.mxu0 %v6039
    %6266 = vmatprep.subr.bf16.mxu0 %v6044
    %6267 = vmatpush1.bf16.msra.mxu0 %v6043
    %6268 = vmatprep.subr.bf16.mxu0 %v6048
    %6269 = vmatpush1.bf16.msra.mxu0 %v6047
    %6270 = vmatprep.subr.bf16.mxu0 %v6052
    %6271 = vmatpush1.bf16.msra.mxu0 %v6051
    %6272 = vmatprep.subr.bf16.mxu0 %v6056
    %6273 = vmatpush1.bf16.msra.mxu0 %v6055
    %6274 = vmatprep.subr.bf16.mxu0 %v6060
    %6275 = vmatpush1.bf16.msra.mxu0 %v6059
    %6276 = vmatprep.subr.bf16.mxu0 %v6064
    %6277 = vmatpush1.bf16.msra.mxu0 %v6063
    %6278 = vmatprep.subr.bf16.mxu0 %v6068
    %6279 = vmatpush1.bf16.msra.mxu0 %v6067
    %6280 = vmatprep.subr.bf16.mxu0 %v6072
    %6281 = vmatpush1.bf16.msra.mxu0 %v6071
    %6282 = vmatprep.mubr.bf16.mxu0 %v5738
    %6283 = vmatmul.mubr.bf16.gmra.mrb[0].mxu0 %v5737
    %v6284 = vpop.f32.mrb[0].mxu0
    %v6285 = vadd.f32 %v2103, %v6284
    %v6286 = vpop.f32.mrb[0].mxu0
    %v6287 = vadd.f32 %v2104, %v6286
    %v6288 = vpop.f32.mrb[0].mxu0
    %v6289 = vadd.f32 %v2111, %v6288
    %v6290 = vpop.f32.mrb[0].mxu0
    %v6291 = vadd.f32 %v2112, %v6290
    %6292 = vmatprep.mubr.bf16.mxu0 %v5740
    %6293 = vmatmul.mubr.bf16.gmra.mrb[0].mxu0 %v5739
    %v6294 = vpop.f32.mrb[0].mxu0
    %v6295 = vadd.f32 %v2119, %v6294
    %v6296 = vpop.f32.mrb[0].mxu0
    %v6297 = vadd.f32 %v2120, %v6296
    %v6298 = vpop.f32.mrb[0].mxu0
    %v6299 = vadd.f32 %v2127, %v6298
    %v6300 = vpop.f32.mrb[0].mxu0
    %v6301 = vadd.f32 %v2128, %v6300
    %6302 = vmatprep.mubr.bf16.mxu0 %v5742
    %6303 = vmatmul.mubr.bf16.gmra.mrb[0].mxu0 %v5741
    %v6304 = vpop.f32.mrb[0].mxu0
    %v6305 = vadd.f32 %v2135, %v6304
    %v6306 = vpop.f32.mrb[0].mxu0
    %v6307 = vadd.f32 %v2136, %v6306
    %v6308 = vpop.f32.mrb[0].mxu0
    %v6309 = vadd.f32 %v2143, %v6308
    %v6310 = vpop.f32.mrb[0].mxu0
    %v6311 = vadd.f32 %v2144, %v6310
    %6312 = vmatprep.mubr.bf16.mxu0 %v5744
    %6313 = vmatmul.mubr.bf16.gmra.mrb[0].mxu0 %v5743
    %v6314 = vpop.f32.mrb[0].mxu0
    %v6315 = vadd.f32 %v2151, %v6314
    %v6316 = vpop.f32.mrb[0].mxu0
    %v6317 = vadd.f32 %v2152, %v6316
    %v6318 = vpop.f32.mrb[0].mxu0
    %v6319 = vadd.f32 %v2159, %v6318
    %v6320 = vpop.f32.mrb[0].mxu0
    %v6321 = vadd.f32 %v2160, %v6320
    %6322 = vmatprep.mubr.bf16.mxu0 %v5746
    %6323 = vmatmul.mubr.bf16.gmra.mrb[0].mxu0 %v5745
    %v6324 = vpop.f32.mrb[0].mxu0
    %v6325 = vadd.f32 %v2167, %v6324
    %v6326 = vpop.f32.mrb[0].mxu0
    %v6327 = vadd.f32 %v2168, %v6326
    %v6328 = vpop.f32.mrb[0].mxu0
    %v6329 = vadd.f32 %v2175, %v6328
    %v6330 = vpop.f32.mrb[0].mxu0
    %v6331 = vadd.f32 %v2176, %v6330
    %6332 = vmatprep.mubr.bf16.mxu0 %v5748
    %6333 = vmatmul.mubr.bf16.gmra.mrb[0].mxu0 %v5747
    %v6334 = vpop.f32.mrb[0].mxu0
    %v6335 = vadd.f32 %v2183, %v6334
    %v6336 = vpop.f32.mrb[0].mxu0
    %v6337 = vadd.f32 %v2184, %v6336
    %v6338 = vpop.f32.mrb[0].mxu0
    %v6339 = vadd.f32 %v2191, %v6338
    %v6340 = vpop.f32.mrb[0].mxu0
    %v6341 = vadd.f32 %v2192, %v6340
    %6342 = vmatprep.mubr.bf16.mxu0 %v5750
    %6343 = vmatmul.mubr.bf16.gmra.mrb[0].mxu0 %v5749
    %v6344 = vpop.f32.mrb[0].mxu0
    %v6345 = vadd.f32 %v2199, %v6344
    %v6346 = vpop.f32.mrb[0].mxu0
    %v6347 = vadd.f32 %v2200, %v6346
    %v6348 = vpop.f32.mrb[0].mxu0
    %v6349 = vadd.f32 %v2207, %v6348
    %v6350 = vpop.f32.mrb[0].mxu0
    %v6351 = vadd.f32 %v2208, %v6350
    %6352 = vmatprep.mubr.bf16.mxu0 %v5752
    %6353 = vmatmul.mubr.bf16.gmra.mrb[0].mxu0 %v5751
    %v6354 = vpop.f32.mrb[0].mxu0
    %v6355 = vadd.f32 %v2215, %v6354
    %v6356 = vpop.f32.mrb[0].mxu0
    %v6357 = vadd.f32 %v2216, %v6356
    %v6358 = vpop.f32.mrb[0].mxu0
    %v6359 = vadd.f32 %v2223, %v6358
    %v6360 = vpop.f32.mrb[0].mxu0
    %v6361 = vadd.f32 %v2224, %v6360
    %6362 = vdwg.mxu0
    %v6363 = vld [vmem:[%s12] sm:$0xf]
    %v6365 = vlaneseq
    %v6366 = vshrl.u32 %v6365, 7
    %v6367 = vsub.s32 0, %v6366
    %v6368 = vrot.slane %v6363, %v6367
    %v6369 = vlaneseq
    %v6370 = vshrl.u32 %v6369, 7
    %v6371 = vsub.s32 1, %v6370
    %v6372 = vrot.slane %v6363, %v6371
    %v6373 = vlaneseq
    %v6374 = vshrl.u32 %v6373, 7
    %v6375 = vsub.s32 2, %v6374
    %v6376 = vrot.slane %v6363, %v6375
    %v6377 = vlaneseq
    %v6378 = vshrl.u32 %v6377, 7
    %v6379 = vsub.s32 3, %v6378
    %v6380 = vrot.slane %v6363, %v6379
    %v6385 = vadd.f32 %v6172, %v6368
    %v6386 = vadd.f32 %v6174, %v6372
    %v6387 = vadd.f32 %v6285, %v6376
    %v6388 = vadd.f32 %v6287, %v6380
    %v6389 = vadd.f32 %v6176, %v6368
    %v6390 = vadd.f32 %v6178, %v6372
    %v6391 = vadd.f32 %v6289, %v6376
    %v6392 = vadd.f32 %v6291, %v6380
    %v6393 = vadd.f32 %v6182, %v6368
    %v6394 = vadd.f32 %v6184, %v6372
    %v6395 = vadd.f32 %v6295, %v6376
    %v6396 = vadd.f32 %v6297, %v6380
    %v6397 = vadd.f32 %v6186, %v6368
    %v6398 = vadd.f32 %v6188, %v6372
    %v6399 = vadd.f32 %v6299, %v6376
    %v6400 = vadd.f32 %v6301, %v6380
    %v6401 = vadd.f32 %v6192, %v6368
    %v6402 = vadd.f32 %v6194, %v6372
    %v6403 = vadd.f32 %v6305, %v6376
    %v6404 = vadd.f32 %v6307, %v6380
    %v6405 = vadd.f32 %v6196, %v6368
    %v6406 = vadd.f32 %v6198, %v6372
    %v6407 = vadd.f32 %v6309, %v6376
    %v6408 = vadd.f32 %v6311, %v6380
    %v6409 = vadd.f32 %v6202, %v6368
    %v6410 = vadd.f32 %v6204, %v6372
    %v6411 = vadd.f32 %v6315, %v6376
    %v6412 = vadd.f32 %v6317, %v6380
    %v6413 = vadd.f32 %v6206, %v6368
    %v6414 = vadd.f32 %v6208, %v6372
    %v6415 = vadd.f32 %v6319, %v6376
    %v6416 = vadd.f32 %v6321, %v6380
    %v6417 = vadd.f32 %v6212, %v6368
    %v6418 = vadd.f32 %v6214, %v6372
    %v6419 = vadd.f32 %v6325, %v6376
    %v6420 = vadd.f32 %v6327, %v6380
    %v6421 = vadd.f32 %v6216, %v6368
    %v6422 = vadd.f32 %v6218, %v6372
    %v6423 = vadd.f32 %v6329, %v6376
    %v6424 = vadd.f32 %v6331, %v6380
    %v6425 = vadd.f32 %v6222, %v6368
    %v6426 = vadd.f32 %v6224, %v6372
    %v6427 = vadd.f32 %v6335, %v6376
    %v6428 = vadd.f32 %v6337, %v6380
    %v6429 = vadd.f32 %v6226, %v6368
    %v6430 = vadd.f32 %v6228, %v6372
    %v6431 = vadd.f32 %v6339, %v6376
    %v6432 = vadd.f32 %v6341, %v6380
    %v6433 = vadd.f32 %v6232, %v6368
    %v6434 = vadd.f32 %v6234, %v6372
    %v6435 = vadd.f32 %v6345, %v6376
    %v6436 = vadd.f32 %v6347, %v6380
    %v6437 = vadd.f32 %v6236, %v6368
    %v6438 = vadd.f32 %v6238, %v6372
    %v6439 = vadd.f32 %v6349, %v6376
    %v6440 = vadd.f32 %v6351, %v6380
    %v6441 = vadd.f32 %v6242, %v6368
    %v6442 = vadd.f32 %v6244, %v6372
    %v6443 = vadd.f32 %v6355, %v6376
    %v6444 = vadd.f32 %v6357, %v6380
    %v6445 = vadd.f32 %v6246, %v6368
    %v6446 = vadd.f32 %v6248, %v6372
    %v6447 = vadd.f32 %v6359, %v6376
    %v6448 = vadd.f32 %v6361, %v6380
    %v6449 = vmax.f32 %v6385, 0.0
    %v6450 = vmax.f32 %v6386, 0.0
    %v6451 = vmax.f32 %v6387, 0.0
    %v6452 = vmax.f32 %v6388, 0.0
    %v6453 = vmax.f32 %v6389, 0.0
    %v6454 = vmax.f32 %v6390, 0.0
    %v6455 = vmax.f32 %v6391, 0.0
    %v6456 = vmax.f32 %v6392, 0.0
    %v6457 = vmax.f32 %v6393, 0.0
    %v6458 = vmax.f32 %v6394, 0.0
    %v6459 = vmax.f32 %v6395, 0.0
    %v6460 = vmax.f32 %v6396, 0.0
    %v6461 = vmax.f32 %v6397, 0.0
    %v6462 = vmax.f32 %v6398, 0.0
    %v6463 = vmax.f32 %v6399, 0.0
    %v6464 = vmax.f32 %v6400, 0.0
    %v6465 = vmax.f32 %v6401, 0.0
    %v6466 = vmax.f32 %v6402, 0.0
    %v6467 = vmax.f32 %v6403, 0.0
    %v6468 = vmax.f32 %v6404, 0.0
    %v6469 = vmax.f32 %v6405, 0.0
    %v6470 = vmax.f32 %v6406, 0.0
    %v6471 = vmax.f32 %v6407, 0.0
    %v6472 = vmax.f32 %v6408, 0.0
    %v6473 = vmax.f32 %v6409, 0.0
    %v6474 = vmax.f32 %v6410, 0.0
    %v6475 = vmax.f32 %v6411, 0.0
    %v6476 = vmax.f32 %v6412, 0.0
    %v6477 = vmax.f32 %v6413, 0.0
    %v6478 = vmax.f32 %v6414, 0.0
    %v6479 = vmax.f32 %v6415, 0.0
    %v6480 = vmax.f32 %v6416, 0.0
    %v6481 = vmax.f32 %v6417, 0.0
    %v6482 = vmax.f32 %v6418, 0.0
    %v6483 = vmax.f32 %v6419, 0.0
    %v6484 = vmax.f32 %v6420, 0.0
    %v6485 = vmax.f32 %v6421, 0.0
    %v6486 = vmax.f32 %v6422, 0.0
    %v6487 = vmax.f32 %v6423, 0.0
    %v6488 = vmax.f32 %v6424, 0.0
    %v6489 = vmax.f32 %v6425, 0.0
    %v6490 = vmax.f32 %v6426, 0.0
    %v6491 = vmax.f32 %v6427, 0.0
    %v6492 = vmax.f32 %v6428, 0.0
    %v6493 = vmax.f32 %v6429, 0.0
    %v6494 = vmax.f32 %v6430, 0.0
    %v6495 = vmax.f32 %v6431, 0.0
    %v6496 = vmax.f32 %v6432, 0.0
    %v6497 = vmax.f32 %v6433, 0.0
    %v6498 = vmax.f32 %v6434, 0.0
    %v6499 = vmax.f32 %v6435, 0.0
    %v6500 = vmax.f32 %v6436, 0.0
    %v6501 = vmax.f32 %v6437, 0.0
    %v6502 = vmax.f32 %v6438, 0.0
    %v6503 = vmax.f32 %v6439, 0.0
    %v6504 = vmax.f32 %v6440, 0.0
    %v6505 = vmax.f32 %v6441, 0.0
    %v6506 = vmax.f32 %v6442, 0.0
    %v6507 = vmax.f32 %v6443, 0.0
    %v6508 = vmax.f32 %v6444, 0.0
    %v6509 = vmax.f32 %v6445, 0.0
    %v6510 = vmax.f32 %v6446, 0.0
    %v6511 = vmax.f32 %v6447, 0.0
    %v6512 = vmax.f32 %v6448, 0.0
    %v6513 = vpack.c.bf16 %v6453, %v6449
    %v6514 = vpack.c.bf16 %v6454, %v6450
    %v6515 = vpack.c.bf16 %v6455, %v6451
    %v6516 = vpack.c.bf16 %v6456, %v6452
    %v6517 = vpack.c.bf16 %v6461, %v6457
    %v6518 = vpack.c.bf16 %v6462, %v6458
    %v6519 = vpack.c.bf16 %v6463, %v6459
    %v6520 = vpack.c.bf16 %v6464, %v6460
    %v6521 = vpack.c.bf16 %v6469, %v6465
    %v6522 = vpack.c.bf16 %v6470, %v6466
    %v6523 = vpack.c.bf16 %v6471, %v6467
    %v6524 = vpack.c.bf16 %v6472, %v6468
    %v6525 = vpack.c.bf16 %v6477, %v6473
    %v6526 = vpack.c.bf16 %v6478, %v6474
    %v6527 = vpack.c.bf16 %v6479, %v6475
    %v6528 = vpack.c.bf16 %v6480, %v6476
    %v6529 = vpack.c.bf16 %v6485, %v6481
    %v6530 = vpack.c.bf16 %v6486, %v6482
    %v6531 = vpack.c.bf16 %v6487, %v6483
    %v6532 = vpack.c.bf16 %v6488, %v6484
    %v6533 = vpack.c.bf16 %v6493, %v6489
    %v6534 = vpack.c.bf16 %v6494, %v6490
    %v6535 = vpack.c.bf16 %v6495, %v6491
    %v6536 = vpack.c.bf16 %v6496, %v6492
    %v6537 = vpack.c.bf16 %v6501, %v6497
    %v6538 = vpack.c.bf16 %v6502, %v6498
    %v6539 = vpack.c.bf16 %v6503, %v6499
    %v6540 = vpack.c.bf16 %v6504, %v6500
    %v6541 = vpack.c.bf16 %v6509, %v6505
    %v6542 = vpack.c.bf16 %v6510, %v6506
    %v6543 = vpack.c.bf16 %v6511, %v6507
    %v6544 = vpack.c.bf16 %v6512, %v6508
    %v6545 = vld [vmem:[#allocation15] sm:$0xff]
    %v6546 = vld [vmem:[#allocation15 + $0x8] sm:$0xff]
    %v6547 = vld [vmem:[#allocation15 + $0x10] sm:$0xff]
    %v6548 = vld [vmem:[#allocation15 + $0x18] sm:$0xff]
    %v6549 = vld [vmem:[#allocation15 + $0x20] sm:$0xff]
    %v6550 = vld [vmem:[#allocation15 + $0x28] sm:$0xff]
    %v6551 = vld [vmem:[#allocation15 + $0x30] sm:$0xff]
    %v6552 = vld [vmem:[#allocation15 + $0x38] sm:$0xff]
    %v6553 = vld [vmem:[#allocation15 + $0x40] sm:$0xff]
    %v6554 = vld [vmem:[#allocation15 + $0x48] sm:$0xff]
    %v6555 = vld [vmem:[#allocation15 + $0x50] sm:$0xff]
    %v6556 = vld [vmem:[#allocation15 + $0x58] sm:$0xff]
    %v6557 = vld [vmem:[#allocation15 + $0x60] sm:$0xff]
    %v6558 = vld [vmem:[#allocation15 + $0x68] sm:$0xff]
    %v6559 = vld [vmem:[#allocation15 + $0x70] sm:$0xff]
    %v6560 = vld [vmem:[#allocation15 + $0x78] sm:$0xff]
    %v6561 = vld [vmem:[#allocation15 + $0x80] sm:$0xff]
    %v6562 = vld [vmem:[#allocation15 + $0x88] sm:$0xff]
    %v6563 = vld [vmem:[#allocation15 + $0x90] sm:$0xff]
    %v6564 = vld [vmem:[#allocation15 + $0x98] sm:$0xff]
    %v6565 = vld [vmem:[#allocation15 + $0xa0] sm:$0xff]
    %v6566 = vld [vmem:[#allocation15 + $0xa8] sm:$0xff]
    %v6567 = vld [vmem:[#allocation15 + $0xb0] sm:$0xff]
    %v6568 = vld [vmem:[#allocation15 + $0xb8] sm:$0xff]
    %v6569 = vld [vmem:[#allocation15 + $0xc0] sm:$0xff]
    %v6570 = vld [vmem:[#allocation15 + $0xc8] sm:$0xff]
    %v6571 = vld [vmem:[#allocation15 + $0xd0] sm:$0xff]
    %v6572 = vld [vmem:[#allocation15 + $0xd8] sm:$0xff]
    %v6573 = vld [vmem:[#allocation15 + $0xe0] sm:$0xff]
    %v6574 = vld [vmem:[#allocation15 + $0xe8] sm:$0xff]
    %v6575 = vld [vmem:[#allocation15 + $0xf0] sm:$0xff]
    %v6576 = vld [vmem:[#allocation15 + $0xf8] sm:$0xff]
    %v6577 = vld [vmem:[#allocation15 + $0x100] sm:$0xff]
    %v6578 = vld [vmem:[#allocation15 + $0x108] sm:$0xff]
    %v6579 = vld [vmem:[#allocation15 + $0x110] sm:$0xff]
    %v6580 = vld [vmem:[#allocation15 + $0x118] sm:$0xff]
    %v6581 = vld [vmem:[#allocation15 + $0x120] sm:$0xff]
    %v6582 = vld [vmem:[#allocation15 + $0x128] sm:$0xff]
    %v6583 = vld [vmem:[#allocation15 + $0x130] sm:$0xff]
    %v6584 = vld [vmem:[#allocation15 + $0x138] sm:$0xff]
    %v6585 = vld [vmem:[#allocation15 + $0x140] sm:$0xff]
    %v6586 = vld [vmem:[#allocation15 + $0x148] sm:$0xff]
    %v6587 = vld [vmem:[#allocation15 + $0x150] sm:$0xff]
    %v6588 = vld [vmem:[#allocation15 + $0x158] sm:$0xff]
    %v6589 = vld [vmem:[#allocation15 + $0x160] sm:$0xff]
    %v6590 = vld [vmem:[#allocation15 + $0x168] sm:$0xff]
    %v6591 = vld [vmem:[#allocation15 + $0x170] sm:$0xff]
    %v6592 = vld [vmem:[#allocation15 + $0x178] sm:$0xff]
    %v6593 = vld [vmem:[#allocation15 + $0x180] sm:$0xff]
    %v6594 = vld [vmem:[#allocation15 + $0x188] sm:$0xff]
    %v6595 = vld [vmem:[#allocation15 + $0x190] sm:$0xff]
    %v6596 = vld [vmem:[#allocation15 + $0x198] sm:$0xff]
    %v6597 = vld [vmem:[#allocation15 + $0x1a0] sm:$0xff]
    %v6598 = vld [vmem:[#allocation15 + $0x1a8] sm:$0xff]
    %v6599 = vld [vmem:[#allocation15 + $0x1b0] sm:$0xff]
    %v6600 = vld [vmem:[#allocation15 + $0x1b8] sm:$0xff]
    %v6601 = vld [vmem:[#allocation15 + $0x1c0] sm:$0xff]
    %v6602 = vld [vmem:[#allocation15 + $0x1c8] sm:$0xff]
    %v6603 = vld [vmem:[#allocation15 + $0x1d0] sm:$0xff]
    %v6604 = vld [vmem:[#allocation15 + $0x1d8] sm:$0xff]
    %v6605 = vld [vmem:[#allocation15 + $0x1e0] sm:$0xff]
    %v6606 = vld [vmem:[#allocation15 + $0x1e8] sm:$0xff]
    %v6607 = vld [vmem:[#allocation15 + $0x1f0] sm:$0xff]
    %v6608 = vld [vmem:[#allocation15 + $0x1f8] sm:$0xff]
    %v6609 = vld [vmem:[#allocation15 + $0x200] sm:$0xff]
    %v6610 = vld [vmem:[#allocation15 + $0x208] sm:$0xff]
    %v6611 = vld [vmem:[#allocation15 + $0x210] sm:$0xff]
    %v6612 = vld [vmem:[#allocation15 + $0x218] sm:$0xff]
    %v6613 = vld [vmem:[#allocation15 + $0x220] sm:$0xff]
    %v6614 = vld [vmem:[#allocation15 + $0x228] sm:$0xff]
    %v6615 = vld [vmem:[#allocation15 + $0x230] sm:$0xff]
    %v6616 = vld [vmem:[#allocation15 + $0x238] sm:$0xff]
    %v6617 = vld [vmem:[#allocation15 + $0x240] sm:$0xff]
    %v6618 = vld [vmem:[#allocation15 + $0x248] sm:$0xff]
    %v6619 = vld [vmem:[#allocation15 + $0x250] sm:$0xff]
    %v6620 = vld [vmem:[#allocation15 + $0x258] sm:$0xff]
    %v6621 = vld [vmem:[#allocation15 + $0x260] sm:$0xff]
    %v6622 = vld [vmem:[#allocation15 + $0x268] sm:$0xff]
    %v6623 = vld [vmem:[#allocation15 + $0x270] sm:$0xff]
    %v6624 = vld [vmem:[#allocation15 + $0x278] sm:$0xff]
    %v6625 = vld [vmem:[#allocation15 + $0x280] sm:$0xff]
    %v6626 = vld [vmem:[#allocation15 + $0x288] sm:$0xff]
    %v6627 = vld [vmem:[#allocation15 + $0x290] sm:$0xff]
    %v6628 = vld [vmem:[#allocation15 + $0x298] sm:$0xff]
    %v6629 = vld [vmem:[#allocation15 + $0x2a0] sm:$0xff]
    %v6630 = vld [vmem:[#allocation15 + $0x2a8] sm:$0xff]
    %v6631 = vld [vmem:[#allocation15 + $0x2b0] sm:$0xff]
    %v6632 = vld [vmem:[#allocation15 + $0x2b8] sm:$0xff]
    %v6633 = vld [vmem:[#allocation15 + $0x2c0] sm:$0xff]
    %v6634 = vld [vmem:[#allocation15 + $0x2c8] sm:$0xff]
    %v6635 = vld [vmem:[#allocation15 + $0x2d0] sm:$0xff]
    %v6636 = vld [vmem:[#allocation15 + $0x2d8] sm:$0xff]
    %v6637 = vld [vmem:[#allocation15 + $0x2e0] sm:$0xff]
    %v6638 = vld [vmem:[#allocation15 + $0x2e8] sm:$0xff]
    %v6639 = vld [vmem:[#allocation15 + $0x2f0] sm:$0xff]
    %v6640 = vld [vmem:[#allocation15 + $0x2f8] sm:$0xff]
    %v6641 = vld [vmem:[#allocation15 + $0x300] sm:$0xff]
    %v6642 = vld [vmem:[#allocation15 + $0x308] sm:$0xff]
    %v6643 = vld [vmem:[#allocation15 + $0x310] sm:$0xff]
    %v6644 = vld [vmem:[#allocation15 + $0x318] sm:$0xff]
    %v6645 = vld [vmem:[#allocation15 + $0x320] sm:$0xff]
    %v6646 = vld [vmem:[#allocation15 + $0x328] sm:$0xff]
    %v6647 = vld [vmem:[#allocation15 + $0x330] sm:$0xff]
    %v6648 = vld [vmem:[#allocation15 + $0x338] sm:$0xff]
    %v6649 = vld [vmem:[#allocation15 + $0x340] sm:$0xff]
    %v6650 = vld [vmem:[#allocation15 + $0x348] sm:$0xff]
    %v6651 = vld [vmem:[#allocation15 + $0x350] sm:$0xff]
    %v6652 = vld [vmem:[#allocation15 + $0x358] sm:$0xff]
    %v6653 = vld [vmem:[#allocation15 + $0x360] sm:$0xff]
    %v6654 = vld [vmem:[#allocation15 + $0x368] sm:$0xff]
    %v6655 = vld [vmem:[#allocation15 + $0x370] sm:$0xff]
    %v6656 = vld [vmem:[#allocation15 + $0x378] sm:$0xff]
    %v6657 = vld [vmem:[#allocation15 + $0x380] sm:$0xff]
    %v6658 = vld [vmem:[#allocation15 + $0x388] sm:$0xff]
    %v6659 = vld [vmem:[#allocation15 + $0x390] sm:$0xff]
    %v6660 = vld [vmem:[#allocation15 + $0x398] sm:$0xff]
    %v6661 = vld [vmem:[#allocation15 + $0x3a0] sm:$0xff]
    %v6662 = vld [vmem:[#allocation15 + $0x3a8] sm:$0xff]
    %v6663 = vld [vmem:[#allocation15 + $0x3b0] sm:$0xff]
    %v6664 = vld [vmem:[#allocation15 + $0x3b8] sm:$0xff]
    %v6665 = vld [vmem:[#allocation15 + $0x3c0] sm:$0xff]
    %v6666 = vld [vmem:[#allocation15 + $0x3c8] sm:$0xff]
    %v6667 = vld [vmem:[#allocation15 + $0x3d0] sm:$0xff]
    %v6668 = vld [vmem:[#allocation15 + $0x3d8] sm:$0xff]
    %v6669 = vld [vmem:[#allocation15 + $0x3e0] sm:$0xff]
    %v6670 = vld [vmem:[#allocation15 + $0x3e8] sm:$0xff]
    %v6671 = vld [vmem:[#allocation15 + $0x3f0] sm:$0xff]
    %v6672 = vld [vmem:[#allocation15 + $0x3f8] sm:$0xff]
    %v6673 = vld [vmem:[%s14] sm:$0xf]
    %v6675 = vlaneseq
    %v6676 = vshrl.u32 %v6675, 7
    %v6677 = vsub.s32 0, %v6676
    %v6678 = vrot.slane %v6673, %v6677
    %v6679 = vlaneseq
    %v6680 = vshrl.u32 %v6679, 7
    %v6681 = vsub.s32 1, %v6680
    %v6682 = vrot.slane %v6673, %v6681
    %v6683 = vlaneseq
    %v6684 = vshrl.u32 %v6683, 7
    %v6685 = vsub.s32 2, %v6684
    %v6686 = vrot.slane %v6673, %v6685
    %v6687 = vlaneseq
    %v6688 = vshrl.u32 %v6687, 7
    %v6689 = vsub.s32 3, %v6688
    %v6690 = vrot.slane %v6673, %v6689
    %v6823 = vunpack.c.l.b16 %v6545
    %v6824 = vunpack.c.h.b16 %v6545
    %v6825 = vunpack.c.l.b16 %v6546
    %v6826 = vunpack.c.h.b16 %v6546
    %v6827 = vunpack.c.l.b16 %v6547
    %v6828 = vunpack.c.h.b16 %v6547
    %v6829 = vunpack.c.l.b16 %v6548
    %v6830 = vunpack.c.h.b16 %v6548
    %v6831 = vunpack.c.l.b16 %v6549
    %v6832 = vunpack.c.h.b16 %v6549
    %v6833 = vunpack.c.l.b16 %v6550
    %v6834 = vunpack.c.h.b16 %v6550
    %v6835 = vunpack.c.l.b16 %v6551
    %v6836 = vunpack.c.h.b16 %v6551
    %v6837 = vunpack.c.l.b16 %v6552
    %v6838 = vunpack.c.h.b16 %v6552
    %v6839 = vunpack.c.l.b16 %v6553
    %v6840 = vunpack.c.h.b16 %v6553
    %v6841 = vunpack.c.l.b16 %v6554
    %v6842 = vunpack.c.h.b16 %v6554
    %v6843 = vunpack.c.l.b16 %v6555
    %v6844 = vunpack.c.h.b16 %v6555
    %v6845 = vunpack.c.l.b16 %v6556
    %v6846 = vunpack.c.h.b16 %v6556
    %v6847 = vunpack.c.l.b16 %v6557
    %v6848 = vunpack.c.h.b16 %v6557
    %v6849 = vunpack.c.l.b16 %v6558
    %v6850 = vunpack.c.h.b16 %v6558
    %v6851 = vunpack.c.l.b16 %v6559
    %v6852 = vunpack.c.h.b16 %v6559
    %v6853 = vunpack.c.l.b16 %v6560
    %v6854 = vunpack.c.h.b16 %v6560
    %v6855 = vunpack.c.l.b16 %v6561
    %v6856 = vunpack.c.h.b16 %v6561
    %v6857 = vunpack.c.l.b16 %v6562
    %v6858 = vunpack.c.h.b16 %v6562
    %v6859 = vunpack.c.l.b16 %v6563
    %v6860 = vunpack.c.h.b16 %v6563
    %v6861 = vunpack.c.l.b16 %v6564
    %v6862 = vunpack.c.h.b16 %v6564
    %v6863 = vunpack.c.l.b16 %v6565
    %v6864 = vunpack.c.h.b16 %v6565
    %v6865 = vunpack.c.l.b16 %v6566
    %v6866 = vunpack.c.h.b16 %v6566
    %v6867 = vunpack.c.l.b16 %v6567
    %v6868 = vunpack.c.h.b16 %v6567
    %v6869 = vunpack.c.l.b16 %v6568
    %v6870 = vunpack.c.h.b16 %v6568
    %v6871 = vunpack.c.l.b16 %v6569
    %v6872 = vunpack.c.h.b16 %v6569
    %v6873 = vunpack.c.l.b16 %v6570
    %v6874 = vunpack.c.h.b16 %v6570
    %v6875 = vunpack.c.l.b16 %v6571
    %v6876 = vunpack.c.h.b16 %v6571
    %v6877 = vunpack.c.l.b16 %v6572
    %v6878 = vunpack.c.h.b16 %v6572
    %v6879 = vunpack.c.l.b16 %v6573
    %v6880 = vunpack.c.h.b16 %v6573
    %v6881 = vunpack.c.l.b16 %v6574
    %v6882 = vunpack.c.h.b16 %v6574
    %v6883 = vunpack.c.l.b16 %v6575
    %v6884 = vunpack.c.h.b16 %v6575
    %v6885 = vunpack.c.l.b16 %v6576
    %v6886 = vunpack.c.h.b16 %v6576
    %v6887 = vunpack.c.l.b16 %v6577
    %v6888 = vunpack.c.h.b16 %v6577
    %v6889 = vunpack.c.l.b16 %v6578
    %v6890 = vunpack.c.h.b16 %v6578
    %v6891 = vunpack.c.l.b16 %v6579
    %v6892 = vunpack.c.h.b16 %v6579
    %v6893 = vunpack.c.l.b16 %v6580
    %v6894 = vunpack.c.h.b16 %v6580
    %v6895 = vunpack.c.l.b16 %v6581
    %v6896 = vunpack.c.h.b16 %v6581
    %v6897 = vunpack.c.l.b16 %v6582
    %v6898 = vunpack.c.h.b16 %v6582
    %v6899 = vunpack.c.l.b16 %v6583
    %v6900 = vunpack.c.h.b16 %v6583
    %v6901 = vunpack.c.l.b16 %v6584
    %v6902 = vunpack.c.h.b16 %v6584
    %v6903 = vunpack.c.l.b16 %v6585
    %v6904 = vunpack.c.h.b16 %v6585
    %v6905 = vunpack.c.l.b16 %v6586
    %v6906 = vunpack.c.h.b16 %v6586
    %v6907 = vunpack.c.l.b16 %v6587
    %v6908 = vunpack.c.h.b16 %v6587
    %v6909 = vunpack.c.l.b16 %v6588
    %v6910 = vunpack.c.h.b16 %v6588
    %v6911 = vunpack.c.l.b16 %v6589
    %v6912 = vunpack.c.h.b16 %v6589
    %v6913 = vunpack.c.l.b16 %v6590
    %v6914 = vunpack.c.h.b16 %v6590
    %v6915 = vunpack.c.l.b16 %v6591
    %v6916 = vunpack.c.h.b16 %v6591
    %v6917 = vunpack.c.l.b16 %v6592
    %v6918 = vunpack.c.h.b16 %v6592
    %v6919 = vunpack.c.l.b16 %v6593
    %v6920 = vunpack.c.h.b16 %v6593
    %v6921 = vunpack.c.l.b16 %v6594
    %v6922 = vunpack.c.h.b16 %v6594
    %v6923 = vunpack.c.l.b16 %v6595
    %v6924 = vunpack.c.h.b16 %v6595
    %v6925 = vunpack.c.l.b16 %v6596
    %v6926 = vunpack.c.h.b16 %v6596
    %v6927 = vunpack.c.l.b16 %v6597
    %v6928 = vunpack.c.h.b16 %v6597
    %v6929 = vunpack.c.l.b16 %v6598
    %v6930 = vunpack.c.h.b16 %v6598
    %v6931 = vunpack.c.l.b16 %v6599
    %v6932 = vunpack.c.h.b16 %v6599
    %v6933 = vunpack.c.l.b16 %v6600
    %v6934 = vunpack.c.h.b16 %v6600
    %v6935 = vunpack.c.l.b16 %v6601
    %v6936 = vunpack.c.h.b16 %v6601
    %v6937 = vunpack.c.l.b16 %v6602
    %v6938 = vunpack.c.h.b16 %v6602
    %v6939 = vunpack.c.l.b16 %v6603
    %v6940 = vunpack.c.h.b16 %v6603
    %v6941 = vunpack.c.l.b16 %v6604
    %v6942 = vunpack.c.h.b16 %v6604
    %v6943 = vunpack.c.l.b16 %v6605
    %v6944 = vunpack.c.h.b16 %v6605
    %v6945 = vunpack.c.l.b16 %v6606
    %v6946 = vunpack.c.h.b16 %v6606
    %v6947 = vunpack.c.l.b16 %v6607
    %v6948 = vunpack.c.h.b16 %v6607
    %v6949 = vunpack.c.l.b16 %v6608
    %v6950 = vunpack.c.h.b16 %v6608
    %v6951 = vunpack.c.l.b16 %v6609
    %v6952 = vunpack.c.h.b16 %v6609
    %v6953 = vunpack.c.l.b16 %v6610
    %v6954 = vunpack.c.h.b16 %v6610
    %v6955 = vunpack.c.l.b16 %v6611
    %v6956 = vunpack.c.h.b16 %v6611
    %v6957 = vunpack.c.l.b16 %v6612
    %v6958 = vunpack.c.h.b16 %v6612
    %v6959 = vunpack.c.l.b16 %v6613
    %v6960 = vunpack.c.h.b16 %v6613
    %v6961 = vunpack.c.l.b16 %v6614
    %v6962 = vunpack.c.h.b16 %v6614
    %v6963 = vunpack.c.l.b16 %v6615
    %v6964 = vunpack.c.h.b16 %v6615
    %v6965 = vunpack.c.l.b16 %v6616
    %v6966 = vunpack.c.h.b16 %v6616
    %v6967 = vunpack.c.l.b16 %v6617
    %v6968 = vunpack.c.h.b16 %v6617
    %v6969 = vunpack.c.l.b16 %v6618
    %v6970 = vunpack.c.h.b16 %v6618
    %v6971 = vunpack.c.l.b16 %v6619
    %v6972 = vunpack.c.h.b16 %v6619
    %v6973 = vunpack.c.l.b16 %v6620
    %v6974 = vunpack.c.h.b16 %v6620
    %v6975 = vunpack.c.l.b16 %v6621
    %v6976 = vunpack.c.h.b16 %v6621
    %v6977 = vunpack.c.l.b16 %v6622
    %v6978 = vunpack.c.h.b16 %v6622
    %v6979 = vunpack.c.l.b16 %v6623
    %v6980 = vunpack.c.h.b16 %v6623
    %v6981 = vunpack.c.l.b16 %v6624
    %v6982 = vunpack.c.h.b16 %v6624
    %v6983 = vunpack.c.l.b16 %v6625
    %v6984 = vunpack.c.h.b16 %v6625
    %v6985 = vunpack.c.l.b16 %v6626
    %v6986 = vunpack.c.h.b16 %v6626
    %v6987 = vunpack.c.l.b16 %v6627
    %v6988 = vunpack.c.h.b16 %v6627
    %v6989 = vunpack.c.l.b16 %v6628
    %v6990 = vunpack.c.h.b16 %v6628
    %v6991 = vunpack.c.l.b16 %v6629
    %v6992 = vunpack.c.h.b16 %v6629
    %v6993 = vunpack.c.l.b16 %v6630
    %v6994 = vunpack.c.h.b16 %v6630
    %v6995 = vunpack.c.l.b16 %v6631
    %v6996 = vunpack.c.h.b16 %v6631
    %v6997 = vunpack.c.l.b16 %v6632
    %v6998 = vunpack.c.h.b16 %v6632
    %v6999 = vunpack.c.l.b16 %v6633
    %v7000 = vunpack.c.h.b16 %v6633
    %v7001 = vunpack.c.l.b16 %v6634
    %v7002 = vunpack.c.h.b16 %v6634
    %v7003 = vunpack.c.l.b16 %v6635
    %v7004 = vunpack.c.h.b16 %v6635
    %v7005 = vunpack.c.l.b16 %v6636
    %v7006 = vunpack.c.h.b16 %v6636
    %v7007 = vunpack.c.l.b16 %v6637
    %v7008 = vunpack.c.h.b16 %v6637
    %v7009 = vunpack.c.l.b16 %v6638
    %v7010 = vunpack.c.h.b16 %v6638
    %v7011 = vunpack.c.l.b16 %v6639
    %v7012 = vunpack.c.h.b16 %v6639
    %v7013 = vunpack.c.l.b16 %v6640
    %v7014 = vunpack.c.h.b16 %v6640
    %v7015 = vunpack.c.l.b16 %v6641
    %v7016 = vunpack.c.h.b16 %v6641
    %v7017 = vunpack.c.l.b16 %v6642
    %v7018 = vunpack.c.h.b16 %v6642
    %v7019 = vunpack.c.l.b16 %v6643
    %v7020 = vunpack.c.h.b16 %v6643
    %v7021 = vunpack.c.l.b16 %v6644
    %v7022 = vunpack.c.h.b16 %v6644
    %v7023 = vunpack.c.l.b16 %v6645
    %v7024 = vunpack.c.h.b16 %v6645
    %v7025 = vunpack.c.l.b16 %v6646
    %v7026 = vunpack.c.h.b16 %v6646
    %v7027 = vunpack.c.l.b16 %v6647
    %v7028 = vunpack.c.h.b16 %v6647
    %v7029 = vunpack.c.l.b16 %v6648
    %v7030 = vunpack.c.h.b16 %v6648
    %v7031 = vunpack.c.l.b16 %v6649
    %v7032 = vunpack.c.h.b16 %v6649
    %v7033 = vunpack.c.l.b16 %v6650
    %v7034 = vunpack.c.h.b16 %v6650
    %v7035 = vunpack.c.l.b16 %v6651
    %v7036 = vunpack.c.h.b16 %v6651
    %v7037 = vunpack.c.l.b16 %v6652
    %v7038 = vunpack.c.h.b16 %v6652
    %v7039 = vunpack.c.l.b16 %v6653
    %v7040 = vunpack.c.h.b16 %v6653
    %v7041 = vunpack.c.l.b16 %v6654
    %v7042 = vunpack.c.h.b16 %v6654
    %v7043 = vunpack.c.l.b16 %v6655
    %v7044 = vunpack.c.h.b16 %v6655
    %v7045 = vunpack.c.l.b16 %v6656
    %v7046 = vunpack.c.h.b16 %v6656
    %v7047 = vunpack.c.l.b16 %v6657
    %v7048 = vunpack.c.h.b16 %v6657
    %v7049 = vunpack.c.l.b16 %v6658
    %v7050 = vunpack.c.h.b16 %v6658
    %v7051 = vunpack.c.l.b16 %v6659
    %v7052 = vunpack.c.h.b16 %v6659
    %v7053 = vunpack.c.l.b16 %v6660
    %v7054 = vunpack.c.h.b16 %v6660
    %v7055 = vunpack.c.l.b16 %v6661
    %v7056 = vunpack.c.h.b16 %v6661
    %v7057 = vunpack.c.l.b16 %v6662
    %v7058 = vunpack.c.h.b16 %v6662
    %v7059 = vunpack.c.l.b16 %v6663
    %v7060 = vunpack.c.h.b16 %v6663
    %v7061 = vunpack.c.l.b16 %v6664
    %v7062 = vunpack.c.h.b16 %v6664
    %v7063 = vunpack.c.l.b16 %v6665
    %v7064 = vunpack.c.h.b16 %v6665
    %v7065 = vunpack.c.l.b16 %v6666
    %v7066 = vunpack.c.h.b16 %v6666
    %v7067 = vunpack.c.l.b16 %v6667
    %v7068 = vunpack.c.h.b16 %v6667
    %v7069 = vunpack.c.l.b16 %v6668
    %v7070 = vunpack.c.h.b16 %v6668
    %v7071 = vunpack.c.l.b16 %v6669
    %v7072 = vunpack.c.h.b16 %v6669
    %v7073 = vunpack.c.l.b16 %v6670
    %v7074 = vunpack.c.h.b16 %v6670
    %v7075 = vunpack.c.l.b16 %v6671
    %v7076 = vunpack.c.h.b16 %v6671
    %v7077 = vunpack.c.l.b16 %v6672
    %v7078 = vunpack.c.h.b16 %v6672
    %v7079 = vpack.c.b16 %v6827, %v6823
    %v7080 = vpack.c.b16 %v6828, %v6824
    %v7081 = vpack.c.b16 %v6829, %v6825
    %v7082 = vpack.c.b16 %v6830, %v6826
    %v7083 = vpack.c.b16 %v6835, %v6831
    %v7084 = vpack.c.b16 %v6836, %v6832
    %v7085 = vpack.c.b16 %v6837, %v6833
    %v7086 = vpack.c.b16 %v6838, %v6834
    %v7087 = vpack.c.b16 %v6843, %v6839
    %v7088 = vpack.c.b16 %v6844, %v6840
    %v7089 = vpack.c.b16 %v6845, %v6841
    %v7090 = vpack.c.b16 %v6846, %v6842
    %v7091 = vpack.c.b16 %v6851, %v6847
    %v7092 = vpack.c.b16 %v6852, %v6848
    %v7093 = vpack.c.b16 %v6853, %v6849
    %v7094 = vpack.c.b16 %v6854, %v6850
    %v7095 = vpack.c.b16 %v6859, %v6855
    %v7096 = vpack.c.b16 %v6860, %v6856
    %v7097 = vpack.c.b16 %v6861, %v6857
    %v7098 = vpack.c.b16 %v6862, %v6858
    %v7099 = vpack.c.b16 %v6867, %v6863
    %v7100 = vpack.c.b16 %v6868, %v6864
    %v7101 = vpack.c.b16 %v6869, %v6865
    %v7102 = vpack.c.b16 %v6870, %v6866
    %v7103 = vpack.c.b16 %v6875, %v6871
    %v7104 = vpack.c.b16 %v6876, %v6872
    %v7105 = vpack.c.b16 %v6877, %v6873
    %v7106 = vpack.c.b16 %v6878, %v6874
    %v7107 = vpack.c.b16 %v6883, %v6879
    %v7108 = vpack.c.b16 %v6884, %v6880
    %v7109 = vpack.c.b16 %v6885, %v6881
    %v7110 = vpack.c.b16 %v6886, %v6882
    %v7111 = vpack.c.b16 %v6891, %v6887
    %v7112 = vpack.c.b16 %v6892, %v6888
    %v7113 = vpack.c.b16 %v6893, %v6889
    %v7114 = vpack.c.b16 %v6894, %v6890
    %v7115 = vpack.c.b16 %v6899, %v6895
    %v7116 = vpack.c.b16 %v6900, %v6896
    %v7117 = vpack.c.b16 %v6901, %v6897
    %v7118 = vpack.c.b16 %v6902, %v6898
    %v7119 = vpack.c.b16 %v6907, %v6903
    %v7120 = vpack.c.b16 %v6908, %v6904
    %v7121 = vpack.c.b16 %v6909, %v6905
    %v7122 = vpack.c.b16 %v6910, %v6906
    %v7123 = vpack.c.b16 %v6915, %v6911
    %v7124 = vpack.c.b16 %v6916, %v6912
    %v7125 = vpack.c.b16 %v6917, %v6913
    %v7126 = vpack.c.b16 %v6918, %v6914
    %v7127 = vpack.c.b16 %v6923, %v6919
    %v7128 = vpack.c.b16 %v6924, %v6920
    %v7129 = vpack.c.b16 %v6925, %v6921
    %v7130 = vpack.c.b16 %v6926, %v6922
    %v7131 = vpack.c.b16 %v6931, %v6927
    %v7132 = vpack.c.b16 %v6932, %v6928
    %v7133 = vpack.c.b16 %v6933, %v6929
    %v7134 = vpack.c.b16 %v6934, %v6930
    %v7135 = vpack.c.b16 %v6939, %v6935
    %v7136 = vpack.c.b16 %v6940, %v6936
    %v7137 = vpack.c.b16 %v6941, %v6937
    %v7138 = vpack.c.b16 %v6942, %v6938
    %v7139 = vpack.c.b16 %v6947, %v6943
    %v7140 = vpack.c.b16 %v6948, %v6944
    %v7141 = vpack.c.b16 %v6949, %v6945
    %v7142 = vpack.c.b16 %v6950, %v6946
    %v7143 = vpack.c.b16 %v6955, %v6951
    %v7144 = vpack.c.b16 %v6956, %v6952
    %v7145 = vpack.c.b16 %v6957, %v6953
    %v7146 = vpack.c.b16 %v6958, %v6954
    %v7147 = vpack.c.b16 %v6963, %v6959
    %v7148 = vpack.c.b16 %v6964, %v6960
    %v7149 = vpack.c.b16 %v6965, %v6961
    %v7150 = vpack.c.b16 %v6966, %v6962
    %v7151 = vpack.c.b16 %v6971, %v6967
    %v7152 = vpack.c.b16 %v6972, %v6968
    %v7153 = vpack.c.b16 %v6973, %v6969
    %v7154 = vpack.c.b16 %v6974, %v6970
    %v7155 = vpack.c.b16 %v6979, %v6975
    %v7156 = vpack.c.b16 %v6980, %v6976
    %v7157 = vpack.c.b16 %v6981, %v6977
    %v7158 = vpack.c.b16 %v6982, %v6978
    %v7159 = vpack.c.b16 %v6987, %v6983
    %v7160 = vpack.c.b16 %v6988, %v6984
    %v7161 = vpack.c.b16 %v6989, %v6985
    %v7162 = vpack.c.b16 %v6990, %v6986
    %v7163 = vpack.c.b16 %v6995, %v6991
    %v7164 = vpack.c.b16 %v6996, %v6992
    %v7165 = vpack.c.b16 %v6997, %v6993
    %v7166 = vpack.c.b16 %v6998, %v6994
    %v7167 = vpack.c.b16 %v7003, %v6999
    %v7168 = vpack.c.b16 %v7004, %v7000
    %v7169 = vpack.c.b16 %v7005, %v7001
    %v7170 = vpack.c.b16 %v7006, %v7002
    %v7171 = vpack.c.b16 %v7011, %v7007
    %v7172 = vpack.c.b16 %v7012, %v7008
    %v7173 = vpack.c.b16 %v7013, %v7009
    %v7174 = vpack.c.b16 %v7014, %v7010
    %v7175 = vpack.c.b16 %v7019, %v7015
    %v7176 = vpack.c.b16 %v7020, %v7016
    %v7177 = vpack.c.b16 %v7021, %v7017
    %v7178 = vpack.c.b16 %v7022, %v7018
    %v7179 = vpack.c.b16 %v7027, %v7023
    %v7180 = vpack.c.b16 %v7028, %v7024
    %v7181 = vpack.c.b16 %v7029, %v7025
    %v7182 = vpack.c.b16 %v7030, %v7026
    %v7183 = vpack.c.b16 %v7035, %v7031
    %v7184 = vpack.c.b16 %v7036, %v7032
    %v7185 = vpack.c.b16 %v7037, %v7033
    %v7186 = vpack.c.b16 %v7038, %v7034
    %v7187 = vpack.c.b16 %v7043, %v7039
    %v7188 = vpack.c.b16 %v7044, %v7040
    %v7189 = vpack.c.b16 %v7045, %v7041
    %v7190 = vpack.c.b16 %v7046, %v7042
    %v7191 = vpack.c.b16 %v7051, %v7047
    %v7192 = vpack.c.b16 %v7052, %v7048
    %v7193 = vpack.c.b16 %v7053, %v7049
    %v7194 = vpack.c.b16 %v7054, %v7050
    %v7195 = vpack.c.b16 %v7059, %v7055
    %v7196 = vpack.c.b16 %v7060, %v7056
    %v7197 = vpack.c.b16 %v7061, %v7057
    %v7198 = vpack.c.b16 %v7062, %v7058
    %v7199 = vpack.c.b16 %v7067, %v7063
    %v7200 = vpack.c.b16 %v7068, %v7064
    %v7201 = vpack.c.b16 %v7069, %v7065
    %v7202 = vpack.c.b16 %v7070, %v7066
    %v7203 = vpack.c.b16 %v7075, %v7071
    %v7204 = vpack.c.b16 %v7076, %v7072
    %v7205 = vpack.c.b16 %v7077, %v7073
    %v7206 = vpack.c.b16 %v7078, %v7074
    %7335 = vmatprep.subr.bf16.mxu0 %v7080
    %7336 = vmatpush1.bf16.msra.mxu0 %v7079
    %7337 = vmatprep.subr.bf16.mxu0 %v7084
    %7338 = vmatpush1.bf16.msra.mxu0 %v7083
    %7339 = vmatprep.subr.bf16.mxu0 %v7088
    %7340 = vmatpush1.bf16.msra.mxu0 %v7087
    %7341 = vmatprep.subr.bf16.mxu0 %v7092
    %7342 = vmatpush1.bf16.msra.mxu0 %v7091
    %7343 = vmatprep.subr.bf16.mxu0 %v7096
    %7344 = vmatpush1.bf16.msra.mxu0 %v7095
    %7345 = vmatprep.subr.bf16.mxu0 %v7100
    %7346 = vmatpush1.bf16.msra.mxu0 %v7099
    %7347 = vmatprep.subr.bf16.mxu0 %v7104
    %7348 = vmatpush1.bf16.msra.mxu0 %v7103
    %7349 = vmatprep.subr.bf16.mxu0 %v7108
    %7350 = vmatpush1.bf16.msra.mxu0 %v7107
    %7351 = vmatprep.subr.bf16.mxu0 %v7112
    %7352 = vmatpush1.bf16.msra.mxu0 %v7111
    %7353 = vmatprep.subr.bf16.mxu0 %v7116
    %7354 = vmatpush1.bf16.msra.mxu0 %v7115
    %7355 = vmatprep.subr.bf16.mxu0 %v7120
    %7356 = vmatpush1.bf16.msra.mxu0 %v7119
    %7357 = vmatprep.subr.bf16.mxu0 %v7124
    %7358 = vmatpush1.bf16.msra.mxu0 %v7123
    %7359 = vmatprep.subr.bf16.mxu0 %v7128
    %7360 = vmatpush1.bf16.msra.mxu0 %v7127
    %7361 = vmatprep.subr.bf16.mxu0 %v7132
    %7362 = vmatpush1.bf16.msra.mxu0 %v7131
    %7363 = vmatprep.subr.bf16.mxu0 %v7136
    %7364 = vmatpush1.bf16.msra.mxu0 %v7135
    %7365 = vmatprep.subr.bf16.mxu0 %v7140
    %7366 = vmatpush1.bf16.msra.mxu0 %v7139
    %7367 = vmatprep.mubr.bf16.mxu0 %v6514
    %7368 = vmatmul.mubr.bf16.gmra.mrb[0].mxu0 %v6513
    %v7369 = vpop.f32.mrb[0].mxu0
    %v7370 = vadd.f32 %v6678, %v7369
    %v7371 = vpop.f32.mrb[0].mxu0
    %v7372 = vadd.f32 %v6682, %v7371
    %v7373 = vpop.f32.mrb[0].mxu0
    %v7374 = vadd.f32 %v6678, %v7373
    %v7375 = vpop.f32.mrb[0].mxu0
    %v7376 = vadd.f32 %v6682, %v7375
    %7377 = vmatprep.mubr.bf16.mxu0 %v6518
    %7378 = vmatmul.mubr.bf16.gmra.mrb[0].mxu0 %v6517
    %v7379 = vpop.f32.mrb[0].mxu0
    %v7380 = vadd.f32 %v6678, %v7379
    %v7381 = vpop.f32.mrb[0].mxu0
    %v7382 = vadd.f32 %v6682, %v7381
    %v7383 = vpop.f32.mrb[0].mxu0
    %v7384 = vadd.f32 %v6678, %v7383
    %v7385 = vpop.f32.mrb[0].mxu0
    %v7386 = vadd.f32 %v6682, %v7385
    %7387 = vmatprep.mubr.bf16.mxu0 %v6522
    %7388 = vmatmul.mubr.bf16.gmra.mrb[0].mxu0 %v6521
    %v7389 = vpop.f32.mrb[0].mxu0
    %v7390 = vadd.f32 %v6678, %v7389
    %v7391 = vpop.f32.mrb[0].mxu0
    %v7392 = vadd.f32 %v6682, %v7391
    %v7393 = vpop.f32.mrb[0].mxu0
    %v7394 = vadd.f32 %v6678, %v7393
    %v7395 = vpop.f32.mrb[0].mxu0
    %v7396 = vadd.f32 %v6682, %v7395
    %7397 = vmatprep.mubr.bf16.mxu0 %v6526
    %7398 = vmatmul.mubr.bf16.gmra.mrb[0].mxu0 %v6525
    %v7399 = vpop.f32.mrb[0].mxu0
    %v7400 = vadd.f32 %v6678, %v7399
    %v7401 = vpop.f32.mrb[0].mxu0
    %v7402 = vadd.f32 %v6682, %v7401
    %v7403 = vpop.f32.mrb[0].mxu0
    %v7404 = vadd.f32 %v6678, %v7403
    %v7405 = vpop.f32.mrb[0].mxu0
    %v7406 = vadd.f32 %v6682, %v7405
    %7407 = vmatprep.mubr.bf16.mxu0 %v6530
    %7408 = vmatmul.mubr.bf16.gmra.mrb[0].mxu0 %v6529
    %v7409 = vpop.f32.mrb[0].mxu0
    %v7410 = vadd.f32 %v6678, %v7409
    %v7411 = vpop.f32.mrb[0].mxu0
    %v7412 = vadd.f32 %v6682, %v7411
    %v7413 = vpop.f32.mrb[0].mxu0
    %v7414 = vadd.f32 %v6678, %v7413
    %v7415 = vpop.f32.mrb[0].mxu0
    %v7416 = vadd.f32 %v6682, %v7415
    %7417 = vmatprep.mubr.bf16.mxu0 %v6534
    %7418 = vmatmul.mubr.bf16.gmra.mrb[0].mxu0 %v6533
    %v7419 = vpop.f32.mrb[0].mxu0
    %v7420 = vadd.f32 %v6678, %v7419
    %v7421 = vpop.f32.mrb[0].mxu0
    %v7422 = vadd.f32 %v6682, %v7421
    %v7423 = vpop.f32.mrb[0].mxu0
    %v7424 = vadd.f32 %v6678, %v7423
    %v7425 = vpop.f32.mrb[0].mxu0
    %v7426 = vadd.f32 %v6682, %v7425
    %7427 = vmatprep.mubr.bf16.mxu0 %v6538
    %7428 = vmatmul.mubr.bf16.gmra.mrb[0].mxu0 %v6537
    %v7429 = vpop.f32.mrb[0].mxu0
    %v7430 = vadd.f32 %v6678, %v7429
    %v7431 = vpop.f32.mrb[0].mxu0
    %v7432 = vadd.f32 %v6682, %v7431
    %v7433 = vpop.f32.mrb[0].mxu0
    %v7434 = vadd.f32 %v6678, %v7433
    %v7435 = vpop.f32.mrb[0].mxu0
    %v7436 = vadd.f32 %v6682, %v7435
    %7437 = vmatprep.mubr.bf16.mxu0 %v6542
    %7438 = vmatmul.mubr.bf16.gmra.mrb[0].mxu0 %v6541
    %v7439 = vpop.f32.mrb[0].mxu0
    %v7440 = vadd.f32 %v6678, %v7439
    %v7441 = vpop.f32.mrb[0].mxu0
    %v7442 = vadd.f32 %v6682, %v7441
    %v7443 = vpop.f32.mrb[0].mxu0
    %v7444 = vadd.f32 %v6678, %v7443
    %v7445 = vpop.f32.mrb[0].mxu0
    %v7446 = vadd.f32 %v6682, %v7445
    %7447 = vdwg.mxu0
    %7448 = vmatprep.subr.bf16.mxu0 %v7144
    %7449 = vmatpush1.bf16.msra.mxu0 %v7143
    %7450 = vmatprep.subr.bf16.mxu0 %v7148
    %7451 = vmatpush1.bf16.msra.mxu0 %v7147
    %7452 = vmatprep.subr.bf16.mxu0 %v7152
    %7453 = vmatpush1.bf16.msra.mxu0 %v7151
    %7454 = vmatprep.subr.bf16.mxu0 %v7156
    %7455 = vmatpush1.bf16.msra.mxu0 %v7155
    %7456 = vmatprep.subr.bf16.mxu0 %v7160
    %7457 = vmatpush1.bf16.msra.mxu0 %v7159
    %7458 = vmatprep.subr.bf16.mxu0 %v7164
    %7459 = vmatpush1.bf16.msra.mxu0 %v7163
    %7460 = vmatprep.subr.bf16.mxu0 %v7168
    %7461 = vmatpush1.bf16.msra.mxu0 %v7167
    %7462 = vmatprep.subr.bf16.mxu0 %v7172
    %7463 = vmatpush1.bf16.msra.mxu0 %v7171
    %7464 = vmatprep.subr.bf16.mxu0 %v7176
    %7465 = vmatpush1.bf16.msra.mxu0 %v7175
    %7466 = vmatprep.subr.bf16.mxu0 %v7180
    %7467 = vmatpush1.bf16.msra.mxu0 %v7179
    %7468 = vmatprep.subr.bf16.mxu0 %v7184
    %7469 = vmatpush1.bf16.msra.mxu0 %v7183
    %7470 = vmatprep.subr.bf16.mxu0 %v7188
    %7471 = vmatpush1.bf16.msra.mxu0 %v7187
    %7472 = vmatprep.subr.bf16.mxu0 %v7192
    %7473 = vmatpush1.bf16.msra.mxu0 %v7191
    %7474 = vmatprep.subr.bf16.mxu0 %v7196
    %7475 = vmatpush1.bf16.msra.mxu0 %v7195
    %7476 = vmatprep.subr.bf16.mxu0 %v7200
    %7477 = vmatpush1.bf16.msra.mxu0 %v7199
    %7478 = vmatprep.subr.bf16.mxu0 %v7204
    %7479 = vmatpush1.bf16.msra.mxu0 %v7203
    %7480 = vmatprep.mubr.bf16.mxu0 %v6516
    %7481 = vmatmul.mubr.bf16.gmra.mrb[0].mxu0 %v6515
    %v7482 = vpop.f32.mrb[0].mxu0
    %v7483 = vadd.f32 %v7370, %v7482
    %v7484 = vpop.f32.mrb[0].mxu0
    %v7485 = vadd.f32 %v7372, %v7484
    %v7486 = vpop.f32.mrb[0].mxu0
    %v7487 = vadd.f32 %v7374, %v7486
    %v7488 = vpop.f32.mrb[0].mxu0
    %v7489 = vadd.f32 %v7376, %v7488
    %7490 = vmatprep.mubr.bf16.mxu0 %v6520
    %7491 = vmatmul.mubr.bf16.gmra.mrb[0].mxu0 %v6519
    %v7492 = vpop.f32.mrb[0].mxu0
    %v7493 = vadd.f32 %v7380, %v7492
    %v7494 = vpop.f32.mrb[0].mxu0
    %v7495 = vadd.f32 %v7382, %v7494
    %v7496 = vpop.f32.mrb[0].mxu0
    %v7497 = vadd.f32 %v7384, %v7496
    %v7498 = vpop.f32.mrb[0].mxu0
    %v7499 = vadd.f32 %v7386, %v7498
    %7500 = vmatprep.mubr.bf16.mxu0 %v6524
    %7501 = vmatmul.mubr.bf16.gmra.mrb[0].mxu0 %v6523
    %v7502 = vpop.f32.mrb[0].mxu0
    %v7503 = vadd.f32 %v7390, %v7502
    %v7504 = vpop.f32.mrb[0].mxu0
    %v7505 = vadd.f32 %v7392, %v7504
    %v7506 = vpop.f32.mrb[0].mxu0
    %v7507 = vadd.f32 %v7394, %v7506
    %v7508 = vpop.f32.mrb[0].mxu0
    %v7509 = vadd.f32 %v7396, %v7508
    %7510 = vmatprep.mubr.bf16.mxu0 %v6528
    %7511 = vmatmul.mubr.bf16.gmra.mrb[0].mxu0 %v6527
    %v7512 = vpop.f32.mrb[0].mxu0
    %v7513 = vadd.f32 %v7400, %v7512
    %v7514 = vpop.f32.mrb[0].mxu0
    %v7515 = vadd.f32 %v7402, %v7514
    %v7516 = vpop.f32.mrb[0].mxu0
    %v7517 = vadd.f32 %v7404, %v7516
    %v7518 = vpop.f32.mrb[0].mxu0
    %v7519 = vadd.f32 %v7406, %v7518
    %7520 = vmatprep.mubr.bf16.mxu0 %v6532
    %7521 = vmatmul.mubr.bf16.gmra.mrb[0].mxu0 %v6531
    %v7522 = vpop.f32.mrb[0].mxu0
    %v7523 = vadd.f32 %v7410, %v7522
    %v7524 = vpop.f32.mrb[0].mxu0
    %v7525 = vadd.f32 %v7412, %v7524
    %v7526 = vpop.f32.mrb[0].mxu0
    %v7527 = vadd.f32 %v7414, %v7526
    %v7528 = vpop.f32.mrb[0].mxu0
    %v7529 = vadd.f32 %v7416, %v7528
    %7530 = vmatprep.mubr.bf16.mxu0 %v6536
    %7531 = vmatmul.mubr.bf16.gmra.mrb[0].mxu0 %v6535
    %v7532 = vpop.f32.mrb[0].mxu0
    %v7533 = vadd.f32 %v7420, %v7532
    %v7534 = vpop.f32.mrb[0].mxu0
    %v7535 = vadd.f32 %v7422, %v7534
    %v7536 = vpop.f32.mrb[0].mxu0
    %v7537 = vadd.f32 %v7424, %v7536
    %v7538 = vpop.f32.mrb[0].mxu0
    %v7539 = vadd.f32 %v7426, %v7538
    %7540 = vmatprep.mubr.bf16.mxu0 %v6540
    %7541 = vmatmul.mubr.bf16.gmra.mrb[0].mxu0 %v6539
    %v7542 = vpop.f32.mrb[0].mxu0
    %v7543 = vadd.f32 %v7430, %v7542
    %v7544 = vpop.f32.mrb[0].mxu0
    %v7545 = vadd.f32 %v7432, %v7544
    %v7546 = vpop.f32.mrb[0].mxu0
    %v7547 = vadd.f32 %v7434, %v7546
    %v7548 = vpop.f32.mrb[0].mxu0
    %v7549 = vadd.f32 %v7436, %v7548
    %7550 = vmatprep.mubr.bf16.mxu0 %v6544
    %7551 = vmatmul.mubr.bf16.gmra.mrb[0].mxu0 %v6543
    %v7552 = vpop.f32.mrb[0].mxu0
    %v7553 = vadd.f32 %v7440, %v7552
    %v7554 = vpop.f32.mrb[0].mxu0
    %v7555 = vadd.f32 %v7442, %v7554
    %v7556 = vpop.f32.mrb[0].mxu0
    %v7557 = vadd.f32 %v7444, %v7556
    %v7558 = vpop.f32.mrb[0].mxu0
    %v7559 = vadd.f32 %v7446, %v7558
    %7560 = vdwg.mxu0
    %7561 = vmatprep.subr.bf16.mxu0 %v7082
    %7562 = vmatpush1.bf16.msra.mxu0 %v7081
    %7563 = vmatprep.subr.bf16.mxu0 %v7086
    %7564 = vmatpush1.bf16.msra.mxu0 %v7085
    %7565 = vmatprep.subr.bf16.mxu0 %v7090
    %7566 = vmatpush1.bf16.msra.mxu0 %v7089
    %7567 = vmatprep.subr.bf16.mxu0 %v7094
    %7568 = vmatpush1.bf16.msra.mxu0 %v7093
    %7569 = vmatprep.subr.bf16.mxu0 %v7098
    %7570 = vmatpush1.bf16.msra.mxu0 %v7097
    %7571 = vmatprep.subr.bf16.mxu0 %v7102
    %7572 = vmatpush1.bf16.msra.mxu0 %v7101
    %7573 = vmatprep.subr.bf16.mxu0 %v7106
    %7574 = vmatpush1.bf16.msra.mxu0 %v7105
    %7575 = vmatprep.subr.bf16.mxu0 %v7110
    %7576 = vmatpush1.bf16.msra.mxu0 %v7109
    %7577 = vmatprep.subr.bf16.mxu0 %v7114
    %7578 = vmatpush1.bf16.msra.mxu0 %v7113
    %7579 = vmatprep.subr.bf16.mxu0 %v7118
    %7580 = vmatpush1.bf16.msra.mxu0 %v7117
    %7581 = vmatprep.subr.bf16.mxu0 %v7122
    %7582 = vmatpush1.bf16.msra.mxu0 %v7121
    %7583 = vmatprep.subr.bf16.mxu0 %v7126
    %7584 = vmatpush1.bf16.msra.mxu0 %v7125
    %7585 = vmatprep.subr.bf16.mxu0 %v7130
    %7586 = vmatpush1.bf16.msra.mxu0 %v7129
    %7587 = vmatprep.subr.bf16.mxu0 %v7134
    %7588 = vmatpush1.bf16.msra.mxu0 %v7133
    %7589 = vmatprep.subr.bf16.mxu0 %v7138
    %7590 = vmatpush1.bf16.msra.mxu0 %v7137
    %7591 = vmatprep.subr.bf16.mxu0 %v7142
    %7592 = vmatpush1.bf16.msra.mxu0 %v7141
    %7593 = vmatprep.mubr.bf16.mxu0 %v6514
    %7594 = vmatmul.mubr.bf16.gmra.mrb[0].mxu0 %v6513
    %v7595 = vpop.f32.mrb[0].mxu0
    %v7596 = vadd.f32 %v6686, %v7595
    %v7597 = vpop.f32.mrb[0].mxu0
    %v7598 = vadd.f32 %v6690, %v7597
    %v7599 = vpop.f32.mrb[0].mxu0
    %v7600 = vadd.f32 %v6686, %v7599
    %v7601 = vpop.f32.mrb[0].mxu0
    %v7602 = vadd.f32 %v6690, %v7601
    %7603 = vmatprep.mubr.bf16.mxu0 %v6518
    %7604 = vmatmul.mubr.bf16.gmra.mrb[0].mxu0 %v6517
    %v7605 = vpop.f32.mrb[0].mxu0
    %v7606 = vadd.f32 %v6686, %v7605
    %v7607 = vpop.f32.mrb[0].mxu0
    %v7608 = vadd.f32 %v6690, %v7607
    %v7609 = vpop.f32.mrb[0].mxu0
    %v7610 = vadd.f32 %v6686, %v7609
    %v7611 = vpop.f32.mrb[0].mxu0
    %v7612 = vadd.f32 %v6690, %v7611
    %7613 = vmatprep.mubr.bf16.mxu0 %v6522
    %7614 = vmatmul.mubr.bf16.gmra.mrb[0].mxu0 %v6521
    %v7615 = vpop.f32.mrb[0].mxu0
    %v7616 = vadd.f32 %v6686, %v7615
    %v7617 = vpop.f32.mrb[0].mxu0
    %v7618 = vadd.f32 %v6690, %v7617
    %v7619 = vpop.f32.mrb[0].mxu0
    %v7620 = vadd.f32 %v6686, %v7619
    %v7621 = vpop.f32.mrb[0].mxu0
    %v7622 = vadd.f32 %v6690, %v7621
    %7623 = vmatprep.mubr.bf16.mxu0 %v6526
    %7624 = vmatmul.mubr.bf16.gmra.mrb[0].mxu0 %v6525
    %v7625 = vpop.f32.mrb[0].mxu0
    %v7626 = vadd.f32 %v6686, %v7625
    %v7627 = vpop.f32.mrb[0].mxu0
    %v7628 = vadd.f32 %v6690, %v7627
    %v7629 = vpop.f32.mrb[0].mxu0
    %v7630 = vadd.f32 %v6686, %v7629
    %v7631 = vpop.f32.mrb[0].mxu0
    %v7632 = vadd.f32 %v6690, %v7631
    %7633 = vmatprep.mubr.bf16.mxu0 %v6530
    %7634 = vmatmul.mubr.bf16.gmra.mrb[0].mxu0 %v6529
    %v7635 = vpop.f32.mrb[0].mxu0
    %v7636 = vadd.f32 %v6686, %v7635
    %v7637 = vpop.f32.mrb[0].mxu0
    %v7638 = vadd.f32 %v6690, %v7637
    %v7639 = vpop.f32.mrb[0].mxu0
    %v7640 = vadd.f32 %v6686, %v7639
    %v7641 = vpop.f32.mrb[0].mxu0
    %v7642 = vadd.f32 %v6690, %v7641
    %7643 = vmatprep.mubr.bf16.mxu0 %v6534
    %7644 = vmatmul.mubr.bf16.gmra.mrb[0].mxu0 %v6533
    %v7645 = vpop.f32.mrb[0].mxu0
    %v7646 = vadd.f32 %v6686, %v7645
    %v7647 = vpop.f32.mrb[0].mxu0
    %v7648 = vadd.f32 %v6690, %v7647
    %v7649 = vpop.f32.mrb[0].mxu0
    %v7650 = vadd.f32 %v6686, %v7649
    %v7651 = vpop.f32.mrb[0].mxu0
    %v7652 = vadd.f32 %v6690, %v7651
    %7653 = vmatprep.mubr.bf16.mxu0 %v6538
    %7654 = vmatmul.mubr.bf16.gmra.mrb[0].mxu0 %v6537
    %v7655 = vpop.f32.mrb[0].mxu0
    %v7656 = vadd.f32 %v6686, %v7655
    %v7657 = vpop.f32.mrb[0].mxu0
    %v7658 = vadd.f32 %v6690, %v7657
    %v7659 = vpop.f32.mrb[0].mxu0
    %v7660 = vadd.f32 %v6686, %v7659
    %v7661 = vpop.f32.mrb[0].mxu0
    %v7662 = vadd.f32 %v6690, %v7661
    %7663 = vmatprep.mubr.bf16.mxu0 %v6542
    %7664 = vmatmul.mubr.bf16.gmra.mrb[0].mxu0 %v6541
    %v7665 = vpop.f32.mrb[0].mxu0
    %v7666 = vadd.f32 %v6686, %v7665
    %v7667 = vpop.f32.mrb[0].mxu0
    %v7668 = vadd.f32 %v6690, %v7667
    %v7669 = vpop.f32.mrb[0].mxu0
    %v7670 = vadd.f32 %v6686, %v7669
    %v7671 = vpop.f32.mrb[0].mxu0
    %v7672 = vadd.f32 %v6690, %v7671
    %7673 = vdwg.mxu0
    %7674 = vmatprep.subr.bf16.mxu0 %v7146
    %7675 = vmatpush1.bf16.msra.mxu0 %v7145
    %7676 = vmatprep.subr.bf16.mxu0 %v7150
    %7677 = vmatpush1.bf16.msra.mxu0 %v7149
    %7678 = vmatprep.subr.bf16.mxu0 %v7154
    %7679 = vmatpush1.bf16.msra.mxu0 %v7153
    %7680 = vmatprep.subr.bf16.mxu0 %v7158
    %7681 = vmatpush1.bf16.msra.mxu0 %v7157
    %7682 = vmatprep.subr.bf16.mxu0 %v7162
    %7683 = vmatpush1.bf16.msra.mxu0 %v7161
    %7684 = vmatprep.subr.bf16.mxu0 %v7166
    %7685 = vmatpush1.bf16.msra.mxu0 %v7165
    %7686 = vmatprep.subr.bf16.mxu0 %v7170
    %7687 = vmatpush1.bf16.msra.mxu0 %v7169
    %7688 = vmatprep.subr.bf16.mxu0 %v7174
    %7689 = vmatpush1.bf16.msra.mxu0 %v7173
    %7690 = vmatprep.subr.bf16.mxu0 %v7178
    %7691 = vmatpush1.bf16.msra.mxu0 %v7177
    %7692 = vmatprep.subr.bf16.mxu0 %v7182
    %7693 = vmatpush1.bf16.msra.mxu0 %v7181
    %7694 = vmatprep.subr.bf16.mxu0 %v7186
    %7695 = vmatpush1.bf16.msra.mxu0 %v7185
    %7696 = vmatprep.subr.bf16.mxu0 %v7190
    %7697 = vmatpush1.bf16.msra.mxu0 %v7189
    %7698 = vmatprep.subr.bf16.mxu0 %v7194
    %7699 = vmatpush1.bf16.msra.mxu0 %v7193
    %7700 = vmatprep.subr.bf16.mxu0 %v7198
    %7701 = vmatpush1.bf16.msra.mxu0 %v7197
    %7702 = vmatprep.subr.bf16.mxu0 %v7202
    %7703 = vmatpush1.bf16.msra.mxu0 %v7201
    %7704 = vmatprep.subr.bf16.mxu0 %v7206
    %7705 = vmatpush1.bf16.msra.mxu0 %v7205
    %7706 = vmatprep.mubr.bf16.mxu0 %v6516
    %7707 = vmatmul.mubr.bf16.gmra.mrb[0].mxu0 %v6515
    %v7708 = vpop.f32.mrb[0].mxu0
    %v7709 = vadd.f32 %v7596, %v7708
    %v7710 = vpop.f32.mrb[0].mxu0
    %v7711 = vadd.f32 %v7598, %v7710
    %v7712 = vpop.f32.mrb[0].mxu0
    %v7713 = vadd.f32 %v7600, %v7712
    %v7714 = vpop.f32.mrb[0].mxu0
    %v7715 = vadd.f32 %v7602, %v7714
    %7716 = vmatprep.mubr.bf16.mxu0 %v6520
    %7717 = vmatmul.mubr.bf16.gmra.mrb[0].mxu0 %v6519
    %v7718 = vpop.f32.mrb[0].mxu0
    %v7719 = vadd.f32 %v7606, %v7718
    %v7720 = vpop.f32.mrb[0].mxu0
    %v7721 = vadd.f32 %v7608, %v7720
    %v7722 = vpop.f32.mrb[0].mxu0
    %v7723 = vadd.f32 %v7610, %v7722
    %v7724 = vpop.f32.mrb[0].mxu0
    %v7725 = vadd.f32 %v7612, %v7724
    %7726 = vmatprep.mubr.bf16.mxu0 %v6524
    %7727 = vmatmul.mubr.bf16.gmra.mrb[0].mxu0 %v6523
    %v7728 = vpop.f32.mrb[0].mxu0
    %v7729 = vadd.f32 %v7616, %v7728
    %v7730 = vpop.f32.mrb[0].mxu0
    %v7731 = vadd.f32 %v7618, %v7730
    %v7732 = vpop.f32.mrb[0].mxu0
    %v7733 = vadd.f32 %v7620, %v7732
    %v7734 = vpop.f32.mrb[0].mxu0
    %v7735 = vadd.f32 %v7622, %v7734
    %7736 = vmatprep.mubr.bf16.mxu0 %v6528
    %7737 = vmatmul.mubr.bf16.gmra.mrb[0].mxu0 %v6527
    %v7738 = vpop.f32.mrb[0].mxu0
    %v7739 = vadd.f32 %v7626, %v7738
    %v7740 = vpop.f32.mrb[0].mxu0
    %v7741 = vadd.f32 %v7628, %v7740
    %v7742 = vpop.f32.mrb[0].mxu0
    %v7743 = vadd.f32 %v7630, %v7742
    %v7744 = vpop.f32.mrb[0].mxu0
    %v7745 = vadd.f32 %v7632, %v7744
    %7746 = vmatprep.mubr.bf16.mxu0 %v6532
    %7747 = vmatmul.mubr.bf16.gmra.mrb[0].mxu0 %v6531
    %v7748 = vpop.f32.mrb[0].mxu0
    %v7749 = vadd.f32 %v7636, %v7748
    %v7750 = vpop.f32.mrb[0].mxu0
    %v7751 = vadd.f32 %v7638, %v7750
    %v7752 = vpop.f32.mrb[0].mxu0
    %v7753 = vadd.f32 %v7640, %v7752
    %v7754 = vpop.f32.mrb[0].mxu0
    %v7755 = vadd.f32 %v7642, %v7754
    %7756 = vmatprep.mubr.bf16.mxu0 %v6536
    %7757 = vmatmul.mubr.bf16.gmra.mrb[0].mxu0 %v6535
    %v7758 = vpop.f32.mrb[0].mxu0
    %v7759 = vadd.f32 %v7646, %v7758
    %v7760 = vpop.f32.mrb[0].mxu0
    %v7761 = vadd.f32 %v7648, %v7760
    %v7762 = vpop.f32.mrb[0].mxu0
    %v7763 = vadd.f32 %v7650, %v7762
    %v7764 = vpop.f32.mrb[0].mxu0
    %v7765 = vadd.f32 %v7652, %v7764
    %7766 = vmatprep.mubr.bf16.mxu0 %v6540
    %7767 = vmatmul.mubr.bf16.gmra.mrb[0].mxu0 %v6539
    %v7768 = vpop.f32.mrb[0].mxu0
    %v7769 = vadd.f32 %v7656, %v7768
    %v7770 = vpop.f32.mrb[0].mxu0
    %v7771 = vadd.f32 %v7658, %v7770
    %v7772 = vpop.f32.mrb[0].mxu0
    %v7773 = vadd.f32 %v7660, %v7772
    %v7774 = vpop.f32.mrb[0].mxu0
    %v7775 = vadd.f32 %v7662, %v7774
    %7776 = vmatprep.mubr.bf16.mxu0 %v6544
    %7777 = vmatmul.mubr.bf16.gmra.mrb[0].mxu0 %v6543
    %v7778 = vpop.f32.mrb[0].mxu0
    %v7779 = vadd.f32 %v7666, %v7778
    %v7780 = vpop.f32.mrb[0].mxu0
    %v7781 = vadd.f32 %v7668, %v7780
    %v7782 = vpop.f32.mrb[0].mxu0
    %v7783 = vadd.f32 %v7670, %v7782
    %v7784 = vpop.f32.mrb[0].mxu0
    %v7785 = vadd.f32 %v7672, %v7784
    %7786 = vdwg.mxu0
    %v7787 = vmax.f32 %v7483, 0.0
    %v7788 = vmax.f32 %v7485, 0.0
    %v7789 = vmax.f32 %v7709, 0.0
    %v7790 = vmax.f32 %v7711, 0.0
    %v7791 = vmax.f32 %v7487, 0.0
    %v7792 = vmax.f32 %v7489, 0.0
    %v7793 = vmax.f32 %v7713, 0.0
    %v7794 = vmax.f32 %v7715, 0.0
    %v7795 = vmax.f32 %v7493, 0.0
    %v7796 = vmax.f32 %v7495, 0.0
    %v7797 = vmax.f32 %v7719, 0.0
    %v7798 = vmax.f32 %v7721, 0.0
    %v7799 = vmax.f32 %v7497, 0.0
    %v7800 = vmax.f32 %v7499, 0.0
    %v7801 = vmax.f32 %v7723, 0.0
    %v7802 = vmax.f32 %v7725, 0.0
    %v7803 = vmax.f32 %v7503, 0.0
    %v7804 = vmax.f32 %v7505, 0.0
    %v7805 = vmax.f32 %v7729, 0.0
    %v7806 = vmax.f32 %v7731, 0.0
    %v7807 = vmax.f32 %v7507, 0.0
    %v7808 = vmax.f32 %v7509, 0.0
    %v7809 = vmax.f32 %v7733, 0.0
    %v7810 = vmax.f32 %v7735, 0.0
    %v7811 = vmax.f32 %v7513, 0.0
    %v7812 = vmax.f32 %v7515, 0.0
    %v7813 = vmax.f32 %v7739, 0.0
    %v7814 = vmax.f32 %v7741, 0.0
    %v7815 = vmax.f32 %v7517, 0.0
    %v7816 = vmax.f32 %v7519, 0.0
    %v7817 = vmax.f32 %v7743, 0.0
    %v7818 = vmax.f32 %v7745, 0.0
    %v7819 = vmax.f32 %v7523, 0.0
    %v7820 = vmax.f32 %v7525, 0.0
    %v7821 = vmax.f32 %v7749, 0.0
    %v7822 = vmax.f32 %v7751, 0.0
    %v7823 = vmax.f32 %v7527, 0.0
    %v7824 = vmax.f32 %v7529, 0.0
    %v7825 = vmax.f32 %v7753, 0.0
    %v7826 = vmax.f32 %v7755, 0.0
    %v7827 = vmax.f32 %v7533, 0.0
    %v7828 = vmax.f32 %v7535, 0.0
    %v7829 = vmax.f32 %v7759, 0.0
    %v7830 = vmax.f32 %v7761, 0.0
    %v7831 = vmax.f32 %v7537, 0.0
    %v7832 = vmax.f32 %v7539, 0.0
    %v7833 = vmax.f32 %v7763, 0.0
    %v7834 = vmax.f32 %v7765, 0.0
    %v7835 = vmax.f32 %v7543, 0.0
    %v7836 = vmax.f32 %v7545, 0.0
    %v7837 = vmax.f32 %v7769, 0.0
    %v7838 = vmax.f32 %v7771, 0.0
    %v7839 = vmax.f32 %v7547, 0.0
    %v7840 = vmax.f32 %v7549, 0.0
    %v7841 = vmax.f32 %v7773, 0.0
    %v7842 = vmax.f32 %v7775, 0.0
    %v7843 = vmax.f32 %v7553, 0.0
    %v7844 = vmax.f32 %v7555, 0.0
    %v7845 = vmax.f32 %v7779, 0.0
    %v7846 = vmax.f32 %v7781, 0.0
    %v7847 = vmax.f32 %v7557, 0.0
    %v7848 = vmax.f32 %v7559, 0.0
    %v7849 = vmax.f32 %v7783, 0.0
    %v7850 = vmax.f32 %v7785, 0.0
    %v7851 = vpack.c.bf16 %v7791, %v7787
    %v7852 = vpack.c.bf16 %v7792, %v7788
    %v7853 = vpack.c.bf16 %v7793, %v7789
    %v7854 = vpack.c.bf16 %v7794, %v7790
    %v7855 = vpack.c.bf16 %v7799, %v7795
    %v7856 = vpack.c.bf16 %v7800, %v7796
    %v7857 = vpack.c.bf16 %v7801, %v7797
    %v7858 = vpack.c.bf16 %v7802, %v7798
    %v7859 = vpack.c.bf16 %v7807, %v7803
    %v7860 = vpack.c.bf16 %v7808, %v7804
    %v7861 = vpack.c.bf16 %v7809, %v7805
    %v7862 = vpack.c.bf16 %v7810, %v7806
    %v7863 = vpack.c.bf16 %v7815, %v7811
    %v7864 = vpack.c.bf16 %v7816, %v7812
    %v7865 = vpack.c.bf16 %v7817, %v7813
    %v7866 = vpack.c.bf16 %v7818, %v7814
    %v7867 = vpack.c.bf16 %v7823, %v7819
    %v7868 = vpack.c.bf16 %v7824, %v7820
    %v7869 = vpack.c.bf16 %v7825, %v7821
    %v7870 = vpack.c.bf16 %v7826, %v7822
    %v7871 = vpack.c.bf16 %v7831, %v7827
    %v7872 = vpack.c.bf16 %v7832, %v7828
    %v7873 = vpack.c.bf16 %v7833, %v7829
    %v7874 = vpack.c.bf16 %v7834, %v7830
    %v7875 = vpack.c.bf16 %v7839, %v7835
    %v7876 = vpack.c.bf16 %v7840, %v7836
    %v7877 = vpack.c.bf16 %v7841, %v7837
    %v7878 = vpack.c.bf16 %v7842, %v7838
    %v7879 = vpack.c.bf16 %v7847, %v7843
    %v7880 = vpack.c.bf16 %v7848, %v7844
    %v7881 = vpack.c.bf16 %v7849, %v7845
    %v7882 = vpack.c.bf16 %v7850, %v7846
    %v7883 = vld [vmem:[#allocation17] sm:$0xff]
    %v7884 = vld [vmem:[#allocation17 + $0x8] sm:$0xff]
    %v7885 = vld [vmem:[#allocation17 + $0x10] sm:$0xff]
    %v7886 = vld [vmem:[#allocation17 + $0x18] sm:$0xff]
    %v7887 = vld [vmem:[#allocation17 + $0x20] sm:$0xff]
    %v7888 = vld [vmem:[#allocation17 + $0x28] sm:$0xff]
    %v7889 = vld [vmem:[#allocation17 + $0x30] sm:$0xff]
    %v7890 = vld [vmem:[#allocation17 + $0x38] sm:$0xff]
    %v7891 = vld [vmem:[#allocation17 + $0x40] sm:$0xff]
    %v7892 = vld [vmem:[#allocation17 + $0x48] sm:$0xff]
    %v7893 = vld [vmem:[#allocation17 + $0x50] sm:$0xff]
    %v7894 = vld [vmem:[#allocation17 + $0x58] sm:$0xff]
    %v7895 = vld [vmem:[#allocation17 + $0x60] sm:$0xff]
    %v7896 = vld [vmem:[#allocation17 + $0x68] sm:$0xff]
    %v7897 = vld [vmem:[#allocation17 + $0x70] sm:$0xff]
    %v7898 = vld [vmem:[#allocation17 + $0x78] sm:$0xff]
    %v7899 = vld [vmem:[#allocation17 + $0x80] sm:$0xff]
    %v7900 = vld [vmem:[#allocation17 + $0x88] sm:$0xff]
    %v7901 = vld [vmem:[#allocation17 + $0x90] sm:$0xff]
    %v7902 = vld [vmem:[#allocation17 + $0x98] sm:$0xff]
    %v7903 = vld [vmem:[#allocation17 + $0xa0] sm:$0xff]
    %v7904 = vld [vmem:[#allocation17 + $0xa8] sm:$0xff]
    %v7905 = vld [vmem:[#allocation17 + $0xb0] sm:$0xff]
    %v7906 = vld [vmem:[#allocation17 + $0xb8] sm:$0xff]
    %v7907 = vld [vmem:[#allocation17 + $0xc0] sm:$0xff]
    %v7908 = vld [vmem:[#allocation17 + $0xc8] sm:$0xff]
    %v7909 = vld [vmem:[#allocation17 + $0xd0] sm:$0xff]
    %v7910 = vld [vmem:[#allocation17 + $0xd8] sm:$0xff]
    %v7911 = vld [vmem:[#allocation17 + $0xe0] sm:$0xff]
    %v7912 = vld [vmem:[#allocation17 + $0xe8] sm:$0xff]
    %v7913 = vld [vmem:[#allocation17 + $0xf0] sm:$0xff]
    %v7914 = vld [vmem:[#allocation17 + $0xf8] sm:$0xff]
    %v7915 = vld [vmem:[#allocation17 + $0x100] sm:$0xff]
    %v7916 = vld [vmem:[#allocation17 + $0x108] sm:$0xff]
    %v7917 = vld [vmem:[#allocation17 + $0x110] sm:$0xff]
    %v7918 = vld [vmem:[#allocation17 + $0x118] sm:$0xff]
    %v7919 = vld [vmem:[#allocation17 + $0x120] sm:$0xff]
    %v7920 = vld [vmem:[#allocation17 + $0x128] sm:$0xff]
    %v7921 = vld [vmem:[#allocation17 + $0x130] sm:$0xff]
    %v7922 = vld [vmem:[#allocation17 + $0x138] sm:$0xff]
    %v7923 = vld [vmem:[#allocation17 + $0x140] sm:$0xff]
    %v7924 = vld [vmem:[#allocation17 + $0x148] sm:$0xff]
    %v7925 = vld [vmem:[#allocation17 + $0x150] sm:$0xff]
    %v7926 = vld [vmem:[#allocation17 + $0x158] sm:$0xff]
    %v7927 = vld [vmem:[#allocation17 + $0x160] sm:$0xff]
    %v7928 = vld [vmem:[#allocation17 + $0x168] sm:$0xff]
    %v7929 = vld [vmem:[#allocation17 + $0x170] sm:$0xff]
    %v7930 = vld [vmem:[#allocation17 + $0x178] sm:$0xff]
    %v7931 = vld [vmem:[#allocation17 + $0x180] sm:$0xff]
    %v7932 = vld [vmem:[#allocation17 + $0x188] sm:$0xff]
    %v7933 = vld [vmem:[#allocation17 + $0x190] sm:$0xff]
    %v7934 = vld [vmem:[#allocation17 + $0x198] sm:$0xff]
    %v7935 = vld [vmem:[#allocation17 + $0x1a0] sm:$0xff]
    %v7936 = vld [vmem:[#allocation17 + $0x1a8] sm:$0xff]
    %v7937 = vld [vmem:[#allocation17 + $0x1b0] sm:$0xff]
    %v7938 = vld [vmem:[#allocation17 + $0x1b8] sm:$0xff]
    %v7939 = vld [vmem:[#allocation17 + $0x1c0] sm:$0xff]
    %v7940 = vld [vmem:[#allocation17 + $0x1c8] sm:$0xff]
    %v7941 = vld [vmem:[#allocation17 + $0x1d0] sm:$0xff]
    %v7942 = vld [vmem:[#allocation17 + $0x1d8] sm:$0xff]
    %v7943 = vld [vmem:[#allocation17 + $0x1e0] sm:$0xff]
    %v7944 = vld [vmem:[#allocation17 + $0x1e8] sm:$0xff]
    %v7945 = vld [vmem:[#allocation17 + $0x1f0] sm:$0xff]
    %v7946 = vld [vmem:[#allocation17 + $0x1f8] sm:$0xff]
    %v7947 = vld [vmem:[#allocation17 + $0x200] sm:$0xff]
    %v7948 = vld [vmem:[#allocation17 + $0x208] sm:$0xff]
    %v7949 = vld [vmem:[#allocation17 + $0x210] sm:$0xff]
    %v7950 = vld [vmem:[#allocation17 + $0x218] sm:$0xff]
    %v7951 = vld [vmem:[#allocation17 + $0x220] sm:$0xff]
    %v7952 = vld [vmem:[#allocation17 + $0x228] sm:$0xff]
    %v7953 = vld [vmem:[#allocation17 + $0x230] sm:$0xff]
    %v7954 = vld [vmem:[#allocation17 + $0x238] sm:$0xff]
    %v7955 = vld [vmem:[#allocation17 + $0x240] sm:$0xff]
    %v7956 = vld [vmem:[#allocation17 + $0x248] sm:$0xff]
    %v7957 = vld [vmem:[#allocation17 + $0x250] sm:$0xff]
    %v7958 = vld [vmem:[#allocation17 + $0x258] sm:$0xff]
    %v7959 = vld [vmem:[#allocation17 + $0x260] sm:$0xff]
    %v7960 = vld [vmem:[#allocation17 + $0x268] sm:$0xff]
    %v7961 = vld [vmem:[#allocation17 + $0x270] sm:$0xff]
    %v7962 = vld [vmem:[#allocation17 + $0x278] sm:$0xff]
    %v7963 = vld [vmem:[#allocation17 + $0x280] sm:$0xff]
    %v7964 = vld [vmem:[#allocation17 + $0x288] sm:$0xff]
    %v7965 = vld [vmem:[#allocation17 + $0x290] sm:$0xff]
    %v7966 = vld [vmem:[#allocation17 + $0x298] sm:$0xff]
    %v7967 = vld [vmem:[#allocation17 + $0x2a0] sm:$0xff]
    %v7968 = vld [vmem:[#allocation17 + $0x2a8] sm:$0xff]
    %v7969 = vld [vmem:[#allocation17 + $0x2b0] sm:$0xff]
    %v7970 = vld [vmem:[#allocation17 + $0x2b8] sm:$0xff]
    %v7971 = vld [vmem:[#allocation17 + $0x2c0] sm:$0xff]
    %v7972 = vld [vmem:[#allocation17 + $0x2c8] sm:$0xff]
    %v7973 = vld [vmem:[#allocation17 + $0x2d0] sm:$0xff]
    %v7974 = vld [vmem:[#allocation17 + $0x2d8] sm:$0xff]
    %v7975 = vld [vmem:[#allocation17 + $0x2e0] sm:$0xff]
    %v7976 = vld [vmem:[#allocation17 + $0x2e8] sm:$0xff]
    %v7977 = vld [vmem:[#allocation17 + $0x2f0] sm:$0xff]
    %v7978 = vld [vmem:[#allocation17 + $0x2f8] sm:$0xff]
    %v7979 = vld [vmem:[#allocation17 + $0x300] sm:$0xff]
    %v7980 = vld [vmem:[#allocation17 + $0x308] sm:$0xff]
    %v7981 = vld [vmem:[#allocation17 + $0x310] sm:$0xff]
    %v7982 = vld [vmem:[#allocation17 + $0x318] sm:$0xff]
    %v7983 = vld [vmem:[#allocation17 + $0x320] sm:$0xff]
    %v7984 = vld [vmem:[#allocation17 + $0x328] sm:$0xff]
    %v7985 = vld [vmem:[#allocation17 + $0x330] sm:$0xff]
    %v7986 = vld [vmem:[#allocation17 + $0x338] sm:$0xff]
    %v7987 = vld [vmem:[#allocation17 + $0x340] sm:$0xff]
    %v7988 = vld [vmem:[#allocation17 + $0x348] sm:$0xff]
    %v7989 = vld [vmem:[#allocation17 + $0x350] sm:$0xff]
    %v7990 = vld [vmem:[#allocation17 + $0x358] sm:$0xff]
    %v7991 = vld [vmem:[#allocation17 + $0x360] sm:$0xff]
    %v7992 = vld [vmem:[#allocation17 + $0x368] sm:$0xff]
    %v7993 = vld [vmem:[#allocation17 + $0x370] sm:$0xff]
    %v7994 = vld [vmem:[#allocation17 + $0x378] sm:$0xff]
    %v7995 = vld [vmem:[#allocation17 + $0x380] sm:$0xff]
    %v7996 = vld [vmem:[#allocation17 + $0x388] sm:$0xff]
    %v7997 = vld [vmem:[#allocation17 + $0x390] sm:$0xff]
    %v7998 = vld [vmem:[#allocation17 + $0x398] sm:$0xff]
    %v7999 = vld [vmem:[#allocation17 + $0x3a0] sm:$0xff]
    %v8000 = vld [vmem:[#allocation17 + $0x3a8] sm:$0xff]
    %v8001 = vld [vmem:[#allocation17 + $0x3b0] sm:$0xff]
    %v8002 = vld [vmem:[#allocation17 + $0x3b8] sm:$0xff]
    %v8003 = vld [vmem:[#allocation17 + $0x3c0] sm:$0xff]
    %v8004 = vld [vmem:[#allocation17 + $0x3c8] sm:$0xff]
    %v8005 = vld [vmem:[#allocation17 + $0x3d0] sm:$0xff]
    %v8006 = vld [vmem:[#allocation17 + $0x3d8] sm:$0xff]
    %v8007 = vld [vmem:[#allocation17 + $0x3e0] sm:$0xff]
    %v8008 = vld [vmem:[#allocation17 + $0x3e8] sm:$0xff]
    %v8009 = vld [vmem:[#allocation17 + $0x3f0] sm:$0xff]
    %v8010 = vld [vmem:[#allocation17 + $0x3f8] sm:$0xff]
    %v8011 = vld [vmem:[%s16] sm:$0xf]
    %v8013 = vlaneseq
    %v8014 = vshrl.u32 %v8013, 7
    %v8015 = vsub.s32 0, %v8014
    %v8016 = vrot.slane %v8011, %v8015
    %v8017 = vlaneseq
    %v8018 = vshrl.u32 %v8017, 7
    %v8019 = vsub.s32 1, %v8018
    %v8020 = vrot.slane %v8011, %v8019
    %v8021 = vlaneseq
    %v8022 = vshrl.u32 %v8021, 7
    %v8023 = vsub.s32 2, %v8022
    %v8024 = vrot.slane %v8011, %v8023
    %v8025 = vlaneseq
    %v8026 = vshrl.u32 %v8025, 7
    %v8027 = vsub.s32 3, %v8026
    %v8028 = vrot.slane %v8011, %v8027
    %v8161 = vunpack.c.l.b16 %v7883
    %v8162 = vunpack.c.h.b16 %v7883
    %v8163 = vunpack.c.l.b16 %v7884
    %v8164 = vunpack.c.h.b16 %v7884
    %v8165 = vunpack.c.l.b16 %v7885
    %v8166 = vunpack.c.h.b16 %v7885
    %v8167 = vunpack.c.l.b16 %v7886
    %v8168 = vunpack.c.h.b16 %v7886
    %v8169 = vunpack.c.l.b16 %v7887
    %v8170 = vunpack.c.h.b16 %v7887
    %v8171 = vunpack.c.l.b16 %v7888
    %v8172 = vunpack.c.h.b16 %v7888
    %v8173 = vunpack.c.l.b16 %v7889
    %v8174 = vunpack.c.h.b16 %v7889
    %v8175 = vunpack.c.l.b16 %v7890
    %v8176 = vunpack.c.h.b16 %v7890
    %v8177 = vunpack.c.l.b16 %v7891
    %v8178 = vunpack.c.h.b16 %v7891
    %v8179 = vunpack.c.l.b16 %v7892
    %v8180 = vunpack.c.h.b16 %v7892
    %v8181 = vunpack.c.l.b16 %v7893
    %v8182 = vunpack.c.h.b16 %v7893
    %v8183 = vunpack.c.l.b16 %v7894
    %v8184 = vunpack.c.h.b16 %v7894
    %v8185 = vunpack.c.l.b16 %v7895
    %v8186 = vunpack.c.h.b16 %v7895
    %v8187 = vunpack.c.l.b16 %v7896
    %v8188 = vunpack.c.h.b16 %v7896
    %v8189 = vunpack.c.l.b16 %v7897
    %v8190 = vunpack.c.h.b16 %v7897
    %v8191 = vunpack.c.l.b16 %v7898
    %v8192 = vunpack.c.h.b16 %v7898
    %v8193 = vunpack.c.l.b16 %v7899
    %v8194 = vunpack.c.h.b16 %v7899
    %v8195 = vunpack.c.l.b16 %v7900
    %v8196 = vunpack.c.h.b16 %v7900
    %v8197 = vunpack.c.l.b16 %v7901
    %v8198 = vunpack.c.h.b16 %v7901
    %v8199 = vunpack.c.l.b16 %v7902
    %v8200 = vunpack.c.h.b16 %v7902
    %v8201 = vunpack.c.l.b16 %v7903
    %v8202 = vunpack.c.h.b16 %v7903
    %v8203 = vunpack.c.l.b16 %v7904
    %v8204 = vunpack.c.h.b16 %v7904
    %v8205 = vunpack.c.l.b16 %v7905
    %v8206 = vunpack.c.h.b16 %v7905
    %v8207 = vunpack.c.l.b16 %v7906
    %v8208 = vunpack.c.h.b16 %v7906
    %v8209 = vunpack.c.l.b16 %v7907
    %v8210 = vunpack.c.h.b16 %v7907
    %v8211 = vunpack.c.l.b16 %v7908
    %v8212 = vunpack.c.h.b16 %v7908
    %v8213 = vunpack.c.l.b16 %v7909
    %v8214 = vunpack.c.h.b16 %v7909
    %v8215 = vunpack.c.l.b16 %v7910
    %v8216 = vunpack.c.h.b16 %v7910
    %v8217 = vunpack.c.l.b16 %v7911
    %v8218 = vunpack.c.h.b16 %v7911
    %v8219 = vunpack.c.l.b16 %v7912
    %v8220 = vunpack.c.h.b16 %v7912
    %v8221 = vunpack.c.l.b16 %v7913
    %v8222 = vunpack.c.h.b16 %v7913
    %v8223 = vunpack.c.l.b16 %v7914
    %v8224 = vunpack.c.h.b16 %v7914
    %v8225 = vunpack.c.l.b16 %v7915
    %v8226 = vunpack.c.h.b16 %v7915
    %v8227 = vunpack.c.l.b16 %v7916
    %v8228 = vunpack.c.h.b16 %v7916
    %v8229 = vunpack.c.l.b16 %v7917
    %v8230 = vunpack.c.h.b16 %v7917
    %v8231 = vunpack.c.l.b16 %v7918
    %v8232 = vunpack.c.h.b16 %v7918
    %v8233 = vunpack.c.l.b16 %v7919
    %v8234 = vunpack.c.h.b16 %v7919
    %v8235 = vunpack.c.l.b16 %v7920
    %v8236 = vunpack.c.h.b16 %v7920
    %v8237 = vunpack.c.l.b16 %v7921
    %v8238 = vunpack.c.h.b16 %v7921
    %v8239 = vunpack.c.l.b16 %v7922
    %v8240 = vunpack.c.h.b16 %v7922
    %v8241 = vunpack.c.l.b16 %v7923
    %v8242 = vunpack.c.h.b16 %v7923
    %v8243 = vunpack.c.l.b16 %v7924
    %v8244 = vunpack.c.h.b16 %v7924
    %v8245 = vunpack.c.l.b16 %v7925
    %v8246 = vunpack.c.h.b16 %v7925
    %v8247 = vunpack.c.l.b16 %v7926
    %v8248 = vunpack.c.h.b16 %v7926
    %v8249 = vunpack.c.l.b16 %v7927
    %v8250 = vunpack.c.h.b16 %v7927
    %v8251 = vunpack.c.l.b16 %v7928
    %v8252 = vunpack.c.h.b16 %v7928
    %v8253 = vunpack.c.l.b16 %v7929
    %v8254 = vunpack.c.h.b16 %v7929
    %v8255 = vunpack.c.l.b16 %v7930
    %v8256 = vunpack.c.h.b16 %v7930
    %v8257 = vunpack.c.l.b16 %v7931
    %v8258 = vunpack.c.h.b16 %v7931
    %v8259 = vunpack.c.l.b16 %v7932
    %v8260 = vunpack.c.h.b16 %v7932
    %v8261 = vunpack.c.l.b16 %v7933
    %v8262 = vunpack.c.h.b16 %v7933
    %v8263 = vunpack.c.l.b16 %v7934
    %v8264 = vunpack.c.h.b16 %v7934
    %v8265 = vunpack.c.l.b16 %v7935
    %v8266 = vunpack.c.h.b16 %v7935
    %v8267 = vunpack.c.l.b16 %v7936
    %v8268 = vunpack.c.h.b16 %v7936
    %v8269 = vunpack.c.l.b16 %v7937
    %v8270 = vunpack.c.h.b16 %v7937
    %v8271 = vunpack.c.l.b16 %v7938
    %v8272 = vunpack.c.h.b16 %v7938
    %v8273 = vunpack.c.l.b16 %v7939
    %v8274 = vunpack.c.h.b16 %v7939
    %v8275 = vunpack.c.l.b16 %v7940
    %v8276 = vunpack.c.h.b16 %v7940
    %v8277 = vunpack.c.l.b16 %v7941
    %v8278 = vunpack.c.h.b16 %v7941
    %v8279 = vunpack.c.l.b16 %v7942
    %v8280 = vunpack.c.h.b16 %v7942
    %v8281 = vunpack.c.l.b16 %v7943
    %v8282 = vunpack.c.h.b16 %v7943
    %v8283 = vunpack.c.l.b16 %v7944
    %v8284 = vunpack.c.h.b16 %v7944
    %v8285 = vunpack.c.l.b16 %v7945
    %v8286 = vunpack.c.h.b16 %v7945
    %v8287 = vunpack.c.l.b16 %v7946
    %v8288 = vunpack.c.h.b16 %v7946
    %v8289 = vunpack.c.l.b16 %v7947
    %v8290 = vunpack.c.h.b16 %v7947
    %v8291 = vunpack.c.l.b16 %v7948
    %v8292 = vunpack.c.h.b16 %v7948
    %v8293 = vunpack.c.l.b16 %v7949
    %v8294 = vunpack.c.h.b16 %v7949
    %v8295 = vunpack.c.l.b16 %v7950
    %v8296 = vunpack.c.h.b16 %v7950
    %v8297 = vunpack.c.l.b16 %v7951
    %v8298 = vunpack.c.h.b16 %v7951
    %v8299 = vunpack.c.l.b16 %v7952
    %v8300 = vunpack.c.h.b16 %v7952
    %v8301 = vunpack.c.l.b16 %v7953
    %v8302 = vunpack.c.h.b16 %v7953
    %v8303 = vunpack.c.l.b16 %v7954
    %v8304 = vunpack.c.h.b16 %v7954
    %v8305 = vunpack.c.l.b16 %v7955
    %v8306 = vunpack.c.h.b16 %v7955
    %v8307 = vunpack.c.l.b16 %v7956
    %v8308 = vunpack.c.h.b16 %v7956
    %v8309 = vunpack.c.l.b16 %v7957
    %v8310 = vunpack.c.h.b16 %v7957
    %v8311 = vunpack.c.l.b16 %v7958
    %v8312 = vunpack.c.h.b16 %v7958
    %v8313 = vunpack.c.l.b16 %v7959
    %v8314 = vunpack.c.h.b16 %v7959
    %v8315 = vunpack.c.l.b16 %v7960
    %v8316 = vunpack.c.h.b16 %v7960
    %v8317 = vunpack.c.l.b16 %v7961
    %v8318 = vunpack.c.h.b16 %v7961
    %v8319 = vunpack.c.l.b16 %v7962
    %v8320 = vunpack.c.h.b16 %v7962
    %v8321 = vunpack.c.l.b16 %v7963
    %v8322 = vunpack.c.h.b16 %v7963
    %v8323 = vunpack.c.l.b16 %v7964
    %v8324 = vunpack.c.h.b16 %v7964
    %v8325 = vunpack.c.l.b16 %v7965
    %v8326 = vunpack.c.h.b16 %v7965
    %v8327 = vunpack.c.l.b16 %v7966
    %v8328 = vunpack.c.h.b16 %v7966
    %v8329 = vunpack.c.l.b16 %v7967
    %v8330 = vunpack.c.h.b16 %v7967
    %v8331 = vunpack.c.l.b16 %v7968
    %v8332 = vunpack.c.h.b16 %v7968
    %v8333 = vunpack.c.l.b16 %v7969
    %v8334 = vunpack.c.h.b16 %v7969
    %v8335 = vunpack.c.l.b16 %v7970
    %v8336 = vunpack.c.h.b16 %v7970
    %v8337 = vunpack.c.l.b16 %v7971
    %v8338 = vunpack.c.h.b16 %v7971
    %v8339 = vunpack.c.l.b16 %v7972
    %v8340 = vunpack.c.h.b16 %v7972
    %v8341 = vunpack.c.l.b16 %v7973
    %v8342 = vunpack.c.h.b16 %v7973
    %v8343 = vunpack.c.l.b16 %v7974
    %v8344 = vunpack.c.h.b16 %v7974
    %v8345 = vunpack.c.l.b16 %v7975
    %v8346 = vunpack.c.h.b16 %v7975
    %v8347 = vunpack.c.l.b16 %v7976
    %v8348 = vunpack.c.h.b16 %v7976
    %v8349 = vunpack.c.l.b16 %v7977
    %v8350 = vunpack.c.h.b16 %v7977
    %v8351 = vunpack.c.l.b16 %v7978
    %v8352 = vunpack.c.h.b16 %v7978
    %v8353 = vunpack.c.l.b16 %v7979
    %v8354 = vunpack.c.h.b16 %v7979
    %v8355 = vunpack.c.l.b16 %v7980
    %v8356 = vunpack.c.h.b16 %v7980
    %v8357 = vunpack.c.l.b16 %v7981
    %v8358 = vunpack.c.h.b16 %v7981
    %v8359 = vunpack.c.l.b16 %v7982
    %v8360 = vunpack.c.h.b16 %v7982
    %v8361 = vunpack.c.l.b16 %v7983
    %v8362 = vunpack.c.h.b16 %v7983
    %v8363 = vunpack.c.l.b16 %v7984
    %v8364 = vunpack.c.h.b16 %v7984
    %v8365 = vunpack.c.l.b16 %v7985
    %v8366 = vunpack.c.h.b16 %v7985
    %v8367 = vunpack.c.l.b16 %v7986
    %v8368 = vunpack.c.h.b16 %v7986
    %v8369 = vunpack.c.l.b16 %v7987
    %v8370 = vunpack.c.h.b16 %v7987
    %v8371 = vunpack.c.l.b16 %v7988
    %v8372 = vunpack.c.h.b16 %v7988
    %v8373 = vunpack.c.l.b16 %v7989
    %v8374 = vunpack.c.h.b16 %v7989
    %v8375 = vunpack.c.l.b16 %v7990
    %v8376 = vunpack.c.h.b16 %v7990
    %v8377 = vunpack.c.l.b16 %v7991
    %v8378 = vunpack.c.h.b16 %v7991
    %v8379 = vunpack.c.l.b16 %v7992
    %v8380 = vunpack.c.h.b16 %v7992
    %v8381 = vunpack.c.l.b16 %v7993
    %v8382 = vunpack.c.h.b16 %v7993
    %v8383 = vunpack.c.l.b16 %v7994
    %v8384 = vunpack.c.h.b16 %v7994
    %v8385 = vunpack.c.l.b16 %v7995
    %v8386 = vunpack.c.h.b16 %v7995
    %v8387 = vunpack.c.l.b16 %v7996
    %v8388 = vunpack.c.h.b16 %v7996
    %v8389 = vunpack.c.l.b16 %v7997
    %v8390 = vunpack.c.h.b16 %v7997
    %v8391 = vunpack.c.l.b16 %v7998
    %v8392 = vunpack.c.h.b16 %v7998
    %v8393 = vunpack.c.l.b16 %v7999
    %v8394 = vunpack.c.h.b16 %v7999
    %v8395 = vunpack.c.l.b16 %v8000
    %v8396 = vunpack.c.h.b16 %v8000
    %v8397 = vunpack.c.l.b16 %v8001
    %v8398 = vunpack.c.h.b16 %v8001
    %v8399 = vunpack.c.l.b16 %v8002
    %v8400 = vunpack.c.h.b16 %v8002
    %v8401 = vunpack.c.l.b16 %v8003
    %v8402 = vunpack.c.h.b16 %v8003
    %v8403 = vunpack.c.l.b16 %v8004
    %v8404 = vunpack.c.h.b16 %v8004
    %v8405 = vunpack.c.l.b16 %v8005
    %v8406 = vunpack.c.h.b16 %v8005
    %v8407 = vunpack.c.l.b16 %v8006
    %v8408 = vunpack.c.h.b16 %v8006
    %v8409 = vunpack.c.l.b16 %v8007
    %v8410 = vunpack.c.h.b16 %v8007
    %v8411 = vunpack.c.l.b16 %v8008
    %v8412 = vunpack.c.h.b16 %v8008
    %v8413 = vunpack.c.l.b16 %v8009
    %v8414 = vunpack.c.h.b16 %v8009
    %v8415 = vunpack.c.l.b16 %v8010
    %v8416 = vunpack.c.h.b16 %v8010
    %v8417 = vpack.c.b16 %v8165, %v8161
    %v8418 = vpack.c.b16 %v8166, %v8162
    %v8419 = vpack.c.b16 %v8167, %v8163
    %v8420 = vpack.c.b16 %v8168, %v8164
    %v8421 = vpack.c.b16 %v8173, %v8169
    %v8422 = vpack.c.b16 %v8174, %v8170
    %v8423 = vpack.c.b16 %v8175, %v8171
    %v8424 = vpack.c.b16 %v8176, %v8172
    %v8425 = vpack.c.b16 %v8181, %v8177
    %v8426 = vpack.c.b16 %v8182, %v8178
    %v8427 = vpack.c.b16 %v8183, %v8179
    %v8428 = vpack.c.b16 %v8184, %v8180
    %v8429 = vpack.c.b16 %v8189, %v8185
    %v8430 = vpack.c.b16 %v8190, %v8186
    %v8431 = vpack.c.b16 %v8191, %v8187
    %v8432 = vpack.c.b16 %v8192, %v8188
    %v8433 = vpack.c.b16 %v8197, %v8193
    %v8434 = vpack.c.b16 %v8198, %v8194
    %v8435 = vpack.c.b16 %v8199, %v8195
    %v8436 = vpack.c.b16 %v8200, %v8196
    %v8437 = vpack.c.b16 %v8205, %v8201
    %v8438 = vpack.c.b16 %v8206, %v8202
    %v8439 = vpack.c.b16 %v8207, %v8203
    %v8440 = vpack.c.b16 %v8208, %v8204
    %v8441 = vpack.c.b16 %v8213, %v8209
    %v8442 = vpack.c.b16 %v8214, %v8210
    %v8443 = vpack.c.b16 %v8215, %v8211
    %v8444 = vpack.c.b16 %v8216, %v8212
    %v8445 = vpack.c.b16 %v8221, %v8217
    %v8446 = vpack.c.b16 %v8222, %v8218
    %v8447 = vpack.c.b16 %v8223, %v8219
    %v8448 = vpack.c.b16 %v8224, %v8220
    %v8449 = vpack.c.b16 %v8229, %v8225
    %v8450 = vpack.c.b16 %v8230, %v8226
    %v8451 = vpack.c.b16 %v8231, %v8227
    %v8452 = vpack.c.b16 %v8232, %v8228
    %v8453 = vpack.c.b16 %v8237, %v8233
    %v8454 = vpack.c.b16 %v8238, %v8234
    %v8455 = vpack.c.b16 %v8239, %v8235
    %v8456 = vpack.c.b16 %v8240, %v8236
    %v8457 = vpack.c.b16 %v8245, %v8241
    %v8458 = vpack.c.b16 %v8246, %v8242
    %v8459 = vpack.c.b16 %v8247, %v8243
    %v8460 = vpack.c.b16 %v8248, %v8244
    %v8461 = vpack.c.b16 %v8253, %v8249
    %v8462 = vpack.c.b16 %v8254, %v8250
    %v8463 = vpack.c.b16 %v8255, %v8251
    %v8464 = vpack.c.b16 %v8256, %v8252
    %v8465 = vpack.c.b16 %v8261, %v8257
    %v8466 = vpack.c.b16 %v8262, %v8258
    %v8467 = vpack.c.b16 %v8263, %v8259
    %v8468 = vpack.c.b16 %v8264, %v8260
    %v8469 = vpack.c.b16 %v8269, %v8265
    %v8470 = vpack.c.b16 %v8270, %v8266
    %v8471 = vpack.c.b16 %v8271, %v8267
    %v8472 = vpack.c.b16 %v8272, %v8268
    %v8473 = vpack.c.b16 %v8277, %v8273
    %v8474 = vpack.c.b16 %v8278, %v8274
    %v8475 = vpack.c.b16 %v8279, %v8275
    %v8476 = vpack.c.b16 %v8280, %v8276
    %v8477 = vpack.c.b16 %v8285, %v8281
    %v8478 = vpack.c.b16 %v8286, %v8282
    %v8479 = vpack.c.b16 %v8287, %v8283
    %v8480 = vpack.c.b16 %v8288, %v8284
    %v8481 = vpack.c.b16 %v8293, %v8289
    %v8482 = vpack.c.b16 %v8294, %v8290
    %v8483 = vpack.c.b16 %v8295, %v8291
    %v8484 = vpack.c.b16 %v8296, %v8292
    %v8485 = vpack.c.b16 %v8301, %v8297
    %v8486 = vpack.c.b16 %v8302, %v8298
    %v8487 = vpack.c.b16 %v8303, %v8299
    %v8488 = vpack.c.b16 %v8304, %v8300
    %v8489 = vpack.c.b16 %v8309, %v8305
    %v8490 = vpack.c.b16 %v8310, %v8306
    %v8491 = vpack.c.b16 %v8311, %v8307
    %v8492 = vpack.c.b16 %v8312, %v8308
    %v8493 = vpack.c.b16 %v8317, %v8313
    %v8494 = vpack.c.b16 %v8318, %v8314
    %v8495 = vpack.c.b16 %v8319, %v8315
    %v8496 = vpack.c.b16 %v8320, %v8316
    %v8497 = vpack.c.b16 %v8325, %v8321
    %v8498 = vpack.c.b16 %v8326, %v8322
    %v8499 = vpack.c.b16 %v8327, %v8323
    %v8500 = vpack.c.b16 %v8328, %v8324
    %v8501 = vpack.c.b16 %v8333, %v8329
    %v8502 = vpack.c.b16 %v8334, %v8330
    %v8503 = vpack.c.b16 %v8335, %v8331
    %v8504 = vpack.c.b16 %v8336, %v8332
    %v8505 = vpack.c.b16 %v8341, %v8337
    %v8506 = vpack.c.b16 %v8342, %v8338
    %v8507 = vpack.c.b16 %v8343, %v8339
    %v8508 = vpack.c.b16 %v8344, %v8340
    %v8509 = vpack.c.b16 %v8349, %v8345
    %v8510 = vpack.c.b16 %v8350, %v8346
    %v8511 = vpack.c.b16 %v8351, %v8347
    %v8512 = vpack.c.b16 %v8352, %v8348
    %v8513 = vpack.c.b16 %v8357, %v8353
    %v8514 = vpack.c.b16 %v8358, %v8354
    %v8515 = vpack.c.b16 %v8359, %v8355
    %v8516 = vpack.c.b16 %v8360, %v8356
    %v8517 = vpack.c.b16 %v8365, %v8361
    %v8518 = vpack.c.b16 %v8366, %v8362
    %v8519 = vpack.c.b16 %v8367, %v8363
    %v8520 = vpack.c.b16 %v8368, %v8364
    %v8521 = vpack.c.b16 %v8373, %v8369
    %v8522 = vpack.c.b16 %v8374, %v8370
    %v8523 = vpack.c.b16 %v8375, %v8371
    %v8524 = vpack.c.b16 %v8376, %v8372
    %v8525 = vpack.c.b16 %v8381, %v8377
    %v8526 = vpack.c.b16 %v8382, %v8378
    %v8527 = vpack.c.b16 %v8383, %v8379
    %v8528 = vpack.c.b16 %v8384, %v8380
    %v8529 = vpack.c.b16 %v8389, %v8385
    %v8530 = vpack.c.b16 %v8390, %v8386
    %v8531 = vpack.c.b16 %v8391, %v8387
    %v8532 = vpack.c.b16 %v8392, %v8388
    %v8533 = vpack.c.b16 %v8397, %v8393
    %v8534 = vpack.c.b16 %v8398, %v8394
    %v8535 = vpack.c.b16 %v8399, %v8395
    %v8536 = vpack.c.b16 %v8400, %v8396
    %v8537 = vpack.c.b16 %v8405, %v8401
    %v8538 = vpack.c.b16 %v8406, %v8402
    %v8539 = vpack.c.b16 %v8407, %v8403
    %v8540 = vpack.c.b16 %v8408, %v8404
    %v8541 = vpack.c.b16 %v8413, %v8409
    %v8542 = vpack.c.b16 %v8414, %v8410
    %v8543 = vpack.c.b16 %v8415, %v8411
    %v8544 = vpack.c.b16 %v8416, %v8412
    %8673 = vmatprep.subr.bf16.mxu0 %v8418
    %8674 = vmatpush1.bf16.msra.mxu0 %v8417
    %8675 = vmatprep.subr.bf16.mxu0 %v8422
    %8676 = vmatpush1.bf16.msra.mxu0 %v8421
    %8677 = vmatprep.subr.bf16.mxu0 %v8426
    %8678 = vmatpush1.bf16.msra.mxu0 %v8425
    %8679 = vmatprep.subr.bf16.mxu0 %v8430
    %8680 = vmatpush1.bf16.msra.mxu0 %v8429
    %8681 = vmatprep.subr.bf16.mxu0 %v8434
    %8682 = vmatpush1.bf16.msra.mxu0 %v8433
    %8683 = vmatprep.subr.bf16.mxu0 %v8438
    %8684 = vmatpush1.bf16.msra.mxu0 %v8437
    %8685 = vmatprep.subr.bf16.mxu0 %v8442
    %8686 = vmatpush1.bf16.msra.mxu0 %v8441
    %8687 = vmatprep.subr.bf16.mxu0 %v8446
    %8688 = vmatpush1.bf16.msra.mxu0 %v8445
    %8689 = vmatprep.subr.bf16.mxu0 %v8450
    %8690 = vmatpush1.bf16.msra.mxu0 %v8449
    %8691 = vmatprep.subr.bf16.mxu0 %v8454
    %8692 = vmatpush1.bf16.msra.mxu0 %v8453
    %8693 = vmatprep.subr.bf16.mxu0 %v8458
    %8694 = vmatpush1.bf16.msra.mxu0 %v8457
    %8695 = vmatprep.subr.bf16.mxu0 %v8462
    %8696 = vmatpush1.bf16.msra.mxu0 %v8461
    %8697 = vmatprep.subr.bf16.mxu0 %v8466
    %8698 = vmatpush1.bf16.msra.mxu0 %v8465
    %8699 = vmatprep.subr.bf16.mxu0 %v8470
    %8700 = vmatpush1.bf16.msra.mxu0 %v8469
    %8701 = vmatprep.subr.bf16.mxu0 %v8474
    %8702 = vmatpush1.bf16.msra.mxu0 %v8473
    %8703 = vmatprep.subr.bf16.mxu0 %v8478
    %8704 = vmatpush1.bf16.msra.mxu0 %v8477
    %8705 = vmatprep.mubr.bf16.mxu0 %v7852
    %8706 = vmatmul.mubr.bf16.gmra.mrb[0].mxu0 %v7851
    %v8707 = vpop.f32.mrb[0].mxu0
    %v8708 = vadd.f32 %v8016, %v8707
    %v8709 = vpop.f32.mrb[0].mxu0
    %v8710 = vadd.f32 %v8020, %v8709
    %v8711 = vpop.f32.mrb[0].mxu0
    %v8712 = vadd.f32 %v8016, %v8711
    %v8713 = vpop.f32.mrb[0].mxu0
    %v8714 = vadd.f32 %v8020, %v8713
    %8715 = vmatprep.mubr.bf16.mxu0 %v7856
    %8716 = vmatmul.mubr.bf16.gmra.mrb[0].mxu0 %v7855
    %v8717 = vpop.f32.mrb[0].mxu0
    %v8718 = vadd.f32 %v8016, %v8717
    %v8719 = vpop.f32.mrb[0].mxu0
    %v8720 = vadd.f32 %v8020, %v8719
    %v8721 = vpop.f32.mrb[0].mxu0
    %v8722 = vadd.f32 %v8016, %v8721
    %v8723 = vpop.f32.mrb[0].mxu0
    %v8724 = vadd.f32 %v8020, %v8723
    %8725 = vmatprep.mubr.bf16.mxu0 %v7860
    %8726 = vmatmul.mubr.bf16.gmra.mrb[0].mxu0 %v7859
    %v8727 = vpop.f32.mrb[0].mxu0
    %v8728 = vadd.f32 %v8016, %v8727
    %v8729 = vpop.f32.mrb[0].mxu0
    %v8730 = vadd.f32 %v8020, %v8729
    %v8731 = vpop.f32.mrb[0].mxu0
    %v8732 = vadd.f32 %v8016, %v8731
    %v8733 = vpop.f32.mrb[0].mxu0
    %v8734 = vadd.f32 %v8020, %v8733
    %8735 = vmatprep.mubr.bf16.mxu0 %v7864
    %8736 = vmatmul.mubr.bf16.gmra.mrb[0].mxu0 %v7863
    %v8737 = vpop.f32.mrb[0].mxu0
    %v8738 = vadd.f32 %v8016, %v8737
    %v8739 = vpop.f32.mrb[0].mxu0
    %v8740 = vadd.f32 %v8020, %v8739
    %v8741 = vpop.f32.mrb[0].mxu0
    %v8742 = vadd.f32 %v8016, %v8741
    %v8743 = vpop.f32.mrb[0].mxu0
    %v8744 = vadd.f32 %v8020, %v8743
    %8745 = vmatprep.mubr.bf16.mxu0 %v7868
    %8746 = vmatmul.mubr.bf16.gmra.mrb[0].mxu0 %v7867
    %v8747 = vpop.f32.mrb[0].mxu0
    %v8748 = vadd.f32 %v8016, %v8747
    %v8749 = vpop.f32.mrb[0].mxu0
    %v8750 = vadd.f32 %v8020, %v8749
    %v8751 = vpop.f32.mrb[0].mxu0
    %v8752 = vadd.f32 %v8016, %v8751
    %v8753 = vpop.f32.mrb[0].mxu0
    %v8754 = vadd.f32 %v8020, %v8753
    %8755 = vmatprep.mubr.bf16.mxu0 %v7872
    %8756 = vmatmul.mubr.bf16.gmra.mrb[0].mxu0 %v7871
    %v8757 = vpop.f32.mrb[0].mxu0
    %v8758 = vadd.f32 %v8016, %v8757
    %v8759 = vpop.f32.mrb[0].mxu0
    %v8760 = vadd.f32 %v8020, %v8759
    %v8761 = vpop.f32.mrb[0].mxu0
    %v8762 = vadd.f32 %v8016, %v8761
    %v8763 = vpop.f32.mrb[0].mxu0
    %v8764 = vadd.f32 %v8020, %v8763
    %8765 = vmatprep.mubr.bf16.mxu0 %v7876
    %8766 = vmatmul.mubr.bf16.gmra.mrb[0].mxu0 %v7875
    %v8767 = vpop.f32.mrb[0].mxu0
    %v8768 = vadd.f32 %v8016, %v8767
    %v8769 = vpop.f32.mrb[0].mxu0
    %v8770 = vadd.f32 %v8020, %v8769
    %v8771 = vpop.f32.mrb[0].mxu0
    %v8772 = vadd.f32 %v8016, %v8771
    %v8773 = vpop.f32.mrb[0].mxu0
    %v8774 = vadd.f32 %v8020, %v8773
    %8775 = vmatprep.mubr.bf16.mxu0 %v7880
    %8776 = vmatmul.mubr.bf16.gmra.mrb[0].mxu0 %v7879
    %v8777 = vpop.f32.mrb[0].mxu0
    %v8778 = vadd.f32 %v8016, %v8777
    %v8779 = vpop.f32.mrb[0].mxu0
    %v8780 = vadd.f32 %v8020, %v8779
    %v8781 = vpop.f32.mrb[0].mxu0
    %v8782 = vadd.f32 %v8016, %v8781
    %v8783 = vpop.f32.mrb[0].mxu0
    %v8784 = vadd.f32 %v8020, %v8783
    %8785 = vdwg.mxu0
    %8786 = vmatprep.subr.bf16.mxu0 %v8482
    %8787 = vmatpush1.bf16.msra.mxu0 %v8481
    %8788 = vmatprep.subr.bf16.mxu0 %v8486
    %8789 = vmatpush1.bf16.msra.mxu0 %v8485
    %8790 = vmatprep.subr.bf16.mxu0 %v8490
    %8791 = vmatpush1.bf16.msra.mxu0 %v8489
    %8792 = vmatprep.subr.bf16.mxu0 %v8494
    %8793 = vmatpush1.bf16.msra.mxu0 %v8493
    %8794 = vmatprep.subr.bf16.mxu0 %v8498
    %8795 = vmatpush1.bf16.msra.mxu0 %v8497
    %8796 = vmatprep.subr.bf16.mxu0 %v8502
    %8797 = vmatpush1.bf16.msra.mxu0 %v8501
    %8798 = vmatprep.subr.bf16.mxu0 %v8506
    %8799 = vmatpush1.bf16.msra.mxu0 %v8505
    %8800 = vmatprep.subr.bf16.mxu0 %v8510
    %8801 = vmatpush1.bf16.msra.mxu0 %v8509
    %8802 = vmatprep.subr.bf16.mxu0 %v8514
    %8803 = vmatpush1.bf16.msra.mxu0 %v8513
    %8804 = vmatprep.subr.bf16.mxu0 %v8518
    %8805 = vmatpush1.bf16.msra.mxu0 %v8517
    %8806 = vmatprep.subr.bf16.mxu0 %v8522
    %8807 = vmatpush1.bf16.msra.mxu0 %v8521
    %8808 = vmatprep.subr.bf16.mxu0 %v8526
    %8809 = vmatpush1.bf16.msra.mxu0 %v8525
    %8810 = vmatprep.subr.bf16.mxu0 %v8530
    %8811 = vmatpush1.bf16.msra.mxu0 %v8529
    %8812 = vmatprep.subr.bf16.mxu0 %v8534
    %8813 = vmatpush1.bf16.msra.mxu0 %v8533
    %8814 = vmatprep.subr.bf16.mxu0 %v8538
    %8815 = vmatpush1.bf16.msra.mxu0 %v8537
    %8816 = vmatprep.subr.bf16.mxu0 %v8542
    %8817 = vmatpush1.bf16.msra.mxu0 %v8541
    %8818 = vmatprep.mubr.bf16.mxu0 %v7854
    %8819 = vmatmul.mubr.bf16.gmra.mrb[0].mxu0 %v7853
    %v8820 = vpop.f32.mrb[0].mxu0
    %v8821 = vadd.f32 %v8708, %v8820
    %v8822 = vpop.f32.mrb[0].mxu0
    %v8823 = vadd.f32 %v8710, %v8822
    %v8824 = vpop.f32.mrb[0].mxu0
    %v8825 = vadd.f32 %v8712, %v8824
    %v8826 = vpop.f32.mrb[0].mxu0
    %v8827 = vadd.f32 %v8714, %v8826
    %8828 = vmatprep.mubr.bf16.mxu0 %v7858
    %8829 = vmatmul.mubr.bf16.gmra.mrb[0].mxu0 %v7857
    %v8830 = vpop.f32.mrb[0].mxu0
    %v8831 = vadd.f32 %v8718, %v8830
    %v8832 = vpop.f32.mrb[0].mxu0
    %v8833 = vadd.f32 %v8720, %v8832
    %v8834 = vpop.f32.mrb[0].mxu0
    %v8835 = vadd.f32 %v8722, %v8834
    %v8836 = vpop.f32.mrb[0].mxu0
    %v8837 = vadd.f32 %v8724, %v8836
    %8838 = vmatprep.mubr.bf16.mxu0 %v7862
    %8839 = vmatmul.mubr.bf16.gmra.mrb[0].mxu0 %v7861
    %v8840 = vpop.f32.mrb[0].mxu0
    %v8841 = vadd.f32 %v8728, %v8840
    %v8842 = vpop.f32.mrb[0].mxu0
    %v8843 = vadd.f32 %v8730, %v8842
    %v8844 = vpop.f32.mrb[0].mxu0
    %v8845 = vadd.f32 %v8732, %v8844
    %v8846 = vpop.f32.mrb[0].mxu0
    %v8847 = vadd.f32 %v8734, %v8846
    %8848 = vmatprep.mubr.bf16.mxu0 %v7866
    %8849 = vmatmul.mubr.bf16.gmra.mrb[0].mxu0 %v7865
    %v8850 = vpop.f32.mrb[0].mxu0
    %v8851 = vadd.f32 %v8738, %v8850
    %v8852 = vpop.f32.mrb[0].mxu0
    %v8853 = vadd.f32 %v8740, %v8852
    %v8854 = vpop.f32.mrb[0].mxu0
    %v8855 = vadd.f32 %v8742, %v8854
    %v8856 = vpop.f32.mrb[0].mxu0
    %v8857 = vadd.f32 %v8744, %v8856
    %8858 = vmatprep.mubr.bf16.mxu0 %v7870
    %8859 = vmatmul.mubr.bf16.gmra.mrb[0].mxu0 %v7869
    %v8860 = vpop.f32.mrb[0].mxu0
    %v8861 = vadd.f32 %v8748, %v8860
    %v8862 = vpop.f32.mrb[0].mxu0
    %v8863 = vadd.f32 %v8750, %v8862
    %v8864 = vpop.f32.mrb[0].mxu0
    %v8865 = vadd.f32 %v8752, %v8864
    %v8866 = vpop.f32.mrb[0].mxu0
    %v8867 = vadd.f32 %v8754, %v8866
    %8868 = vmatprep.mubr.bf16.mxu0 %v7874
    %8869 = vmatmul.mubr.bf16.gmra.mrb[0].mxu0 %v7873
    %v8870 = vpop.f32.mrb[0].mxu0
    %v8871 = vadd.f32 %v8758, %v8870
    %v8872 = vpop.f32.mrb[0].mxu0
    %v8873 = vadd.f32 %v8760, %v8872
    %v8874 = vpop.f32.mrb[0].mxu0
    %v8875 = vadd.f32 %v8762, %v8874
    %v8876 = vpop.f32.mrb[0].mxu0
    %v8877 = vadd.f32 %v8764, %v8876
    %8878 = vmatprep.mubr.bf16.mxu0 %v7878
    %8879 = vmatmul.mubr.bf16.gmra.mrb[0].mxu0 %v7877
    %v8880 = vpop.f32.mrb[0].mxu0
    %v8881 = vadd.f32 %v8768, %v8880
    %v8882 = vpop.f32.mrb[0].mxu0
    %v8883 = vadd.f32 %v8770, %v8882
    %v8884 = vpop.f32.mrb[0].mxu0
    %v8885 = vadd.f32 %v8772, %v8884
    %v8886 = vpop.f32.mrb[0].mxu0
    %v8887 = vadd.f32 %v8774, %v8886
    %8888 = vmatprep.mubr.bf16.mxu0 %v7882
    %8889 = vmatmul.mubr.bf16.gmra.mrb[0].mxu0 %v7881
    %v8890 = vpop.f32.mrb[0].mxu0
    %v8891 = vadd.f32 %v8778, %v8890
    %v8892 = vpop.f32.mrb[0].mxu0
    %v8893 = vadd.f32 %v8780, %v8892
    %v8894 = vpop.f32.mrb[0].mxu0
    %v8895 = vadd.f32 %v8782, %v8894
    %v8896 = vpop.f32.mrb[0].mxu0
    %v8897 = vadd.f32 %v8784, %v8896
    %8898 = vdwg.mxu0
    %8899 = vmatprep.subr.bf16.mxu0 %v8420
    %8900 = vmatpush1.bf16.msra.mxu0 %v8419
    %8901 = vmatprep.subr.bf16.mxu0 %v8424
    %8902 = vmatpush1.bf16.msra.mxu0 %v8423
    %8903 = vmatprep.subr.bf16.mxu0 %v8428
    %8904 = vmatpush1.bf16.msra.mxu0 %v8427
    %8905 = vmatprep.subr.bf16.mxu0 %v8432
    %8906 = vmatpush1.bf16.msra.mxu0 %v8431
    %8907 = vmatprep.subr.bf16.mxu0 %v8436
    %8908 = vmatpush1.bf16.msra.mxu0 %v8435
    %8909 = vmatprep.subr.bf16.mxu0 %v8440
    %8910 = vmatpush1.bf16.msra.mxu0 %v8439
    %8911 = vmatprep.subr.bf16.mxu0 %v8444
    %8912 = vmatpush1.bf16.msra.mxu0 %v8443
    %8913 = vmatprep.subr.bf16.mxu0 %v8448
    %8914 = vmatpush1.bf16.msra.mxu0 %v8447
    %8915 = vmatprep.subr.bf16.mxu0 %v8452
    %8916 = vmatpush1.bf16.msra.mxu0 %v8451
    %8917 = vmatprep.subr.bf16.mxu0 %v8456
    %8918 = vmatpush1.bf16.msra.mxu0 %v8455
    %8919 = vmatprep.subr.bf16.mxu0 %v8460
    %8920 = vmatpush1.bf16.msra.mxu0 %v8459
    %8921 = vmatprep.subr.bf16.mxu0 %v8464
    %8922 = vmatpush1.bf16.msra.mxu0 %v8463
    %8923 = vmatprep.subr.bf16.mxu0 %v8468
    %8924 = vmatpush1.bf16.msra.mxu0 %v8467
    %8925 = vmatprep.subr.bf16.mxu0 %v8472
    %8926 = vmatpush1.bf16.msra.mxu0 %v8471
    %8927 = vmatprep.subr.bf16.mxu0 %v8476
    %8928 = vmatpush1.bf16.msra.mxu0 %v8475
    %8929 = vmatprep.subr.bf16.mxu0 %v8480
    %8930 = vmatpush1.bf16.msra.mxu0 %v8479
    %8931 = vmatprep.mubr.bf16.mxu0 %v7852
    %8932 = vmatmul.mubr.bf16.gmra.mrb[0].mxu0 %v7851
    %v8933 = vpop.f32.mrb[0].mxu0
    %v8934 = vadd.f32 %v8024, %v8933
    %v8935 = vpop.f32.mrb[0].mxu0
    %v8936 = vadd.f32 %v8028, %v8935
    %v8937 = vpop.f32.mrb[0].mxu0
    %v8938 = vadd.f32 %v8024, %v8937
    %v8939 = vpop.f32.mrb[0].mxu0
    %v8940 = vadd.f32 %v8028, %v8939
    %8941 = vmatprep.mubr.bf16.mxu0 %v7856
    %8942 = vmatmul.mubr.bf16.gmra.mrb[0].mxu0 %v7855
    %v8943 = vpop.f32.mrb[0].mxu0
    %v8944 = vadd.f32 %v8024, %v8943
    %v8945 = vpop.f32.mrb[0].mxu0
    %v8946 = vadd.f32 %v8028, %v8945
    %v8947 = vpop.f32.mrb[0].mxu0
    %v8948 = vadd.f32 %v8024, %v8947
    %v8949 = vpop.f32.mrb[0].mxu0
    %v8950 = vadd.f32 %v8028, %v8949
    %8951 = vmatprep.mubr.bf16.mxu0 %v7860
    %8952 = vmatmul.mubr.bf16.gmra.mrb[0].mxu0 %v7859
    %v8953 = vpop.f32.mrb[0].mxu0
    %v8954 = vadd.f32 %v8024, %v8953
    %v8955 = vpop.f32.mrb[0].mxu0
    %v8956 = vadd.f32 %v8028, %v8955
    %v8957 = vpop.f32.mrb[0].mxu0
    %v8958 = vadd.f32 %v8024, %v8957
    %v8959 = vpop.f32.mrb[0].mxu0
    %v8960 = vadd.f32 %v8028, %v8959
    %8961 = vmatprep.mubr.bf16.mxu0 %v7864
    %8962 = vmatmul.mubr.bf16.gmra.mrb[0].mxu0 %v7863
    %v8963 = vpop.f32.mrb[0].mxu0
    %v8964 = vadd.f32 %v8024, %v8963
    %v8965 = vpop.f32.mrb[0].mxu0
    %v8966 = vadd.f32 %v8028, %v8965
    %v8967 = vpop.f32.mrb[0].mxu0
    %v8968 = vadd.f32 %v8024, %v8967
    %v8969 = vpop.f32.mrb[0].mxu0
    %v8970 = vadd.f32 %v8028, %v8969
    %8971 = vmatprep.mubr.bf16.mxu0 %v7868
    %8972 = vmatmul.mubr.bf16.gmra.mrb[0].mxu0 %v7867
    %v8973 = vpop.f32.mrb[0].mxu0
    %v8974 = vadd.f32 %v8024, %v8973
    %v8975 = vpop.f32.mrb[0].mxu0
    %v8976 = vadd.f32 %v8028, %v8975
    %v8977 = vpop.f32.mrb[0].mxu0
    %v8978 = vadd.f32 %v8024, %v8977
    %v8979 = vpop.f32.mrb[0].mxu0
    %v8980 = vadd.f32 %v8028, %v8979
    %8981 = vmatprep.mubr.bf16.mxu0 %v7872
    %8982 = vmatmul.mubr.bf16.gmra.mrb[0].mxu0 %v7871
    %v8983 = vpop.f32.mrb[0].mxu0
    %v8984 = vadd.f32 %v8024, %v8983
    %v8985 = vpop.f32.mrb[0].mxu0
    %v8986 = vadd.f32 %v8028, %v8985
    %v8987 = vpop.f32.mrb[0].mxu0
    %v8988 = vadd.f32 %v8024, %v8987
    %v8989 = vpop.f32.mrb[0].mxu0
    %v8990 = vadd.f32 %v8028, %v8989
    %8991 = vmatprep.mubr.bf16.mxu0 %v7876
    %8992 = vmatmul.mubr.bf16.gmra.mrb[0].mxu0 %v7875
    %v8993 = vpop.f32.mrb[0].mxu0
    %v8994 = vadd.f32 %v8024, %v8993
    %v8995 = vpop.f32.mrb[0].mxu0
    %v8996 = vadd.f32 %v8028, %v8995
    %v8997 = vpop.f32.mrb[0].mxu0
    %v8998 = vadd.f32 %v8024, %v8997
    %v8999 = vpop.f32.mrb[0].mxu0
    %v9000 = vadd.f32 %v8028, %v8999
    %9001 = vmatprep.mubr.bf16.mxu0 %v7880
    %9002 = vmatmul.mubr.bf16.gmra.mrb[0].mxu0 %v7879
    %v9003 = vpop.f32.mrb[0].mxu0
    %v9004 = vadd.f32 %v8024, %v9003
    %v9005 = vpop.f32.mrb[0].mxu0
    %v9006 = vadd.f32 %v8028, %v9005
    %v9007 = vpop.f32.mrb[0].mxu0
    %v9008 = vadd.f32 %v8024, %v9007
    %v9009 = vpop.f32.mrb[0].mxu0
    %v9010 = vadd.f32 %v8028, %v9009
    %9011 = vdwg.mxu0
    %9012 = vmatprep.subr.bf16.mxu0 %v8484
    %9013 = vmatpush1.bf16.msra.mxu0 %v8483
    %9014 = vmatprep.subr.bf16.mxu0 %v8488
    %9015 = vmatpush1.bf16.msra.mxu0 %v8487
    %9016 = vmatprep.subr.bf16.mxu0 %v8492
    %9017 = vmatpush1.bf16.msra.mxu0 %v8491
    %9018 = vmatprep.subr.bf16.mxu0 %v8496
    %9019 = vmatpush1.bf16.msra.mxu0 %v8495
    %9020 = vmatprep.subr.bf16.mxu0 %v8500
    %9021 = vmatpush1.bf16.msra.mxu0 %v8499
    %9022 = vmatprep.subr.bf16.mxu0 %v8504
    %9023 = vmatpush1.bf16.msra.mxu0 %v8503
    %9024 = vmatprep.subr.bf16.mxu0 %v8508
    %9025 = vmatpush1.bf16.msra.mxu0 %v8507
    %9026 = vmatprep.subr.bf16.mxu0 %v8512
    %9027 = vmatpush1.bf16.msra.mxu0 %v8511
    %9028 = vmatprep.subr.bf16.mxu0 %v8516
    %9029 = vmatpush1.bf16.msra.mxu0 %v8515
    %9030 = vmatprep.subr.bf16.mxu0 %v8520
    %9031 = vmatpush1.bf16.msra.mxu0 %v8519
    %9032 = vmatprep.subr.bf16.mxu0 %v8524
    %9033 = vmatpush1.bf16.msra.mxu0 %v8523
    %9034 = vmatprep.subr.bf16.mxu0 %v8528
    %9035 = vmatpush1.bf16.msra.mxu0 %v8527
    %9036 = vmatprep.subr.bf16.mxu0 %v8532
    %9037 = vmatpush1.bf16.msra.mxu0 %v8531
    %9038 = vmatprep.subr.bf16.mxu0 %v8536
    %9039 = vmatpush1.bf16.msra.mxu0 %v8535
    %9040 = vmatprep.subr.bf16.mxu0 %v8540
    %9041 = vmatpush1.bf16.msra.mxu0 %v8539
    %9042 = vmatprep.subr.bf16.mxu0 %v8544
    %9043 = vmatpush1.bf16.msra.mxu0 %v8543
    %9044 = vmatprep.mubr.bf16.mxu0 %v7854
    %9045 = vmatmul.mubr.bf16.gmra.mrb[0].mxu0 %v7853
    %v9046 = vpop.f32.mrb[0].mxu0
    %v9047 = vadd.f32 %v8934, %v9046
    %v9048 = vpop.f32.mrb[0].mxu0
    %v9049 = vadd.f32 %v8936, %v9048
    %v9050 = vpop.f32.mrb[0].mxu0
    %v9051 = vadd.f32 %v8938, %v9050
    %v9052 = vpop.f32.mrb[0].mxu0
    %v9053 = vadd.f32 %v8940, %v9052
    %9054 = vmatprep.mubr.bf16.mxu0 %v7858
    %9055 = vmatmul.mubr.bf16.gmra.mrb[0].mxu0 %v7857
    %v9056 = vpop.f32.mrb[0].mxu0
    %v9057 = vadd.f32 %v8944, %v9056
    %v9058 = vpop.f32.mrb[0].mxu0
    %v9059 = vadd.f32 %v8946, %v9058
    %v9060 = vpop.f32.mrb[0].mxu0
    %v9061 = vadd.f32 %v8948, %v9060
    %v9062 = vpop.f32.mrb[0].mxu0
    %v9063 = vadd.f32 %v8950, %v9062
    %9064 = vmatprep.mubr.bf16.mxu0 %v7862
    %9065 = vmatmul.mubr.bf16.gmra.mrb[0].mxu0 %v7861
    %v9066 = vpop.f32.mrb[0].mxu0
    %v9067 = vadd.f32 %v8954, %v9066
    %v9068 = vpop.f32.mrb[0].mxu0
    %v9069 = vadd.f32 %v8956, %v9068
    %v9070 = vpop.f32.mrb[0].mxu0
    %v9071 = vadd.f32 %v8958, %v9070
    %v9072 = vpop.f32.mrb[0].mxu0
    %v9073 = vadd.f32 %v8960, %v9072
    %9074 = vmatprep.mubr.bf16.mxu0 %v7866
    %9075 = vmatmul.mubr.bf16.gmra.mrb[0].mxu0 %v7865
    %v9076 = vpop.f32.mrb[0].mxu0
    %v9077 = vadd.f32 %v8964, %v9076
    %v9078 = vpop.f32.mrb[0].mxu0
    %v9079 = vadd.f32 %v8966, %v9078
    %v9080 = vpop.f32.mrb[0].mxu0
    %v9081 = vadd.f32 %v8968, %v9080
    %v9082 = vpop.f32.mrb[0].mxu0
    %v9083 = vadd.f32 %v8970, %v9082
    %9084 = vmatprep.mubr.bf16.mxu0 %v7870
    %9085 = vmatmul.mubr.bf16.gmra.mrb[0].mxu0 %v7869
    %v9086 = vpop.f32.mrb[0].mxu0
    %v9087 = vadd.f32 %v8974, %v9086
    %v9088 = vpop.f32.mrb[0].mxu0
    %v9089 = vadd.f32 %v8976, %v9088
    %v9090 = vpop.f32.mrb[0].mxu0
    %v9091 = vadd.f32 %v8978, %v9090
    %v9092 = vpop.f32.mrb[0].mxu0
    %v9093 = vadd.f32 %v8980, %v9092
    %9094 = vmatprep.mubr.bf16.mxu0 %v7874
    %9095 = vmatmul.mubr.bf16.gmra.mrb[0].mxu0 %v7873
    %v9096 = vpop.f32.mrb[0].mxu0
    %v9097 = vadd.f32 %v8984, %v9096
    %v9098 = vpop.f32.mrb[0].mxu0
    %v9099 = vadd.f32 %v8986, %v9098
    %v9100 = vpop.f32.mrb[0].mxu0
    %v9101 = vadd.f32 %v8988, %v9100
    %v9102 = vpop.f32.mrb[0].mxu0
    %v9103 = vadd.f32 %v8990, %v9102
    %9104 = vmatprep.mubr.bf16.mxu0 %v7878
    %9105 = vmatmul.mubr.bf16.gmra.mrb[0].mxu0 %v7877
    %v9106 = vpop.f32.mrb[0].mxu0
    %v9107 = vadd.f32 %v8994, %v9106
    %v9108 = vpop.f32.mrb[0].mxu0
    %v9109 = vadd.f32 %v8996, %v9108
    %v9110 = vpop.f32.mrb[0].mxu0
    %v9111 = vadd.f32 %v8998, %v9110
    %v9112 = vpop.f32.mrb[0].mxu0
    %v9113 = vadd.f32 %v9000, %v9112
    %9114 = vmatprep.mubr.bf16.mxu0 %v7882
    %9115 = vmatmul.mubr.bf16.gmra.mrb[0].mxu0 %v7881
    %v9116 = vpop.f32.mrb[0].mxu0
    %v9117 = vadd.f32 %v9004, %v9116
    %v9118 = vpop.f32.mrb[0].mxu0
    %v9119 = vadd.f32 %v9006, %v9118
    %v9120 = vpop.f32.mrb[0].mxu0
    %v9121 = vadd.f32 %v9008, %v9120
    %v9122 = vpop.f32.mrb[0].mxu0
    %v9123 = vadd.f32 %v9010, %v9122
    %9124 = vdwg.mxu0
    %v9125 = vmax.f32 %v8821, 0.0
    %v9126 = vmax.f32 %v8823, 0.0
    %v9127 = vmax.f32 %v9047, 0.0
    %v9128 = vmax.f32 %v9049, 0.0
    %v9129 = vmax.f32 %v8825, 0.0
    %v9130 = vmax.f32 %v8827, 0.0
    %v9131 = vmax.f32 %v9051, 0.0
    %v9132 = vmax.f32 %v9053, 0.0
    %v9133 = vmax.f32 %v8831, 0.0
    %v9134 = vmax.f32 %v8833, 0.0
    %v9135 = vmax.f32 %v9057, 0.0
    %v9136 = vmax.f32 %v9059, 0.0
    %v9137 = vmax.f32 %v8835, 0.0
    %v9138 = vmax.f32 %v8837, 0.0
    %v9139 = vmax.f32 %v9061, 0.0
    %v9140 = vmax.f32 %v9063, 0.0
    %v9141 = vmax.f32 %v8841, 0.0
    %v9142 = vmax.f32 %v8843, 0.0
    %v9143 = vmax.f32 %v9067, 0.0
    %v9144 = vmax.f32 %v9069, 0.0
    %v9145 = vmax.f32 %v8845, 0.0
    %v9146 = vmax.f32 %v8847, 0.0
    %v9147 = vmax.f32 %v9071, 0.0
    %v9148 = vmax.f32 %v9073, 0.0
    %v9149 = vmax.f32 %v8851, 0.0
    %v9150 = vmax.f32 %v8853, 0.0
    %v9151 = vmax.f32 %v9077, 0.0
    %v9152 = vmax.f32 %v9079, 0.0
    %v9153 = vmax.f32 %v8855, 0.0
    %v9154 = vmax.f32 %v8857, 0.0
    %v9155 = vmax.f32 %v9081, 0.0
    %v9156 = vmax.f32 %v9083, 0.0
    %v9157 = vmax.f32 %v8861, 0.0
    %v9158 = vmax.f32 %v8863, 0.0
    %v9159 = vmax.f32 %v9087, 0.0
    %v9160 = vmax.f32 %v9089, 0.0
    %v9161 = vmax.f32 %v8865, 0.0
    %v9162 = vmax.f32 %v8867, 0.0
    %v9163 = vmax.f32 %v9091, 0.0
    %v9164 = vmax.f32 %v9093, 0.0
    %v9165 = vmax.f32 %v8871, 0.0
    %v9166 = vmax.f32 %v8873, 0.0
    %v9167 = vmax.f32 %v9097, 0.0
    %v9168 = vmax.f32 %v9099, 0.0
    %v9169 = vmax.f32 %v8875, 0.0
    %v9170 = vmax.f32 %v8877, 0.0
    %v9171 = vmax.f32 %v9101, 0.0
    %v9172 = vmax.f32 %v9103, 0.0
    %v9173 = vmax.f32 %v8881, 0.0
    %v9174 = vmax.f32 %v8883, 0.0
    %v9175 = vmax.f32 %v9107, 0.0
    %v9176 = vmax.f32 %v9109, 0.0
    %v9177 = vmax.f32 %v8885, 0.0
    %v9178 = vmax.f32 %v8887, 0.0
    %v9179 = vmax.f32 %v9111, 0.0
    %v9180 = vmax.f32 %v9113, 0.0
    %v9181 = vmax.f32 %v8891, 0.0
    %v9182 = vmax.f32 %v8893, 0.0
    %v9183 = vmax.f32 %v9117, 0.0
    %v9184 = vmax.f32 %v9119, 0.0
    %v9185 = vmax.f32 %v8895, 0.0
    %v9186 = vmax.f32 %v8897, 0.0
    %v9187 = vmax.f32 %v9121, 0.0
    %v9188 = vmax.f32 %v9123, 0.0
    %v9189 = vld [vmem:[%s17] sm:$0xf]
    %v9191 = vlaneseq
    %v9192 = vshrl.u32 %v9191, 7
    %v9193 = vsub.s32 0, %v9192
    %v9194 = vrot.slane %v9189, %v9193
    %v9195 = vlaneseq
    %v9196 = vshrl.u32 %v9195, 7
    %v9197 = vsub.s32 1, %v9196
    %v9198 = vrot.slane %v9189, %v9197
    %v9199 = vlaneseq
    %v9200 = vshrl.u32 %v9199, 7
    %v9201 = vsub.s32 2, %v9200
    %v9202 = vrot.slane %v9189, %v9201
    %v9203 = vlaneseq
    %v9204 = vshrl.u32 %v9203, 7
    %v9205 = vsub.s32 3, %v9204
    %v9206 = vrot.slane %v9189, %v9205
    %v9211 = vmul.f32 %v9125, %v9194
    %v9212 = vmul.f32 %v9126, %v9198
    %v9213 = vmul.f32 %v9127, %v9202
    %v9214 = vmul.f32 %v9128, %v9206
    %v9215 = vmul.f32 %v9129, %v9194
    %v9216 = vmul.f32 %v9130, %v9198
    %v9217 = vmul.f32 %v9131, %v9202
    %v9218 = vmul.f32 %v9132, %v9206
    %v9219 = vmul.f32 %v9133, %v9194
    %v9220 = vmul.f32 %v9134, %v9198
    %v9221 = vmul.f32 %v9135, %v9202
    %v9222 = vmul.f32 %v9136, %v9206
    %v9223 = vmul.f32 %v9137, %v9194
    %v9224 = vmul.f32 %v9138, %v9198
    %v9225 = vmul.f32 %v9139, %v9202
    %v9226 = vmul.f32 %v9140, %v9206
    %v9227 = vmul.f32 %v9141, %v9194
    %v9228 = vmul.f32 %v9142, %v9198
    %v9229 = vmul.f32 %v9143, %v9202
    %v9230 = vmul.f32 %v9144, %v9206
    %v9231 = vmul.f32 %v9145, %v9194
    %v9232 = vmul.f32 %v9146, %v9198
    %v9233 = vmul.f32 %v9147, %v9202
    %v9234 = vmul.f32 %v9148, %v9206
    %v9235 = vmul.f32 %v9149, %v9194
    %v9236 = vmul.f32 %v9150, %v9198
    %v9237 = vmul.f32 %v9151, %v9202
    %v9238 = vmul.f32 %v9152, %v9206
    %v9239 = vmul.f32 %v9153, %v9194
    %v9240 = vmul.f32 %v9154, %v9198
    %v9241 = vmul.f32 %v9155, %v9202
    %v9242 = vmul.f32 %v9156, %v9206
    %v9243 = vmul.f32 %v9157, %v9194
    %v9244 = vmul.f32 %v9158, %v9198
    %v9245 = vmul.f32 %v9159, %v9202
    %v9246 = vmul.f32 %v9160, %v9206
    %v9247 = vmul.f32 %v9161, %v9194
    %v9248 = vmul.f32 %v9162, %v9198
    %v9249 = vmul.f32 %v9163, %v9202
    %v9250 = vmul.f32 %v9164, %v9206
    %v9251 = vmul.f32 %v9165, %v9194
    %v9252 = vmul.f32 %v9166, %v9198
    %v9253 = vmul.f32 %v9167, %v9202
    %v9254 = vmul.f32 %v9168, %v9206
    %v9255 = vmul.f32 %v9169, %v9194
    %v9256 = vmul.f32 %v9170, %v9198
    %v9257 = vmul.f32 %v9171, %v9202
    %v9258 = vmul.f32 %v9172, %v9206
    %v9259 = vmul.f32 %v9173, %v9194
    %v9260 = vmul.f32 %v9174, %v9198
    %v9261 = vmul.f32 %v9175, %v9202
    %v9262 = vmul.f32 %v9176, %v9206
    %v9263 = vmul.f32 %v9177, %v9194
    %v9264 = vmul.f32 %v9178, %v9198
    %v9265 = vmul.f32 %v9179, %v9202
    %v9266 = vmul.f32 %v9180, %v9206
    %v9267 = vmul.f32 %v9181, %v9194
    %v9268 = vmul.f32 %v9182, %v9198
    %v9269 = vmul.f32 %v9183, %v9202
    %v9270 = vmul.f32 %v9184, %v9206
    %v9271 = vmul.f32 %v9185, %v9194
    %v9272 = vmul.f32 %v9186, %v9198
    %v9273 = vmul.f32 %v9187, %v9202
    %v9274 = vmul.f32 %v9188, %v9206
    %v9275 = vadd.f32 %v9211, %v9212
    %v9276 = vadd.f32 %v9275, %v9213
    %v9277 = vadd.f32 %v9276, %v9214
    %9278 = vadd.xlane.f32.xlu0 %v9277
    %v9279 = vpop.xlane.xlu0 %9278
    %v9280 = vadd.f32 %v9215, %v9216
    %v9281 = vadd.f32 %v9280, %v9217
    %v9282 = vadd.f32 %v9281, %v9218
    %9283 = vadd.xlane.f32.xlu0 %v9282
    %v9284 = vpop.xlane.xlu0 %9283
    %v9285 = vadd.f32 %v9219, %v9220
    %v9286 = vadd.f32 %v9285, %v9221
    %v9287 = vadd.f32 %v9286, %v9222
    %9288 = vadd.xlane.f32.xlu0 %v9287
    %v9289 = vpop.xlane.xlu0 %9288
    %v9290 = vadd.f32 %v9223, %v9224
    %v9291 = vadd.f32 %v9290, %v9225
    %v9292 = vadd.f32 %v9291, %v9226
    %9293 = vadd.xlane.f32.xlu0 %v9292
    %v9294 = vpop.xlane.xlu0 %9293
    %v9295 = vadd.f32 %v9227, %v9228
    %v9296 = vadd.f32 %v9295, %v9229
    %v9297 = vadd.f32 %v9296, %v9230
    %9298 = vadd.xlane.f32.xlu0 %v9297
    %v9299 = vpop.xlane.xlu0 %9298
    %v9300 = vadd.f32 %v9231, %v9232
    %v9301 = vadd.f32 %v9300, %v9233
    %v9302 = vadd.f32 %v9301, %v9234
    %9303 = vadd.xlane.f32.xlu0 %v9302
    %v9304 = vpop.xlane.xlu0 %9303
    %v9305 = vadd.f32 %v9235, %v9236
    %v9306 = vadd.f32 %v9305, %v9237
    %v9307 = vadd.f32 %v9306, %v9238
    %9308 = vadd.xlane.f32.xlu0 %v9307
    %v9309 = vpop.xlane.xlu0 %9308
    %v9310 = vadd.f32 %v9239, %v9240
    %v9311 = vadd.f32 %v9310, %v9241
    %v9312 = vadd.f32 %v9311, %v9242
    %9313 = vadd.xlane.f32.xlu0 %v9312
    %v9314 = vpop.xlane.xlu0 %9313
    %v9315 = vadd.f32 %v9243, %v9244
    %v9316 = vadd.f32 %v9315, %v9245
    %v9317 = vadd.f32 %v9316, %v9246
    %9318 = vadd.xlane.f32.xlu0 %v9317
    %v9319 = vpop.xlane.xlu0 %9318
    %v9320 = vadd.f32 %v9247, %v9248
    %v9321 = vadd.f32 %v9320, %v9249
    %v9322 = vadd.f32 %v9321, %v9250
    %9323 = vadd.xlane.f32.xlu0 %v9322
    %v9324 = vpop.xlane.xlu0 %9323
    %v9325 = vadd.f32 %v9251, %v9252
    %v9326 = vadd.f32 %v9325, %v9253
    %v9327 = vadd.f32 %v9326, %v9254
    %9328 = vadd.xlane.f32.xlu0 %v9327
    %v9329 = vpop.xlane.xlu0 %9328
    %v9330 = vadd.f32 %v9255, %v9256
    %v9331 = vadd.f32 %v9330, %v9257
    %v9332 = vadd.f32 %v9331, %v9258
    %9333 = vadd.xlane.f32.xlu0 %v9332
    %v9334 = vpop.xlane.xlu0 %9333
    %v9335 = vadd.f32 %v9259, %v9260
    %v9336 = vadd.f32 %v9335, %v9261
    %v9337 = vadd.f32 %v9336, %v9262
    %9338 = vadd.xlane.f32.xlu0 %v9337
    %v9339 = vpop.xlane.xlu0 %9338
    %v9340 = vadd.f32 %v9263, %v9264
    %v9341 = vadd.f32 %v9340, %v9265
    %v9342 = vadd.f32 %v9341, %v9266
    %9343 = vadd.xlane.f32.xlu0 %v9342
    %v9344 = vpop.xlane.xlu0 %9343
    %v9345 = vadd.f32 %v9267, %v9268
    %v9346 = vadd.f32 %v9345, %v9269
    %v9347 = vadd.f32 %v9346, %v9270
    %9348 = vadd.xlane.f32.xlu0 %v9347
    %v9349 = vpop.xlane.xlu0 %9348
    %v9350 = vadd.f32 %v9271, %v9272
    %v9351 = vadd.f32 %v9350, %v9273
    %v9352 = vadd.f32 %v9351, %v9274
    %9353 = vadd.xlane.f32.xlu0 %v9352
    %v9354 = vpop.xlane.xlu0 %9353
    %v9355 = vld [vmem:[#allocation2] sm:$0x1]
    %v9357 = vlaneseq
    %v9358 = vshrl.u32 %v9357, 7
    %v9359 = vsub.s32 0, %v9358
    %v9360 = vrot.slane %v9355, %v9359
    %v9362 = vadd.f32 %v9279, %v9360
    %v9363 = vadd.f32 %v9284, %v9360
    %v9364 = vadd.f32 %v9289, %v9360
    %v9365 = vadd.f32 %v9294, %v9360
    %v9366 = vadd.f32 %v9299, %v9360
    %v9367 = vadd.f32 %v9304, %v9360
    %v9368 = vadd.f32 %v9309, %v9360
    %v9369 = vadd.f32 %v9314, %v9360
    %v9370 = vadd.f32 %v9319, %v9360
    %v9371 = vadd.f32 %v9324, %v9360
    %v9372 = vadd.f32 %v9329, %v9360
    %v9373 = vadd.f32 %v9334, %v9360
    %v9374 = vadd.f32 %v9339, %v9360
    %v9375 = vadd.f32 %v9344, %v9360
    %v9376 = vadd.f32 %v9349, %v9360
    %v9377 = vadd.f32 %v9354, %v9360
    %v9378 = vtanh.pop %v9362
    %v9379 = vtanh.pop %v9363
    %v9380 = vtanh.pop %v9364
    %v9381 = vtanh.pop %v9365
    %v9382 = vtanh.pop %v9366
    %v9383 = vtanh.pop %v9367
    %v9384 = vtanh.pop %v9368
    %v9385 = vtanh.pop %v9369
    %v9386 = vtanh.pop %v9370
    %v9387 = vtanh.pop %v9371
    %v9388 = vtanh.pop %v9372
    %v9389 = vtanh.pop %v9373
    %v9390 = vtanh.pop %v9374
    %v9391 = vtanh.pop %v9375
    %v9392 = vtanh.pop %v9376
    %v9393 = vtanh.pop %v9377
    %9395 = vset.pattern.permute.xlu0 0
    %9396 = vperm.xlu0 %9395, %v9378
    %v9397 = vpop.permute.xlu0 %9396
    %9400 = vset.pattern.permute.xlu0 0
    %9401 = vperm.xlu0 %9400, %v9379
    %v9402 = vpop.permute.xlu0 %9401
    %9405 = vset.pattern.permute.xlu0 0
    %9406 = vperm.xlu0 %9405, %v9380
    %v9407 = vpop.permute.xlu0 %9406
    %9410 = vset.pattern.permute.xlu0 0
    %9411 = vperm.xlu0 %9410, %v9381
    %v9412 = vpop.permute.xlu0 %9411
    %9415 = vset.pattern.permute.xlu0 0
    %9416 = vperm.xlu0 %9415, %v9382
    %v9417 = vpop.permute.xlu0 %9416
    %9420 = vset.pattern.permute.xlu0 0
    %9421 = vperm.xlu0 %9420, %v9383
    %v9422 = vpop.permute.xlu0 %9421
    %9425 = vset.pattern.permute.xlu0 0
    %9426 = vperm.xlu0 %9425, %v9384
    %v9427 = vpop.permute.xlu0 %9426
    %9430 = vset.pattern.permute.xlu0 0
    %9431 = vperm.xlu0 %9430, %v9385
    %v9432 = vpop.permute.xlu0 %9431
    %9435 = vset.pattern.permute.xlu0 0
    %9436 = vperm.xlu0 %9435, %v9386
    %v9437 = vpop.permute.xlu0 %9436
    %9440 = vset.pattern.permute.xlu0 0
    %9441 = vperm.xlu0 %9440, %v9387
    %v9442 = vpop.permute.xlu0 %9441
    %9445 = vset.pattern.permute.xlu0 0
    %9446 = vperm.xlu0 %9445, %v9388
    %v9447 = vpop.permute.xlu0 %9446
    %9450 = vset.pattern.permute.xlu0 0
    %9451 = vperm.xlu0 %9450, %v9389
    %v9452 = vpop.permute.xlu0 %9451
    %9455 = vset.pattern.permute.xlu0 0
    %9456 = vperm.xlu0 %9455, %v9390
    %v9457 = vpop.permute.xlu0 %9456
    %9460 = vset.pattern.permute.xlu0 0
    %9461 = vperm.xlu0 %9460, %v9391
    %v9462 = vpop.permute.xlu0 %9461
    %9465 = vset.pattern.permute.xlu0 0
    %9466 = vperm.xlu0 %9465, %v9392
    %v9467 = vpop.permute.xlu0 %9466
    %9470 = vset.pattern.permute.xlu0 0
    %9471 = vperm.xlu0 %9470, %v9393
    %v9472 = vpop.permute.xlu0 %9471
    %9474 = vst [vmem:[#allocation18] sm:$0xff] %v9397
    %9475 = vst [vmem:[#allocation18 + $0x8] sm:$0xff] %v9402
    %9476 = vst [vmem:[#allocation18 + $0x10] sm:$0xff] %v9407
    %9477 = vst [vmem:[#allocation18 + $0x18] sm:$0xff] %v9412
    %9478 = vst [vmem:[#allocation18 + $0x20] sm:$0xff] %v9417
    %9479 = vst [vmem:[#allocation18 + $0x28] sm:$0xff] %v9422
    %9480 = vst [vmem:[#allocation18 + $0x30] sm:$0xff] %v9427
    %9481 = vst [vmem:[#allocation18 + $0x38] sm:$0xff] %v9432
    %9482 = vst [vmem:[#allocation18 + $0x40] sm:$0xff] %v9437
    %9483 = vst [vmem:[#allocation18 + $0x48] sm:$0xff] %v9442
    %9484 = vst [vmem:[#allocation18 + $0x50] sm:$0xff] %v9447
    %9485 = vst [vmem:[#allocation18 + $0x58] sm:$0xff] %v9452
    %9486 = vst [vmem:[#allocation18 + $0x60] sm:$0xff] %v9457
    %9487 = vst [vmem:[#allocation18 + $0x68] sm:$0xff] %v9462
    %9488 = vst [vmem:[#allocation18 + $0x70] sm:$0xff] %v9467
    %9489 = vst [vmem:[#allocation18 + $0x78] sm:$0xff] %v9472
    // Predicated region
    $region114: #{tpu_custom_call.1} parent=1 // pred_check
      _
    $region115: #{tpu_custom_call.1} parent=1 // pred_check_branch
      %9491 = sbr.rel (0) target = $region117
    $region116: #{tpu_custom_call.1} parent=1 // pred_region
      %s9493 = ssub.s32 2048, 2048
      %9494 = vsyncadd [#allocation5], %s9493
      %s9495 = sshll.u32 [#allocation18], 4
      %s9496 = int_to_ptr.vmem [resolvable:$true] %s9495
      %9501 = dma.vmem_to_hbm [thread:$0]  %s9496, 2048, %s19, [#allocation5], 128, 128, 8
    $region117: #{tpu_custom_call.1} parent=1 // pred_fallthru
      _
    // Predicated region
    $region118: #{tpu_custom_call.1} parent=1 // pred_check
      _
    $region119: #{tpu_custom_call.1} parent=1 // pred_check_branch
      %9503 = sbr.rel (0) target = $region121
    $region120: #{tpu_custom_call.1} parent=1 // pred_region
      %9504 = dma.done [#allocation5], 2048
    $region121: #{tpu_custom_call.1} parent=1 // pred_fallthru
      _
    %9505 = vsyncpa [#allocation4], 1
    %9506 = vsyncpa [#allocation7], 1
    %9507 = vsyncpa [#allocation10], 1
    %9508 = vsyncpa [#allocation13], 1
    %9509 = vsyncpa [#allocation16], 1
    %9510 = vsyncpa [#allocation5], 1

</llo_original>
